<compile_context>
chip_gen: v6e
topology: v6e:2x2x1
jax: 0.10.0
libtpu: 0.0.40
codegen_flags: <defaults>
</compile_context>

<pallas_src>
import numpy as np

import jax
import jax.numpy as jnp
from jax import lax
from jax.experimental import pallas as pl
from jax.experimental.pallas import tpu as pltpu

K0 = 32  # stem conv1 im2col K: 9 taps * 3 channels = 27, padded to 32 lanes


# ----------------------------------------------------------------------------
# In-kernel helpers (operate on VMEM values; only proven-to-lower ops)
# ----------------------------------------------------------------------------
def _pad_hw(x, p):
    """Zero-pad H and W by p via concatenation (tensors are tiny and stay in VMEM)."""
    if p == 0:
        return x
    n, h, w, c = x.shape
    zr = jnp.zeros((n, p, w, c), x.dtype)
    x = jnp.concatenate([zr, x, zr], axis=1)
    zc = jnp.zeros((n, h + 2 * p, p, c), x.dtype)
    return jnp.concatenate([zc, x, zc], axis=2)


def _conv3x3(x, w2d, bias, *, dil, residual=None, select=None):
    """'same' 3x3 conv (stride 1, padding == dilation) + folded BN + ReLU.

    x: (1, h, w, cin) bf16.  w2d: (9*cin, cout) bf16 (BN scale folded),
    bias: (1, cout) f32.  Taps are concatenated at REAL cin so the conv is one
    MXU matmul with compact K.  If `select` (0/1 row-selection matrix) is given
    the conv is evaluated only at the selected output pixels (stride-2 conv).
    If `residual` is given it is added before the ReLU (BasicBlock conv2).
    Returns (m_out, cout) f32.
    """
    n, h, w, c = x.shape
    xp = _pad_hw(x, dil)
    taps = [lax.slice(xp, (0, kh * dil, kw * dil, 0),
                      (n, kh * dil + h, kw * dil + w, c))
            for kh in range(3) for kw in range(3)]
    cols = jnp.concatenate(taps, axis=-1).reshape(h * w, 9 * c)
    if select is not None:
        cols = jnp.dot(select, cols,
                       preferred_element_type=jnp.float32).astype(jnp.bfloat16)
    out = jnp.dot(cols, w2d, preferred_element_type=jnp.float32) + bias
    if residual is not None:
        out = out + residual
    return jnp.maximum(out, 0.0)


def _maxpool3x3_s1(x):
    """3x3 stride-1 max pool, pad 1.  Input is post-ReLU (>= 0), so zero padding
    is equivalent to PyTorch's -inf padding (and avoids bf16 -inf entirely)."""
    n, h, w, c = x.shape
    xp = _pad_hw(x, 1)
    out = None
    for kh in range(3):
        for kw in range(3):
            t = lax.slice(xp, (0, kh, kw, 0), (n, kh + h, kw + w, c))
            out = t if out is None else jnp.maximum(out, t)
    return out.reshape(h * w, c)


def _basic_block(x, p, *, d1, d2, ho, wo, select=None):
    """BasicBlock: conv1+BN+ReLU, 1x1 downsample+BN, conv2+BN, add, ReLU.

    x: (1, h, w, cin) bf16.  If `select` is given, conv1 and the downsample are
    stride 2 (stride-1 compute + row selection) and (ho, wo) is the output
    resolution; otherwise the block is stride 1 with dilations (d1, d2).
    """
    wc1, bc1, wds, bds, wc2, bc2 = p
    n, h, w, cin = x.shape
    cout = wc1.shape[1]
    y1 = _conv3x3(x, wc1, bc1, dil=d1, select=select)          # (ho*wo, cout) f32
    x_flat = x.reshape(h * w, cin)
    if select is not None:                                     # 1x1 stride-2 downsample
        x_flat = jnp.dot(select, x_flat,
                         preferred_element_type=jnp.float32).astype(jnp.bfloat16)
    ident = jnp.dot(x_flat, wds, preferred_element_type=jnp.float32) + bds
    y1 = y1.astype(jnp.bfloat16).reshape(1, ho, wo, cout)
    out = _conv3x3(y1, wc2, bc2, dil=d2, residual=ident)       # add then ReLU
    return out.astype(jnp.bfloat16).reshape(1, ho, wo, cout)


# ----------------------------------------------------------------------------
# XLA-side helpers
# ----------------------------------------------------------------------------
def _subsample_matrix(h, w):
    """0/1 matrix selecting rows (2i, 2j) from an (h, w) grid flattened h-major.
    Used to express stride-2 conv / maxpool as stride-1 compute + one tiny matmul."""
    ho, wo = h // 2, w // 2
    s = np.zeros((ho * wo, h * w), np.float32)
    rows = np.arange(ho * wo)
    s[rows, (rows // wo) * 2 * w + (rows % wo) * 2] = 1.0
    return jnp.asarray(s, dtype=jnp.bfloat16)


def _fold_conv(key, k, cin, cout, k_pad=None):
    """Conv weight with eval-mode BatchNorm folded in, stored COMPACT.

    Returns w2d bf16 [k*k*cin(, padded to k_pad), cout] with K ordered
    (kh, kw, cin)-major->minor, and bias f32 [1, cout].
    """
    k1, k2, k3 = jax.random.split(key, 3)
    w = jax.random.normal(k1, (k, k, cin, cout), jnp.float32)
    w = w * (1.0 / (k * k * cin)) ** 0.5
    gamma = 1.0 + 0.1 * jax.random.normal(k2, (cout,), jnp.float32)
    beta = 0.1 * jax.random.normal(k3, (cout,), jnp.float32)
    mean = jnp.zeros((cout,), jnp.float32)
    var = jnp.ones((cout,), jnp.float32)
    scale = gamma / jnp.sqrt(var + 1e-5)
    bias = beta - mean * scale
    w2d = (w * scale).reshape(k * k * cin, cout)
    if k_pad is not None and k_pad > k * k * cin:
        w2d = jnp.pad(w2d, ((0, k_pad - k * k * cin), (0, 0)))
    return w2d.astype(jnp.bfloat16), bias.reshape(1, cout).astype(jnp.float32)


def init_params(key):
    """Deep-stem ResNet (BasicBlock, 1 block/layer, channels scaled down 8x) with
    _nostride_dilate(dilate_scale=8) applied statically:
      layer3: conv1 s1 d1 p1, conv2 d2 p2, downsample s1
      layer4: conv1 s1 d2 p2, conv2 d4 p4, downsample s1
    """
    keys = iter(jax.random.split(key, 16))
    p = {}
    p["stem1"] = _fold_conv(next(keys), 3, 3, 8, k_pad=K0)   # conv1 3x3 s2
    p["stem2"] = _fold_conv(next(keys), 3, 8, 8)             # conv2 3x3 s1
    p["stem3"] = _fold_conv(next(keys), 3, 8, 16)            # conv3 3x3 s1

    def block(cin, cout):
        return (_fold_conv(next(keys), 3, cin, cout),        # conv1
                _fold_conv(next(keys), 1, cin, cout),        # 1x1 downsample
                _fold_conv(next(keys), 3, cout, cout))       # conv2

    p["l1"] = block(16, 8)
    p["l2"] = block(8, 16)
    p["l3"] = block(16, 32)
    p["l4"] = block(32, 64)
    return p


# ----------------------------------------------------------------------------
# Forward: ONE pallas_call for the whole network (NCHW in / NCHW out)
# ----------------------------------------------------------------------------
def resnet_dilated_forward(params, x_nchw, return_feature_maps=False):
    n, cin, h, w = x_nchw.shape
    assert h % 8 == 0 and w % 8 == 0 and 9 * cin <= K0
    h1, w1 = h // 2, w // 2          # stem output (pre-pool)
    h2, w2 = h1 // 2, w1 // 2        # maxpool / layer1
    h3, w3 = h2 // 2, w2 // 2        # layer2..layer4 (dilated, stride 1)

    # ---- XLA-side prep: stem conv1 im2col patches + stride-2 selection mats ----
    x = jnp.transpose(x_nchw, (0, 2, 3, 1)).astype(jnp.bfloat16)       # NHWC
    xp = jnp.pad(x, ((0, 0), (1, 1), (1, 1), (0, 0)))
    taps = [xp[:, kh:kh + 2 * h1:2, kw:kw + 2 * w1:2, :]
            for kh in range(3) for kw in range(3)]
    cols0 = jnp.concatenate(taps, axis=-1)                             # (N,h1,w1,27)
    cols0 = jnp.pad(cols0, ((0, 0), (0, 0), (0, 0), (0, K0 - 9 * cin)))

    s_pool = _subsample_matrix(h1, w1)      # (h2*w2, h1*w1) - maxpool stride 2
    s_l2 = _subsample_matrix(h2, w2)        # (h3*w3, h2*w2) - layer2 stride 2

    wb = [*params["stem1"], *params["stem2"], *params["stem3"]]
    for name in ("l1", "l2", "l3", "l4"):
        for pair in params[name]:
            wb.extend(pair)                 # wc1, bc1, wds, bds, wc2, bc2
    const_args = [s_pool, s_l2] + wb        # 32 small VMEM-resident constants

    c_stem = params["stem3"][0].shape[1]
    c1 = params["l1"][0][0].shape[1]
    c2 = params["l2"][0][0].shape[1]
    c3 = params["l3"][0][0].shape[1]
    c4 = params["l4"][0][0].shape[1]

    out_shape = (
        jax.ShapeDtypeStruct((n, h1, w1, c_stem), jnp.bfloat16),
        jax.ShapeDtypeStruct((n, h2, w2, c1), jnp.bfloat16),
        jax.ShapeDtypeStruct((n, h3, w3, c2), jnp.bfloat16),
        jax.ShapeDtypeStruct((n, h3, w3, c3), jnp.bfloat16),
        jax.ShapeDtypeStruct((n, h3, w3, c4), jnp.bfloat16),
    )

    def kernel(cols0_ref, spool_ref, sl2_ref, *refs):
        wrefs, (o0, o1, o2, o3, o4) = refs[:30], refs[30:]
        v = [r[...] for r in wrefs]
        ws1, bs1, ws2, bs2, ws3, bs3 = v[0:6]
        l1p, l2p, l3p, l4p = v[6:12], v[12:18], v[18:24], v[24:30]

        # --- deep stem: conv1(3x3, s2) from pre-built patches, conv2, conv3 ---
        cols = cols0_ref[...].reshape(h1 * w1, K0)
        a = jnp.dot(cols, ws1, preferred_element_type=jnp.float32) + bs1
        a = jnp.maximum(a, 0.0).astype(jnp.bfloat16).reshape(1, h1, w1, ws1.shape[1])
        a = _conv3x3(a, ws2, bs2, dil=1)
        a = a.astype(jnp.bfloat16).reshape(1, h1, w1, ws2.shape[1])
        stem = _conv3x3(a, ws3, bs3, dil=1)
        stem = stem.astype(jnp.bfloat16).reshape(1, h1, w1, ws3.shape[1])
        o0[...] = stem

        # --- maxpool(3, s2, p1): stride-1 pool + 0/1 row-selection matmul ---
        pool1 = _maxpool3x3_s1(stem)                                   # (h1*w1, c)
        pooled = jnp.dot(spool_ref[...], pool1,
                         preferred_element_type=jnp.float32)
        x_in = pooled.astype(jnp.bfloat16).reshape(1, h2, w2, ws3.shape[1])

        x1 = _basic_block(x_in, l1p, d1=1, d2=1, ho=h2, wo=w2)         # layer1
        o1[...] = x1
        x2 = _basic_block(x1, l2p, d1=1, d2=1, ho=h3, wo=w3,
                          select=sl2_ref[...])                         # layer2 (s2)
        o2[...] = x2
        x3 = _basic_block(x2, l3p, d1=1, d2=2, ho=h3, wo=w3)           # layer3 (dil 2)
        o3[...] = x3
        x4 = _basic_block(x3, l4p, d1=2, d2=4, ho=h3, wo=w3)           # layer4 (dil 4)
        o4[...] = x4

    in_specs = [pl.BlockSpec((1, h1, w1, K0), lambda i: (i, 0, 0, 0))]
    # weights / biases / selection matrices: constant index_map -> fetched once,
    # stay VMEM-resident across the batch grid (~0.17 MiB total).
    in_specs += [pl.BlockSpec(a.shape, lambda i: (0, 0)) for a in const_args]
    out_specs = tuple(pl.BlockSpec((1,) + s.shape[1:], lambda i: (i, 0, 0, 0))
                      for s in out_shape)

    outs = pl.pallas_call(
        kernel,
        grid=(n,),
        in_specs=in_specs,
        out_specs=out_specs,
        out_shape=out_shape,
        compiler_params=pltpu.CompilerParams(
            dimension_semantics=("parallel",)),   # v7x: one batch elem per TC
    )(cols0, *const_args)

    feats = list(outs) if return_feature_maps else [outs[-1]]
    return [jnp.transpose(f, (0, 3, 1, 2)).astype(jnp.float32) for f in feats]


if __name__ == "__main__":
    key = jax.random.PRNGKey(0)
    pkey, xkey = jax.random.split(key)
    params = init_params(pkey)
    x = jax.random.normal(xkey, (2, 3, 32, 32), jnp.float32)

    fwd = jax.jit(resnet_dilated_forward, static_argnames=("return_feature_maps",))

    out = fwd(params, x, return_feature_maps=False)
    out = [jax.block_until_ready(o) for o in out]
    assert out[0].shape == (2, 64, 4, 4), out[0].shape
    assert bool(jnp.isfinite(out[0]).all())

    feats = fwd(params, x, return_feature_maps=True)
    feats = [jax.block_until_ready(o) for o in feats]
    expected = [(2, 16, 16, 16), (2, 8, 8, 8), (2, 16, 4, 4),
                (2, 32, 4, 4), (2, 64, 4, 4)]
    assert [tuple(f.shape) for f in feats] == expected, [f.shape for f in feats]

    print("KERNEL_OK")
</pallas_src>

<mosaic_0001>
module attributes {stable_mosaic.version = 11 : i64} {
  func.func @kernel(%arg0: i32, %arg1: memref<1x16x16x32xbf16, #tpu.memory_space<vmem>>, %arg2: memref<64x256xbf16, #tpu.memory_space<vmem>>, %arg3: memref<16x64xbf16, #tpu.memory_space<vmem>>, %arg4: memref<32x8xbf16, #tpu.memory_space<vmem>>, %arg5: memref<1x8xf32, #tpu.memory_space<vmem>>, %arg6: memref<72x8xbf16, #tpu.memory_space<vmem>>, %arg7: memref<1x8xf32, #tpu.memory_space<vmem>>, %arg8: memref<72x16xbf16, #tpu.memory_space<vmem>>, %arg9: memref<1x16xf32, #tpu.memory_space<vmem>>, %arg10: memref<144x8xbf16, #tpu.memory_space<vmem>>, %arg11: memref<1x8xf32, #tpu.memory_space<vmem>>, %arg12: memref<16x8xbf16, #tpu.memory_space<vmem>>, %arg13: memref<1x8xf32, #tpu.memory_space<vmem>>, %arg14: memref<72x8xbf16, #tpu.memory_space<vmem>>, %arg15: memref<1x8xf32, #tpu.memory_space<vmem>>, %arg16: memref<72x16xbf16, #tpu.memory_space<vmem>>, %arg17: memref<1x16xf32, #tpu.memory_space<vmem>>, %arg18: memref<8x16xbf16, #tpu.memory_space<vmem>>, %arg19: memref<1x16xf32, #tpu.memory_space<vmem>>, %arg20: memref<144x16xbf16, #tpu.memory_space<vmem>>, %arg21: memref<1x16xf32, #tpu.memory_space<vmem>>, %arg22: memref<144x32xbf16, #tpu.memory_space<vmem>>, %arg23: memref<1x32xf32, #tpu.memory_space<vmem>>, %arg24: memref<16x32xbf16, #tpu.memory_space<vmem>>, %arg25: memref<1x32xf32, #tpu.memory_space<vmem>>, %arg26: memref<288x32xbf16, #tpu.memory_space<vmem>>, %arg27: memref<1x32xf32, #tpu.memory_space<vmem>>, %arg28: memref<288x64xbf16, #tpu.memory_space<vmem>>, %arg29: memref<1x64xf32, #tpu.memory_space<vmem>>, %arg30: memref<32x64xbf16, #tpu.memory_space<vmem>>, %arg31: memref<1x64xf32, #tpu.memory_space<vmem>>, %arg32: memref<576x64xbf16, #tpu.memory_space<vmem>>, %arg33: memref<1x64xf32, #tpu.memory_space<vmem>>, %arg34: memref<1x16x16x16xbf16, #tpu.memory_space<vmem>>, %arg35: memref<1x8x8x8xbf16, #tpu.memory_space<vmem>>, %arg36: memref<1x4x4x16xbf16, #tpu.memory_space<vmem>>, %arg37: memref<1x4x4x32xbf16, #tpu.memory_space<vmem>>, %arg38: memref<1x4x4x64xbf16, #tpu.memory_space<vmem>>) attributes {dimension_semantics = [#tpu.dimension_semantics<parallel>], iteration_bounds = array<i64: 2>, scalar_prefetch = 0 : i64, scratch_operands = 0 : i64, tpu.core_type = #tpu.core_type<tc>, window_params = [{transform_indices = @transform_0, window_bounds = array<i64: 1, 16, 16, 32>}, {pipeline_mode = #tpu.pipeline_mode<synchronous>, transform_indices = @transform_1, window_bounds = array<i64: 64, 256>}, {pipeline_mode = #tpu.pipeline_mode<synchronous>, transform_indices = @transform_2, window_bounds = array<i64: 16, 64>}, {pipeline_mode = #tpu.pipeline_mode<synchronous>, transform_indices = @transform_3, window_bounds = array<i64: 32, 8>}, {pipeline_mode = #tpu.pipeline_mode<synchronous>, transform_indices = @transform_4, window_bounds = array<i64: 1, 8>}, {pipeline_mode = #tpu.pipeline_mode<synchronous>, transform_indices = @transform_5, window_bounds = array<i64: 72, 8>}, {pipeline_mode = #tpu.pipeline_mode<synchronous>, transform_indices = @transform_6, window_bounds = array<i64: 1, 8>}, {pipeline_mode = #tpu.pipeline_mode<synchronous>, transform_indices = @transform_7, window_bounds = array<i64: 72, 16>}, {pipeline_mode = #tpu.pipeline_mode<synchronous>, transform_indices = @transform_8, window_bounds = array<i64: 1, 16>}, {pipeline_mode = #tpu.pipeline_mode<synchronous>, transform_indices = @transform_9, window_bounds = array<i64: 144, 8>}, {pipeline_mode = #tpu.pipeline_mode<synchronous>, transform_indices = @transform_10, window_bounds = array<i64: 1, 8>}, {pipeline_mode = #tpu.pipeline_mode<synchronous>, transform_indices = @transform_11, window_bounds = array<i64: 16, 8>}, {pipeline_mode = #tpu.pipeline_mode<synchronous>, transform_indices = @transform_12, window_bounds = array<i64: 1, 8>}, {pipeline_mode = #tpu.pipeline_mode<synchronous>, transform_indices = @transform_13, window_bounds = array<i64: 72, 8>}, {pipeline_mode = #tpu.pipeline_mode<synchronous>, transform_indices = @transform_14, window_bounds = array<i64: 1, 8>}, {pipeline_mode = #tpu.pipeline_mode<synchronous>, transform_indices = @transform_15, window_bounds = array<i64: 72, 16>}, {pipeline_mode = #tpu.pipeline_mode<synchronous>, transform_indices = @transform_16, window_bounds = array<i64: 1, 16>}, {pipeline_mode = #tpu.pipeline_mode<synchronous>, transform_indices = @transform_17, window_bounds = array<i64: 8, 16>}, {pipeline_mode = #tpu.pipeline_mode<synchronous>, transform_indices = @transform_18, window_bounds = array<i64: 1, 16>}, {pipeline_mode = #tpu.pipeline_mode<synchronous>, transform_indices = @transform_19, window_bounds = array<i64: 144, 16>}, {pipeline_mode = #tpu.pipeline_mode<synchronous>, transform_indices = @transform_20, window_bounds = array<i64: 1, 16>}, {pipeline_mode = #tpu.pipeline_mode<synchronous>, transform_indices = @transform_21, window_bounds = array<i64: 144, 32>}, {pipeline_mode = #tpu.pipeline_mode<synchronous>, transform_indices = @transform_22, window_bounds = array<i64: 1, 32>}, {pipeline_mode = #tpu.pipeline_mode<synchronous>, transform_indices = @transform_23, window_bounds = array<i64: 16, 32>}, {pipeline_mode = #tpu.pipeline_mode<synchronous>, transform_indices = @transform_24, window_bounds = array<i64: 1, 32>}, {pipeline_mode = #tpu.pipeline_mode<synchronous>, transform_indices = @transform_25, window_bounds = array<i64: 288, 32>}, {pipeline_mode = #tpu.pipeline_mode<synchronous>, transform_indices = @transform_26, window_bounds = array<i64: 1, 32>}, {pipeline_mode = #tpu.pipeline_mode<synchronous>, transform_indices = @transform_27, window_bounds = array<i64: 288, 64>}, {pipeline_mode = #tpu.pipeline_mode<synchronous>, transform_indices = @transform_28, window_bounds = array<i64: 1, 64>}, {pipeline_mode = #tpu.pipeline_mode<synchronous>, transform_indices = @transform_29, window_bounds = array<i64: 32, 64>}, {pipeline_mode = #tpu.pipeline_mode<synchronous>, transform_indices = @transform_30, window_bounds = array<i64: 1, 64>}, {pipeline_mode = #tpu.pipeline_mode<synchronous>, transform_indices = @transform_31, window_bounds = array<i64: 576, 64>}, {pipeline_mode = #tpu.pipeline_mode<synchronous>, transform_indices = @transform_32, window_bounds = array<i64: 1, 64>}, {transform_indices = @transform_33, window_bounds = array<i64: 1, 16, 16, 16>}, {transform_indices = @transform_34, window_bounds = array<i64: 1, 8, 8, 8>}, {transform_indices = @transform_35, window_bounds = array<i64: 1, 4, 4, 16>}, {transform_indices = @transform_36, window_bounds = array<i64: 1, 4, 4, 32>}, {transform_indices = @transform_37, window_bounds = array<i64: 1, 4, 4, 64>}]} {
    %c0 = arith.constant 0 : index
    %c0_0 = arith.constant 0 : index
    %0 = vector.load %arg4[%c0, %c0_0] : memref<32x8xbf16, #tpu.memory_space<vmem>>, vector<32x8xbf16>
    %c0_1 = arith.constant 0 : index
    %c0_2 = arith.constant 0 : index
    %1 = vector.load %arg5[%c0_1, %c0_2] : memref<1x8xf32, #tpu.memory_space<vmem>>, vector<1x8xf32>
    %c0_3 = arith.constant 0 : index
    %c0_4 = arith.constant 0 : index
    %2 = vector.load %arg6[%c0_3, %c0_4] : memref<72x8xbf16, #tpu.memory_space<vmem>>, vector<72x8xbf16>
    %c0_5 = arith.constant 0 : index
    %c0_6 = arith.constant 0 : index
    %3 = vector.load %arg7[%c0_5, %c0_6] : memref<1x8xf32, #tpu.memory_space<vmem>>, vector<1x8xf32>
    %c0_7 = arith.constant 0 : index
    %c0_8 = arith.constant 0 : index
    %4 = vector.load %arg8[%c0_7, %c0_8] : memref<72x16xbf16, #tpu.memory_space<vmem>>, vector<72x16xbf16>
    %c0_9 = arith.constant 0 : index
    %c0_10 = arith.constant 0 : index
    %5 = vector.load %arg9[%c0_9, %c0_10] : memref<1x16xf32, #tpu.memory_space<vmem>>, vector<1x16xf32>
    %c0_11 = arith.constant 0 : index
    %c0_12 = arith.constant 0 : index
    %6 = vector.load %arg10[%c0_11, %c0_12] : memref<144x8xbf16, #tpu.memory_space<vmem>>, vector<144x8xbf16>
    %c0_13 = arith.constant 0 : index
    %c0_14 = arith.constant 0 : index
    %7 = vector.load %arg11[%c0_13, %c0_14] : memref<1x8xf32, #tpu.memory_space<vmem>>, vector<1x8xf32>
    %c0_15 = arith.constant 0 : index
    %c0_16 = arith.constant 0 : index
    %8 = vector.load %arg12[%c0_15, %c0_16] : memref<16x8xbf16, #tpu.memory_space<vmem>>, vector<16x8xbf16>
    %c0_17 = arith.constant 0 : index
    %c0_18 = arith.constant 0 : index
    %9 = vector.load %arg13[%c0_17, %c0_18] : memref<1x8xf32, #tpu.memory_space<vmem>>, vector<1x8xf32>
    %c0_19 = arith.constant 0 : index
    %c0_20 = arith.constant 0 : index
    %10 = vector.load %arg14[%c0_19, %c0_20] : memref<72x8xbf16, #tpu.memory_space<vmem>>, vector<72x8xbf16>
    %c0_21 = arith.constant 0 : index
    %c0_22 = arith.constant 0 : index
    %11 = vector.load %arg15[%c0_21, %c0_22] : memref<1x8xf32, #tpu.memory_space<vmem>>, vector<1x8xf32>
    %c0_23 = arith.constant 0 : index
    %c0_24 = arith.constant 0 : index
    %12 = vector.load %arg16[%c0_23, %c0_24] : memref<72x16xbf16, #tpu.memory_space<vmem>>, vector<72x16xbf16>
    %c0_25 = arith.constant 0 : index
    %c0_26 = arith.constant 0 : index
    %13 = vector.load %arg17[%c0_25, %c0_26] : memref<1x16xf32, #tpu.memory_space<vmem>>, vector<1x16xf32>
    %c0_27 = arith.constant 0 : index
    %c0_28 = arith.constant 0 : index
    %14 = vector.load %arg18[%c0_27, %c0_28] : memref<8x16xbf16, #tpu.memory_space<vmem>>, vector<8x16xbf16>
    %c0_29 = arith.constant 0 : index
    %c0_30 = arith.constant 0 : index
    %15 = vector.load %arg19[%c0_29, %c0_30] : memref<1x16xf32, #tpu.memory_space<vmem>>, vector<1x16xf32>
    %c0_31 = arith.constant 0 : index
    %c0_32 = arith.constant 0 : index
    %16 = vector.load %arg20[%c0_31, %c0_32] : memref<144x16xbf16, #tpu.memory_space<vmem>>, vector<144x16xbf16>
    %c0_33 = arith.constant 0 : index
    %c0_34 = arith.constant 0 : index
    %17 = vector.load %arg21[%c0_33, %c0_34] : memref<1x16xf32, #tpu.memory_space<vmem>>, vector<1x16xf32>
    %c0_35 = arith.constant 0 : index
    %c0_36 = arith.constant 0 : index
    %18 = vector.load %arg22[%c0_35, %c0_36] : memref<144x32xbf16, #tpu.memory_space<vmem>>, vector<144x32xbf16>
    %c0_37 = arith.constant 0 : index
    %c0_38 = arith.constant 0 : index
    %19 = vector.load %arg23[%c0_37, %c0_38] : memref<1x32xf32, #tpu.memory_space<vmem>>, vector<1x32xf32>
    %c0_39 = arith.constant 0 : index
    %c0_40 = arith.constant 0 : index
    %20 = vector.load %arg24[%c0_39, %c0_40] : memref<16x32xbf16, #tpu.memory_space<vmem>>, vector<16x32xbf16>
    %c0_41 = arith.constant 0 : index
    %c0_42 = arith.constant 0 : index
    %21 = vector.load %arg25[%c0_41, %c0_42] : memref<1x32xf32, #tpu.memory_space<vmem>>, vector<1x32xf32>
    %c0_43 = arith.constant 0 : index
    %c0_44 = arith.constant 0 : index
    %22 = vector.load %arg26[%c0_43, %c0_44] : memref<288x32xbf16, #tpu.memory_space<vmem>>, vector<288x32xbf16>
    %c0_45 = arith.constant 0 : index
    %c0_46 = arith.constant 0 : index
    %23 = vector.load %arg27[%c0_45, %c0_46] : memref<1x32xf32, #tpu.memory_space<vmem>>, vector<1x32xf32>
    %c0_47 = arith.constant 0 : index
    %c0_48 = arith.constant 0 : index
    %24 = vector.load %arg28[%c0_47, %c0_48] : memref<288x64xbf16, #tpu.memory_space<vmem>>, vector<288x64xbf16>
    %c0_49 = arith.constant 0 : index
    %c0_50 = arith.constant 0 : index
    %25 = vector.load %arg29[%c0_49, %c0_50] : memref<1x64xf32, #tpu.memory_space<vmem>>, vector<1x64xf32>
    %c0_51 = arith.constant 0 : index
    %c0_52 = arith.constant 0 : index
    %26 = vector.load %arg30[%c0_51, %c0_52] : memref<32x64xbf16, #tpu.memory_space<vmem>>, vector<32x64xbf16>
    %c0_53 = arith.constant 0 : index
    %c0_54 = arith.constant 0 : index
    %27 = vector.load %arg31[%c0_53, %c0_54] : memref<1x64xf32, #tpu.memory_space<vmem>>, vector<1x64xf32>
    %c0_55 = arith.constant 0 : index
    %c0_56 = arith.constant 0 : index
    %28 = vector.load %arg32[%c0_55, %c0_56] : memref<576x64xbf16, #tpu.memory_space<vmem>>, vector<576x64xbf16>
    %c0_57 = arith.constant 0 : index
    %c0_58 = arith.constant 0 : index
    %29 = vector.load %arg33[%c0_57, %c0_58] : memref<1x64xf32, #tpu.memory_space<vmem>>, vector<1x64xf32>
    %c0_59 = arith.constant 0 : index
    %c0_60 = arith.constant 0 : index
    %c0_61 = arith.constant 0 : index
    %c0_62 = arith.constant 0 : index
    %30 = vector.load %arg1[%c0_59, %c0_60, %c0_61, %c0_62] : memref<1x16x16x32xbf16, #tpu.memory_space<vmem>>, vector<1x16x16x32xbf16>
    %31 = vector.shape_cast %30 : vector<1x16x16x32xbf16> to vector<256x32xbf16>
    %cst = arith.constant dense<0.000000e+00> : vector<256x8xf32>
    %32 = tpu.matmul %31, %0, %cst {dimension_numbers = #tpu.dot_dimension_numbers<[1], [0], [0], [1], [0, 0, 1, 1], [], []>} : vector<256x32xbf16>, vector<32x8xbf16>, vector<256x8xf32> -> vector<256x8xf32>
    %33 = vector.broadcast %1 : vector<1x8xf32> to vector<256x8xf32>
    %34 = arith.addf %32, %33 : vector<256x8xf32>
    %cst_63 = arith.constant 0.000000e+00 : f32
    %35 = vector.broadcast %cst_63 : f32 to vector<256x8xf32>
    %36 = arith.maximumf %34, %35 : vector<256x8xf32>
    %37 = arith.truncf %36 : vector<256x8xf32> to vector<256x8xbf16>
    %38 = vector.shape_cast %37 : vector<256x8xbf16> to vector<1x16x16x8xbf16>
    %cst_64 = arith.constant 0.000000e+00 : bf16
    %39 = vector.broadcast %cst_64 : bf16 to vector<1x1x16x8xbf16>
    %40 = tpu.concatenate %39, %38, %39 in 1 : vector<1x1x16x8xbf16>, vector<1x16x16x8xbf16>, vector<1x1x16x8xbf16> -> vector<1x18x16x8xbf16>
    %cst_65 = arith.constant 0.000000e+00 : bf16
    %41 = vector.broadcast %cst_65 : bf16 to vector<1x18x1x8xbf16>
    %42 = tpu.concatenate %41, %40, %41 in 2 : vector<1x18x1x8xbf16>, vector<1x18x16x8xbf16>, vector<1x18x1x8xbf16> -> vector<1x18x18x8xbf16>
    %43 = vector.extract_strided_slice %42 {offsets = [0, 0, 0, 0], sizes = [1, 16, 16, 8], strides = [1, 1, 1, 1]} : vector<1x18x18x8xbf16> to vector<1x16x16x8xbf16>
    %44 = vector.extract_strided_slice %42 {offsets = [0, 0, 1, 0], sizes = [1, 16, 16, 8], strides = [1, 1, 1, 1]} : vector<1x18x18x8xbf16> to vector<1x16x16x8xbf16>
    %45 = vector.extract_strided_slice %42 {offsets = [0, 0, 2, 0], sizes = [1, 16, 16, 8], strides = [1, 1, 1, 1]} : vector<1x18x18x8xbf16> to vector<1x16x16x8xbf16>
    %46 = vector.extract_strided_slice %42 {offsets = [0, 1, 0, 0], sizes = [1, 16, 16, 8], strides = [1, 1, 1, 1]} : vector<1x18x18x8xbf16> to vector<1x16x16x8xbf16>
    %47 = vector.extract_strided_slice %42 {offsets = [0, 1, 1, 0], sizes = [1, 16, 16, 8], strides = [1, 1, 1, 1]} : vector<1x18x18x8xbf16> to vector<1x16x16x8xbf16>
    %48 = vector.extract_strided_slice %42 {offsets = [0, 1, 2, 0], sizes = [1, 16, 16, 8], strides = [1, 1, 1, 1]} : vector<1x18x18x8xbf16> to vector<1x16x16x8xbf16>
    %49 = vector.extract_strided_slice %42 {offsets = [0, 2, 0, 0], sizes = [1, 16, 16, 8], strides = [1, 1, 1, 1]} : vector<1x18x18x8xbf16> to vector<1x16x16x8xbf16>
    %50 = vector.extract_strided_slice %42 {offsets = [0, 2, 1, 0], sizes = [1, 16, 16, 8], strides = [1, 1, 1, 1]} : vector<1x18x18x8xbf16> to vector<1x16x16x8xbf16>
    %51 = vector.extract_strided_slice %42 {offsets = [0, 2, 2, 0], sizes = [1, 16, 16, 8], strides = [1, 1, 1, 1]} : vector<1x18x18x8xbf16> to vector<1x16x16x8xbf16>
    %52 = tpu.concatenate %43, %44, %45, %46, %47, %48, %49, %50, %51 in 3 : vector<1x16x16x8xbf16>, vector<1x16x16x8xbf16>, vector<1x16x16x8xbf16>, vector<1x16x16x8xbf16>, vector<1x16x16x8xbf16>, vector<1x16x16x8xbf16>, vector<1x16x16x8xbf16>, vector<1x16x16x8xbf16>, vector<1x16x16x8xbf16> -> vector<1x16x16x72xbf16>
    %53 = vector.shape_cast %52 : vector<1x16x16x72xbf16> to vector<256x72xbf16>
    %cst_66 = arith.constant dense<0.000000e+00> : vector<256x8xf32>
    %54 = tpu.matmul %53, %2, %cst_66 {dimension_numbers = #tpu.dot_dimension_numbers<[1], [0], [0], [1], [0, 0, 1, 1], [], []>} : vector<256x72xbf16>, vector<72x8xbf16>, vector<256x8xf32> -> vector<256x8xf32>
    %55 = vector.broadcast %3 : vector<1x8xf32> to vector<256x8xf32>
    %56 = arith.addf %54, %55 : vector<256x8xf32>
    %cst_67 = arith.constant 0.000000e+00 : f32
    %57 = vector.broadcast %cst_67 : f32 to vector<256x8xf32>
    %58 = arith.maximumf %56, %57 : vector<256x8xf32>
    %59 = arith.truncf %58 : vector<256x8xf32> to vector<256x8xbf16>
    %60 = vector.shape_cast %59 : vector<256x8xbf16> to vector<1x16x16x8xbf16>
    %cst_68 = arith.constant 0.000000e+00 : bf16
    %61 = vector.broadcast %cst_68 : bf16 to vector<1x1x16x8xbf16>
    %62 = tpu.concatenate %61, %60, %61 in 1 : vector<1x1x16x8xbf16>, vector<1x16x16x8xbf16>, vector<1x1x16x8xbf16> -> vector<1x18x16x8xbf16>
    %cst_69 = arith.constant 0.000000e+00 : bf16
    %63 = vector.broadcast %cst_69 : bf16 to vector<1x18x1x8xbf16>
    %64 = tpu.concatenate %63, %62, %63 in 2 : vector<1x18x1x8xbf16>, vector<1x18x16x8xbf16>, vector<1x18x1x8xbf16> -> vector<1x18x18x8xbf16>
    %65 = vector.extract_strided_slice %64 {offsets = [0, 0, 0, 0], sizes = [1, 16, 16, 8], strides = [1, 1, 1, 1]} : vector<1x18x18x8xbf16> to vector<1x16x16x8xbf16>
    %66 = vector.extract_strided_slice %64 {offsets = [0, 0, 1, 0], sizes = [1, 16, 16, 8], strides = [1, 1, 1, 1]} : vector<1x18x18x8xbf16> to vector<1x16x16x8xbf16>
    %67 = vector.extract_strided_slice %64 {offsets = [0, 0, 2, 0], sizes = [1, 16, 16, 8], strides = [1, 1, 1, 1]} : vector<1x18x18x8xbf16> to vector<1x16x16x8xbf16>
    %68 = vector.extract_strided_slice %64 {offsets = [0, 1, 0, 0], sizes = [1, 16, 16, 8], strides = [1, 1, 1, 1]} : vector<1x18x18x8xbf16> to vector<1x16x16x8xbf16>
    %69 = vector.extract_strided_slice %64 {offsets = [0, 1, 1, 0], sizes = [1, 16, 16, 8], strides = [1, 1, 1, 1]} : vector<1x18x18x8xbf16> to vector<1x16x16x8xbf16>
    %70 = vector.extract_strided_slice %64 {offsets = [0, 1, 2, 0], sizes = [1, 16, 16, 8], strides = [1, 1, 1, 1]} : vector<1x18x18x8xbf16> to vector<1x16x16x8xbf16>
    %71 = vector.extract_strided_slice %64 {offsets = [0, 2, 0, 0], sizes = [1, 16, 16, 8], strides = [1, 1, 1, 1]} : vector<1x18x18x8xbf16> to vector<1x16x16x8xbf16>
    %72 = vector.extract_strided_slice %64 {offsets = [0, 2, 1, 0], sizes = [1, 16, 16, 8], strides = [1, 1, 1, 1]} : vector<1x18x18x8xbf16> to vector<1x16x16x8xbf16>
    %73 = vector.extract_strided_slice %64 {offsets = [0, 2, 2, 0], sizes = [1, 16, 16, 8], strides = [1, 1, 1, 1]} : vector<1x18x18x8xbf16> to vector<1x16x16x8xbf16>
    %74 = tpu.concatenate %65, %66, %67, %68, %69, %70, %71, %72, %73 in 3 : vector<1x16x16x8xbf16>, vector<1x16x16x8xbf16>, vector<1x16x16x8xbf16>, vector<1x16x16x8xbf16>, vector<1x16x16x8xbf16>, vector<1x16x16x8xbf16>, vector<1x16x16x8xbf16>, vector<1x16x16x8xbf16>, vector<1x16x16x8xbf16> -> vector<1x16x16x72xbf16>
    %75 = vector.shape_cast %74 : vector<1x16x16x72xbf16> to vector<256x72xbf16>
    %cst_70 = arith.constant dense<0.000000e+00> : vector<256x16xf32>
    %76 = tpu.matmul %75, %4, %cst_70 {dimension_numbers = #tpu.dot_dimension_numbers<[1], [0], [0], [1], [0, 0, 1, 1], [], []>} : vector<256x72xbf16>, vector<72x16xbf16>, vector<256x16xf32> -> vector<256x16xf32>
    %77 = vector.broadcast %5 : vector<1x16xf32> to vector<256x16xf32>
    %78 = arith.addf %76, %77 : vector<256x16xf32>
    %cst_71 = arith.constant 0.000000e+00 : f32
    %79 = vector.broadcast %cst_71 : f32 to vector<256x16xf32>
    %80 = arith.maximumf %78, %79 : vector<256x16xf32>
    %81 = arith.truncf %80 : vector<256x16xf32> to vector<256x16xbf16>
    %82 = vector.shape_cast %81 : vector<256x16xbf16> to vector<1x16x16x16xbf16>
    %c0_72 = arith.constant 0 : index
    %c0_73 = arith.constant 0 : index
    %c0_74 = arith.constant 0 : index
    %c0_75 = arith.constant 0 : index
    %83 = vector.load %arg34[%c0_72, %c0_73, %c0_74, %c0_75] : memref<1x16x16x16xbf16, #tpu.memory_space<vmem>>, vector<1x16x16x16xbf16>
    tpu.vector_store %arg34[%c0_72, %c0_73, %c0_74, %c0_75], %82 {strides = array<i32>} : memref<1x16x16x16xbf16, #tpu.memory_space<vmem>>, vector<1x16x16x16xbf16>,
    %cst_76 = arith.constant 0.000000e+00 : bf16
    %84 = vector.broadcast %cst_76 : bf16 to vector<1x1x16x16xbf16>
    %85 = tpu.concatenate %84, %82, %84 in 1 : vector<1x1x16x16xbf16>, vector<1x16x16x16xbf16>, vector<1x1x16x16xbf16> -> vector<1x18x16x16xbf16>
    %cst_77 = arith.constant 0.000000e+00 : bf16
    %86 = vector.broadcast %cst_77 : bf16 to vector<1x18x1x16xbf16>
    %87 = tpu.concatenate %86, %85, %86 in 2 : vector<1x18x1x16xbf16>, vector<1x18x16x16xbf16>, vector<1x18x1x16xbf16> -> vector<1x18x18x16xbf16>
    %88 = vector.extract_strided_slice %87 {offsets = [0, 0, 0, 0], sizes = [1, 16, 16, 16], strides = [1, 1, 1, 1]} : vector<1x18x18x16xbf16> to vector<1x16x16x16xbf16>
    %89 = vector.extract_strided_slice %87 {offsets = [0, 0, 1, 0], sizes = [1, 16, 16, 16], strides = [1, 1, 1, 1]} : vector<1x18x18x16xbf16> to vector<1x16x16x16xbf16>
    %90 = arith.maximumf %88, %89 : vector<1x16x16x16xbf16>
    %91 = vector.extract_strided_slice %87 {offsets = [0, 0, 2, 0], sizes = [1, 16, 16, 16], strides = [1, 1, 1, 1]} : vector<1x18x18x16xbf16> to vector<1x16x16x16xbf16>
    %92 = arith.maximumf %90, %91 : vector<1x16x16x16xbf16>
    %93 = vector.extract_strided_slice %87 {offsets = [0, 1, 0, 0], sizes = [1, 16, 16, 16], strides = [1, 1, 1, 1]} : vector<1x18x18x16xbf16> to vector<1x16x16x16xbf16>
    %94 = arith.maximumf %92, %93 : vector<1x16x16x16xbf16>
    %95 = vector.extract_strided_slice %87 {offsets = [0, 1, 1, 0], sizes = [1, 16, 16, 16], strides = [1, 1, 1, 1]} : vector<1x18x18x16xbf16> to vector<1x16x16x16xbf16>
    %96 = arith.maximumf %94, %95 : vector<1x16x16x16xbf16>
    %97 = vector.extract_strided_slice %87 {offsets = [0, 1, 2, 0], sizes = [1, 16, 16, 16], strides = [1, 1, 1, 1]} : vector<1x18x18x16xbf16> to vector<1x16x16x16xbf16>
    %98 = arith.maximumf %96, %97 : vector<1x16x16x16xbf16>
    %99 = vector.extract_strided_slice %87 {offsets = [0, 2, 0, 0], sizes = [1, 16, 16, 16], strides = [1, 1, 1, 1]} : vector<1x18x18x16xbf16> to vector<1x16x16x16xbf16>
    %100 = arith.maximumf %98, %99 : vector<1x16x16x16xbf16>
    %101 = vector.extract_strided_slice %87 {offsets = [0, 2, 1, 0], sizes = [1, 16, 16, 16], strides = [1, 1, 1, 1]} : vector<1x18x18x16xbf16> to vector<1x16x16x16xbf16>
    %102 = arith.maximumf %100, %101 : vector<1x16x16x16xbf16>
    %103 = vector.extract_strided_slice %87 {offsets = [0, 2, 2, 0], sizes = [1, 16, 16, 16], strides = [1, 1, 1, 1]} : vector<1x18x18x16xbf16> to vector<1x16x16x16xbf16>
    %104 = arith.maximumf %102, %103 : vector<1x16x16x16xbf16>
    %105 = vector.shape_cast %104 : vector<1x16x16x16xbf16> to vector<256x16xbf16>
    %c0_78 = arith.constant 0 : index
    %c0_79 = arith.constant 0 : index
    %106 = vector.load %arg2[%c0_78, %c0_79] : memref<64x256xbf16, #tpu.memory_space<vmem>>, vector<64x256xbf16>
    %cst_80 = arith.constant dense<0.000000e+00> : vector<64x16xf32>
    %107 = tpu.matmul %106, %105, %cst_80 {dimension_numbers = #tpu.dot_dimension_numbers<[1], [0], [0], [1], [0, 0, 1, 1], [], []>} : vector<64x256xbf16>, vector<256x16xbf16>, vector<64x16xf32> -> vector<64x16xf32>
    %108 = arith.truncf %107 : vector<64x16xf32> to vector<64x16xbf16>
    %109 = vector.shape_cast %108 : vector<64x16xbf16> to vector<1x8x8x16xbf16>
    %cst_81 = arith.constant 0.000000e+00 : bf16
    %110 = vector.broadcast %cst_81 : bf16 to vector<1x1x8x16xbf16>
    %111 = tpu.concatenate %110, %109, %110 in 1 : vector<1x1x8x16xbf16>, vector<1x8x8x16xbf16>, vector<1x1x8x16xbf16> -> vector<1x10x8x16xbf16>
    %cst_82 = arith.constant 0.000000e+00 : bf16
    %112 = vector.broadcast %cst_82 : bf16 to vector<1x10x1x16xbf16>
    %113 = tpu.concatenate %112, %111, %112 in 2 : vector<1x10x1x16xbf16>, vector<1x10x8x16xbf16>, vector<1x10x1x16xbf16> -> vector<1x10x10x16xbf16>
    %114 = vector.extract_strided_slice %113 {offsets = [0, 0, 0, 0], sizes = [1, 8, 8, 16], strides = [1, 1, 1, 1]} : vector<1x10x10x16xbf16> to vector<1x8x8x16xbf16>
    %115 = vector.extract_strided_slice %113 {offsets = [0, 0, 1, 0], sizes = [1, 8, 8, 16], strides = [1, 1, 1, 1]} : vector<1x10x10x16xbf16> to vector<1x8x8x16xbf16>
    %116 = vector.extract_strided_slice %113 {offsets = [0, 0, 2, 0], sizes = [1, 8, 8, 16], strides = [1, 1, 1, 1]} : vector<1x10x10x16xbf16> to vector<1x8x8x16xbf16>
    %117 = vector.extract_strided_slice %113 {offsets = [0, 1, 0, 0], sizes = [1, 8, 8, 16], strides = [1, 1, 1, 1]} : vector<1x10x10x16xbf16> to vector<1x8x8x16xbf16>
    %118 = vector.extract_strided_slice %113 {offsets = [0, 1, 1, 0], sizes = [1, 8, 8, 16], strides = [1, 1, 1, 1]} : vector<1x10x10x16xbf16> to vector<1x8x8x16xbf16>
    %119 = vector.extract_strided_slice %113 {offsets = [0, 1, 2, 0], sizes = [1, 8, 8, 16], strides = [1, 1, 1, 1]} : vector<1x10x10x16xbf16> to vector<1x8x8x16xbf16>
    %120 = vector.extract_strided_slice %113 {offsets = [0, 2, 0, 0], sizes = [1, 8, 8, 16], strides = [1, 1, 1, 1]} : vector<1x10x10x16xbf16> to vector<1x8x8x16xbf16>
    %121 = vector.extract_strided_slice %113 {offsets = [0, 2, 1, 0], sizes = [1, 8, 8, 16], strides = [1, 1, 1, 1]} : vector<1x10x10x16xbf16> to vector<1x8x8x16xbf16>
    %122 = vector.extract_strided_slice %113 {offsets = [0, 2, 2, 0], sizes = [1, 8, 8, 16], strides = [1, 1, 1, 1]} : vector<1x10x10x16xbf16> to vector<1x8x8x16xbf16>
    %123 = tpu.concatenate %114, %115, %116, %117, %118, %119, %120, %121, %122 in 3 : vector<1x8x8x16xbf16>, vector<1x8x8x16xbf16>, vector<1x8x8x16xbf16>, vector<1x8x8x16xbf16>, vector<1x8x8x16xbf16>, vector<1x8x8x16xbf16>, vector<1x8x8x16xbf16>, vector<1x8x8x16xbf16>, vector<1x8x8x16xbf16> -> vector<1x8x8x144xbf16>
    %124 = vector.shape_cast %123 : vector<1x8x8x144xbf16> to vector<64x144xbf16>
    %cst_83 = arith.constant dense<0.000000e+00> : vector<64x8xf32>
    %125 = tpu.matmul %124, %6, %cst_83 {dimension_numbers = #tpu.dot_dimension_numbers<[1], [0], [0], [1], [0, 0, 1, 1], [], []>} : vector<64x144xbf16>, vector<144x8xbf16>, vector<64x8xf32> -> vector<64x8xf32>
    %126 = vector.broadcast %7 : vector<1x8xf32> to vector<64x8xf32>
    %127 = arith.addf %125, %126 : vector<64x8xf32>
    %cst_84 = arith.constant 0.000000e+00 : f32
    %128 = vector.broadcast %cst_84 : f32 to vector<64x8xf32>
    %129 = arith.maximumf %127, %128 : vector<64x8xf32>
    %130 = vector.shape_cast %109 : vector<1x8x8x16xbf16> to vector<64x16xbf16>
    %cst_85 = arith.constant dense<0.000000e+00> : vector<64x8xf32>
    %131 = tpu.matmul %130, %8, %cst_85 {dimension_numbers = #tpu.dot_dimension_numbers<[1], [0], [0], [1], [0, 0, 1, 1], [], []>} : vector<64x16xbf16>, vector<16x8xbf16>, vector<64x8xf32> -> vector<64x8xf32>
    %132 = vector.broadcast %9 : vector<1x8xf32> to vector<64x8xf32>
    %133 = arith.addf %131, %132 : vector<64x8xf32>
    %134 = arith.truncf %129 : vector<64x8xf32> to vector<64x8xbf16>
    %135 = vector.shape_cast %134 : vector<64x8xbf16> to vector<1x8x8x8xbf16>
    %cst_86 = arith.constant 0.000000e+00 : bf16
    %136 = vector.broadcast %cst_86 : bf16 to vector<1x1x8x8xbf16>
    %137 = tpu.concatenate %136, %135, %136 in 1 : vector<1x1x8x8xbf16>, vector<1x8x8x8xbf16>, vector<1x1x8x8xbf16> -> vector<1x10x8x8xbf16>
    %cst_87 = arith.constant 0.000000e+00 : bf16
    %138 = vector.broadcast %cst_87 : bf16 to vector<1x10x1x8xbf16>
    %139 = tpu.concatenate %138, %137, %138 in 2 : vector<1x10x1x8xbf16>, vector<1x10x8x8xbf16>, vector<1x10x1x8xbf16> -> vector<1x10x10x8xbf16>
    %140 = vector.extract_strided_slice %139 {offsets = [0, 0, 0, 0], sizes = [1, 8, 8, 8], strides = [1, 1, 1, 1]} : vector<1x10x10x8xbf16> to vector<1x8x8x8xbf16>
    %141 = vector.extract_strided_slice %139 {offsets = [0, 0, 1, 0], sizes = [1, 8, 8, 8], strides = [1, 1, 1, 1]} : vector<1x10x10x8xbf16> to vector<1x8x8x8xbf16>
    %142 = vector.extract_strided_slice %139 {offsets = [0, 0, 2, 0], sizes = [1, 8, 8, 8], strides = [1, 1, 1, 1]} : vector<1x10x10x8xbf16> to vector<1x8x8x8xbf16>
    %143 = vector.extract_strided_slice %139 {offsets = [0, 1, 0, 0], sizes = [1, 8, 8, 8], strides = [1, 1, 1, 1]} : vector<1x10x10x8xbf16> to vector<1x8x8x8xbf16>
    %144 = vector.extract_strided_slice %139 {offsets = [0, 1, 1, 0], sizes = [1, 8, 8, 8], strides = [1, 1, 1, 1]} : vector<1x10x10x8xbf16> to vector<1x8x8x8xbf16>
    %145 = vector.extract_strided_slice %139 {offsets = [0, 1, 2, 0], sizes = [1, 8, 8, 8], strides = [1, 1, 1, 1]} : vector<1x10x10x8xbf16> to vector<1x8x8x8xbf16>
    %146 = vector.extract_strided_slice %139 {offsets = [0, 2, 0, 0], sizes = [1, 8, 8, 8], strides = [1, 1, 1, 1]} : vector<1x10x10x8xbf16> to vector<1x8x8x8xbf16>
    %147 = vector.extract_strided_slice %139 {offsets = [0, 2, 1, 0], sizes = [1, 8, 8, 8], strides = [1, 1, 1, 1]} : vector<1x10x10x8xbf16> to vector<1x8x8x8xbf16>
    %148 = vector.extract_strided_slice %139 {offsets = [0, 2, 2, 0], sizes = [1, 8, 8, 8], strides = [1, 1, 1, 1]} : vector<1x10x10x8xbf16> to vector<1x8x8x8xbf16>
    %149 = tpu.concatenate %140, %141, %142, %143, %144, %145, %146, %147, %148 in 3 : vector<1x8x8x8xbf16>, vector<1x8x8x8xbf16>, vector<1x8x8x8xbf16>, vector<1x8x8x8xbf16>, vector<1x8x8x8xbf16>, vector<1x8x8x8xbf16>, vector<1x8x8x8xbf16>, vector<1x8x8x8xbf16>, vector<1x8x8x8xbf16> -> vector<1x8x8x72xbf16>
    %150 = vector.shape_cast %149 : vector<1x8x8x72xbf16> to vector<64x72xbf16>
    %cst_88 = arith.constant dense<0.000000e+00> : vector<64x8xf32>
    %151 = tpu.matmul %150, %10, %cst_88 {dimension_numbers = #tpu.dot_dimension_numbers<[1], [0], [0], [1], [0, 0, 1, 1], [], []>} : vector<64x72xbf16>, vector<72x8xbf16>, vector<64x8xf32> -> vector<64x8xf32>
    %152 = vector.broadcast %11 : vector<1x8xf32> to vector<64x8xf32>
    %153 = arith.addf %151, %152 : vector<64x8xf32>
    %154 = arith.addf %153, %133 : vector<64x8xf32>
    %cst_89 = arith.constant 0.000000e+00 : f32
    %155 = vector.broadcast %cst_89 : f32 to vector<64x8xf32>
    %156 = arith.maximumf %154, %155 : vector<64x8xf32>
    %157 = arith.truncf %156 : vector<64x8xf32> to vector<64x8xbf16>
    %158 = vector.shape_cast %157 : vector<64x8xbf16> to vector<1x8x8x8xbf16>
    %c0_90 = arith.constant 0 : index
    %c0_91 = arith.constant 0 : index
    %c0_92 = arith.constant 0 : index
    %c0_93 = arith.constant 0 : index
    %159 = vector.load %arg35[%c0_90, %c0_91, %c0_92, %c0_93] : memref<1x8x8x8xbf16, #tpu.memory_space<vmem>>, vector<1x8x8x8xbf16>
    tpu.vector_store %arg35[%c0_90, %c0_91, %c0_92, %c0_93], %158 {strides = array<i32>} : memref<1x8x8x8xbf16, #tpu.memory_space<vmem>>, vector<1x8x8x8xbf16>,
    %c0_94 = arith.constant 0 : index
    %c0_95 = arith.constant 0 : index
    %160 = vector.load %arg3[%c0_94, %c0_95] : memref<16x64xbf16, #tpu.memory_space<vmem>>, vector<16x64xbf16>
    %cst_96 = arith.constant 0.000000e+00 : bf16
    %161 = vector.broadcast %cst_96 : bf16 to vector<1x1x8x8xbf16>
    %162 = tpu.concatenate %161, %158, %161 in 1 : vector<1x1x8x8xbf16>, vector<1x8x8x8xbf16>, vector<1x1x8x8xbf16> -> vector<1x10x8x8xbf16>
    %cst_97 = arith.constant 0.000000e+00 : bf16
    %163 = vector.broadcast %cst_97 : bf16 to vector<1x10x1x8xbf16>
    %164 = tpu.concatenate %163, %162, %163 in 2 : vector<1x10x1x8xbf16>, vector<1x10x8x8xbf16>, vector<1x10x1x8xbf16> -> vector<1x10x10x8xbf16>
    %165 = vector.extract_strided_slice %164 {offsets = [0, 0, 0, 0], sizes = [1, 8, 8, 8], strides = [1, 1, 1, 1]} : vector<1x10x10x8xbf16> to vector<1x8x8x8xbf16>
    %166 = vector.extract_strided_slice %164 {offsets = [0, 0, 1, 0], sizes = [1, 8, 8, 8], strides = [1, 1, 1, 1]} : vector<1x10x10x8xbf16> to vector<1x8x8x8xbf16>
    %167 = vector.extract_strided_slice %164 {offsets = [0, 0, 2, 0], sizes = [1, 8, 8, 8], strides = [1, 1, 1, 1]} : vector<1x10x10x8xbf16> to vector<1x8x8x8xbf16>
    %168 = vector.extract_strided_slice %164 {offsets = [0, 1, 0, 0], sizes = [1, 8, 8, 8], strides = [1, 1, 1, 1]} : vector<1x10x10x8xbf16> to vector<1x8x8x8xbf16>
    %169 = vector.extract_strided_slice %164 {offsets = [0, 1, 1, 0], sizes = [1, 8, 8, 8], strides = [1, 1, 1, 1]} : vector<1x10x10x8xbf16> to vector<1x8x8x8xbf16>
    %170 = vector.extract_strided_slice %164 {offsets = [0, 1, 2, 0], sizes = [1, 8, 8, 8], strides = [1, 1, 1, 1]} : vector<1x10x10x8xbf16> to vector<1x8x8x8xbf16>
    %171 = vector.extract_strided_slice %164 {offsets = [0, 2, 0, 0], sizes = [1, 8, 8, 8], strides = [1, 1, 1, 1]} : vector<1x10x10x8xbf16> to vector<1x8x8x8xbf16>
    %172 = vector.extract_strided_slice %164 {offsets = [0, 2, 1, 0], sizes = [1, 8, 8, 8], strides = [1, 1, 1, 1]} : vector<1x10x10x8xbf16> to vector<1x8x8x8xbf16>
    %173 = vector.extract_strided_slice %164 {offsets = [0, 2, 2, 0], sizes = [1, 8, 8, 8], strides = [1, 1, 1, 1]} : vector<1x10x10x8xbf16> to vector<1x8x8x8xbf16>
    %174 = tpu.concatenate %165, %166, %167, %168, %169, %170, %171, %172, %173 in 3 : vector<1x8x8x8xbf16>, vector<1x8x8x8xbf16>, vector<1x8x8x8xbf16>, vector<1x8x8x8xbf16>, vector<1x8x8x8xbf16>, vector<1x8x8x8xbf16>, vector<1x8x8x8xbf16>, vector<1x8x8x8xbf16>, vector<1x8x8x8xbf16> -> vector<1x8x8x72xbf16>
    %175 = vector.shape_cast %174 : vector<1x8x8x72xbf16> to vector<64x72xbf16>
    %cst_98 = arith.constant dense<0.000000e+00> : vector<16x72xf32>
    %176 = tpu.matmul %160, %175, %cst_98 {dimension_numbers = #tpu.dot_dimension_numbers<[1], [0], [0], [1], [0, 0, 1, 1], [], []>} : vector<16x64xbf16>, vector<64x72xbf16>, vector<16x72xf32> -> vector<16x72xf32>
    %177 = arith.truncf %176 : vector<16x72xf32> to vector<16x72xbf16>
    %cst_99 = arith.constant dense<0.000000e+00> : vector<16x16xf32>
    %178 = tpu.matmul %177, %12, %cst_99 {dimension_numbers = #tpu.dot_dimension_numbers<[1], [0], [0], [1], [0, 0, 1, 1], [], []>} : vector<16x72xbf16>, vector<72x16xbf16>, vector<16x16xf32> -> vector<16x16xf32>
    %179 = vector.broadcast %13 : vector<1x16xf32> to vector<16x16xf32>
    %180 = arith.addf %178, %179 : vector<16x16xf32>
    %cst_100 = arith.constant 0.000000e+00 : f32
    %181 = vector.broadcast %cst_100 : f32 to vector<16x16xf32>
    %182 = arith.maximumf %180, %181 : vector<16x16xf32>
    %183 = vector.shape_cast %158 : vector<1x8x8x8xbf16> to vector<64x8xbf16>
    %cst_101 = arith.constant dense<0.000000e+00> : vector<16x8xf32>
    %184 = tpu.matmul %160, %183, %cst_101 {dimension_numbers = #tpu.dot_dimension_numbers<[1], [0], [0], [1], [0, 0, 1, 1], [], []>} : vector<16x64xbf16>, vector<64x8xbf16>, vector<16x8xf32> -> vector<16x8xf32>
    %185 = arith.truncf %184 : vector<16x8xf32> to vector<16x8xbf16>
    %cst_102 = arith.constant dense<0.000000e+00> : vector<16x16xf32>
    %186 = tpu.matmul %185, %14, %cst_102 {dimension_numbers = #tpu.dot_dimension_numbers<[1], [0], [0], [1], [0, 0, 1, 1], [], []>} : vector<16x8xbf16>, vector<8x16xbf16>, vector<16x16xf32> -> vector<16x16xf32>
    %187 = vector.broadcast %15 : vector<1x16xf32> to vector<16x16xf32>
    %188 = arith.addf %186, %187 : vector<16x16xf32>
    %189 = arith.truncf %182 : vector<16x16xf32> to vector<16x16xbf16>
    %190 = vector.shape_cast %189 : vector<16x16xbf16> to vector<1x4x4x16xbf16>
    %cst_103 = arith.constant 0.000000e+00 : bf16
    %191 = vector.broadcast %cst_103 : bf16 to vector<1x1x4x16xbf16>
    %192 = tpu.concatenate %191, %190, %191 in 1 : vector<1x1x4x16xbf16>, vector<1x4x4x16xbf16>, vector<1x1x4x16xbf16> -> vector<1x6x4x16xbf16>
    %cst_104 = arith.constant 0.000000e+00 : bf16
    %193 = vector.broadcast %cst_104 : bf16 to vector<1x6x1x16xbf16>
    %194 = tpu.concatenate %193, %192, %193 in 2 : vector<1x6x1x16xbf16>, vector<1x6x4x16xbf16>, vector<1x6x1x16xbf16> -> vector<1x6x6x16xbf16>
    %195 = vector.extract_strided_slice %194 {offsets = [0, 0, 0, 0], sizes = [1, 4, 4, 16], strides = [1, 1, 1, 1]} : vector<1x6x6x16xbf16> to vector<1x4x4x16xbf16>
    %196 = vector.extract_strided_slice %194 {offsets = [0, 0, 1, 0], sizes = [1, 4, 4, 16], strides = [1, 1, 1, 1]} : vector<1x6x6x16xbf16> to vector<1x4x4x16xbf16>
    %197 = vector.extract_strided_slice %194 {offsets = [0, 0, 2, 0], sizes = [1, 4, 4, 16], strides = [1, 1, 1, 1]} : vector<1x6x6x16xbf16> to vector<1x4x4x16xbf16>
    %198 = vector.extract_strided_slice %194 {offsets = [0, 1, 0, 0], sizes = [1, 4, 4, 16], strides = [1, 1, 1, 1]} : vector<1x6x6x16xbf16> to vector<1x4x4x16xbf16>
    %199 = vector.extract_strided_slice %194 {offsets = [0, 1, 1, 0], sizes = [1, 4, 4, 16], strides = [1, 1, 1, 1]} : vector<1x6x6x16xbf16> to vector<1x4x4x16xbf16>
    %200 = vector.extract_strided_slice %194 {offsets = [0, 1, 2, 0], sizes = [1, 4, 4, 16], strides = [1, 1, 1, 1]} : vector<1x6x6x16xbf16> to vector<1x4x4x16xbf16>
    %201 = vector.extract_strided_slice %194 {offsets = [0, 2, 0, 0], sizes = [1, 4, 4, 16], strides = [1, 1, 1, 1]} : vector<1x6x6x16xbf16> to vector<1x4x4x16xbf16>
    %202 = vector.extract_strided_slice %194 {offsets = [0, 2, 1, 0], sizes = [1, 4, 4, 16], strides = [1, 1, 1, 1]} : vector<1x6x6x16xbf16> to vector<1x4x4x16xbf16>
    %203 = vector.extract_strided_slice %194 {offsets = [0, 2, 2, 0], sizes = [1, 4, 4, 16], strides = [1, 1, 1, 1]} : vector<1x6x6x16xbf16> to vector<1x4x4x16xbf16>
    %204 = tpu.concatenate %195, %196, %197, %198, %199, %200, %201, %202, %203 in 3 : vector<1x4x4x16xbf16>, vector<1x4x4x16xbf16>, vector<1x4x4x16xbf16>, vector<1x4x4x16xbf16>, vector<1x4x4x16xbf16>, vector<1x4x4x16xbf16>, vector<1x4x4x16xbf16>, vector<1x4x4x16xbf16>, vector<1x4x4x16xbf16> -> vector<1x4x4x144xbf16>
    %205 = vector.shape_cast %204 : vector<1x4x4x144xbf16> to vector<16x144xbf16>
    %cst_105 = arith.constant dense<0.000000e+00> : vector<16x16xf32>
    %206 = tpu.matmul %205, %16, %cst_105 {dimension_numbers = #tpu.dot_dimension_numbers<[1], [0], [0], [1], [0, 0, 1, 1], [], []>} : vector<16x144xbf16>, vector<144x16xbf16>, vector<16x16xf32> -> vector<16x16xf32>
    %207 = vector.broadcast %17 : vector<1x16xf32> to vector<16x16xf32>
    %208 = arith.addf %206, %207 : vector<16x16xf32>
    %209 = arith.addf %208, %188 : vector<16x16xf32>
    %cst_106 = arith.constant 0.000000e+00 : f32
    %210 = vector.broadcast %cst_106 : f32 to vector<16x16xf32>
    %211 = arith.maximumf %209, %210 : vector<16x16xf32>
    %212 = arith.truncf %211 : vector<16x16xf32> to vector<16x16xbf16>
    %213 = vector.shape_cast %212 : vector<16x16xbf16> to vector<1x4x4x16xbf16>
    %c0_107 = arith.constant 0 : index
    %c0_108 = arith.constant 0 : index
    %c0_109 = arith.constant 0 : index
    %c0_110 = arith.constant 0 : index
    %214 = vector.load %arg36[%c0_107, %c0_108, %c0_109, %c0_110] : memref<1x4x4x16xbf16, #tpu.memory_space<vmem>>, vector<1x4x4x16xbf16>
    tpu.vector_store %arg36[%c0_107, %c0_108, %c0_109, %c0_110], %213 {strides = array<i32>} : memref<1x4x4x16xbf16, #tpu.memory_space<vmem>>, vector<1x4x4x16xbf16>,
    %cst_111 = arith.constant 0.000000e+00 : bf16
    %215 = vector.broadcast %cst_111 : bf16 to vector<1x1x4x16xbf16>
    %216 = tpu.concatenate %215, %213, %215 in 1 : vector<1x1x4x16xbf16>, vector<1x4x4x16xbf16>, vector<1x1x4x16xbf16> -> vector<1x6x4x16xbf16>
    %cst_112 = arith.constant 0.000000e+00 : bf16
    %217 = vector.broadcast %cst_112 : bf16 to vector<1x6x1x16xbf16>
    %218 = tpu.concatenate %217, %216, %217 in 2 : vector<1x6x1x16xbf16>, vector<1x6x4x16xbf16>, vector<1x6x1x16xbf16> -> vector<1x6x6x16xbf16>
    %219 = vector.extract_strided_slice %218 {offsets = [0, 0, 0, 0], sizes = [1, 4, 4, 16], strides = [1, 1, 1, 1]} : vector<1x6x6x16xbf16> to vector<1x4x4x16xbf16>
    %220 = vector.extract_strided_slice %218 {offsets = [0, 0, 1, 0], sizes = [1, 4, 4, 16], strides = [1, 1, 1, 1]} : vector<1x6x6x16xbf16> to vector<1x4x4x16xbf16>
    %221 = vector.extract_strided_slice %218 {offsets = [0, 0, 2, 0], sizes = [1, 4, 4, 16], strides = [1, 1, 1, 1]} : vector<1x6x6x16xbf16> to vector<1x4x4x16xbf16>
    %222 = vector.extract_strided_slice %218 {offsets = [0, 1, 0, 0], sizes = [1, 4, 4, 16], strides = [1, 1, 1, 1]} : vector<1x6x6x16xbf16> to vector<1x4x4x16xbf16>
    %223 = vector.extract_strided_slice %218 {offsets = [0, 1, 1, 0], sizes = [1, 4, 4, 16], strides = [1, 1, 1, 1]} : vector<1x6x6x16xbf16> to vector<1x4x4x16xbf16>
    %224 = vector.extract_strided_slice %218 {offsets = [0, 1, 2, 0], sizes = [1, 4, 4, 16], strides = [1, 1, 1, 1]} : vector<1x6x6x16xbf16> to vector<1x4x4x16xbf16>
    %225 = vector.extract_strided_slice %218 {offsets = [0, 2, 0, 0], sizes = [1, 4, 4, 16], strides = [1, 1, 1, 1]} : vector<1x6x6x16xbf16> to vector<1x4x4x16xbf16>
    %226 = vector.extract_strided_slice %218 {offsets = [0, 2, 1, 0], sizes = [1, 4, 4, 16], strides = [1, 1, 1, 1]} : vector<1x6x6x16xbf16> to vector<1x4x4x16xbf16>
    %227 = vector.extract_strided_slice %218 {offsets = [0, 2, 2, 0], sizes = [1, 4, 4, 16], strides = [1, 1, 1, 1]} : vector<1x6x6x16xbf16> to vector<1x4x4x16xbf16>
    %228 = tpu.concatenate %219, %220, %221, %222, %223, %224, %225, %226, %227 in 3 : vector<1x4x4x16xbf16>, vector<1x4x4x16xbf16>, vector<1x4x4x16xbf16>, vector<1x4x4x16xbf16>, vector<1x4x4x16xbf16>, vector<1x4x4x16xbf16>, vector<1x4x4x16xbf16>, vector<1x4x4x16xbf16>, vector<1x4x4x16xbf16> -> vector<1x4x4x144xbf16>
    %229 = vector.shape_cast %228 : vector<1x4x4x144xbf16> to vector<16x144xbf16>
    %cst_113 = arith.constant dense<0.000000e+00> : vector<16x32xf32>
    %230 = tpu.matmul %229, %18, %cst_113 {dimension_numbers = #tpu.dot_dimension_numbers<[1], [0], [0], [1], [0, 0, 1, 1], [], []>} : vector<16x144xbf16>, vector<144x32xbf16>, vector<16x32xf32> -> vector<16x32xf32>
    %231 = vector.broadcast %19 : vector<1x32xf32> to vector<16x32xf32>
    %232 = arith.addf %230, %231 : vector<16x32xf32>
    %cst_114 = arith.constant 0.000000e+00 : f32
    %233 = vector.broadcast %cst_114 : f32 to vector<16x32xf32>
    %234 = arith.maximumf %232, %233 : vector<16x32xf32>
    %235 = vector.shape_cast %213 : vector<1x4x4x16xbf16> to vector<16x16xbf16>
    %cst_115 = arith.constant dense<0.000000e+00> : vector<16x32xf32>
    %236 = tpu.matmul %235, %20, %cst_115 {dimension_numbers = #tpu.dot_dimension_numbers<[1], [0], [0], [1], [0, 0, 1, 1], [], []>} : vector<16x16xbf16>, vector<16x32xbf16>, vector<16x32xf32> -> vector<16x32xf32>
    %237 = vector.broadcast %21 : vector<1x32xf32> to vector<16x32xf32>
    %238 = arith.addf %236, %237 : vector<16x32xf32>
    %239 = arith.truncf %234 : vector<16x32xf32> to vector<16x32xbf16>
    %240 = vector.shape_cast %239 : vector<16x32xbf16> to vector<1x4x4x32xbf16>
    %cst_116 = arith.constant 0.000000e+00 : bf16
    %241 = vector.broadcast %cst_116 : bf16 to vector<1x2x4x32xbf16>
    %242 = tpu.concatenate %241, %240, %241 in 1 : vector<1x2x4x32xbf16>, vector<1x4x4x32xbf16>, vector<1x2x4x32xbf16> -> vector<1x8x4x32xbf16>
    %cst_117 = arith.constant 0.000000e+00 : bf16
    %243 = vector.broadcast %cst_117 : bf16 to vector<1x8x2x32xbf16>
    %244 = tpu.concatenate %243, %242, %243 in 2 : vector<1x8x2x32xbf16>, vector<1x8x4x32xbf16>, vector<1x8x2x32xbf16> -> vector<1x8x8x32xbf16>
    %245 = vector.extract_strided_slice %244 {offsets = [0, 0, 0, 0], sizes = [1, 4, 4, 32], strides = [1, 1, 1, 1]} : vector<1x8x8x32xbf16> to vector<1x4x4x32xbf16>
    %246 = vector.extract_strided_slice %244 {offsets = [0, 0, 2, 0], sizes = [1, 4, 4, 32], strides = [1, 1, 1, 1]} : vector<1x8x8x32xbf16> to vector<1x4x4x32xbf16>
    %247 = vector.extract_strided_slice %244 {offsets = [0, 0, 4, 0], sizes = [1, 4, 4, 32], strides = [1, 1, 1, 1]} : vector<1x8x8x32xbf16> to vector<1x4x4x32xbf16>
    %248 = vector.extract_strided_slice %244 {offsets = [0, 2, 0, 0], sizes = [1, 4, 4, 32], strides = [1, 1, 1, 1]} : vector<1x8x8x32xbf16> to vector<1x4x4x32xbf16>
    %249 = vector.extract_strided_slice %244 {offsets = [0, 2, 2, 0], sizes = [1, 4, 4, 32], strides = [1, 1, 1, 1]} : vector<1x8x8x32xbf16> to vector<1x4x4x32xbf16>
    %250 = vector.extract_strided_slice %244 {offsets = [0, 2, 4, 0], sizes = [1, 4, 4, 32], strides = [1, 1, 1, 1]} : vector<1x8x8x32xbf16> to vector<1x4x4x32xbf16>
    %251 = vector.extract_strided_slice %244 {offsets = [0, 4, 0, 0], sizes = [1, 4, 4, 32], strides = [1, 1, 1, 1]} : vector<1x8x8x32xbf16> to vector<1x4x4x32xbf16>
    %252 = vector.extract_strided_slice %244 {offsets = [0, 4, 2, 0], sizes = [1, 4, 4, 32], strides = [1, 1, 1, 1]} : vector<1x8x8x32xbf16> to vector<1x4x4x32xbf16>
    %253 = vector.extract_strided_slice %244 {offsets = [0, 4, 4, 0], sizes = [1, 4, 4, 32], strides = [1, 1, 1, 1]} : vector<1x8x8x32xbf16> to vector<1x4x4x32xbf16>
    %254 = tpu.concatenate %245, %246, %247, %248, %249, %250, %251, %252, %253 in 3 : vector<1x4x4x32xbf16>, vector<1x4x4x32xbf16>, vector<1x4x4x32xbf16>, vector<1x4x4x32xbf16>, vector<1x4x4x32xbf16>, vector<1x4x4x32xbf16>, vector<1x4x4x32xbf16>, vector<1x4x4x32xbf16>, vector<1x4x4x32xbf16> -> vector<1x4x4x288xbf16>
    %255 = vector.shape_cast %254 : vector<1x4x4x288xbf16> to vector<16x288xbf16>
    %cst_118 = arith.constant dense<0.000000e+00> : vector<16x32xf32>
    %256 = tpu.matmul %255, %22, %cst_118 {dimension_numbers = #tpu.dot_dimension_numbers<[1], [0], [0], [1], [0, 0, 1, 1], [], []>} : vector<16x288xbf16>, vector<288x32xbf16>, vector<16x32xf32> -> vector<16x32xf32>
    %257 = vector.broadcast %23 : vector<1x32xf32> to vector<16x32xf32>
    %258 = arith.addf %256, %257 : vector<16x32xf32>
    %259 = arith.addf %258, %238 : vector<16x32xf32>
    %cst_119 = arith.constant 0.000000e+00 : f32
    %260 = vector.broadcast %cst_119 : f32 to vector<16x32xf32>
    %261 = arith.maximumf %259, %260 : vector<16x32xf32>
    %262 = arith.truncf %261 : vector<16x32xf32> to vector<16x32xbf16>
    %263 = vector.shape_cast %262 : vector<16x32xbf16> to vector<1x4x4x32xbf16>
    %c0_120 = arith.constant 0 : index
    %c0_121 = arith.constant 0 : index
    %c0_122 = arith.constant 0 : index
    %c0_123 = arith.constant 0 : index
    %264 = vector.load %arg37[%c0_120, %c0_121, %c0_122, %c0_123] : memref<1x4x4x32xbf16, #tpu.memory_space<vmem>>, vector<1x4x4x32xbf16>
    tpu.vector_store %arg37[%c0_120, %c0_121, %c0_122, %c0_123], %263 {strides = array<i32>} : memref<1x4x4x32xbf16, #tpu.memory_space<vmem>>, vector<1x4x4x32xbf16>,
    %cst_124 = arith.constant 0.000000e+00 : bf16
    %265 = vector.broadcast %cst_124 : bf16 to vector<1x2x4x32xbf16>
    %266 = tpu.concatenate %265, %263, %265 in 1 : vector<1x2x4x32xbf16>, vector<1x4x4x32xbf16>, vector<1x2x4x32xbf16> -> vector<1x8x4x32xbf16>
    %cst_125 = arith.constant 0.000000e+00 : bf16
    %267 = vector.broadcast %cst_125 : bf16 to vector<1x8x2x32xbf16>
    %268 = tpu.concatenate %267, %266, %267 in 2 : vector<1x8x2x32xbf16>, vector<1x8x4x32xbf16>, vector<1x8x2x32xbf16> -> vector<1x8x8x32xbf16>
    %269 = vector.extract_strided_slice %268 {offsets = [0, 0, 0, 0], sizes = [1, 4, 4, 32], strides = [1, 1, 1, 1]} : vector<1x8x8x32xbf16> to vector<1x4x4x32xbf16>
    %270 = vector.extract_strided_slice %268 {offsets = [0, 0, 2, 0], sizes = [1, 4, 4, 32], strides = [1, 1, 1, 1]} : vector<1x8x8x32xbf16> to vector<1x4x4x32xbf16>
    %271 = vector.extract_strided_slice %268 {offsets = [0, 0, 4, 0], sizes = [1, 4, 4, 32], strides = [1, 1, 1, 1]} : vector<1x8x8x32xbf16> to vector<1x4x4x32xbf16>
    %272 = vector.extract_strided_slice %268 {offsets = [0, 2, 0, 0], sizes = [1, 4, 4, 32], strides = [1, 1, 1, 1]} : vector<1x8x8x32xbf16> to vector<1x4x4x32xbf16>
    %273 = vector.extract_strided_slice %268 {offsets = [0, 2, 2, 0], sizes = [1, 4, 4, 32], strides = [1, 1, 1, 1]} : vector<1x8x8x32xbf16> to vector<1x4x4x32xbf16>
    %274 = vector.extract_strided_slice %268 {offsets = [0, 2, 4, 0], sizes = [1, 4, 4, 32], strides = [1, 1, 1, 1]} : vector<1x8x8x32xbf16> to vector<1x4x4x32xbf16>
    %275 = vector.extract_strided_slice %268 {offsets = [0, 4, 0, 0], sizes = [1, 4, 4, 32], strides = [1, 1, 1, 1]} : vector<1x8x8x32xbf16> to vector<1x4x4x32xbf16>
    %276 = vector.extract_strided_slice %268 {offsets = [0, 4, 2, 0], sizes = [1, 4, 4, 32], strides = [1, 1, 1, 1]} : vector<1x8x8x32xbf16> to vector<1x4x4x32xbf16>
    %277 = vector.extract_strided_slice %268 {offsets = [0, 4, 4, 0], sizes = [1, 4, 4, 32], strides = [1, 1, 1, 1]} : vector<1x8x8x32xbf16> to vector<1x4x4x32xbf16>
    %278 = tpu.concatenate %269, %270, %271, %272, %273, %274, %275, %276, %277 in 3 : vector<1x4x4x32xbf16>, vector<1x4x4x32xbf16>, vector<1x4x4x32xbf16>, vector<1x4x4x32xbf16>, vector<1x4x4x32xbf16>, vector<1x4x4x32xbf16>, vector<1x4x4x32xbf16>, vector<1x4x4x32xbf16>, vector<1x4x4x32xbf16> -> vector<1x4x4x288xbf16>
    %279 = vector.shape_cast %278 : vector<1x4x4x288xbf16> to vector<16x288xbf16>
    %cst_126 = arith.constant dense<0.000000e+00> : vector<16x64xf32>
    %280 = tpu.matmul %279, %24, %cst_126 {dimension_numbers = #tpu.dot_dimension_numbers<[1], [0], [0], [1], [0, 0, 1, 1], [], []>} : vector<16x288xbf16>, vector<288x64xbf16>, vector<16x64xf32> -> vector<16x64xf32>
    %281 = vector.broadcast %25 : vector<1x64xf32> to vector<16x64xf32>
    %282 = arith.addf %280, %281 : vector<16x64xf32>
    %cst_127 = arith.constant 0.000000e+00 : f32
    %283 = vector.broadcast %cst_127 : f32 to vector<16x64xf32>
    %284 = arith.maximumf %282, %283 : vector<16x64xf32>
    %285 = vector.shape_cast %263 : vector<1x4x4x32xbf16> to vector<16x32xbf16>
    %cst_128 = arith.constant dense<0.000000e+00> : vector<16x64xf32>
    %286 = tpu.matmul %285, %26, %cst_128 {dimension_numbers = #tpu.dot_dimension_numbers<[1], [0], [0], [1], [0, 0, 1, 1], [], []>} : vector<16x32xbf16>, vector<32x64xbf16>, vector<16x64xf32> -> vector<16x64xf32>
    %287 = vector.broadcast %27 : vector<1x64xf32> to vector<16x64xf32>
    %288 = arith.addf %286, %287 : vector<16x64xf32>
    %289 = arith.truncf %284 : vector<16x64xf32> to vector<16x64xbf16>
    %290 = vector.shape_cast %289 : vector<16x64xbf16> to vector<1x4x4x64xbf16>
    %cst_129 = arith.constant 0.000000e+00 : bf16
    %291 = vector.broadcast %cst_129 : bf16 to vector<1x4x4x64xbf16>
    %292 = tpu.concatenate %291, %290, %291 in 1 : vector<1x4x4x64xbf16>, vector<1x4x4x64xbf16>, vector<1x4x4x64xbf16> -> vector<1x12x4x64xbf16>
    %cst_130 = arith.constant 0.000000e+00 : bf16
    %293 = vector.broadcast %cst_130 : bf16 to vector<1x12x4x64xbf16>
    %294 = tpu.concatenate %293, %292, %293 in 2 : vector<1x12x4x64xbf16>, vector<1x12x4x64xbf16>, vector<1x12x4x64xbf16> -> vector<1x12x12x64xbf16>
    %295 = vector.extract_strided_slice %294 {offsets = [0, 0, 0, 0], sizes = [1, 4, 4, 64], strides = [1, 1, 1, 1]} : vector<1x12x12x64xbf16> to vector<1x4x4x64xbf16>
    %296 = vector.extract_strided_slice %294 {offsets = [0, 0, 4, 0], sizes = [1, 4, 4, 64], strides = [1, 1, 1, 1]} : vector<1x12x12x64xbf16> to vector<1x4x4x64xbf16>
    %297 = vector.extract_strided_slice %294 {offsets = [0, 0, 8, 0], sizes = [1, 4, 4, 64], strides = [1, 1, 1, 1]} : vector<1x12x12x64xbf16> to vector<1x4x4x64xbf16>
    %298 = vector.extract_strided_slice %294 {offsets = [0, 4, 0, 0], sizes = [1, 4, 4, 64], strides = [1, 1, 1, 1]} : vector<1x12x12x64xbf16> to vector<1x4x4x64xbf16>
    %299 = vector.extract_strided_slice %294 {offsets = [0, 4, 4, 0], sizes = [1, 4, 4, 64], strides = [1, 1, 1, 1]} : vector<1x12x12x64xbf16> to vector<1x4x4x64xbf16>
    %300 = vector.extract_strided_slice %294 {offsets = [0, 4, 8, 0], sizes = [1, 4, 4, 64], strides = [1, 1, 1, 1]} : vector<1x12x12x64xbf16> to vector<1x4x4x64xbf16>
    %301 = vector.extract_strided_slice %294 {offsets = [0, 8, 0, 0], sizes = [1, 4, 4, 64], strides = [1, 1, 1, 1]} : vector<1x12x12x64xbf16> to vector<1x4x4x64xbf16>
    %302 = vector.extract_strided_slice %294 {offsets = [0, 8, 4, 0], sizes = [1, 4, 4, 64], strides = [1, 1, 1, 1]} : vector<1x12x12x64xbf16> to vector<1x4x4x64xbf16>
    %303 = vector.extract_strided_slice %294 {offsets = [0, 8, 8, 0], sizes = [1, 4, 4, 64], strides = [1, 1, 1, 1]} : vector<1x12x12x64xbf16> to vector<1x4x4x64xbf16>
    %304 = tpu.concatenate %295, %296, %297, %298, %299, %300, %301, %302, %303 in 3 : vector<1x4x4x64xbf16>, vector<1x4x4x64xbf16>, vector<1x4x4x64xbf16>, vector<1x4x4x64xbf16>, vector<1x4x4x64xbf16>, vector<1x4x4x64xbf16>, vector<1x4x4x64xbf16>, vector<1x4x4x64xbf16>, vector<1x4x4x64xbf16> -> vector<1x4x4x576xbf16>
    %305 = vector.shape_cast %304 : vector<1x4x4x576xbf16> to vector<16x576xbf16>
    %cst_131 = arith.constant dense<0.000000e+00> : vector<16x64xf32>
    %306 = tpu.matmul %305, %28, %cst_131 {dimension_numbers = #tpu.dot_dimension_numbers<[1], [0], [0], [1], [0, 0, 1, 1], [], []>} : vector<16x576xbf16>, vector<576x64xbf16>, vector<16x64xf32> -> vector<16x64xf32>
    %307 = vector.broadcast %29 : vector<1x64xf32> to vector<16x64xf32>
    %308 = arith.addf %306, %307 : vector<16x64xf32>
    %309 = arith.addf %308, %288 : vector<16x64xf32>
    %cst_132 = arith.constant 0.000000e+00 : f32
    %310 = vector.broadcast %cst_132 : f32 to vector<16x64xf32>
    %311 = arith.maximumf %309, %310 : vector<16x64xf32>
    %312 = arith.truncf %311 : vector<16x64xf32> to vector<16x64xbf16>
    %313 = vector.shape_cast %312 : vector<16x64xbf16> to vector<1x4x4x64xbf16>
    %c0_133 = arith.constant 0 : index
    %c0_134 = arith.constant 0 : index
    %c0_135 = arith.constant 0 : index
    %c0_136 = arith.constant 0 : index
    %314 = vector.load %arg38[%c0_133, %c0_134, %c0_135, %c0_136] : memref<1x4x4x64xbf16, #tpu.memory_space<vmem>>, vector<1x4x4x64xbf16>
    tpu.vector_store %arg38[%c0_133, %c0_134, %c0_135, %c0_136], %313 {strides = array<i32>} : memref<1x4x4x64xbf16, #tpu.memory_space<vmem>>, vector<1x4x4x64xbf16>,
    return
  }
  func.func @transform_0(%arg0: i32) -> (i32, i32, i32, i32) {
    %c0_i32 = arith.constant 0 : i32
    %c0_i32_0 = arith.constant 0 : i32
    %c0_i32_1 = arith.constant 0 : i32
    %c0_i32_2 = arith.constant 0 : i32
    return %arg0, %c0_i32, %c0_i32_0, %c0_i32_1 : i32, i32, i32, i32
  }
  func.func @transform_1(%arg0: i32) -> (i32, i32) {
    %c0_i32 = arith.constant 0 : i32
    %c0_i32_0 = arith.constant 0 : i32
    %c0_i32_1 = arith.constant 0 : i32
    return %c0_i32, %c0_i32_0 : i32, i32
  }
  func.func @transform_2(%arg0: i32) -> (i32, i32) {
    %c0_i32 = arith.constant 0 : i32
    %c0_i32_0 = arith.constant 0 : i32
    %c0_i32_1 = arith.constant 0 : i32
    return %c0_i32, %c0_i32_0 : i32, i32
  }
  func.func @transform_3(%arg0: i32) -> (i32, i32) {
    %c0_i32 = arith.constant 0 : i32
    %c0_i32_0 = arith.constant 0 : i32
    %c0_i32_1 = arith.constant 0 : i32
    return %c0_i32, %c0_i32_0 : i32, i32
  }
  func.func @transform_4(%arg0: i32) -> (i32, i32) {
    %c0_i32 = arith.constant 0 : i32
    %c0_i32_0 = arith.constant 0 : i32
    %c0_i32_1 = arith.constant 0 : i32
    return %c0_i32, %c0_i32_0 : i32, i32
  }
  func.func @transform_5(%arg0: i32) -> (i32, i32) {
    %c0_i32 = arith.constant 0 : i32
    %c0_i32_0 = arith.constant 0 : i32
    %c0_i32_1 = arith.constant 0 : i32
    return %c0_i32, %c0_i32_0 : i32, i32
  }
  func.func @transform_6(%arg0: i32) -> (i32, i32) {
    %c0_i32 = arith.constant 0 : i32
    %c0_i32_0 = arith.constant 0 : i32
    %c0_i32_1 = arith.constant 0 : i32
    return %c0_i32, %c0_i32_0 : i32, i32
  }
  func.func @transform_7(%arg0: i32) -> (i32, i32) {
    %c0_i32 = arith.constant 0 : i32
    %c0_i32_0 = arith.constant 0 : i32
    %c0_i32_1 = arith.constant 0 : i32
    return %c0_i32, %c0_i32_0 : i32, i32
  }
  func.func @transform_8(%arg0: i32) -> (i32, i32) {
    %c0_i32 = arith.constant 0 : i32
    %c0_i32_0 = arith.constant 0 : i32
    %c0_i32_1 = arith.constant 0 : i32
    return %c0_i32, %c0_i32_0 : i32, i32
  }
  func.func @transform_9(%arg0: i32) -> (i32, i32) {
    %c0_i32 = arith.constant 0 : i32
    %c0_i32_0 = arith.constant 0 : i32
    %c0_i32_1 = arith.constant 0 : i32
    return %c0_i32, %c0_i32_0 : i32, i32
  }
  func.func @transform_10(%arg0: i32) -> (i32, i32) {
    %c0_i32 = arith.constant 0 : i32
    %c0_i32_0 = arith.constant 0 : i32
    %c0_i32_1 = arith.constant 0 : i32
    return %c0_i32, %c0_i32_0 : i32, i32
  }
  func.func @transform_11(%arg0: i32) -> (i32, i32) {
    %c0_i32 = arith.constant 0 : i32
    %c0_i32_0 = arith.constant 0 : i32
    %c0_i32_1 = arith.constant 0 : i32
    return %c0_i32, %c0_i32_0 : i32, i32
  }
  func.func @transform_12(%arg0: i32) -> (i32, i32) {
    %c0_i32 = arith.constant 0 : i32
    %c0_i32_0 = arith.constant 0 : i32
    %c0_i32_1 = arith.constant 0 : i32
    return %c0_i32, %c0_i32_0 : i32, i32
  }
  func.func @transform_13(%arg0: i32) -> (i32, i32) {
    %c0_i32 = arith.constant 0 : i32
    %c0_i32_0 = arith.constant 0 : i32
    %c0_i32_1 = arith.constant 0 : i32
    return %c0_i32, %c0_i32_0 : i32, i32
  }
  func.func @transform_14(%arg0: i32) -> (i32, i32) {
    %c0_i32 = arith.constant 0 : i32
    %c0_i32_0 = arith.constant 0 : i32
    %c0_i32_1 = arith.constant 0 : i32
    return %c0_i32, %c0_i32_0 : i32, i32
  }
  func.func @transform_15(%arg0: i32) -> (i32, i32) {
    %c0_i32 = arith.constant 0 : i32
    %c0_i32_0 = arith.constant 0 : i32
    %c0_i32_1 = arith.constant 0 : i32
    return %c0_i32, %c0_i32_0 : i32, i32
  }
  func.func @transform_16(%arg0: i32) -> (i32, i32) {
    %c0_i32 = arith.constant 0 : i32
    %c0_i32_0 = arith.constant 0 : i32
    %c0_i32_1 = arith.constant 0 : i32
    return %c0_i32, %c0_i32_0 : i32, i32
  }
  func.func @transform_17(%arg0: i32) -> (i32, i32) {
    %c0_i32 = arith.constant 0 : i32
    %c0_i32_0 = arith.constant 0 : i32
    %c0_i32_1 = arith.constant 0 : i32
    return %c0_i32, %c0_i32_0 : i32, i32
  }
  func.func @transform_18(%arg0: i32) -> (i32, i32) {
    %c0_i32 = arith.constant 0 : i32
    %c0_i32_0 = arith.constant 0 : i32
    %c0_i32_1 = arith.constant 0 : i32
    return %c0_i32, %c0_i32_0 : i32, i32
  }
  func.func @transform_19(%arg0: i32) -> (i32, i32) {
    %c0_i32 = arith.constant 0 : i32
    %c0_i32_0 = arith.constant 0 : i32
    %c0_i32_1 = arith.constant 0 : i32
    return %c0_i32, %c0_i32_0 : i32, i32
  }
  func.func @transform_20(%arg0: i32) -> (i32, i32) {
    %c0_i32 = arith.constant 0 : i32
    %c0_i32_0 = arith.constant 0 : i32
    %c0_i32_1 = arith.constant 0 : i32
    return %c0_i32, %c0_i32_0 : i32, i32
  }
  func.func @transform_21(%arg0: i32) -> (i32, i32) {
    %c0_i32 = arith.constant 0 : i32
    %c0_i32_0 = arith.constant 0 : i32
    %c0_i32_1 = arith.constant 0 : i32
    return %c0_i32, %c0_i32_0 : i32, i32
  }
  func.func @transform_22(%arg0: i32) -> (i32, i32) {
    %c0_i32 = arith.constant 0 : i32
    %c0_i32_0 = arith.constant 0 : i32
    %c0_i32_1 = arith.constant 0 : i32
    return %c0_i32, %c0_i32_0 : i32, i32
  }
  func.func @transform_23(%arg0: i32) -> (i32, i32) {
    %c0_i32 = arith.constant 0 : i32
    %c0_i32_0 = arith.constant 0 : i32
    %c0_i32_1 = arith.constant 0 : i32
    return %c0_i32, %c0_i32_0 : i32, i32
  }
  func.func @transform_24(%arg0: i32) -> (i32, i32) {
    %c0_i32 = arith.constant 0 : i32
    %c0_i32_0 = arith.constant 0 : i32
    %c0_i32_1 = arith.constant 0 : i32
    return %c0_i32, %c0_i32_0 : i32, i32
  }
  func.func @transform_25(%arg0: i32) -> (i32, i32) {
    %c0_i32 = arith.constant 0 : i32
    %c0_i32_0 = arith.constant 0 : i32
    %c0_i32_1 = arith.constant 0 : i32
    return %c0_i32, %c0_i32_0 : i32, i32
  }
  func.func @transform_26(%arg0: i32) -> (i32, i32) {
    %c0_i32 = arith.constant 0 : i32
    %c0_i32_0 = arith.constant 0 : i32
    %c0_i32_1 = arith.constant 0 : i32
    return %c0_i32, %c0_i32_0 : i32, i32
  }
  func.func @transform_27(%arg0: i32) -> (i32, i32) {
    %c0_i32 = arith.constant 0 : i32
    %c0_i32_0 = arith.constant 0 : i32
    %c0_i32_1 = arith.constant 0 : i32
    return %c0_i32, %c0_i32_0 : i32, i32
  }
  func.func @transform_28(%arg0: i32) -> (i32, i32) {
    %c0_i32 = arith.constant 0 : i32
    %c0_i32_0 = arith.constant 0 : i32
    %c0_i32_1 = arith.constant 0 : i32
    return %c0_i32, %c0_i32_0 : i32, i32
  }
  func.func @transform_29(%arg0: i32) -> (i32, i32) {
    %c0_i32 = arith.constant 0 : i32
    %c0_i32_0 = arith.constant 0 : i32
    %c0_i32_1 = arith.constant 0 : i32
    return %c0_i32, %c0_i32_0 : i32, i32
  }
  func.func @transform_30(%arg0: i32) -> (i32, i32) {
    %c0_i32 = arith.constant 0 : i32
    %c0_i32_0 = arith.constant 0 : i32
    %c0_i32_1 = arith.constant 0 : i32
    return %c0_i32, %c0_i32_0 : i32, i32
  }
  func.func @transform_31(%arg0: i32) -> (i32, i32) {
    %c0_i32 = arith.constant 0 : i32
    %c0_i32_0 = arith.constant 0 : i32
    %c0_i32_1 = arith.constant 0 : i32
    return %c0_i32, %c0_i32_0 : i32, i32
  }
  func.func @transform_32(%arg0: i32) -> (i32, i32) {
    %c0_i32 = arith.constant 0 : i32
    %c0_i32_0 = arith.constant 0 : i32
    %c0_i32_1 = arith.constant 0 : i32
    return %c0_i32, %c0_i32_0 : i32, i32
  }
  func.func @transform_33(%arg0: i32) -> (i32, i32, i32, i32) {
    %c0_i32 = arith.constant 0 : i32
    %c0_i32_0 = arith.constant 0 : i32
    %c0_i32_1 = arith.constant 0 : i32
    %c0_i32_2 = arith.constant 0 : i32
    return %arg0, %c0_i32, %c0_i32_0, %c0_i32_1 : i32, i32, i32, i32
  }
  func.func @transform_34(%arg0: i32) -> (i32, i32, i32, i32) {
    %c0_i32 = arith.constant 0 : i32
    %c0_i32_0 = arith.constant 0 : i32
    %c0_i32_1 = arith.constant 0 : i32
    %c0_i32_2 = arith.constant 0 : i32
    return %arg0, %c0_i32, %c0_i32_0, %c0_i32_1 : i32, i32, i32, i32
  }
  func.func @transform_35(%arg0: i32) -> (i32, i32, i32, i32) {
    %c0_i32 = arith.constant 0 : i32
    %c0_i32_0 = arith.constant 0 : i32
    %c0_i32_1 = arith.constant 0 : i32
    %c0_i32_2 = arith.constant 0 : i32
    return %arg0, %c0_i32, %c0_i32_0, %c0_i32_1 : i32, i32, i32, i32
  }
  func.func @transform_36(%arg0: i32) -> (i32, i32, i32, i32) {
    %c0_i32 = arith.constant 0 : i32
    %c0_i32_0 = arith.constant 0 : i32
    %c0_i32_1 = arith.constant 0 : i32
    %c0_i32_2 = arith.constant 0 : i32
    return %arg0, %c0_i32, %c0_i32_0, %c0_i32_1 : i32, i32, i32, i32
  }
  func.func @transform_37(%arg0: i32) -> (i32, i32, i32, i32) {
    %c0_i32 = arith.constant 0 : i32
    %c0_i32_0 = arith.constant 0 : i32
    %c0_i32_1 = arith.constant 0 : i32
    %c0_i32_2 = arith.constant 0 : i32
    return %arg0, %c0_i32, %c0_i32_0, %c0_i32_1 : i32, i32, i32, i32
  }
}

</mosaic_0001>

<llo_original>
// kernel: resnet_dilated_forward.1
$region0: #{resnet_dilated_forward.1}
  #allocation0 [shape = 'u32[]', space=smem, size = 0x4, offset = 0x4, fixed_abs, tag = 'smem constant byte address 0x4 - core index']
  #allocation1 [shape = 'u32[144,128]{1,0:T(1,128)}', space=vmem, size = 0x12000, scoped, tag = 'internal scratch']
  %s0 = inlined_call_operand.smem [shape: u32[38], index: -1, kind: input, shape index: {}]
  %s1 = sld [smem:[%s0]]
  %s2 = scalar_lea.smem %s0, 1
  %s3 = sld [smem:[%s2]]
  %s4 = scalar_lea.smem %s0, 2
  %s5 = sld [smem:[%s4]]
  %s6 = scalar_lea.smem %s0, 3
  %s7 = sld [smem:[%s6]]
  %s8 = scalar_lea.smem %s0, 4
  %s9 = sld [smem:[%s8]]
  %s10 = scalar_lea.smem %s0, 5
  %s11 = sld [smem:[%s10]]
  %s12 = scalar_lea.smem %s0, 6
  %s13 = sld [smem:[%s12]]
  %s14 = scalar_lea.smem %s0, 7
  %s15 = sld [smem:[%s14]]
  %s16 = scalar_lea.smem %s0, 8
  %s17 = sld [smem:[%s16]]
  %s18 = scalar_lea.smem %s0, 9
  %s19 = sld [smem:[%s18]]
  %s20 = scalar_lea.smem %s0, 10
  %s21 = sld [smem:[%s20]]
  %s22 = scalar_lea.smem %s0, 11
  %s23 = sld [smem:[%s22]]
  %s24 = scalar_lea.smem %s0, 12
  %s25 = sld [smem:[%s24]]
  %s26 = scalar_lea.smem %s0, 13
  %s27 = sld [smem:[%s26]]
  %s28 = scalar_lea.smem %s0, 14
  %s29 = sld [smem:[%s28]]
  %s30 = scalar_lea.smem %s0, 15
  %s31 = sld [smem:[%s30]]
  %s32 = scalar_lea.smem %s0, 16
  %s33 = sld [smem:[%s32]]
  %s34 = scalar_lea.smem %s0, 17
  %s35 = sld [smem:[%s34]]
  %s36 = scalar_lea.smem %s0, 18
  %s37 = sld [smem:[%s36]]
  %s38 = scalar_lea.smem %s0, 19
  %s39 = sld [smem:[%s38]]
  %s40 = scalar_lea.smem %s0, 20
  %s41 = sld [smem:[%s40]]
  %s42 = scalar_lea.smem %s0, 21
  %s43 = sld [smem:[%s42]]
  %s44 = scalar_lea.smem %s0, 22
  %s45 = sld [smem:[%s44]]
  %s46 = scalar_lea.smem %s0, 23
  %s47 = sld [smem:[%s46]]
  %s48 = scalar_lea.smem %s0, 24
  %s49 = sld [smem:[%s48]]
  %s50 = scalar_lea.smem %s0, 25
  %s51 = sld [smem:[%s50]]
  %s52 = scalar_lea.smem %s0, 26
  %s53 = sld [smem:[%s52]]
  %s54 = scalar_lea.smem %s0, 27
  %s55 = sld [smem:[%s54]]
  %s56 = scalar_lea.smem %s0, 28
  %s57 = sld [smem:[%s56]]
  %s58 = scalar_lea.smem %s0, 29
  %s59 = sld [smem:[%s58]]
  %s60 = scalar_lea.smem %s0, 30
  %s61 = sld [smem:[%s60]]
  %s62 = scalar_lea.smem %s0, 31
  %s63 = sld [smem:[%s62]]
  %s64 = scalar_lea.smem %s0, 32
  %s65 = sld [smem:[%s64]]
  %s66 = scalar_lea.smem %s0, 33
  %s67 = sld [smem:[%s66]]
  %s68 = scalar_lea.smem %s0, 34
  %s69 = sld [smem:[%s68]]
  %s70 = scalar_lea.smem %s0, 35
  %s71 = sld [smem:[%s70]]
  %s72 = scalar_lea.smem %s0, 36
  %s73 = sld [smem:[%s72]]
  %s74 = scalar_lea.smem %s0, 37
  %s75 = sld [smem:[%s74]]
  %76 = xla_tuple %s67, %s69, %s71, %s73, %s75
  %s77 = sld [smem:[#allocation0]]
  $region197: #{resnet_dilated_forward.1} parent=0
    _
  %s79 = ssub.s32 1, %s77
  %s80 = scalar_select 0, %s79, %s77
  $region1: #{resnet_dilated_forward.1} parent=0
    #allocation2 [shape = 'u8[131072]{0}', space=vmem, size = 0x20000, scoped, tag = 'output window, operand 0']
    #allocation3 [shape = 's32[2]{0}', space=sflag, size = 0x8, scoped, tag = 'scoped memory for resnet_dilated_forward.1']
    #allocation4 [shape = 'u8[32768]{0}', space=vmem, size = 0x8000, scoped, tag = 'output window, operand 1']
    #allocation5 [shape = 's32[2]{0}', space=sflag, size = 0x8, scoped, tag = 'scoped memory for resnet_dilated_forward.1']
    #allocation6 [shape = 'u8[8192]{0}', space=vmem, size = 0x2000, scoped, tag = 'output window, operand 2']
    #allocation7 [shape = 'u8[8192]{0}', space=vmem, size = 0x2000, scoped, tag = 'output window, operand 3']
    #allocation8 [shape = 's32[2]{0}', space=sflag, size = 0x8, scoped, tag = 'scoped memory for resnet_dilated_forward.1']
    %81 = vsyncpa [#allocation3], 0
    %s82 = scalar_lea.sflag [#allocation3], 1
    %83 = vsyncpa %s82, 0
    %84 = vsyncpa [#allocation5], 0
    %s85 = scalar_lea.sflag [#allocation5], 1
    %86 = vsyncpa %s85, 0
    %87 = vsyncpa [#allocation8], 0
    %s88 = scalar_lea.sflag [#allocation8], 1
    %89 = vsyncpa %s88, 0
    loop: start=0, step=1, limit=4
    $region2: #{resnet_dilated_forward.1} parent=1 // loop_pre_header
      _
    $region3: #{resnet_dilated_forward.1} parent=1 // loop_header
      %s91 = sphi 0, %s95
      %p92 = scmp.ge.s32.totalorder %s91, 4
      %s101 = sphi 0, %s103
      %s104 = sphi 0, %s101
      %s105 = sphi 0, %s104
      %s121 = sphi 0, %s105
      %s125 = sphi 0, %s125
      %s127 = sphi 0, %s125
      %s128 = sphi 0, %s127
      %s142 = sphi 0, %s128
      %s146 = sphi 0, %s146
      %s148 = sphi 0, %s146
      %s149 = sphi 0, %s148
      %s163 = sphi 0, %s149
      %s167 = sphi 0, %s167
      %s169 = sphi 0, %s167
      %s170 = sphi 0, %s169
      %s184 = sphi 0, %s170
      %s188 = sphi 0, %s188
      %s190 = sphi 0, %s188
      %s191 = sphi 0, %s190
      %s205 = sphi 0, %s191
      %s209 = sphi 0, %s209
      %s211 = sphi 0, %s209
      %s212 = sphi 0, %s211
      %s226 = sphi 0, %s212
      %s230 = sphi 0, %s230
      %s232 = sphi 0, %s230
      %s233 = sphi 0, %s232
      %s247 = sphi 0, %s233
      %s251 = sphi 0, %s251
      %s253 = sphi 0, %s251
      %s254 = sphi 0, %s253
      %s268 = sphi 0, %s254
      %s272 = sphi 0, %s272
      %s274 = sphi 0, %s272
      %s275 = sphi 0, %s274
      %s289 = sphi 0, %s275
      %s293 = sphi 0, %s293
      %s295 = sphi 0, %s293
      %s296 = sphi 0, %s295
      %s310 = sphi 0, %s296
      %s314 = sphi 0, %s314
      %s316 = sphi 0, %s314
      %s317 = sphi 0, %s316
      %s331 = sphi 0, %s317
      %s335 = sphi 0, %s335
      %s337 = sphi 0, %s335
      %s338 = sphi 0, %s337
      %s352 = sphi 0, %s338
      %s356 = sphi 0, %s356
      %s358 = sphi 0, %s356
      %s359 = sphi 0, %s358
      %s373 = sphi 0, %s359
      %s377 = sphi 0, %s377
      %s379 = sphi 0, %s377
      %s380 = sphi 0, %s379
      %s394 = sphi 0, %s380
      %s398 = sphi 0, %s398
      %s400 = sphi 0, %s398
      %s401 = sphi 0, %s400
      %s415 = sphi 0, %s401
      %s419 = sphi 0, %s419
      %s421 = sphi 0, %s419
      %s422 = sphi 0, %s421
      %s436 = sphi 0, %s422
      %s440 = sphi 0, %s440
      %s442 = sphi 0, %s440
      %s443 = sphi 0, %s442
      %s457 = sphi 0, %s443
      %s461 = sphi 0, %s461
      %s463 = sphi 0, %s461
      %s464 = sphi 0, %s463
      %s478 = sphi 0, %s464
      %s482 = sphi 0, %s482
      %s484 = sphi 0, %s482
      %s485 = sphi 0, %s484
      %s499 = sphi 0, %s485
      %s503 = sphi 0, %s503
      %s505 = sphi 0, %s503
      %s506 = sphi 0, %s505
      %s520 = sphi 0, %s506
      %s524 = sphi 0, %s524
      %s526 = sphi 0, %s524
      %s527 = sphi 0, %s526
      %s541 = sphi 0, %s527
      %s545 = sphi 0, %s545
      %s547 = sphi 0, %s545
      %s548 = sphi 0, %s547
      %s562 = sphi 0, %s548
      %s566 = sphi 0, %s566
      %s568 = sphi 0, %s566
      %s569 = sphi 0, %s568
      %s583 = sphi 0, %s569
      %s587 = sphi 0, %s587
      %s589 = sphi 0, %s587
      %s590 = sphi 0, %s589
      %s604 = sphi 0, %s590
      %s608 = sphi 0, %s608
      %s610 = sphi 0, %s608
      %s611 = sphi 0, %s610
      %s625 = sphi 0, %s611
      %s629 = sphi 0, %s629
      %s631 = sphi 0, %s629
      %s632 = sphi 0, %s631
      %s646 = sphi 0, %s632
      %s650 = sphi 0, %s650
      %s652 = sphi 0, %s650
      %s653 = sphi 0, %s652
      %s667 = sphi 0, %s653
      %s671 = sphi 0, %s671
      %s673 = sphi 0, %s671
      %s674 = sphi 0, %s673
      %s688 = sphi 0, %s674
      %s692 = sphi 0, %s692
      %s694 = sphi 0, %s692
      %s695 = sphi 0, %s694
      %s709 = sphi 0, %s695
      %s713 = sphi 0, %s713
      %s715 = sphi 0, %s713
      %s716 = sphi 0, %s715
      %s730 = sphi 0, %s716
      %s734 = sphi 0, %s734
      %s736 = sphi 0, %s734
      %s737 = sphi 0, %s736
      %s751 = sphi 0, %s737
      %s755 = sphi 0, %s755
      %s757 = sphi 0, %s755
      %s758 = sphi 0, %s757
      %s772 = sphi 0, %s758
      %s776 = sphi 0, %s776
      %s778 = sphi 0, %s776
      %s779 = sphi 0, %s778
      %s793 = sphi 0, %s779
      %s799 = sphi 0, %s801
      %s802 = sphi 0, %s799
      %s803 = sphi 0, %s802
      %s819 = sphi 0, %s803
      %s825 = sphi 0, %s827
      %s828 = sphi 0, %s825
      %s829 = sphi 0, %s828
      %s845 = sphi 0, %s829
      %s851 = sphi 0, %s853
      %s854 = sphi 0, %s851
      %s855 = sphi 0, %s854
      %s871 = sphi 0, %s855
      %s877 = sphi 0, %s879
      %s880 = sphi 0, %s877
      %s881 = sphi 0, %s880
      %s897 = sphi 0, %s881
      %s903 = sphi 0, %s905
      %s906 = sphi 0, %s903
      %s907 = sphi 0, %s906
      %s923 = sphi 0, %s907
    $region4: #{resnet_dilated_forward.1} parent=1 // loop_header_branch
      %94 = sbr.rel (%p92) target = $region8
    $region5: #{resnet_dilated_forward.1} parent=1 // loop_body
      %s96 = ssub.s32 %s91, 1
      %s97 = ssub.s32 %s91, 2
      %s98 = sadd.s32 %s91, 1
      %s99 = ssub.s32 %s91, %s98
      %p100 = scmp.eq.s32.totalorder %s99, 0
      %s102 = sadd.s32 %s101, 1
      %s103 = scalar_select %p100, %s101, %s102
      %p106 = pneg %p100
      %p107 = scmp.eq.s32.totalorder %s91, 1
      %p108 = por %p106, %p107
      %p109 = scmp.ne.s32.totalorder %s101, %s104
      %p110 = scmp.eq.s32.totalorder %s91, 0
      %p111 = por %p109, %p110
      %p112 = scmp.ne.s32.totalorder %s101, %s104
      %p113 = scmp.eq.s32.totalorder %s96, 1
      %p114 = por %p112, %p113
      %p115 = scmp.ne.s32.totalorder %s104, %s105
      %p116 = scmp.eq.s32.totalorder %s96, 0
      %p117 = por %p115, %p116
      %p118 = scmp.ne.s32.totalorder %s104, %s105
      %p119 = scmp.eq.s32.totalorder %s97, 1
      %p120 = por %p118, %p119
      %p122 = scmp.ne.s32.totalorder %s105, %s121
      %p123 = scmp.eq.s32.totalorder %s97, 0
      %p124 = por %p122, %p123
      %s126 = sadd.s32 %s125, 1
      %p129 = scmp.eq.s32.totalorder %s91, 1
      %p130 = scmp.ne.s32.totalorder %s125, %s127
      %p131 = scmp.eq.s32.totalorder %s91, 0
      %p132 = por %p130, %p131
      %p133 = scmp.ne.s32.totalorder %s125, %s127
      %p134 = scmp.eq.s32.totalorder %s96, 1
      %p135 = por %p133, %p134
      %p136 = scmp.ne.s32.totalorder %s127, %s128
      %p137 = scmp.eq.s32.totalorder %s96, 0
      %p138 = por %p136, %p137
      %p139 = scmp.ne.s32.totalorder %s127, %s128
      %p140 = scmp.eq.s32.totalorder %s97, 1
      %p141 = por %p139, %p140
      %p143 = scmp.ne.s32.totalorder %s128, %s142
      %p144 = scmp.eq.s32.totalorder %s97, 0
      %p145 = por %p143, %p144
      %s147 = sadd.s32 %s146, 1
      %p150 = scmp.eq.s32.totalorder %s91, 1
      %p151 = scmp.ne.s32.totalorder %s146, %s148
      %p152 = scmp.eq.s32.totalorder %s91, 0
      %p153 = por %p151, %p152
      %p154 = scmp.ne.s32.totalorder %s146, %s148
      %p155 = scmp.eq.s32.totalorder %s96, 1
      %p156 = por %p154, %p155
      %p157 = scmp.ne.s32.totalorder %s148, %s149
      %p158 = scmp.eq.s32.totalorder %s96, 0
      %p159 = por %p157, %p158
      %p160 = scmp.ne.s32.totalorder %s148, %s149
      %p161 = scmp.eq.s32.totalorder %s97, 1
      %p162 = por %p160, %p161
      %p164 = scmp.ne.s32.totalorder %s149, %s163
      %p165 = scmp.eq.s32.totalorder %s97, 0
      %p166 = por %p164, %p165
      %s168 = sadd.s32 %s167, 1
      %p171 = scmp.eq.s32.totalorder %s91, 1
      %p172 = scmp.ne.s32.totalorder %s167, %s169
      %p173 = scmp.eq.s32.totalorder %s91, 0
      %p174 = por %p172, %p173
      %p175 = scmp.ne.s32.totalorder %s167, %s169
      %p176 = scmp.eq.s32.totalorder %s96, 1
      %p177 = por %p175, %p176
      %p178 = scmp.ne.s32.totalorder %s169, %s170
      %p179 = scmp.eq.s32.totalorder %s96, 0
      %p180 = por %p178, %p179
      %p181 = scmp.ne.s32.totalorder %s169, %s170
      %p182 = scmp.eq.s32.totalorder %s97, 1
      %p183 = por %p181, %p182
      %p185 = scmp.ne.s32.totalorder %s170, %s184
      %p186 = scmp.eq.s32.totalorder %s97, 0
      %p187 = por %p185, %p186
      %s189 = sadd.s32 %s188, 1
      %p192 = scmp.eq.s32.totalorder %s91, 1
      %p193 = scmp.ne.s32.totalorder %s188, %s190
      %p194 = scmp.eq.s32.totalorder %s91, 0
      %p195 = por %p193, %p194
      %p196 = scmp.ne.s32.totalorder %s188, %s190
      %p197 = scmp.eq.s32.totalorder %s96, 1
      %p198 = por %p196, %p197
      %p199 = scmp.ne.s32.totalorder %s190, %s191
      %p200 = scmp.eq.s32.totalorder %s96, 0
      %p201 = por %p199, %p200
      %p202 = scmp.ne.s32.totalorder %s190, %s191
      %p203 = scmp.eq.s32.totalorder %s97, 1
      %p204 = por %p202, %p203
      %p206 = scmp.ne.s32.totalorder %s191, %s205
      %p207 = scmp.eq.s32.totalorder %s97, 0
      %p208 = por %p206, %p207
      %s210 = sadd.s32 %s209, 1
      %p213 = scmp.eq.s32.totalorder %s91, 1
      %p214 = scmp.ne.s32.totalorder %s209, %s211
      %p215 = scmp.eq.s32.totalorder %s91, 0
      %p216 = por %p214, %p215
      %p217 = scmp.ne.s32.totalorder %s209, %s211
      %p218 = scmp.eq.s32.totalorder %s96, 1
      %p219 = por %p217, %p218
      %p220 = scmp.ne.s32.totalorder %s211, %s212
      %p221 = scmp.eq.s32.totalorder %s96, 0
      %p222 = por %p220, %p221
      %p223 = scmp.ne.s32.totalorder %s211, %s212
      %p224 = scmp.eq.s32.totalorder %s97, 1
      %p225 = por %p223, %p224
      %p227 = scmp.ne.s32.totalorder %s212, %s226
      %p228 = scmp.eq.s32.totalorder %s97, 0
      %p229 = por %p227, %p228
      %s231 = sadd.s32 %s230, 1
      %p234 = scmp.eq.s32.totalorder %s91, 1
      %p235 = scmp.ne.s32.totalorder %s230, %s232
      %p236 = scmp.eq.s32.totalorder %s91, 0
      %p237 = por %p235, %p236
      %p238 = scmp.ne.s32.totalorder %s230, %s232
      %p239 = scmp.eq.s32.totalorder %s96, 1
      %p240 = por %p238, %p239
      %p241 = scmp.ne.s32.totalorder %s232, %s233
      %p242 = scmp.eq.s32.totalorder %s96, 0
      %p243 = por %p241, %p242
      %p244 = scmp.ne.s32.totalorder %s232, %s233
      %p245 = scmp.eq.s32.totalorder %s97, 1
      %p246 = por %p244, %p245
      %p248 = scmp.ne.s32.totalorder %s233, %s247
      %p249 = scmp.eq.s32.totalorder %s97, 0
      %p250 = por %p248, %p249
      %s252 = sadd.s32 %s251, 1
      %p255 = scmp.eq.s32.totalorder %s91, 1
      %p256 = scmp.ne.s32.totalorder %s251, %s253
      %p257 = scmp.eq.s32.totalorder %s91, 0
      %p258 = por %p256, %p257
      %p259 = scmp.ne.s32.totalorder %s251, %s253
      %p260 = scmp.eq.s32.totalorder %s96, 1
      %p261 = por %p259, %p260
      %p262 = scmp.ne.s32.totalorder %s253, %s254
      %p263 = scmp.eq.s32.totalorder %s96, 0
      %p264 = por %p262, %p263
      %p265 = scmp.ne.s32.totalorder %s253, %s254
      %p266 = scmp.eq.s32.totalorder %s97, 1
      %p267 = por %p265, %p266
      %p269 = scmp.ne.s32.totalorder %s254, %s268
      %p270 = scmp.eq.s32.totalorder %s97, 0
      %p271 = por %p269, %p270
      %s273 = sadd.s32 %s272, 1
      %p276 = scmp.eq.s32.totalorder %s91, 1
      %p277 = scmp.ne.s32.totalorder %s272, %s274
      %p278 = scmp.eq.s32.totalorder %s91, 0
      %p279 = por %p277, %p278
      %p280 = scmp.ne.s32.totalorder %s272, %s274
      %p281 = scmp.eq.s32.totalorder %s96, 1
      %p282 = por %p280, %p281
      %p283 = scmp.ne.s32.totalorder %s274, %s275
      %p284 = scmp.eq.s32.totalorder %s96, 0
      %p285 = por %p283, %p284
      %p286 = scmp.ne.s32.totalorder %s274, %s275
      %p287 = scmp.eq.s32.totalorder %s97, 1
      %p288 = por %p286, %p287
      %p290 = scmp.ne.s32.totalorder %s275, %s289
      %p291 = scmp.eq.s32.totalorder %s97, 0
      %p292 = por %p290, %p291
      %s294 = sadd.s32 %s293, 1
      %p297 = scmp.eq.s32.totalorder %s91, 1
      %p298 = scmp.ne.s32.totalorder %s293, %s295
      %p299 = scmp.eq.s32.totalorder %s91, 0
      %p300 = por %p298, %p299
      %p301 = scmp.ne.s32.totalorder %s293, %s295
      %p302 = scmp.eq.s32.totalorder %s96, 1
      %p303 = por %p301, %p302
      %p304 = scmp.ne.s32.totalorder %s295, %s296
      %p305 = scmp.eq.s32.totalorder %s96, 0
      %p306 = por %p304, %p305
      %p307 = scmp.ne.s32.totalorder %s295, %s296
      %p308 = scmp.eq.s32.totalorder %s97, 1
      %p309 = por %p307, %p308
      %p311 = scmp.ne.s32.totalorder %s296, %s310
      %p312 = scmp.eq.s32.totalorder %s97, 0
      %p313 = por %p311, %p312
      %s315 = sadd.s32 %s314, 1
      %p318 = scmp.eq.s32.totalorder %s91, 1
      %p319 = scmp.ne.s32.totalorder %s314, %s316
      %p320 = scmp.eq.s32.totalorder %s91, 0
      %p321 = por %p319, %p320
      %p322 = scmp.ne.s32.totalorder %s314, %s316
      %p323 = scmp.eq.s32.totalorder %s96, 1
      %p324 = por %p322, %p323
      %p325 = scmp.ne.s32.totalorder %s316, %s317
      %p326 = scmp.eq.s32.totalorder %s96, 0
      %p327 = por %p325, %p326
      %p328 = scmp.ne.s32.totalorder %s316, %s317
      %p329 = scmp.eq.s32.totalorder %s97, 1
      %p330 = por %p328, %p329
      %p332 = scmp.ne.s32.totalorder %s317, %s331
      %p333 = scmp.eq.s32.totalorder %s97, 0
      %p334 = por %p332, %p333
      %s336 = sadd.s32 %s335, 1
      %p339 = scmp.eq.s32.totalorder %s91, 1
      %p340 = scmp.ne.s32.totalorder %s335, %s337
      %p341 = scmp.eq.s32.totalorder %s91, 0
      %p342 = por %p340, %p341
      %p343 = scmp.ne.s32.totalorder %s335, %s337
      %p344 = scmp.eq.s32.totalorder %s96, 1
      %p345 = por %p343, %p344
      %p346 = scmp.ne.s32.totalorder %s337, %s338
      %p347 = scmp.eq.s32.totalorder %s96, 0
      %p348 = por %p346, %p347
      %p349 = scmp.ne.s32.totalorder %s337, %s338
      %p350 = scmp.eq.s32.totalorder %s97, 1
      %p351 = por %p349, %p350
      %p353 = scmp.ne.s32.totalorder %s338, %s352
      %p354 = scmp.eq.s32.totalorder %s97, 0
      %p355 = por %p353, %p354
      %s357 = sadd.s32 %s356, 1
      %p360 = scmp.eq.s32.totalorder %s91, 1
      %p361 = scmp.ne.s32.totalorder %s356, %s358
      %p362 = scmp.eq.s32.totalorder %s91, 0
      %p363 = por %p361, %p362
      %p364 = scmp.ne.s32.totalorder %s356, %s358
      %p365 = scmp.eq.s32.totalorder %s96, 1
      %p366 = por %p364, %p365
      %p367 = scmp.ne.s32.totalorder %s358, %s359
      %p368 = scmp.eq.s32.totalorder %s96, 0
      %p369 = por %p367, %p368
      %p370 = scmp.ne.s32.totalorder %s358, %s359
      %p371 = scmp.eq.s32.totalorder %s97, 1
      %p372 = por %p370, %p371
      %p374 = scmp.ne.s32.totalorder %s359, %s373
      %p375 = scmp.eq.s32.totalorder %s97, 0
      %p376 = por %p374, %p375
      %s378 = sadd.s32 %s377, 1
      %p381 = scmp.eq.s32.totalorder %s91, 1
      %p382 = scmp.ne.s32.totalorder %s377, %s379
      %p383 = scmp.eq.s32.totalorder %s91, 0
      %p384 = por %p382, %p383
      %p385 = scmp.ne.s32.totalorder %s377, %s379
      %p386 = scmp.eq.s32.totalorder %s96, 1
      %p387 = por %p385, %p386
      %p388 = scmp.ne.s32.totalorder %s379, %s380
      %p389 = scmp.eq.s32.totalorder %s96, 0
      %p390 = por %p388, %p389
      %p391 = scmp.ne.s32.totalorder %s379, %s380
      %p392 = scmp.eq.s32.totalorder %s97, 1
      %p393 = por %p391, %p392
      %p395 = scmp.ne.s32.totalorder %s380, %s394
      %p396 = scmp.eq.s32.totalorder %s97, 0
      %p397 = por %p395, %p396
      %s399 = sadd.s32 %s398, 1
      %p402 = scmp.eq.s32.totalorder %s91, 1
      %p403 = scmp.ne.s32.totalorder %s398, %s400
      %p404 = scmp.eq.s32.totalorder %s91, 0
      %p405 = por %p403, %p404
      %p406 = scmp.ne.s32.totalorder %s398, %s400
      %p407 = scmp.eq.s32.totalorder %s96, 1
      %p408 = por %p406, %p407
      %p409 = scmp.ne.s32.totalorder %s400, %s401
      %p410 = scmp.eq.s32.totalorder %s96, 0
      %p411 = por %p409, %p410
      %p412 = scmp.ne.s32.totalorder %s400, %s401
      %p413 = scmp.eq.s32.totalorder %s97, 1
      %p414 = por %p412, %p413
      %p416 = scmp.ne.s32.totalorder %s401, %s415
      %p417 = scmp.eq.s32.totalorder %s97, 0
      %p418 = por %p416, %p417
      %s420 = sadd.s32 %s419, 1
      %p423 = scmp.eq.s32.totalorder %s91, 1
      %p424 = scmp.ne.s32.totalorder %s419, %s421
      %p425 = scmp.eq.s32.totalorder %s91, 0
      %p426 = por %p424, %p425
      %p427 = scmp.ne.s32.totalorder %s419, %s421
      %p428 = scmp.eq.s32.totalorder %s96, 1
      %p429 = por %p427, %p428
      %p430 = scmp.ne.s32.totalorder %s421, %s422
      %p431 = scmp.eq.s32.totalorder %s96, 0
      %p432 = por %p430, %p431
      %p433 = scmp.ne.s32.totalorder %s421, %s422
      %p434 = scmp.eq.s32.totalorder %s97, 1
      %p435 = por %p433, %p434
      %p437 = scmp.ne.s32.totalorder %s422, %s436
      %p438 = scmp.eq.s32.totalorder %s97, 0
      %p439 = por %p437, %p438
      %s441 = sadd.s32 %s440, 1
      %p444 = scmp.eq.s32.totalorder %s91, 1
      %p445 = scmp.ne.s32.totalorder %s440, %s442
      %p446 = scmp.eq.s32.totalorder %s91, 0
      %p447 = por %p445, %p446
      %p448 = scmp.ne.s32.totalorder %s440, %s442
      %p449 = scmp.eq.s32.totalorder %s96, 1
      %p450 = por %p448, %p449
      %p451 = scmp.ne.s32.totalorder %s442, %s443
      %p452 = scmp.eq.s32.totalorder %s96, 0
      %p453 = por %p451, %p452
      %p454 = scmp.ne.s32.totalorder %s442, %s443
      %p455 = scmp.eq.s32.totalorder %s97, 1
      %p456 = por %p454, %p455
      %p458 = scmp.ne.s32.totalorder %s443, %s457
      %p459 = scmp.eq.s32.totalorder %s97, 0
      %p460 = por %p458, %p459
      %s462 = sadd.s32 %s461, 1
      %p465 = scmp.eq.s32.totalorder %s91, 1
      %p466 = scmp.ne.s32.totalorder %s461, %s463
      %p467 = scmp.eq.s32.totalorder %s91, 0
      %p468 = por %p466, %p467
      %p469 = scmp.ne.s32.totalorder %s461, %s463
      %p470 = scmp.eq.s32.totalorder %s96, 1
      %p471 = por %p469, %p470
      %p472 = scmp.ne.s32.totalorder %s463, %s464
      %p473 = scmp.eq.s32.totalorder %s96, 0
      %p474 = por %p472, %p473
      %p475 = scmp.ne.s32.totalorder %s463, %s464
      %p476 = scmp.eq.s32.totalorder %s97, 1
      %p477 = por %p475, %p476
      %p479 = scmp.ne.s32.totalorder %s464, %s478
      %p480 = scmp.eq.s32.totalorder %s97, 0
      %p481 = por %p479, %p480
      %s483 = sadd.s32 %s482, 1
      %p486 = scmp.eq.s32.totalorder %s91, 1
      %p487 = scmp.ne.s32.totalorder %s482, %s484
      %p488 = scmp.eq.s32.totalorder %s91, 0
      %p489 = por %p487, %p488
      %p490 = scmp.ne.s32.totalorder %s482, %s484
      %p491 = scmp.eq.s32.totalorder %s96, 1
      %p492 = por %p490, %p491
      %p493 = scmp.ne.s32.totalorder %s484, %s485
      %p494 = scmp.eq.s32.totalorder %s96, 0
      %p495 = por %p493, %p494
      %p496 = scmp.ne.s32.totalorder %s484, %s485
      %p497 = scmp.eq.s32.totalorder %s97, 1
      %p498 = por %p496, %p497
      %p500 = scmp.ne.s32.totalorder %s485, %s499
      %p501 = scmp.eq.s32.totalorder %s97, 0
      %p502 = por %p500, %p501
      %s504 = sadd.s32 %s503, 1
      %p507 = scmp.eq.s32.totalorder %s91, 1
      %p508 = scmp.ne.s32.totalorder %s503, %s505
      %p509 = scmp.eq.s32.totalorder %s91, 0
      %p510 = por %p508, %p509
      %p511 = scmp.ne.s32.totalorder %s503, %s505
      %p512 = scmp.eq.s32.totalorder %s96, 1
      %p513 = por %p511, %p512
      %p514 = scmp.ne.s32.totalorder %s505, %s506
      %p515 = scmp.eq.s32.totalorder %s96, 0
      %p516 = por %p514, %p515
      %p517 = scmp.ne.s32.totalorder %s505, %s506
      %p518 = scmp.eq.s32.totalorder %s97, 1
      %p519 = por %p517, %p518
      %p521 = scmp.ne.s32.totalorder %s506, %s520
      %p522 = scmp.eq.s32.totalorder %s97, 0
      %p523 = por %p521, %p522
      %s525 = sadd.s32 %s524, 1
      %p528 = scmp.eq.s32.totalorder %s91, 1
      %p529 = scmp.ne.s32.totalorder %s524, %s526
      %p530 = scmp.eq.s32.totalorder %s91, 0
      %p531 = por %p529, %p530
      %p532 = scmp.ne.s32.totalorder %s524, %s526
      %p533 = scmp.eq.s32.totalorder %s96, 1
      %p534 = por %p532, %p533
      %p535 = scmp.ne.s32.totalorder %s526, %s527
      %p536 = scmp.eq.s32.totalorder %s96, 0
      %p537 = por %p535, %p536
      %p538 = scmp.ne.s32.totalorder %s526, %s527
      %p539 = scmp.eq.s32.totalorder %s97, 1
      %p540 = por %p538, %p539
      %p542 = scmp.ne.s32.totalorder %s527, %s541
      %p543 = scmp.eq.s32.totalorder %s97, 0
      %p544 = por %p542, %p543
      %s546 = sadd.s32 %s545, 1
      %p549 = scmp.eq.s32.totalorder %s91, 1
      %p550 = scmp.ne.s32.totalorder %s545, %s547
      %p551 = scmp.eq.s32.totalorder %s91, 0
      %p552 = por %p550, %p551
      %p553 = scmp.ne.s32.totalorder %s545, %s547
      %p554 = scmp.eq.s32.totalorder %s96, 1
      %p555 = por %p553, %p554
      %p556 = scmp.ne.s32.totalorder %s547, %s548
      %p557 = scmp.eq.s32.totalorder %s96, 0
      %p558 = por %p556, %p557
      %p559 = scmp.ne.s32.totalorder %s547, %s548
      %p560 = scmp.eq.s32.totalorder %s97, 1
      %p561 = por %p559, %p560
      %p563 = scmp.ne.s32.totalorder %s548, %s562
      %p564 = scmp.eq.s32.totalorder %s97, 0
      %p565 = por %p563, %p564
      %s567 = sadd.s32 %s566, 1
      %p570 = scmp.eq.s32.totalorder %s91, 1
      %p571 = scmp.ne.s32.totalorder %s566, %s568
      %p572 = scmp.eq.s32.totalorder %s91, 0
      %p573 = por %p571, %p572
      %p574 = scmp.ne.s32.totalorder %s566, %s568
      %p575 = scmp.eq.s32.totalorder %s96, 1
      %p576 = por %p574, %p575
      %p577 = scmp.ne.s32.totalorder %s568, %s569
      %p578 = scmp.eq.s32.totalorder %s96, 0
      %p579 = por %p577, %p578
      %p580 = scmp.ne.s32.totalorder %s568, %s569
      %p581 = scmp.eq.s32.totalorder %s97, 1
      %p582 = por %p580, %p581
      %p584 = scmp.ne.s32.totalorder %s569, %s583
      %p585 = scmp.eq.s32.totalorder %s97, 0
      %p586 = por %p584, %p585
      %s588 = sadd.s32 %s587, 1
      %p591 = scmp.eq.s32.totalorder %s91, 1
      %p592 = scmp.ne.s32.totalorder %s587, %s589
      %p593 = scmp.eq.s32.totalorder %s91, 0
      %p594 = por %p592, %p593
      %p595 = scmp.ne.s32.totalorder %s587, %s589
      %p596 = scmp.eq.s32.totalorder %s96, 1
      %p597 = por %p595, %p596
      %p598 = scmp.ne.s32.totalorder %s589, %s590
      %p599 = scmp.eq.s32.totalorder %s96, 0
      %p600 = por %p598, %p599
      %p601 = scmp.ne.s32.totalorder %s589, %s590
      %p602 = scmp.eq.s32.totalorder %s97, 1
      %p603 = por %p601, %p602
      %p605 = scmp.ne.s32.totalorder %s590, %s604
      %p606 = scmp.eq.s32.totalorder %s97, 0
      %p607 = por %p605, %p606
      %s609 = sadd.s32 %s608, 1
      %p612 = scmp.eq.s32.totalorder %s91, 1
      %p613 = scmp.ne.s32.totalorder %s608, %s610
      %p614 = scmp.eq.s32.totalorder %s91, 0
      %p615 = por %p613, %p614
      %p616 = scmp.ne.s32.totalorder %s608, %s610
      %p617 = scmp.eq.s32.totalorder %s96, 1
      %p618 = por %p616, %p617
      %p619 = scmp.ne.s32.totalorder %s610, %s611
      %p620 = scmp.eq.s32.totalorder %s96, 0
      %p621 = por %p619, %p620
      %p622 = scmp.ne.s32.totalorder %s610, %s611
      %p623 = scmp.eq.s32.totalorder %s97, 1
      %p624 = por %p622, %p623
      %p626 = scmp.ne.s32.totalorder %s611, %s625
      %p627 = scmp.eq.s32.totalorder %s97, 0
      %p628 = por %p626, %p627
      %s630 = sadd.s32 %s629, 1
      %p633 = scmp.eq.s32.totalorder %s91, 1
      %p634 = scmp.ne.s32.totalorder %s629, %s631
      %p635 = scmp.eq.s32.totalorder %s91, 0
      %p636 = por %p634, %p635
      %p637 = scmp.ne.s32.totalorder %s629, %s631
      %p638 = scmp.eq.s32.totalorder %s96, 1
      %p639 = por %p637, %p638
      %p640 = scmp.ne.s32.totalorder %s631, %s632
      %p641 = scmp.eq.s32.totalorder %s96, 0
      %p642 = por %p640, %p641
      %p643 = scmp.ne.s32.totalorder %s631, %s632
      %p644 = scmp.eq.s32.totalorder %s97, 1
      %p645 = por %p643, %p644
      %p647 = scmp.ne.s32.totalorder %s632, %s646
      %p648 = scmp.eq.s32.totalorder %s97, 0
      %p649 = por %p647, %p648
      %s651 = sadd.s32 %s650, 1
      %p654 = scmp.eq.s32.totalorder %s91, 1
      %p655 = scmp.ne.s32.totalorder %s650, %s652
      %p656 = scmp.eq.s32.totalorder %s91, 0
      %p657 = por %p655, %p656
      %p658 = scmp.ne.s32.totalorder %s650, %s652
      %p659 = scmp.eq.s32.totalorder %s96, 1
      %p660 = por %p658, %p659
      %p661 = scmp.ne.s32.totalorder %s652, %s653
      %p662 = scmp.eq.s32.totalorder %s96, 0
      %p663 = por %p661, %p662
      %p664 = scmp.ne.s32.totalorder %s652, %s653
      %p665 = scmp.eq.s32.totalorder %s97, 1
      %p666 = por %p664, %p665
      %p668 = scmp.ne.s32.totalorder %s653, %s667
      %p669 = scmp.eq.s32.totalorder %s97, 0
      %p670 = por %p668, %p669
      %s672 = sadd.s32 %s671, 1
      %p675 = scmp.eq.s32.totalorder %s91, 1
      %p676 = scmp.ne.s32.totalorder %s671, %s673
      %p677 = scmp.eq.s32.totalorder %s91, 0
      %p678 = por %p676, %p677
      %p679 = scmp.ne.s32.totalorder %s671, %s673
      %p680 = scmp.eq.s32.totalorder %s96, 1
      %p681 = por %p679, %p680
      %p682 = scmp.ne.s32.totalorder %s673, %s674
      %p683 = scmp.eq.s32.totalorder %s96, 0
      %p684 = por %p682, %p683
      %p685 = scmp.ne.s32.totalorder %s673, %s674
      %p686 = scmp.eq.s32.totalorder %s97, 1
      %p687 = por %p685, %p686
      %p689 = scmp.ne.s32.totalorder %s674, %s688
      %p690 = scmp.eq.s32.totalorder %s97, 0
      %p691 = por %p689, %p690
      %s693 = sadd.s32 %s692, 1
      %p696 = scmp.eq.s32.totalorder %s91, 1
      %p697 = scmp.ne.s32.totalorder %s692, %s694
      %p698 = scmp.eq.s32.totalorder %s91, 0
      %p699 = por %p697, %p698
      %p700 = scmp.ne.s32.totalorder %s692, %s694
      %p701 = scmp.eq.s32.totalorder %s96, 1
      %p702 = por %p700, %p701
      %p703 = scmp.ne.s32.totalorder %s694, %s695
      %p704 = scmp.eq.s32.totalorder %s96, 0
      %p705 = por %p703, %p704
      %p706 = scmp.ne.s32.totalorder %s694, %s695
      %p707 = scmp.eq.s32.totalorder %s97, 1
      %p708 = por %p706, %p707
      %p710 = scmp.ne.s32.totalorder %s695, %s709
      %p711 = scmp.eq.s32.totalorder %s97, 0
      %p712 = por %p710, %p711
      %s714 = sadd.s32 %s713, 1
      %p717 = scmp.eq.s32.totalorder %s91, 1
      %p718 = scmp.ne.s32.totalorder %s713, %s715
      %p719 = scmp.eq.s32.totalorder %s91, 0
      %p720 = por %p718, %p719
      %p721 = scmp.ne.s32.totalorder %s713, %s715
      %p722 = scmp.eq.s32.totalorder %s96, 1
      %p723 = por %p721, %p722
      %p724 = scmp.ne.s32.totalorder %s715, %s716
      %p725 = scmp.eq.s32.totalorder %s96, 0
      %p726 = por %p724, %p725
      %p727 = scmp.ne.s32.totalorder %s715, %s716
      %p728 = scmp.eq.s32.totalorder %s97, 1
      %p729 = por %p727, %p728
      %p731 = scmp.ne.s32.totalorder %s716, %s730
      %p732 = scmp.eq.s32.totalorder %s97, 0
      %p733 = por %p731, %p732
      %s735 = sadd.s32 %s734, 1
      %p738 = scmp.eq.s32.totalorder %s91, 1
      %p739 = scmp.ne.s32.totalorder %s734, %s736
      %p740 = scmp.eq.s32.totalorder %s91, 0
      %p741 = por %p739, %p740
      %p742 = scmp.ne.s32.totalorder %s734, %s736
      %p743 = scmp.eq.s32.totalorder %s96, 1
      %p744 = por %p742, %p743
      %p745 = scmp.ne.s32.totalorder %s736, %s737
      %p746 = scmp.eq.s32.totalorder %s96, 0
      %p747 = por %p745, %p746
      %p748 = scmp.ne.s32.totalorder %s736, %s737
      %p749 = scmp.eq.s32.totalorder %s97, 1
      %p750 = por %p748, %p749
      %p752 = scmp.ne.s32.totalorder %s737, %s751
      %p753 = scmp.eq.s32.totalorder %s97, 0
      %p754 = por %p752, %p753
      %s756 = sadd.s32 %s755, 1
      %p759 = scmp.eq.s32.totalorder %s91, 1
      %p760 = scmp.ne.s32.totalorder %s755, %s757
      %p761 = scmp.eq.s32.totalorder %s91, 0
      %p762 = por %p760, %p761
      %p763 = scmp.ne.s32.totalorder %s755, %s757
      %p764 = scmp.eq.s32.totalorder %s96, 1
      %p765 = por %p763, %p764
      %p766 = scmp.ne.s32.totalorder %s757, %s758
      %p767 = scmp.eq.s32.totalorder %s96, 0
      %p768 = por %p766, %p767
      %p769 = scmp.ne.s32.totalorder %s757, %s758
      %p770 = scmp.eq.s32.totalorder %s97, 1
      %p771 = por %p769, %p770
      %p773 = scmp.ne.s32.totalorder %s758, %s772
      %p774 = scmp.eq.s32.totalorder %s97, 0
      %p775 = por %p773, %p774
      %s777 = sadd.s32 %s776, 1
      %p780 = scmp.eq.s32.totalorder %s91, 1
      %p781 = scmp.ne.s32.totalorder %s776, %s778
      %p782 = scmp.eq.s32.totalorder %s91, 0
      %p783 = por %p781, %p782
      %p784 = scmp.ne.s32.totalorder %s776, %s778
      %p785 = scmp.eq.s32.totalorder %s96, 1
      %p786 = por %p784, %p785
      %p787 = scmp.ne.s32.totalorder %s778, %s779
      %p788 = scmp.eq.s32.totalorder %s96, 0
      %p789 = por %p787, %p788
      %p790 = scmp.ne.s32.totalorder %s778, %s779
      %p791 = scmp.eq.s32.totalorder %s97, 1
      %p792 = por %p790, %p791
      %p794 = scmp.ne.s32.totalorder %s779, %s793
      %p795 = scmp.eq.s32.totalorder %s97, 0
      %p796 = por %p794, %p795
      %s797 = ssub.s32 %s91, %s98
      %p798 = scmp.eq.s32.totalorder %s797, 0
      %s800 = sadd.s32 %s799, 1
      %s801 = scalar_select %p798, %s799, %s800
      %p804 = pneg %p798
      %p805 = scmp.eq.s32.totalorder %s91, 1
      %p806 = por %p804, %p805
      %p807 = scmp.ne.s32.totalorder %s799, %s802
      %p808 = scmp.eq.s32.totalorder %s91, 0
      %p809 = por %p807, %p808
      %p810 = scmp.ne.s32.totalorder %s799, %s802
      %p811 = scmp.eq.s32.totalorder %s96, 1
      %p812 = por %p810, %p811
      %p813 = scmp.ne.s32.totalorder %s802, %s803
      %p814 = scmp.eq.s32.totalorder %s96, 0
      %p815 = por %p813, %p814
      %p816 = scmp.ne.s32.totalorder %s802, %s803
      %p817 = scmp.eq.s32.totalorder %s97, 1
      %p818 = por %p816, %p817
      %p820 = scmp.ne.s32.totalorder %s803, %s819
      %p821 = scmp.eq.s32.totalorder %s97, 0
      %p822 = por %p820, %p821
      %s823 = ssub.s32 %s91, %s98
      %p824 = scmp.eq.s32.totalorder %s823, 0
      %s826 = sadd.s32 %s825, 1
      %s827 = scalar_select %p824, %s825, %s826
      %p830 = pneg %p824
      %p831 = scmp.eq.s32.totalorder %s91, 1
      %p832 = por %p830, %p831
      %p833 = scmp.ne.s32.totalorder %s825, %s828
      %p834 = scmp.eq.s32.totalorder %s91, 0
      %p835 = por %p833, %p834
      %p836 = scmp.ne.s32.totalorder %s825, %s828
      %p837 = scmp.eq.s32.totalorder %s96, 1
      %p838 = por %p836, %p837
      %p839 = scmp.ne.s32.totalorder %s828, %s829
      %p840 = scmp.eq.s32.totalorder %s96, 0
      %p841 = por %p839, %p840
      %p842 = scmp.ne.s32.totalorder %s828, %s829
      %p843 = scmp.eq.s32.totalorder %s97, 1
      %p844 = por %p842, %p843
      %p846 = scmp.ne.s32.totalorder %s829, %s845
      %p847 = scmp.eq.s32.totalorder %s97, 0
      %p848 = por %p846, %p847
      %s849 = ssub.s32 %s91, %s98
      %p850 = scmp.eq.s32.totalorder %s849, 0
      %s852 = sadd.s32 %s851, 1
      %s853 = scalar_select %p850, %s851, %s852
      %p856 = pneg %p850
      %p857 = scmp.eq.s32.totalorder %s91, 1
      %p858 = por %p856, %p857
      %p859 = scmp.ne.s32.totalorder %s851, %s854
      %p860 = scmp.eq.s32.totalorder %s91, 0
      %p861 = por %p859, %p860
      %p862 = scmp.ne.s32.totalorder %s851, %s854
      %p863 = scmp.eq.s32.totalorder %s96, 1
      %p864 = por %p862, %p863
      %p865 = scmp.ne.s32.totalorder %s854, %s855
      %p866 = scmp.eq.s32.totalorder %s96, 0
      %p867 = por %p865, %p866
      %p868 = scmp.ne.s32.totalorder %s854, %s855
      %p869 = scmp.eq.s32.totalorder %s97, 1
      %p870 = por %p868, %p869
      %p872 = scmp.ne.s32.totalorder %s855, %s871
      %p873 = scmp.eq.s32.totalorder %s97, 0
      %p874 = por %p872, %p873
      %s875 = ssub.s32 %s91, %s98
      %p876 = scmp.eq.s32.totalorder %s875, 0
      %s878 = sadd.s32 %s877, 1
      %s879 = scalar_select %p876, %s877, %s878
      %p882 = pneg %p876
      %p883 = scmp.eq.s32.totalorder %s91, 1
      %p884 = por %p882, %p883
      %p885 = scmp.ne.s32.totalorder %s877, %s880
      %p886 = scmp.eq.s32.totalorder %s91, 0
      %p887 = por %p885, %p886
      %p888 = scmp.ne.s32.totalorder %s877, %s880
      %p889 = scmp.eq.s32.totalorder %s96, 1
      %p890 = por %p888, %p889
      %p891 = scmp.ne.s32.totalorder %s880, %s881
      %p892 = scmp.eq.s32.totalorder %s96, 0
      %p893 = por %p891, %p892
      %p894 = scmp.ne.s32.totalorder %s880, %s881
      %p895 = scmp.eq.s32.totalorder %s97, 1
      %p896 = por %p894, %p895
      %p898 = scmp.ne.s32.totalorder %s881, %s897
      %p899 = scmp.eq.s32.totalorder %s97, 0
      %p900 = por %p898, %p899
      %s901 = ssub.s32 %s91, %s98
      %p902 = scmp.eq.s32.totalorder %s901, 0
      %s904 = sadd.s32 %s903, 1
      %s905 = scalar_select %p902, %s903, %s904
      %p908 = pneg %p902
      %p909 = scmp.eq.s32.totalorder %s91, 1
      %p910 = por %p908, %p909
      %p911 = scmp.ne.s32.totalorder %s903, %s906
      %p912 = scmp.eq.s32.totalorder %s91, 0
      %p913 = por %p911, %p912
      %p914 = scmp.ne.s32.totalorder %s903, %s906
      %p915 = scmp.eq.s32.totalorder %s96, 1
      %p916 = por %p914, %p915
      %p917 = scmp.ne.s32.totalorder %s906, %s907
      %p918 = scmp.eq.s32.totalorder %s96, 0
      %p919 = por %p917, %p918
      %p920 = scmp.ne.s32.totalorder %s906, %s907
      %p921 = scmp.eq.s32.totalorder %s97, 1
      %p922 = por %p920, %p921
      %p924 = scmp.ne.s32.totalorder %s907, %s923
      %p925 = scmp.eq.s32.totalorder %s97, 0
      %p926 = por %p924, %p925
      %p927 = scmp.le.s32.totalorder 1, %s91
      %p928 = scmp.lt.s32.totalorder %s91, 3
      %p929 = pnand %p927, %p928
      %p930 = pneg %p929
      // Predicated region
      $region9: #{resnet_dilated_forward.1} parent=5 // pred_check
        _
      $region10: #{resnet_dilated_forward.1} parent=5 // pred_check_branch
        %932 = sbr.rel (%p929) target = $region12
      $region11: #{resnet_dilated_forward.1} parent=5 // pred_region
        %s933 = ssub.s32 %s91, 1
        // Predicated region
        $region13: #{resnet_dilated_forward.1} parent=11 // pred_check
          %p934 = pneg %p138
        $region14: #{resnet_dilated_forward.1} parent=11 // pred_check_branch
          %936 = sbr.rel (%p934) target = $region16
        $region15: #{resnet_dilated_forward.1} parent=11 // pred_region
          _
        $region16: #{resnet_dilated_forward.1} parent=11 // pred_fallthru
          _
        // Predicated region
        $region17: #{resnet_dilated_forward.1} parent=11 // pred_check
          %p937 = pneg %p159
        $region18: #{resnet_dilated_forward.1} parent=11 // pred_check_branch
          %939 = sbr.rel (%p937) target = $region20
        $region19: #{resnet_dilated_forward.1} parent=11 // pred_region
          _
        $region20: #{resnet_dilated_forward.1} parent=11 // pred_fallthru
          _
        // Predicated region
        $region21: #{resnet_dilated_forward.1} parent=11 // pred_check
          %p940 = pneg %p180
        $region22: #{resnet_dilated_forward.1} parent=11 // pred_check_branch
          %942 = sbr.rel (%p940) target = $region24
        $region23: #{resnet_dilated_forward.1} parent=11 // pred_region
          _
        $region24: #{resnet_dilated_forward.1} parent=11 // pred_fallthru
          _
        // Predicated region
        $region25: #{resnet_dilated_forward.1} parent=11 // pred_check
          %p943 = pneg %p201
        $region26: #{resnet_dilated_forward.1} parent=11 // pred_check_branch
          %945 = sbr.rel (%p943) target = $region28
        $region27: #{resnet_dilated_forward.1} parent=11 // pred_region
          _
        $region28: #{resnet_dilated_forward.1} parent=11 // pred_fallthru
          _
        // Predicated region
        $region29: #{resnet_dilated_forward.1} parent=11 // pred_check
          %p946 = pneg %p222
        $region30: #{resnet_dilated_forward.1} parent=11 // pred_check_branch
          %948 = sbr.rel (%p946) target = $region32
        $region31: #{resnet_dilated_forward.1} parent=11 // pred_region
          _
        $region32: #{resnet_dilated_forward.1} parent=11 // pred_fallthru
          _
        // Predicated region
        $region33: #{resnet_dilated_forward.1} parent=11 // pred_check
          %p949 = pneg %p243
        $region34: #{resnet_dilated_forward.1} parent=11 // pred_check_branch
          %951 = sbr.rel (%p949) target = $region36
        $region35: #{resnet_dilated_forward.1} parent=11 // pred_region
          _
        $region36: #{resnet_dilated_forward.1} parent=11 // pred_fallthru
          _
        // Predicated region
        $region37: #{resnet_dilated_forward.1} parent=11 // pred_check
          %p952 = pneg %p264
        $region38: #{resnet_dilated_forward.1} parent=11 // pred_check_branch
          %954 = sbr.rel (%p952) target = $region40
        $region39: #{resnet_dilated_forward.1} parent=11 // pred_region
          _
        $region40: #{resnet_dilated_forward.1} parent=11 // pred_fallthru
          _
        // Predicated region
        $region41: #{resnet_dilated_forward.1} parent=11 // pred_check
          %p955 = pneg %p285
        $region42: #{resnet_dilated_forward.1} parent=11 // pred_check_branch
          %957 = sbr.rel (%p955) target = $region44
        $region43: #{resnet_dilated_forward.1} parent=11 // pred_region
          _
        $region44: #{resnet_dilated_forward.1} parent=11 // pred_fallthru
          _
        // Predicated region
        $region45: #{resnet_dilated_forward.1} parent=11 // pred_check
          %p958 = pneg %p306
        $region46: #{resnet_dilated_forward.1} parent=11 // pred_check_branch
          %960 = sbr.rel (%p958) target = $region48
        $region47: #{resnet_dilated_forward.1} parent=11 // pred_region
          _
        $region48: #{resnet_dilated_forward.1} parent=11 // pred_fallthru
          _
        // Predicated region
        $region49: #{resnet_dilated_forward.1} parent=11 // pred_check
          %p961 = pneg %p327
        $region50: #{resnet_dilated_forward.1} parent=11 // pred_check_branch
          %963 = sbr.rel (%p961) target = $region52
        $region51: #{resnet_dilated_forward.1} parent=11 // pred_region
          _
        $region52: #{resnet_dilated_forward.1} parent=11 // pred_fallthru
          _
        // Predicated region
        $region53: #{resnet_dilated_forward.1} parent=11 // pred_check
          %p964 = pneg %p348
        $region54: #{resnet_dilated_forward.1} parent=11 // pred_check_branch
          %966 = sbr.rel (%p964) target = $region56
        $region55: #{resnet_dilated_forward.1} parent=11 // pred_region
          _
        $region56: #{resnet_dilated_forward.1} parent=11 // pred_fallthru
          _
        // Predicated region
        $region57: #{resnet_dilated_forward.1} parent=11 // pred_check
          %p967 = pneg %p369
        $region58: #{resnet_dilated_forward.1} parent=11 // pred_check_branch
          %969 = sbr.rel (%p967) target = $region60
        $region59: #{resnet_dilated_forward.1} parent=11 // pred_region
          _
        $region60: #{resnet_dilated_forward.1} parent=11 // pred_fallthru
          _
        // Predicated region
        $region61: #{resnet_dilated_forward.1} parent=11 // pred_check
          %p970 = pneg %p390
        $region62: #{resnet_dilated_forward.1} parent=11 // pred_check_branch
          %972 = sbr.rel (%p970) target = $region64
        $region63: #{resnet_dilated_forward.1} parent=11 // pred_region
          _
        $region64: #{resnet_dilated_forward.1} parent=11 // pred_fallthru
          _
        // Predicated region
        $region65: #{resnet_dilated_forward.1} parent=11 // pred_check
          %p973 = pneg %p411
        $region66: #{resnet_dilated_forward.1} parent=11 // pred_check_branch
          %975 = sbr.rel (%p973) target = $region68
        $region67: #{resnet_dilated_forward.1} parent=11 // pred_region
          _
        $region68: #{resnet_dilated_forward.1} parent=11 // pred_fallthru
          _
        // Predicated region
        $region69: #{resnet_dilated_forward.1} parent=11 // pred_check
          %p976 = pneg %p432
        $region70: #{resnet_dilated_forward.1} parent=11 // pred_check_branch
          %978 = sbr.rel (%p976) target = $region72
        $region71: #{resnet_dilated_forward.1} parent=11 // pred_region
          _
        $region72: #{resnet_dilated_forward.1} parent=11 // pred_fallthru
          _
        // Predicated region
        $region73: #{resnet_dilated_forward.1} parent=11 // pred_check
          %p979 = pneg %p453
        $region74: #{resnet_dilated_forward.1} parent=11 // pred_check_branch
          %981 = sbr.rel (%p979) target = $region76
        $region75: #{resnet_dilated_forward.1} parent=11 // pred_region
          _
        $region76: #{resnet_dilated_forward.1} parent=11 // pred_fallthru
          _
        // Predicated region
        $region77: #{resnet_dilated_forward.1} parent=11 // pred_check
          %p982 = pneg %p474
        $region78: #{resnet_dilated_forward.1} parent=11 // pred_check_branch
          %984 = sbr.rel (%p982) target = $region80
        $region79: #{resnet_dilated_forward.1} parent=11 // pred_region
          _
        $region80: #{resnet_dilated_forward.1} parent=11 // pred_fallthru
          _
        // Predicated region
        $region81: #{resnet_dilated_forward.1} parent=11 // pred_check
          %p985 = pneg %p495
        $region82: #{resnet_dilated_forward.1} parent=11 // pred_check_branch
          %987 = sbr.rel (%p985) target = $region84
        $region83: #{resnet_dilated_forward.1} parent=11 // pred_region
          _
        $region84: #{resnet_dilated_forward.1} parent=11 // pred_fallthru
          _
        // Predicated region
        $region85: #{resnet_dilated_forward.1} parent=11 // pred_check
          %p988 = pneg %p516
        $region86: #{resnet_dilated_forward.1} parent=11 // pred_check_branch
          %990 = sbr.rel (%p988) target = $region88
        $region87: #{resnet_dilated_forward.1} parent=11 // pred_region
          _
        $region88: #{resnet_dilated_forward.1} parent=11 // pred_fallthru
          _
        // Predicated region
        $region89: #{resnet_dilated_forward.1} parent=11 // pred_check
          %p991 = pneg %p537
        $region90: #{resnet_dilated_forward.1} parent=11 // pred_check_branch
          %993 = sbr.rel (%p991) target = $region92
        $region91: #{resnet_dilated_forward.1} parent=11 // pred_region
          _
        $region92: #{resnet_dilated_forward.1} parent=11 // pred_fallthru
          _
        // Predicated region
        $region93: #{resnet_dilated_forward.1} parent=11 // pred_check
          %p994 = pneg %p558
        $region94: #{resnet_dilated_forward.1} parent=11 // pred_check_branch
          %996 = sbr.rel (%p994) target = $region96
        $region95: #{resnet_dilated_forward.1} parent=11 // pred_region
          _
        $region96: #{resnet_dilated_forward.1} parent=11 // pred_fallthru
          _
        // Predicated region
        $region97: #{resnet_dilated_forward.1} parent=11 // pred_check
          %p997 = pneg %p579
        $region98: #{resnet_dilated_forward.1} parent=11 // pred_check_branch
          %999 = sbr.rel (%p997) target = $region100
        $region99: #{resnet_dilated_forward.1} parent=11 // pred_region
          _
        $region100: #{resnet_dilated_forward.1} parent=11 // pred_fallthru
          _
        // Predicated region
        $region101: #{resnet_dilated_forward.1} parent=11 // pred_check
          %p1000 = pneg %p600
        $region102: #{resnet_dilated_forward.1} parent=11 // pred_check_branch
          %1002 = sbr.rel (%p1000) target = $region104
        $region103: #{resnet_dilated_forward.1} parent=11 // pred_region
          _
        $region104: #{resnet_dilated_forward.1} parent=11 // pred_fallthru
          _
        // Predicated region
        $region105: #{resnet_dilated_forward.1} parent=11 // pred_check
          %p1003 = pneg %p621
        $region106: #{resnet_dilated_forward.1} parent=11 // pred_check_branch
          %1005 = sbr.rel (%p1003) target = $region108
        $region107: #{resnet_dilated_forward.1} parent=11 // pred_region
          _
        $region108: #{resnet_dilated_forward.1} parent=11 // pred_fallthru
          _
        // Predicated region
        $region109: #{resnet_dilated_forward.1} parent=11 // pred_check
          %p1006 = pneg %p642
        $region110: #{resnet_dilated_forward.1} parent=11 // pred_check_branch
          %1008 = sbr.rel (%p1006) target = $region112
        $region111: #{resnet_dilated_forward.1} parent=11 // pred_region
          _
        $region112: #{resnet_dilated_forward.1} parent=11 // pred_fallthru
          _
        // Predicated region
        $region113: #{resnet_dilated_forward.1} parent=11 // pred_check
          %p1009 = pneg %p663
        $region114: #{resnet_dilated_forward.1} parent=11 // pred_check_branch
          %1011 = sbr.rel (%p1009) target = $region116
        $region115: #{resnet_dilated_forward.1} parent=11 // pred_region
          _
        $region116: #{resnet_dilated_forward.1} parent=11 // pred_fallthru
          _
        // Predicated region
        $region117: #{resnet_dilated_forward.1} parent=11 // pred_check
          %p1012 = pneg %p684
        $region118: #{resnet_dilated_forward.1} parent=11 // pred_check_branch
          %1014 = sbr.rel (%p1012) target = $region120
        $region119: #{resnet_dilated_forward.1} parent=11 // pred_region
          _
        $region120: #{resnet_dilated_forward.1} parent=11 // pred_fallthru
          _
        // Predicated region
        $region121: #{resnet_dilated_forward.1} parent=11 // pred_check
          %p1015 = pneg %p705
        $region122: #{resnet_dilated_forward.1} parent=11 // pred_check_branch
          %1017 = sbr.rel (%p1015) target = $region124
        $region123: #{resnet_dilated_forward.1} parent=11 // pred_region
          _
        $region124: #{resnet_dilated_forward.1} parent=11 // pred_fallthru
          _
        // Predicated region
        $region125: #{resnet_dilated_forward.1} parent=11 // pred_check
          %p1018 = pneg %p726
        $region126: #{resnet_dilated_forward.1} parent=11 // pred_check_branch
          %1020 = sbr.rel (%p1018) target = $region128
        $region127: #{resnet_dilated_forward.1} parent=11 // pred_region
          _
        $region128: #{resnet_dilated_forward.1} parent=11 // pred_fallthru
          _
        // Predicated region
        $region129: #{resnet_dilated_forward.1} parent=11 // pred_check
          %p1021 = pneg %p747
        $region130: #{resnet_dilated_forward.1} parent=11 // pred_check_branch
          %1023 = sbr.rel (%p1021) target = $region132
        $region131: #{resnet_dilated_forward.1} parent=11 // pred_region
          _
        $region132: #{resnet_dilated_forward.1} parent=11 // pred_fallthru
          _
        // Predicated region
        $region133: #{resnet_dilated_forward.1} parent=11 // pred_check
          %p1024 = pneg %p768
        $region134: #{resnet_dilated_forward.1} parent=11 // pred_check_branch
          %1026 = sbr.rel (%p1024) target = $region136
        $region135: #{resnet_dilated_forward.1} parent=11 // pred_region
          _
        $region136: #{resnet_dilated_forward.1} parent=11 // pred_fallthru
          _
        // Predicated region
        $region137: #{resnet_dilated_forward.1} parent=11 // pred_check
          %p1027 = pneg %p789
        $region138: #{resnet_dilated_forward.1} parent=11 // pred_check_branch
          %1029 = sbr.rel (%p1027) target = $region140
        $region139: #{resnet_dilated_forward.1} parent=11 // pred_region
          _
        $region140: #{resnet_dilated_forward.1} parent=11 // pred_fallthru
          _
      $region12: #{resnet_dilated_forward.1} parent=5 // pred_fallthru
        _
      %p1030 = scmp.lt.s32.totalorder %s91, 2
      // Predicated region
      $region141: #{resnet_dilated_forward.1} parent=5 // pred_check
        %p1031 = pneg %p1030
      $region142: #{resnet_dilated_forward.1} parent=5 // pred_check_branch
        %1033 = sbr.rel (%p1031) target = $region144
      $region143: #{resnet_dilated_forward.1} parent=5 // pred_region
        // Predicated region
        $region145: #{resnet_dilated_forward.1} parent=143 // pred_check
          %p1034 = pneg %p111
        $region146: #{resnet_dilated_forward.1} parent=143 // pred_check_branch
          %1036 = sbr.rel (%p1034) target = $region148
        $region147: #{resnet_dilated_forward.1} parent=143 // pred_region
          %p1037 = scmp.lt.s32.totalorder %s91, 1
          %s1038 = scalar_select %p1037, %s91, 1
          %s1039 = smul.addr %s1038, 32
          %s1040 = smul.addr %s1039, 4
          %s1041 = scalar_lea.vmem %s1, %s1040
        $region148: #{resnet_dilated_forward.1} parent=143 // pred_fallthru
          _
      $region144: #{resnet_dilated_forward.1} parent=5 // pred_fallthru
        _
      %p1042 = scmp.le.s32.totalorder 1, %s91
      %p1043 = scmp.lt.s32.totalorder %s91, 3
      %p1044 = pnand %p1042, %p1043
      %p1045 = pneg %p1044
      // Predicated region
      $region149: #{resnet_dilated_forward.1} parent=5 // pred_check
        _
      $region150: #{resnet_dilated_forward.1} parent=5 // pred_check_branch
        %1047 = sbr.rel (%p1044) target = $region152
      $region151: #{resnet_dilated_forward.1} parent=5 // pred_region
        %s1048 = ssub.s32 %s91, 1
        %p1049 = scmp.lt.s32.totalorder %s96, 1
        %s1050 = scalar_select %p1049, %s96, 1
        %s1051 = smul.addr %s1050, 32
        %s1052 = smul.addr %s1051, 4
        %s1053 = scalar_lea.vmem %s1, %s1052
        %p1054 = pneg %p117
        %p1055 = pneg %p114
        %p1056 = pneg %p138
        %p1057 = pneg %p135
        %p1058 = pneg %p159
        %p1059 = pneg %p156
        %p1060 = pneg %p180
        %p1061 = pneg %p177
        %p1062 = pneg %p201
        %p1063 = pneg %p198
        %p1064 = pneg %p222
        %p1065 = pneg %p219
        %p1066 = pneg %p243
        %p1067 = pneg %p240
        %p1068 = pneg %p264
        %p1069 = pneg %p261
        %p1070 = pneg %p285
        %p1071 = pneg %p282
        %p1072 = pneg %p306
        %p1073 = pneg %p303
        %p1074 = pneg %p327
        %p1075 = pneg %p324
        %p1076 = pneg %p348
        %p1077 = pneg %p345
        %p1078 = pneg %p369
        %p1079 = pneg %p366
        %p1080 = pneg %p390
        %p1081 = pneg %p387
        %p1082 = pneg %p411
        %p1083 = pneg %p408
        %p1084 = pneg %p432
        %p1085 = pneg %p429
        %p1086 = pneg %p453
        %p1087 = pneg %p450
        %p1088 = pneg %p474
        %p1089 = pneg %p471
        %p1090 = pneg %p495
        %p1091 = pneg %p492
        %p1092 = pneg %p516
        %p1093 = pneg %p513
        %p1094 = pneg %p537
        %p1095 = pneg %p534
        %p1096 = pneg %p558
        %p1097 = pneg %p555
        %p1098 = pneg %p579
        %p1099 = pneg %p576
        %p1100 = pneg %p600
        %p1101 = pneg %p597
        %p1102 = pneg %p621
        %p1103 = pneg %p618
        %p1104 = pneg %p642
        %p1105 = pneg %p639
        %p1106 = pneg %p663
        %p1107 = pneg %p660
        %p1108 = pneg %p684
        %p1109 = pneg %p681
        %p1110 = pneg %p705
        %p1111 = pneg %p702
        %p1112 = pneg %p726
        %p1113 = pneg %p723
        %p1114 = pneg %p747
        %p1115 = pneg %p744
        %p1116 = pneg %p768
        %p1117 = pneg %p765
        %p1118 = pneg %p789
        %p1119 = pneg %p786
        %p1120 = pneg %p815
        %p1121 = pneg %p812
        %s1122 = sand.u32 %s802, 1
        %s1123 = scalar_lea.sflag [#allocation3], %s1122
        %s1124 = sand.u32 %s802, 1
        %s1125 = smul.addr %s1124, 128
        %s1126 = scalar_lea.vmem [#allocation2], %s1125
        %p1127 = pneg %p841
        %p1128 = pneg %p838
        %s1129 = sand.u32 %s96, 1
        %s1130 = scalar_lea.sflag [#allocation5], %s1129
        %s1131 = sand.u32 %s828, 1
        %s1132 = smul.addr %s1131, 32
        %s1133 = scalar_lea.vmem [#allocation4], %s1132
        %p1134 = pneg %p867
        %p1135 = pneg %p864
        %s1136 = sand.u32 %s96, 1
        %s1137 = scalar_lea.sflag [#allocation5], %s1136
        %s1138 = sand.u32 %s854, 1
        %s1139 = smul.addr %s1138, 8
        %s1140 = scalar_lea.vmem [#allocation6], %s1139
        %p1141 = pneg %p893
        %p1142 = pneg %p890
        %s1143 = sand.u32 %s880, 1
        %s1144 = scalar_lea.sflag [#allocation8], %s1143
        %s1145 = sand.u32 %s880, 1
        %s1146 = smul.addr %s1145, 8
        %s1147 = scalar_lea.vmem [#allocation7], %s1146
        %p1148 = pneg %p919
        %p1149 = pneg %p916
        %p1150 = scmp.lt.s32.totalorder %s96, 1
        %s1151 = scalar_select %p1150, %s96, 1
        %s1152 = smul.addr %s1151, 4
        %s1153 = smul.addr %s1152, 2
        %s1154 = scalar_lea.vmem %s75, %s1153
        %p1155 = scmp.lt.s32.totalorder %s96, 1
        %s1156 = scalar_select %p1155, %s96, 1
        %s1157 = smul.addr %s1156, 32
        %s1158 = smul.addr %s1157, 4
        %s1159 = scalar_lea.vmem %s1, %s1158
        %p1160 = scmp.lt.s32.totalorder %s96, 1
        %s1161 = scalar_select %p1160, %s96, 1
        %s1162 = smul.addr %s1161, 4
        %s1163 = smul.addr %s1162, 2
        %s1164 = scalar_lea.vmem %s75, %s1163
        %v1166 = vld [vmem:[%s7] sm:$0xf]
        %v1167 = vld [vmem:[%s7 + $0x4] sm:$0xf]
        %v1168 = vld [vmem:[%s7 + $0x8] sm:$0xf]
        %v1169 = vld [vmem:[%s7 + $0xc] sm:$0xf]
        %v1170 = vld [vmem:[%s9] sm:$0x1]
        %v1171 = vld [vmem:[%s11] sm:$0xf]
        %v1172 = vld [vmem:[%s11 + $0x4] sm:$0xf]
        %v1173 = vld [vmem:[%s11 + $0x8] sm:$0xf]
        %v1174 = vld [vmem:[%s11 + $0xc] sm:$0xf]
        %v1175 = vld [vmem:[%s11 + $0x10] sm:$0xf]
        %v1176 = vld [vmem:[%s11 + $0x14] sm:$0xf]
        %v1177 = vld [vmem:[%s11 + $0x18] sm:$0xf]
        %v1178 = vld [vmem:[%s11 + $0x1c] sm:$0xf]
        %v1179 = vld [vmem:[%s11 + $0x20] sm:$0xf]
        %v1180 = vld [vmem:[%s13] sm:$0x1]
        %v1181 = vld [vmem:[%s15] sm:$0xf]
        %v1182 = vld [vmem:[%s15 + $0x4] sm:$0xf]
        %v1183 = vld [vmem:[%s15 + $0x8] sm:$0xf]
        %v1184 = vld [vmem:[%s15 + $0xc] sm:$0xf]
        %v1185 = vld [vmem:[%s15 + $0x10] sm:$0xf]
        %v1186 = vld [vmem:[%s15 + $0x14] sm:$0xf]
        %v1187 = vld [vmem:[%s15 + $0x18] sm:$0xf]
        %v1188 = vld [vmem:[%s15 + $0x1c] sm:$0xf]
        %v1189 = vld [vmem:[%s15 + $0x20] sm:$0xf]
        %v1190 = vld [vmem:[%s17] sm:$0x1]
        %v1191 = vld [vmem:[%s19] sm:$0xf]
        %v1192 = vld [vmem:[%s19 + $0x4] sm:$0xf]
        %v1193 = vld [vmem:[%s19 + $0x8] sm:$0xf]
        %v1194 = vld [vmem:[%s19 + $0xc] sm:$0xf]
        %v1195 = vld [vmem:[%s19 + $0x10] sm:$0xf]
        %v1196 = vld [vmem:[%s19 + $0x14] sm:$0xf]
        %v1197 = vld [vmem:[%s19 + $0x18] sm:$0xf]
        %v1198 = vld [vmem:[%s19 + $0x1c] sm:$0xf]
        %v1199 = vld [vmem:[%s19 + $0x20] sm:$0xf]
        %v1200 = vld [vmem:[%s19 + $0x24] sm:$0xf]
        %v1201 = vld [vmem:[%s19 + $0x28] sm:$0xf]
        %v1202 = vld [vmem:[%s19 + $0x2c] sm:$0xf]
        %v1203 = vld [vmem:[%s19 + $0x30] sm:$0xf]
        %v1204 = vld [vmem:[%s19 + $0x34] sm:$0xf]
        %v1205 = vld [vmem:[%s19 + $0x38] sm:$0xf]
        %v1206 = vld [vmem:[%s19 + $0x3c] sm:$0xf]
        %v1207 = vld [vmem:[%s19 + $0x40] sm:$0xf]
        %v1208 = vld [vmem:[%s19 + $0x44] sm:$0xf]
        %v1209 = vld [vmem:[%s21] sm:$0x1]
        %v1210 = vld [vmem:[%s23] sm:$0xf]
        %v1211 = vld [vmem:[%s23 + $0x4] sm:$0xf]
        %v1212 = vld [vmem:[%s25] sm:$0x1]
        %v1213 = vld [vmem:[%s27] sm:$0xf]
        %v1214 = vld [vmem:[%s27 + $0x4] sm:$0xf]
        %v1215 = vld [vmem:[%s27 + $0x8] sm:$0xf]
        %v1216 = vld [vmem:[%s27 + $0xc] sm:$0xf]
        %v1217 = vld [vmem:[%s27 + $0x10] sm:$0xf]
        %v1218 = vld [vmem:[%s27 + $0x14] sm:$0xf]
        %v1219 = vld [vmem:[%s27 + $0x18] sm:$0xf]
        %v1220 = vld [vmem:[%s27 + $0x1c] sm:$0xf]
        %v1221 = vld [vmem:[%s27 + $0x20] sm:$0xf]
        %v1222 = vld [vmem:[%s29] sm:$0x1]
        %v1223 = vld [vmem:[%s31] sm:$0xf]
        %v1224 = vld [vmem:[%s31 + $0x4] sm:$0xf]
        %v1225 = vld [vmem:[%s31 + $0x8] sm:$0xf]
        %v1226 = vld [vmem:[%s31 + $0xc] sm:$0xf]
        %v1227 = vld [vmem:[%s31 + $0x10] sm:$0xf]
        %v1228 = vld [vmem:[%s31 + $0x14] sm:$0xf]
        %v1229 = vld [vmem:[%s31 + $0x18] sm:$0xf]
        %v1230 = vld [vmem:[%s31 + $0x1c] sm:$0xf]
        %v1231 = vld [vmem:[%s31 + $0x20] sm:$0xf]
        %v1232 = vld [vmem:[%s33] sm:$0x1]
        %v1233 = vld [vmem:[%s35] sm:$0xf]
        %v1234 = vld [vmem:[%s37] sm:$0x1]
        %v1235 = vld [vmem:[%s39] sm:$0xf]
        %v1236 = vld [vmem:[%s39 + $0x4] sm:$0xf]
        %v1237 = vld [vmem:[%s39 + $0x8] sm:$0xf]
        %v1238 = vld [vmem:[%s39 + $0xc] sm:$0xf]
        %v1239 = vld [vmem:[%s39 + $0x10] sm:$0xf]
        %v1240 = vld [vmem:[%s39 + $0x14] sm:$0xf]
        %v1241 = vld [vmem:[%s39 + $0x18] sm:$0xf]
        %v1242 = vld [vmem:[%s39 + $0x1c] sm:$0xf]
        %v1243 = vld [vmem:[%s39 + $0x20] sm:$0xf]
        %v1244 = vld [vmem:[%s39 + $0x24] sm:$0xf]
        %v1245 = vld [vmem:[%s39 + $0x28] sm:$0xf]
        %v1246 = vld [vmem:[%s39 + $0x2c] sm:$0xf]
        %v1247 = vld [vmem:[%s39 + $0x30] sm:$0xf]
        %v1248 = vld [vmem:[%s39 + $0x34] sm:$0xf]
        %v1249 = vld [vmem:[%s39 + $0x38] sm:$0xf]
        %v1250 = vld [vmem:[%s39 + $0x3c] sm:$0xf]
        %v1251 = vld [vmem:[%s39 + $0x40] sm:$0xf]
        %v1252 = vld [vmem:[%s39 + $0x44] sm:$0xf]
        %v1253 = vld [vmem:[%s41] sm:$0x1]
        %v1254 = vld [vmem:[%s43] sm:$0xf]
        %v1255 = vld [vmem:[%s43 + $0x4] sm:$0xf]
        %v1256 = vld [vmem:[%s43 + $0x8] sm:$0xf]
        %v1257 = vld [vmem:[%s43 + $0xc] sm:$0xf]
        %v1258 = vld [vmem:[%s43 + $0x10] sm:$0xf]
        %v1259 = vld [vmem:[%s43 + $0x14] sm:$0xf]
        %v1260 = vld [vmem:[%s43 + $0x18] sm:$0xf]
        %v1261 = vld [vmem:[%s43 + $0x1c] sm:$0xf]
        %v1262 = vld [vmem:[%s43 + $0x20] sm:$0xf]
        %v1263 = vld [vmem:[%s43 + $0x24] sm:$0xf]
        %v1264 = vld [vmem:[%s43 + $0x28] sm:$0xf]
        %v1265 = vld [vmem:[%s43 + $0x2c] sm:$0xf]
        %v1266 = vld [vmem:[%s43 + $0x30] sm:$0xf]
        %v1267 = vld [vmem:[%s43 + $0x34] sm:$0xf]
        %v1268 = vld [vmem:[%s43 + $0x38] sm:$0xf]
        %v1269 = vld [vmem:[%s43 + $0x3c] sm:$0xf]
        %v1270 = vld [vmem:[%s43 + $0x40] sm:$0xf]
        %v1271 = vld [vmem:[%s43 + $0x44] sm:$0xf]
        %v1272 = vld [vmem:[%s45] sm:$0x1]
        %v1273 = vld [vmem:[%s47] sm:$0xf]
        %v1274 = vld [vmem:[%s47 + $0x4] sm:$0xf]
        %v1275 = vld [vmem:[%s49] sm:$0x1]
        %v1276 = vld [vmem:[%s51] sm:$0xf]
        %v1277 = vld [vmem:[%s51 + $0x4] sm:$0xf]
        %v1278 = vld [vmem:[%s51 + $0x8] sm:$0xf]
        %v1279 = vld [vmem:[%s51 + $0xc] sm:$0xf]
        %v1280 = vld [vmem:[%s51 + $0x10] sm:$0xf]
        %v1281 = vld [vmem:[%s51 + $0x14] sm:$0xf]
        %v1282 = vld [vmem:[%s51 + $0x18] sm:$0xf]
        %v1283 = vld [vmem:[%s51 + $0x1c] sm:$0xf]
        %v1284 = vld [vmem:[%s51 + $0x20] sm:$0xf]
        %v1285 = vld [vmem:[%s51 + $0x24] sm:$0xf]
        %v1286 = vld [vmem:[%s51 + $0x28] sm:$0xf]
        %v1287 = vld [vmem:[%s51 + $0x2c] sm:$0xf]
        %v1288 = vld [vmem:[%s51 + $0x30] sm:$0xf]
        %v1289 = vld [vmem:[%s51 + $0x34] sm:$0xf]
        %v1290 = vld [vmem:[%s51 + $0x38] sm:$0xf]
        %v1291 = vld [vmem:[%s51 + $0x3c] sm:$0xf]
        %v1292 = vld [vmem:[%s51 + $0x40] sm:$0xf]
        %v1293 = vld [vmem:[%s51 + $0x44] sm:$0xf]
        %v1294 = vld [vmem:[%s51 + $0x48] sm:$0xf]
        %v1295 = vld [vmem:[%s51 + $0x4c] sm:$0xf]
        %v1296 = vld [vmem:[%s51 + $0x50] sm:$0xf]
        %v1297 = vld [vmem:[%s51 + $0x54] sm:$0xf]
        %v1298 = vld [vmem:[%s51 + $0x58] sm:$0xf]
        %v1299 = vld [vmem:[%s51 + $0x5c] sm:$0xf]
        %v1300 = vld [vmem:[%s51 + $0x60] sm:$0xf]
        %v1301 = vld [vmem:[%s51 + $0x64] sm:$0xf]
        %v1302 = vld [vmem:[%s51 + $0x68] sm:$0xf]
        %v1303 = vld [vmem:[%s51 + $0x6c] sm:$0xf]
        %v1304 = vld [vmem:[%s51 + $0x70] sm:$0xf]
        %v1305 = vld [vmem:[%s51 + $0x74] sm:$0xf]
        %v1306 = vld [vmem:[%s51 + $0x78] sm:$0xf]
        %v1307 = vld [vmem:[%s51 + $0x7c] sm:$0xf]
        %v1308 = vld [vmem:[%s51 + $0x80] sm:$0xf]
        %v1309 = vld [vmem:[%s51 + $0x84] sm:$0xf]
        %v1310 = vld [vmem:[%s51 + $0x88] sm:$0xf]
        %v1311 = vld [vmem:[%s51 + $0x8c] sm:$0xf]
        %v1312 = vld [vmem:[%s53] sm:$0x1]
        %v1313 = vld [vmem:[%s55] sm:$0xf]
        %v1314 = vld [vmem:[%s55 + $0x4] sm:$0xf]
        %v1315 = vld [vmem:[%s55 + $0x8] sm:$0xf]
        %v1316 = vld [vmem:[%s55 + $0xc] sm:$0xf]
        %v1317 = vld [vmem:[%s55 + $0x10] sm:$0xf]
        %v1318 = vld [vmem:[%s55 + $0x14] sm:$0xf]
        %v1319 = vld [vmem:[%s55 + $0x18] sm:$0xf]
        %v1320 = vld [vmem:[%s55 + $0x1c] sm:$0xf]
        %v1321 = vld [vmem:[%s55 + $0x20] sm:$0xf]
        %v1322 = vld [vmem:[%s55 + $0x24] sm:$0xf]
        %v1323 = vld [vmem:[%s55 + $0x28] sm:$0xf]
        %v1324 = vld [vmem:[%s55 + $0x2c] sm:$0xf]
        %v1325 = vld [vmem:[%s55 + $0x30] sm:$0xf]
        %v1326 = vld [vmem:[%s55 + $0x34] sm:$0xf]
        %v1327 = vld [vmem:[%s55 + $0x38] sm:$0xf]
        %v1328 = vld [vmem:[%s55 + $0x3c] sm:$0xf]
        %v1329 = vld [vmem:[%s55 + $0x40] sm:$0xf]
        %v1330 = vld [vmem:[%s55 + $0x44] sm:$0xf]
        %v1331 = vld [vmem:[%s55 + $0x48] sm:$0xf]
        %v1332 = vld [vmem:[%s55 + $0x4c] sm:$0xf]
        %v1333 = vld [vmem:[%s55 + $0x50] sm:$0xf]
        %v1334 = vld [vmem:[%s55 + $0x54] sm:$0xf]
        %v1335 = vld [vmem:[%s55 + $0x58] sm:$0xf]
        %v1336 = vld [vmem:[%s55 + $0x5c] sm:$0xf]
        %v1337 = vld [vmem:[%s55 + $0x60] sm:$0xf]
        %v1338 = vld [vmem:[%s55 + $0x64] sm:$0xf]
        %v1339 = vld [vmem:[%s55 + $0x68] sm:$0xf]
        %v1340 = vld [vmem:[%s55 + $0x6c] sm:$0xf]
        %v1341 = vld [vmem:[%s55 + $0x70] sm:$0xf]
        %v1342 = vld [vmem:[%s55 + $0x74] sm:$0xf]
        %v1343 = vld [vmem:[%s55 + $0x78] sm:$0xf]
        %v1344 = vld [vmem:[%s55 + $0x7c] sm:$0xf]
        %v1345 = vld [vmem:[%s55 + $0x80] sm:$0xf]
        %v1346 = vld [vmem:[%s55 + $0x84] sm:$0xf]
        %v1347 = vld [vmem:[%s55 + $0x88] sm:$0xf]
        %v1348 = vld [vmem:[%s55 + $0x8c] sm:$0xf]
        %v1349 = vld [vmem:[%s57] sm:$0x1]
        %v1350 = vld [vmem:[%s59] sm:$0xf]
        %v1351 = vld [vmem:[%s59 + $0x4] sm:$0xf]
        %v1352 = vld [vmem:[%s59 + $0x8] sm:$0xf]
        %v1353 = vld [vmem:[%s59 + $0xc] sm:$0xf]
        %v1354 = vld [vmem:[%s61] sm:$0x1]
        %v1355 = vld [vmem:[%s63] sm:$0xf]
        %v1356 = vld [vmem:[%s63 + $0x4] sm:$0xf]
        %v1357 = vld [vmem:[%s63 + $0x8] sm:$0xf]
        %v1358 = vld [vmem:[%s63 + $0xc] sm:$0xf]
        %v1359 = vld [vmem:[%s63 + $0x10] sm:$0xf]
        %v1360 = vld [vmem:[%s63 + $0x14] sm:$0xf]
        %v1361 = vld [vmem:[%s63 + $0x18] sm:$0xf]
        %v1362 = vld [vmem:[%s63 + $0x1c] sm:$0xf]
        %v1363 = vld [vmem:[%s63 + $0x20] sm:$0xf]
        %v1364 = vld [vmem:[%s63 + $0x24] sm:$0xf]
        %v1365 = vld [vmem:[%s63 + $0x28] sm:$0xf]
        %v1366 = vld [vmem:[%s63 + $0x2c] sm:$0xf]
        %v1367 = vld [vmem:[%s63 + $0x30] sm:$0xf]
        %v1368 = vld [vmem:[%s63 + $0x34] sm:$0xf]
        %v1369 = vld [vmem:[%s63 + $0x38] sm:$0xf]
        %v1370 = vld [vmem:[%s63 + $0x3c] sm:$0xf]
        %v1371 = vld [vmem:[%s63 + $0x40] sm:$0xf]
        %v1372 = vld [vmem:[%s63 + $0x44] sm:$0xf]
        %v1373 = vld [vmem:[%s63 + $0x48] sm:$0xf]
        %v1374 = vld [vmem:[%s63 + $0x4c] sm:$0xf]
        %v1375 = vld [vmem:[%s63 + $0x50] sm:$0xf]
        %v1376 = vld [vmem:[%s63 + $0x54] sm:$0xf]
        %v1377 = vld [vmem:[%s63 + $0x58] sm:$0xf]
        %v1378 = vld [vmem:[%s63 + $0x5c] sm:$0xf]
        %v1379 = vld [vmem:[%s63 + $0x60] sm:$0xf]
        %v1380 = vld [vmem:[%s63 + $0x64] sm:$0xf]
        %v1381 = vld [vmem:[%s63 + $0x68] sm:$0xf]
        %v1382 = vld [vmem:[%s63 + $0x6c] sm:$0xf]
        %v1383 = vld [vmem:[%s63 + $0x70] sm:$0xf]
        %v1384 = vld [vmem:[%s63 + $0x74] sm:$0xf]
        %v1385 = vld [vmem:[%s63 + $0x78] sm:$0xf]
        %v1386 = vld [vmem:[%s63 + $0x7c] sm:$0xf]
        %v1387 = vld [vmem:[%s63 + $0x80] sm:$0xf]
        %v1388 = vld [vmem:[%s63 + $0x84] sm:$0xf]
        %v1389 = vld [vmem:[%s63 + $0x88] sm:$0xf]
        %v1390 = vld [vmem:[%s63 + $0x8c] sm:$0xf]
        %v1391 = vld [vmem:[%s63 + $0x90] sm:$0xf]
        %v1392 = vld [vmem:[%s63 + $0x94] sm:$0xf]
        %v1393 = vld [vmem:[%s63 + $0x98] sm:$0xf]
        %v1394 = vld [vmem:[%s63 + $0x9c] sm:$0xf]
        %v1395 = vld [vmem:[%s63 + $0xa0] sm:$0xf]
        %v1396 = vld [vmem:[%s63 + $0xa4] sm:$0xf]
        %v1397 = vld [vmem:[%s63 + $0xa8] sm:$0xf]
        %v1398 = vld [vmem:[%s63 + $0xac] sm:$0xf]
        %v1399 = vld [vmem:[%s63 + $0xb0] sm:$0xf]
        %v1400 = vld [vmem:[%s63 + $0xb4] sm:$0xf]
        %v1401 = vld [vmem:[%s63 + $0xb8] sm:$0xf]
        %v1402 = vld [vmem:[%s63 + $0xbc] sm:$0xf]
        %v1403 = vld [vmem:[%s63 + $0xc0] sm:$0xf]
        %v1404 = vld [vmem:[%s63 + $0xc4] sm:$0xf]
        %v1405 = vld [vmem:[%s63 + $0xc8] sm:$0xf]
        %v1406 = vld [vmem:[%s63 + $0xcc] sm:$0xf]
        %v1407 = vld [vmem:[%s63 + $0xd0] sm:$0xf]
        %v1408 = vld [vmem:[%s63 + $0xd4] sm:$0xf]
        %v1409 = vld [vmem:[%s63 + $0xd8] sm:$0xf]
        %v1410 = vld [vmem:[%s63 + $0xdc] sm:$0xf]
        %v1411 = vld [vmem:[%s63 + $0xe0] sm:$0xf]
        %v1412 = vld [vmem:[%s63 + $0xe4] sm:$0xf]
        %v1413 = vld [vmem:[%s63 + $0xe8] sm:$0xf]
        %v1414 = vld [vmem:[%s63 + $0xec] sm:$0xf]
        %v1415 = vld [vmem:[%s63 + $0xf0] sm:$0xf]
        %v1416 = vld [vmem:[%s63 + $0xf4] sm:$0xf]
        %v1417 = vld [vmem:[%s63 + $0xf8] sm:$0xf]
        %v1418 = vld [vmem:[%s63 + $0xfc] sm:$0xf]
        %v1419 = vld [vmem:[%s63 + $0x100] sm:$0xf]
        %v1420 = vld [vmem:[%s63 + $0x104] sm:$0xf]
        %v1421 = vld [vmem:[%s63 + $0x108] sm:$0xf]
        %v1422 = vld [vmem:[%s63 + $0x10c] sm:$0xf]
        %v1423 = vld [vmem:[%s63 + $0x110] sm:$0xf]
        %v1424 = vld [vmem:[%s63 + $0x114] sm:$0xf]
        %v1425 = vld [vmem:[%s63 + $0x118] sm:$0xf]
        %v1426 = vld [vmem:[%s63 + $0x11c] sm:$0xf]
        %v1427 = vld [vmem:[%s65] sm:$0x1]
        %v1428 = vld [vmem:[%s1159] sm:$0xf]
        %v1429 = vld [vmem:[%s1159 + $0x4] sm:$0xf]
        %v1430 = vld [vmem:[%s1159 + $0x8] sm:$0xf]
        %v1431 = vld [vmem:[%s1159 + $0xc] sm:$0xf]
        %v1432 = vld [vmem:[%s1159 + $0x10] sm:$0xf]
        %v1433 = vld [vmem:[%s1159 + $0x14] sm:$0xf]
        %v1434 = vld [vmem:[%s1159 + $0x18] sm:$0xf]
        %v1435 = vld [vmem:[%s1159 + $0x1c] sm:$0xf]
        %v1436 = vld [vmem:[%s1159 + $0x20] sm:$0xf]
        %v1437 = vld [vmem:[%s1159 + $0x24] sm:$0xf]
        %v1438 = vld [vmem:[%s1159 + $0x28] sm:$0xf]
        %v1439 = vld [vmem:[%s1159 + $0x2c] sm:$0xf]
        %v1440 = vld [vmem:[%s1159 + $0x30] sm:$0xf]
        %v1441 = vld [vmem:[%s1159 + $0x34] sm:$0xf]
        %v1442 = vld [vmem:[%s1159 + $0x38] sm:$0xf]
        %v1443 = vld [vmem:[%s1159 + $0x3c] sm:$0xf]
        %v1444 = vld [vmem:[%s1159 + $0x40] sm:$0xf]
        %v1445 = vld [vmem:[%s1159 + $0x44] sm:$0xf]
        %v1446 = vld [vmem:[%s1159 + $0x48] sm:$0xf]
        %v1447 = vld [vmem:[%s1159 + $0x4c] sm:$0xf]
        %v1448 = vld [vmem:[%s1159 + $0x50] sm:$0xf]
        %v1449 = vld [vmem:[%s1159 + $0x54] sm:$0xf]
        %v1450 = vld [vmem:[%s1159 + $0x58] sm:$0xf]
        %v1451 = vld [vmem:[%s1159 + $0x5c] sm:$0xf]
        %v1452 = vld [vmem:[%s1159 + $0x60] sm:$0xf]
        %v1453 = vld [vmem:[%s1159 + $0x64] sm:$0xf]
        %v1454 = vld [vmem:[%s1159 + $0x68] sm:$0xf]
        %v1455 = vld [vmem:[%s1159 + $0x6c] sm:$0xf]
        %v1456 = vld [vmem:[%s1159 + $0x70] sm:$0xf]
        %v1457 = vld [vmem:[%s1159 + $0x74] sm:$0xf]
        %v1458 = vld [vmem:[%s1159 + $0x78] sm:$0xf]
        %v1459 = vld [vmem:[%s1159 + $0x7c] sm:$0xf]
        %v1461 = vlaneseq
        %v1462 = vshrl.u32 %v1461, 7
        %v1463 = vsub.s32 0, %v1462
        %v1464 = vrot.slane %v1170, %v1463
        %v1498 = vunpack.c.l.b16 %v1428
        %v1499 = vunpack.c.l.b16 %v1429
        %v1500 = vunpack.c.l.b16 %v1430
        %v1501 = vunpack.c.l.b16 %v1431
        %v1502 = vunpack.c.l.b16 %v1432
        %v1503 = vunpack.c.l.b16 %v1433
        %v1504 = vunpack.c.l.b16 %v1434
        %v1505 = vunpack.c.l.b16 %v1435
        %v1506 = vunpack.c.l.b16 %v1436
        %v1507 = vunpack.c.l.b16 %v1437
        %v1508 = vunpack.c.l.b16 %v1438
        %v1509 = vunpack.c.l.b16 %v1439
        %v1510 = vunpack.c.l.b16 %v1440
        %v1511 = vunpack.c.l.b16 %v1441
        %v1512 = vunpack.c.l.b16 %v1442
        %v1513 = vunpack.c.l.b16 %v1443
        %v1514 = vunpack.c.l.b16 %v1444
        %v1515 = vunpack.c.l.b16 %v1445
        %v1516 = vunpack.c.l.b16 %v1446
        %v1517 = vunpack.c.l.b16 %v1447
        %v1518 = vunpack.c.l.b16 %v1448
        %v1519 = vunpack.c.l.b16 %v1449
        %v1520 = vunpack.c.l.b16 %v1450
        %v1521 = vunpack.c.l.b16 %v1451
        %v1522 = vunpack.c.l.b16 %v1452
        %v1523 = vunpack.c.l.b16 %v1453
        %v1524 = vunpack.c.l.b16 %v1454
        %v1525 = vunpack.c.l.b16 %v1455
        %v1526 = vunpack.c.l.b16 %v1456
        %v1527 = vunpack.c.l.b16 %v1457
        %v1528 = vunpack.c.l.b16 %v1458
        %v1529 = vunpack.c.l.b16 %v1459
        %v1530 = vpack.c.b16 %v1499, %v1498
        %v1531 = vpack.c.b16 %v1501, %v1500
        %v1532 = vpack.c.b16 %v1503, %v1502
        %v1533 = vpack.c.b16 %v1505, %v1504
        %v1534 = vpack.c.b16 %v1507, %v1506
        %v1535 = vpack.c.b16 %v1509, %v1508
        %v1536 = vpack.c.b16 %v1511, %v1510
        %v1537 = vpack.c.b16 %v1513, %v1512
        %v1538 = vpack.c.b16 %v1515, %v1514
        %v1539 = vpack.c.b16 %v1517, %v1516
        %v1540 = vpack.c.b16 %v1519, %v1518
        %v1541 = vpack.c.b16 %v1521, %v1520
        %v1542 = vpack.c.b16 %v1523, %v1522
        %v1543 = vpack.c.b16 %v1525, %v1524
        %v1544 = vpack.c.b16 %v1527, %v1526
        %v1545 = vpack.c.b16 %v1529, %v1528
        %v1550 = vunpack.c.l.b16 %v1166
        %v1551 = vunpack.c.l.b16 %v1167
        %v1552 = vunpack.c.l.b16 %v1168
        %v1553 = vunpack.c.l.b16 %v1169
        %v1554 = vpack.c.b16 %v1551, %v1550
        %v1555 = vpack.c.b16 %v1553, %v1552
        %vm1558 = vcmask 261120
        %v1560 = vsel %vm1558, %v1530, 0
        %v1563 = vsel %vm1558, %v1531, 0
        %v1566 = vsel %vm1558, %v1532, 0
        %v1569 = vsel %vm1558, %v1533, 0
        %v1572 = vsel %vm1558, %v1534, 0
        %v1575 = vsel %vm1558, %v1535, 0
        %v1578 = vsel %vm1558, %v1536, 0
        %v1581 = vsel %vm1558, %v1537, 0
        %v1584 = vsel %vm1558, %v1538, 0
        %v1587 = vsel %vm1558, %v1539, 0
        %v1590 = vsel %vm1558, %v1540, 0
        %v1593 = vsel %vm1558, %v1541, 0
        %v1596 = vsel %vm1558, %v1542, 0
        %v1599 = vsel %vm1558, %v1543, 0
        %v1602 = vsel %vm1558, %v1544, 0
        %v1605 = vsel %vm1558, %v1545, 0
        %1607 = vmatprep.subr.bf16.mxu0 0
        %1608 = vmatpush1.bf16.msra.mxu0 0
        %1609 = vmatprep.subr.bf16.mxu0 0
        %1610 = vmatpush1.bf16.msra.mxu0 0
        %1611 = vmatprep.subr.bf16.mxu0 0
        %1612 = vmatpush1.bf16.msra.mxu0 0
        %1613 = vmatprep.subr.bf16.mxu0 0
        %1614 = vmatpush1.bf16.msra.mxu0 0
        %1615 = vmatprep.subr.bf16.mxu0 0
        %1616 = vmatpush1.bf16.msra.mxu0 0
        %1617 = vmatprep.subr.bf16.mxu0 0
        %1618 = vmatpush1.bf16.msra.mxu0 0
        %1619 = vmatprep.subr.bf16.mxu0 0
        %1620 = vmatpush1.bf16.msra.mxu0 %v1555
        %1621 = vmatprep.subr.bf16.mxu0 0
        %1622 = vmatpush1.bf16.msra.mxu0 %v1554
        %1623 = vmatprep.subr.bf16.mxu0 0
        %1624 = vmatpush2.bf16.msra.mxu0 0
        %1625 = vmatprep.subr.bf16.mxu0 0
        %1626 = vmatpush2.bf16.msra.mxu0 0
        %1627 = vmatprep.subr.bf16.mxu0 0
        %1628 = vmatpush2.bf16.msra.mxu0 0
        %1629 = vmatprep.subr.bf16.mxu0 0
        %1630 = vmatpush2.bf16.msra.mxu0 0
        %1631 = vmatprep.subr.bf16.mxu0 0
        %1632 = vmatpush2.bf16.msra.mxu0 0
        %1633 = vmatprep.subr.bf16.mxu0 0
        %1634 = vmatpush2.bf16.msra.mxu0 0
        %1635 = vmatprep.subr.bf16.mxu0 0
        %1636 = vmatpush2.bf16.msra.mxu0 0
        %1637 = vmatprep.subr.bf16.mxu0 0
        %1638 = vmatpush2.bf16.msra.mxu0 0
        %1639 = vmatprep.mubr.bf16.mxu0 0
        %1640 = vmatmul.mubr.bf16.gmra.mxu0 %v1560
        %v1641 = vpop.f32.mrf.mxu0
        %v1642 = vadd.f32 %v1464, %v1641
        %v1643 = vpop.f32.mrf.mxu0
        %v1644 = vpop.f32.mrf.mxu0
        %v1645 = vadd.f32 %v1464, %v1644
        %v1646 = vpop.f32.mrf.mxu0
        %1647 = vmatprep.mubr.bf16.mxu0 0
        %1648 = vmatmul.mubr.bf16.gmra.mxu0 %v1563
        %v1649 = vpop.f32.mrf.mxu0
        %v1650 = vadd.f32 %v1464, %v1649
        %v1651 = vpop.f32.mrf.mxu0
        %v1652 = vpop.f32.mrf.mxu0
        %v1653 = vadd.f32 %v1464, %v1652
        %v1654 = vpop.f32.mrf.mxu0
        %1655 = vmatprep.mubr.bf16.mxu0 0
        %1656 = vmatmul.mubr.bf16.gmra.mxu0 %v1566
        %v1657 = vpop.f32.mrf.mxu0
        %v1658 = vadd.f32 %v1464, %v1657
        %v1659 = vpop.f32.mrf.mxu0
        %v1660 = vpop.f32.mrf.mxu0
        %v1661 = vadd.f32 %v1464, %v1660
        %v1662 = vpop.f32.mrf.mxu0
        %1663 = vmatprep.mubr.bf16.mxu0 0
        %1664 = vmatmul.mubr.bf16.gmra.mxu0 %v1569
        %v1665 = vpop.f32.mrf.mxu0
        %v1666 = vadd.f32 %v1464, %v1665
        %v1667 = vpop.f32.mrf.mxu0
        %v1668 = vpop.f32.mrf.mxu0
        %v1669 = vadd.f32 %v1464, %v1668
        %v1670 = vpop.f32.mrf.mxu0
        %1671 = vmatprep.mubr.bf16.mxu0 0
        %1672 = vmatmul.mubr.bf16.gmra.mxu0 %v1572
        %v1673 = vpop.f32.mrf.mxu0
        %v1674 = vadd.f32 %v1464, %v1673
        %v1675 = vpop.f32.mrf.mxu0
        %v1676 = vpop.f32.mrf.mxu0
        %v1677 = vadd.f32 %v1464, %v1676
        %v1678 = vpop.f32.mrf.mxu0
        %1679 = vmatprep.mubr.bf16.mxu0 0
        %1680 = vmatmul.mubr.bf16.gmra.mxu0 %v1575
        %v1681 = vpop.f32.mrf.mxu0
        %v1682 = vadd.f32 %v1464, %v1681
        %v1683 = vpop.f32.mrf.mxu0
        %v1684 = vpop.f32.mrf.mxu0
        %v1685 = vadd.f32 %v1464, %v1684
        %v1686 = vpop.f32.mrf.mxu0
        %1687 = vmatprep.mubr.bf16.mxu0 0
        %1688 = vmatmul.mubr.bf16.gmra.mxu0 %v1578
        %v1689 = vpop.f32.mrf.mxu0
        %v1690 = vadd.f32 %v1464, %v1689
        %v1691 = vpop.f32.mrf.mxu0
        %v1692 = vpop.f32.mrf.mxu0
        %v1693 = vadd.f32 %v1464, %v1692
        %v1694 = vpop.f32.mrf.mxu0
        %1695 = vmatprep.mubr.bf16.mxu0 0
        %1696 = vmatmul.mubr.bf16.gmra.mxu0 %v1581
        %v1697 = vpop.f32.mrf.mxu0
        %v1698 = vadd.f32 %v1464, %v1697
        %v1699 = vpop.f32.mrf.mxu0
        %v1700 = vpop.f32.mrf.mxu0
        %v1701 = vadd.f32 %v1464, %v1700
        %v1702 = vpop.f32.mrf.mxu0
        %1703 = vmatprep.mubr.bf16.mxu0 0
        %1704 = vmatmul.mubr.bf16.gmra.mxu0 %v1584
        %v1705 = vpop.f32.mrf.mxu0
        %v1706 = vadd.f32 %v1464, %v1705
        %v1707 = vpop.f32.mrf.mxu0
        %v1708 = vpop.f32.mrf.mxu0
        %v1709 = vadd.f32 %v1464, %v1708
        %v1710 = vpop.f32.mrf.mxu0
        %1711 = vmatprep.mubr.bf16.mxu0 0
        %1712 = vmatmul.mubr.bf16.gmra.mxu0 %v1587
        %v1713 = vpop.f32.mrf.mxu0
        %v1714 = vadd.f32 %v1464, %v1713
        %v1715 = vpop.f32.mrf.mxu0
        %v1716 = vpop.f32.mrf.mxu0
        %v1717 = vadd.f32 %v1464, %v1716
        %v1718 = vpop.f32.mrf.mxu0
        %1719 = vmatprep.mubr.bf16.mxu0 0
        %1720 = vmatmul.mubr.bf16.gmra.mxu0 %v1590
        %v1721 = vpop.f32.mrf.mxu0
        %v1722 = vadd.f32 %v1464, %v1721
        %v1723 = vpop.f32.mrf.mxu0
        %v1724 = vpop.f32.mrf.mxu0
        %v1725 = vadd.f32 %v1464, %v1724
        %v1726 = vpop.f32.mrf.mxu0
        %1727 = vmatprep.mubr.bf16.mxu0 0
        %1728 = vmatmul.mubr.bf16.gmra.mxu0 %v1593
        %v1729 = vpop.f32.mrf.mxu0
        %v1730 = vadd.f32 %v1464, %v1729
        %v1731 = vpop.f32.mrf.mxu0
        %v1732 = vpop.f32.mrf.mxu0
        %v1733 = vadd.f32 %v1464, %v1732
        %v1734 = vpop.f32.mrf.mxu0
        %1735 = vmatprep.mubr.bf16.mxu0 0
        %1736 = vmatmul.mubr.bf16.gmra.mxu0 %v1596
        %v1737 = vpop.f32.mrf.mxu0
        %v1738 = vadd.f32 %v1464, %v1737
        %v1739 = vpop.f32.mrf.mxu0
        %v1740 = vpop.f32.mrf.mxu0
        %v1741 = vadd.f32 %v1464, %v1740
        %v1742 = vpop.f32.mrf.mxu0
        %1743 = vmatprep.mubr.bf16.mxu0 0
        %1744 = vmatmul.mubr.bf16.gmra.mxu0 %v1599
        %v1745 = vpop.f32.mrf.mxu0
        %v1746 = vadd.f32 %v1464, %v1745
        %v1747 = vpop.f32.mrf.mxu0
        %v1748 = vpop.f32.mrf.mxu0
        %v1749 = vadd.f32 %v1464, %v1748
        %v1750 = vpop.f32.mrf.mxu0
        %1751 = vmatprep.mubr.bf16.mxu0 0
        %1752 = vmatmul.mubr.bf16.gmra.mxu0 %v1602
        %v1753 = vpop.f32.mrf.mxu0
        %v1754 = vadd.f32 %v1464, %v1753
        %v1755 = vpop.f32.mrf.mxu0
        %v1756 = vpop.f32.mrf.mxu0
        %v1757 = vadd.f32 %v1464, %v1756
        %v1758 = vpop.f32.mrf.mxu0
        %1759 = vmatprep.mubr.bf16.mxu0 0
        %1760 = vmatmul.mubr.bf16.gmra.mxu0 %v1605
        %v1761 = vpop.f32.mrf.mxu0
        %v1762 = vadd.f32 %v1464, %v1761
        %v1763 = vpop.f32.mrf.mxu0
        %v1764 = vpop.f32.mrf.mxu0
        %v1765 = vadd.f32 %v1464, %v1764
        %v1766 = vpop.f32.mrf.mxu0
        %1767 = vdwg.mxu0
        %v1768 = vmax.f32 %v1642, 0.0
        %v1769 = vmax.f32 %v1645, 0.0
        %v1770 = vmax.f32 %v1650, 0.0
        %v1771 = vmax.f32 %v1653, 0.0
        %v1772 = vmax.f32 %v1658, 0.0
        %v1773 = vmax.f32 %v1661, 0.0
        %v1774 = vmax.f32 %v1666, 0.0
        %v1775 = vmax.f32 %v1669, 0.0
        %v1776 = vmax.f32 %v1674, 0.0
        %v1777 = vmax.f32 %v1677, 0.0
        %v1778 = vmax.f32 %v1682, 0.0
        %v1779 = vmax.f32 %v1685, 0.0
        %v1780 = vmax.f32 %v1690, 0.0
        %v1781 = vmax.f32 %v1693, 0.0
        %v1782 = vmax.f32 %v1698, 0.0
        %v1783 = vmax.f32 %v1701, 0.0
        %v1784 = vmax.f32 %v1706, 0.0
        %v1785 = vmax.f32 %v1709, 0.0
        %v1786 = vmax.f32 %v1714, 0.0
        %v1787 = vmax.f32 %v1717, 0.0
        %v1788 = vmax.f32 %v1722, 0.0
        %v1789 = vmax.f32 %v1725, 0.0
        %v1790 = vmax.f32 %v1730, 0.0
        %v1791 = vmax.f32 %v1733, 0.0
        %v1792 = vmax.f32 %v1738, 0.0
        %v1793 = vmax.f32 %v1741, 0.0
        %v1794 = vmax.f32 %v1746, 0.0
        %v1795 = vmax.f32 %v1749, 0.0
        %v1796 = vmax.f32 %v1754, 0.0
        %v1797 = vmax.f32 %v1757, 0.0
        %v1798 = vmax.f32 %v1762, 0.0
        %v1799 = vmax.f32 %v1765, 0.0
        %v1800 = vpack.c.bf16 %v1769, %v1768
        %v1801 = vpack.c.bf16 %v1771, %v1770
        %v1802 = vpack.c.bf16 %v1773, %v1772
        %v1803 = vpack.c.bf16 %v1775, %v1774
        %v1804 = vpack.c.bf16 %v1777, %v1776
        %v1805 = vpack.c.bf16 %v1779, %v1778
        %v1806 = vpack.c.bf16 %v1781, %v1780
        %v1807 = vpack.c.bf16 %v1783, %v1782
        %v1808 = vpack.c.bf16 %v1785, %v1784
        %v1809 = vpack.c.bf16 %v1787, %v1786
        %v1810 = vpack.c.bf16 %v1789, %v1788
        %v1811 = vpack.c.bf16 %v1791, %v1790
        %v1812 = vpack.c.bf16 %v1793, %v1792
        %v1813 = vpack.c.bf16 %v1795, %v1794
        %v1814 = vpack.c.bf16 %v1797, %v1796
        %v1815 = vpack.c.bf16 %v1799, %v1798
        %v1817 = vshrl.u32 0, 16
        %v1819 = vrot.slane %v1817, 7
        %v1820 = vshll.u32 0, 16
        %v1822 = vor.u32 %v1819, %v1820
        %v1824 = vshrl.u32 %v1800, 16
        %v1826 = vrot.slane %v1824, 7
        %v1827 = vshll.u32 %v1800, 16
        %v1829 = vor.u32 %v1826, %v1827
        %v1831 = vshrl.u32 %v1801, 16
        %v1833 = vrot.slane %v1831, 7
        %v1834 = vshll.u32 %v1801, 16
        %v1836 = vor.u32 %v1833, %v1834
        %v1838 = vshrl.u32 %v1802, 16
        %v1840 = vrot.slane %v1838, 7
        %v1841 = vshll.u32 %v1802, 16
        %v1843 = vor.u32 %v1840, %v1841
        %v1845 = vshrl.u32 %v1803, 16
        %v1847 = vrot.slane %v1845, 7
        %v1848 = vshll.u32 %v1803, 16
        %v1850 = vor.u32 %v1847, %v1848
        %v1852 = vshrl.u32 %v1804, 16
        %v1854 = vrot.slane %v1852, 7
        %v1855 = vshll.u32 %v1804, 16
        %v1857 = vor.u32 %v1854, %v1855
        %v1859 = vshrl.u32 %v1805, 16
        %v1861 = vrot.slane %v1859, 7
        %v1862 = vshll.u32 %v1805, 16
        %v1864 = vor.u32 %v1861, %v1862
        %v1866 = vshrl.u32 %v1806, 16
        %v1868 = vrot.slane %v1866, 7
        %v1869 = vshll.u32 %v1806, 16
        %v1871 = vor.u32 %v1868, %v1869
        %v1873 = vshrl.u32 %v1807, 16
        %v1875 = vrot.slane %v1873, 7
        %v1876 = vshll.u32 %v1807, 16
        %v1878 = vor.u32 %v1875, %v1876
        %v1880 = vshrl.u32 %v1808, 16
        %v1882 = vrot.slane %v1880, 7
        %v1883 = vshll.u32 %v1808, 16
        %v1885 = vor.u32 %v1882, %v1883
        %v1887 = vshrl.u32 %v1809, 16
        %v1889 = vrot.slane %v1887, 7
        %v1890 = vshll.u32 %v1809, 16
        %v1892 = vor.u32 %v1889, %v1890
        %v1894 = vshrl.u32 %v1810, 16
        %v1896 = vrot.slane %v1894, 7
        %v1897 = vshll.u32 %v1810, 16
        %v1899 = vor.u32 %v1896, %v1897
        %v1901 = vshrl.u32 %v1811, 16
        %v1903 = vrot.slane %v1901, 7
        %v1904 = vshll.u32 %v1811, 16
        %v1906 = vor.u32 %v1903, %v1904
        %v1908 = vshrl.u32 %v1812, 16
        %v1910 = vrot.slane %v1908, 7
        %v1911 = vshll.u32 %v1812, 16
        %v1913 = vor.u32 %v1910, %v1911
        %v1915 = vshrl.u32 %v1813, 16
        %v1917 = vrot.slane %v1915, 7
        %v1918 = vshll.u32 %v1813, 16
        %v1920 = vor.u32 %v1917, %v1918
        %v1922 = vshrl.u32 %v1814, 16
        %v1924 = vrot.slane %v1922, 7
        %v1925 = vshll.u32 %v1814, 16
        %v1927 = vor.u32 %v1924, %v1925
        %v1929 = vshrl.u32 %v1815, 16
        %v1931 = vrot.slane %v1929, 7
        %v1932 = vshll.u32 %v1815, 16
        %v1934 = vor.u32 %v1931, %v1932
        %vm1969 = vcmask 1040384
        %vm1970 = vsmask.f32 256
        %vm1971 = vmand %vm1969, %vm1970
        %v1972 = vsel %vm1971, 0, %v1822
        %v1973 = vsel %vm1971, 0, %v1829
        %v1974 = vsel %vm1971, 0, %v1836
        %v1975 = vsel %vm1971, 0, %v1843
        %v1976 = vsel %vm1971, 0, %v1850
        %v1977 = vsel %vm1971, 0, %v1857
        %v1978 = vsel %vm1971, 0, %v1864
        %v1979 = vsel %vm1971, 0, %v1871
        %v1980 = vsel %vm1971, 0, %v1878
        %v1981 = vsel %vm1971, 0, %v1885
        %v1982 = vsel %vm1971, 0, %v1892
        %v1983 = vsel %vm1971, 0, %v1899
        %v1984 = vsel %vm1971, 0, %v1906
        %v1985 = vsel %vm1971, 0, %v1913
        %v1986 = vsel %vm1971, 0, %v1920
        %v1987 = vsel %vm1971, 0, %v1927
        %v1988 = vsel %vm1971, 0, %v1934
        %v1989 = vsel %vm1971, %v1819, 0
        %v1990 = vsel %vm1971, %v1826, 0
        %v1991 = vsel %vm1971, %v1833, 0
        %v1992 = vsel %vm1971, %v1840, 0
        %v1993 = vsel %vm1971, %v1847, 0
        %v1994 = vsel %vm1971, %v1854, 0
        %v1995 = vsel %vm1971, %v1861, 0
        %v1996 = vsel %vm1971, %v1868, 0
        %v1997 = vsel %vm1971, %v1875, 0
        %v1998 = vsel %vm1971, %v1882, 0
        %v1999 = vsel %vm1971, %v1889, 0
        %v2000 = vsel %vm1971, %v1896, 0
        %v2001 = vsel %vm1971, %v1903, 0
        %v2002 = vsel %vm1971, %v1910, 0
        %v2003 = vsel %vm1971, %v1917, 0
        %v2004 = vsel %vm1971, %v1924, 0
        %v2005 = vsel %vm1971, %v1931, 0
        %vm2006 = vsmask.f32 7424
        %v2008 = vshrl.u32 %v1972, 16
        %v2010 = vshll.u32 %v1972, 16
        %v2012 = vrot.slane %v2010, 1
        %v2013 = vor.u32 %v2008, %v2012
        %v2015 = vshll.u32 %v1989, 16
        %v2017 = vrot.slane %v2015, 1
        %v2018 = vsel %vm2006, %v2013, %v2017
        %v2020 = vshrl.u32 %v1973, 16
        %v2022 = vshll.u32 %v1973, 16
        %v2024 = vrot.slane %v2022, 1
        %v2025 = vor.u32 %v2020, %v2024
        %v2027 = vshll.u32 %v1990, 16
        %v2029 = vrot.slane %v2027, 1
        %v2030 = vsel %vm2006, %v2025, %v2029
        %v2032 = vshrl.u32 %v1974, 16
        %v2034 = vshll.u32 %v1974, 16
        %v2036 = vrot.slane %v2034, 1
        %v2037 = vor.u32 %v2032, %v2036
        %v2039 = vshll.u32 %v1991, 16
        %v2041 = vrot.slane %v2039, 1
        %v2042 = vsel %vm2006, %v2037, %v2041
        %v2044 = vshrl.u32 %v1975, 16
        %v2046 = vshll.u32 %v1975, 16
        %v2048 = vrot.slane %v2046, 1
        %v2049 = vor.u32 %v2044, %v2048
        %v2051 = vshll.u32 %v1992, 16
        %v2053 = vrot.slane %v2051, 1
        %v2054 = vsel %vm2006, %v2049, %v2053
        %v2056 = vshrl.u32 %v1976, 16
        %v2058 = vshll.u32 %v1976, 16
        %v2060 = vrot.slane %v2058, 1
        %v2061 = vor.u32 %v2056, %v2060
        %v2063 = vshll.u32 %v1993, 16
        %v2065 = vrot.slane %v2063, 1
        %v2066 = vsel %vm2006, %v2061, %v2065
        %v2068 = vshrl.u32 %v1977, 16
        %v2070 = vshll.u32 %v1977, 16
        %v2072 = vrot.slane %v2070, 1
        %v2073 = vor.u32 %v2068, %v2072
        %v2075 = vshll.u32 %v1994, 16
        %v2077 = vrot.slane %v2075, 1
        %v2078 = vsel %vm2006, %v2073, %v2077
        %v2080 = vshrl.u32 %v1978, 16
        %v2082 = vshll.u32 %v1978, 16
        %v2084 = vrot.slane %v2082, 1
        %v2085 = vor.u32 %v2080, %v2084
        %v2087 = vshll.u32 %v1995, 16
        %v2089 = vrot.slane %v2087, 1
        %v2090 = vsel %vm2006, %v2085, %v2089
        %v2092 = vshrl.u32 %v1979, 16
        %v2094 = vshll.u32 %v1979, 16
        %v2096 = vrot.slane %v2094, 1
        %v2097 = vor.u32 %v2092, %v2096
        %v2099 = vshll.u32 %v1996, 16
        %v2101 = vrot.slane %v2099, 1
        %v2102 = vsel %vm2006, %v2097, %v2101
        %v2104 = vshrl.u32 %v1980, 16
        %v2106 = vshll.u32 %v1980, 16
        %v2108 = vrot.slane %v2106, 1
        %v2109 = vor.u32 %v2104, %v2108
        %v2111 = vshll.u32 %v1997, 16
        %v2113 = vrot.slane %v2111, 1
        %v2114 = vsel %vm2006, %v2109, %v2113
        %v2116 = vshrl.u32 %v1981, 16
        %v2118 = vshll.u32 %v1981, 16
        %v2120 = vrot.slane %v2118, 1
        %v2121 = vor.u32 %v2116, %v2120
        %v2123 = vshll.u32 %v1998, 16
        %v2125 = vrot.slane %v2123, 1
        %v2126 = vsel %vm2006, %v2121, %v2125
        %v2128 = vshrl.u32 %v1982, 16
        %v2130 = vshll.u32 %v1982, 16
        %v2132 = vrot.slane %v2130, 1
        %v2133 = vor.u32 %v2128, %v2132
        %v2135 = vshll.u32 %v1999, 16
        %v2137 = vrot.slane %v2135, 1
        %v2138 = vsel %vm2006, %v2133, %v2137
        %v2140 = vshrl.u32 %v1983, 16
        %v2142 = vshll.u32 %v1983, 16
        %v2144 = vrot.slane %v2142, 1
        %v2145 = vor.u32 %v2140, %v2144
        %v2147 = vshll.u32 %v2000, 16
        %v2149 = vrot.slane %v2147, 1
        %v2150 = vsel %vm2006, %v2145, %v2149
        %v2152 = vshrl.u32 %v1984, 16
        %v2154 = vshll.u32 %v1984, 16
        %v2156 = vrot.slane %v2154, 1
        %v2157 = vor.u32 %v2152, %v2156
        %v2159 = vshll.u32 %v2001, 16
        %v2161 = vrot.slane %v2159, 1
        %v2162 = vsel %vm2006, %v2157, %v2161
        %v2164 = vshrl.u32 %v1985, 16
        %v2166 = vshll.u32 %v1985, 16
        %v2168 = vrot.slane %v2166, 1
        %v2169 = vor.u32 %v2164, %v2168
        %v2171 = vshll.u32 %v2002, 16
        %v2173 = vrot.slane %v2171, 1
        %v2174 = vsel %vm2006, %v2169, %v2173
        %v2176 = vshrl.u32 %v1986, 16
        %v2178 = vshll.u32 %v1986, 16
        %v2180 = vrot.slane %v2178, 1
        %v2181 = vor.u32 %v2176, %v2180
        %v2183 = vshll.u32 %v2003, 16
        %v2185 = vrot.slane %v2183, 1
        %v2186 = vsel %vm2006, %v2181, %v2185
        %v2188 = vshrl.u32 %v1987, 16
        %v2190 = vshll.u32 %v1987, 16
        %v2192 = vrot.slane %v2190, 1
        %v2193 = vor.u32 %v2188, %v2192
        %v2195 = vshll.u32 %v2004, 16
        %v2197 = vrot.slane %v2195, 1
        %v2198 = vsel %vm2006, %v2193, %v2197
        %2199 = vrot.lane.b32.xlu0 %v2018, 8
        %v2200 = vpop.permute.xlu0 %2199
        %2201 = vrot.lane.b32.xlu0 %v2030, 8
        %v2202 = vpop.permute.xlu0 %2201
        %2203 = vrot.lane.b32.xlu0 %v2042, 8
        %v2204 = vpop.permute.xlu0 %2203
        %2205 = vrot.lane.b32.xlu0 %v2054, 8
        %v2206 = vpop.permute.xlu0 %2205
        %2207 = vrot.lane.b32.xlu0 %v2066, 8
        %v2208 = vpop.permute.xlu0 %2207
        %2209 = vrot.lane.b32.xlu0 %v2078, 8
        %v2210 = vpop.permute.xlu0 %2209
        %2211 = vrot.lane.b32.xlu0 %v2090, 8
        %v2212 = vpop.permute.xlu0 %2211
        %2213 = vrot.lane.b32.xlu0 %v2102, 8
        %v2214 = vpop.permute.xlu0 %2213
        %2215 = vrot.lane.b32.xlu0 %v2114, 8
        %v2216 = vpop.permute.xlu0 %2215
        %2217 = vrot.lane.b32.xlu0 %v2126, 8
        %v2218 = vpop.permute.xlu0 %2217
        %2219 = vrot.lane.b32.xlu0 %v2138, 8
        %v2220 = vpop.permute.xlu0 %2219
        %2221 = vrot.lane.b32.xlu0 %v2150, 8
        %v2222 = vpop.permute.xlu0 %2221
        %2223 = vrot.lane.b32.xlu0 %v2162, 8
        %v2224 = vpop.permute.xlu0 %2223
        %2225 = vrot.lane.b32.xlu0 %v2174, 8
        %v2226 = vpop.permute.xlu0 %2225
        %2227 = vrot.lane.b32.xlu0 %v2186, 8
        %v2228 = vpop.permute.xlu0 %2227
        %2229 = vrot.lane.b32.xlu0 %v2198, 8
        %v2230 = vpop.permute.xlu0 %2229
        %vm2263 = vcmask 1046528
        %v2264 = vrot.slane %v1972, 1
        %v2265 = vrot.slane %v1989, 1
        %v2266 = vsel %vm2263, %v2264, %v2265
        %v2267 = vrot.slane %v1973, 1
        %v2268 = vrot.slane %v1990, 1
        %v2269 = vsel %vm2263, %v2267, %v2268
        %v2270 = vrot.slane %v1974, 1
        %v2271 = vrot.slane %v1991, 1
        %v2272 = vsel %vm2263, %v2270, %v2271
        %v2273 = vrot.slane %v1975, 1
        %v2274 = vrot.slane %v1992, 1
        %v2275 = vsel %vm2263, %v2273, %v2274
        %v2276 = vrot.slane %v1976, 1
        %v2277 = vrot.slane %v1993, 1
        %v2278 = vsel %vm2263, %v2276, %v2277
        %v2279 = vrot.slane %v1977, 1
        %v2280 = vrot.slane %v1994, 1
        %v2281 = vsel %vm2263, %v2279, %v2280
        %v2282 = vrot.slane %v1978, 1
        %v2283 = vrot.slane %v1995, 1
        %v2284 = vsel %vm2263, %v2282, %v2283
        %v2285 = vrot.slane %v1979, 1
        %v2286 = vrot.slane %v1996, 1
        %v2287 = vsel %vm2263, %v2285, %v2286
        %v2288 = vrot.slane %v1980, 1
        %v2289 = vrot.slane %v1997, 1
        %v2290 = vsel %vm2263, %v2288, %v2289
        %v2291 = vrot.slane %v1981, 1
        %v2292 = vrot.slane %v1998, 1
        %v2293 = vsel %vm2263, %v2291, %v2292
        %v2294 = vrot.slane %v1982, 1
        %v2295 = vrot.slane %v1999, 1
        %v2296 = vsel %vm2263, %v2294, %v2295
        %v2297 = vrot.slane %v1983, 1
        %v2298 = vrot.slane %v2000, 1
        %v2299 = vsel %vm2263, %v2297, %v2298
        %v2300 = vrot.slane %v1984, 1
        %v2301 = vrot.slane %v2001, 1
        %v2302 = vsel %vm2263, %v2300, %v2301
        %v2303 = vrot.slane %v1985, 1
        %v2304 = vrot.slane %v2002, 1
        %v2305 = vsel %vm2263, %v2303, %v2304
        %v2306 = vrot.slane %v1986, 1
        %v2307 = vrot.slane %v2003, 1
        %v2308 = vsel %vm2263, %v2306, %v2307
        %v2309 = vrot.slane %v1987, 1
        %v2310 = vrot.slane %v2004, 1
        %v2311 = vsel %vm2263, %v2309, %v2310
        %2312 = vrot.lane.b32.xlu0 %v2266, 16
        %v2313 = vpop.permute.xlu0 %2312
        %2314 = vrot.lane.b32.xlu0 %v2269, 16
        %v2315 = vpop.permute.xlu0 %2314
        %2316 = vrot.lane.b32.xlu0 %v2272, 16
        %v2317 = vpop.permute.xlu0 %2316
        %2318 = vrot.lane.b32.xlu0 %v2275, 16
        %v2319 = vpop.permute.xlu0 %2318
        %2320 = vrot.lane.b32.xlu0 %v2278, 16
        %v2321 = vpop.permute.xlu0 %2320
        %2322 = vrot.lane.b32.xlu0 %v2281, 16
        %v2323 = vpop.permute.xlu0 %2322
        %2324 = vrot.lane.b32.xlu0 %v2284, 16
        %v2325 = vpop.permute.xlu0 %2324
        %2326 = vrot.lane.b32.xlu0 %v2287, 16
        %v2327 = vpop.permute.xlu0 %2326
        %2328 = vrot.lane.b32.xlu0 %v2290, 16
        %v2329 = vpop.permute.xlu0 %2328
        %2330 = vrot.lane.b32.xlu0 %v2293, 16
        %v2331 = vpop.permute.xlu0 %2330
        %2332 = vrot.lane.b32.xlu0 %v2296, 16
        %v2333 = vpop.permute.xlu0 %2332
        %2334 = vrot.lane.b32.xlu0 %v2299, 16
        %v2335 = vpop.permute.xlu0 %2334
        %2336 = vrot.lane.b32.xlu0 %v2302, 16
        %v2337 = vpop.permute.xlu0 %2336
        %2338 = vrot.lane.b32.xlu0 %v2305, 16
        %v2339 = vpop.permute.xlu0 %2338
        %2340 = vrot.lane.b32.xlu0 %v2308, 16
        %v2341 = vpop.permute.xlu0 %2340
        %2342 = vrot.lane.b32.xlu0 %v2311, 16
        %v2343 = vpop.permute.xlu0 %2342
        %2345 = vrot.lane.b32.xlu0 %v1973, 24
        %v2346 = vpop.permute.xlu0 %2345
        %2347 = vrot.lane.b32.xlu0 %v1974, 24
        %v2348 = vpop.permute.xlu0 %2347
        %2349 = vrot.lane.b32.xlu0 %v1975, 24
        %v2350 = vpop.permute.xlu0 %2349
        %2351 = vrot.lane.b32.xlu0 %v1976, 24
        %v2352 = vpop.permute.xlu0 %2351
        %2353 = vrot.lane.b32.xlu0 %v1977, 24
        %v2354 = vpop.permute.xlu0 %2353
        %2355 = vrot.lane.b32.xlu0 %v1978, 24
        %v2356 = vpop.permute.xlu0 %2355
        %2357 = vrot.lane.b32.xlu0 %v1979, 24
        %v2358 = vpop.permute.xlu0 %2357
        %2359 = vrot.lane.b32.xlu0 %v1980, 24
        %v2360 = vpop.permute.xlu0 %2359
        %2361 = vrot.lane.b32.xlu0 %v1981, 24
        %v2362 = vpop.permute.xlu0 %2361
        %2363 = vrot.lane.b32.xlu0 %v1982, 24
        %v2364 = vpop.permute.xlu0 %2363
        %2365 = vrot.lane.b32.xlu0 %v1983, 24
        %v2366 = vpop.permute.xlu0 %2365
        %2367 = vrot.lane.b32.xlu0 %v1984, 24
        %v2368 = vpop.permute.xlu0 %2367
        %2369 = vrot.lane.b32.xlu0 %v1985, 24
        %v2370 = vpop.permute.xlu0 %2369
        %2371 = vrot.lane.b32.xlu0 %v1986, 24
        %v2372 = vpop.permute.xlu0 %2371
        %2373 = vrot.lane.b32.xlu0 %v1987, 24
        %v2374 = vpop.permute.xlu0 %2373
        %2375 = vrot.lane.b32.xlu0 %v1988, 24
        %v2376 = vpop.permute.xlu0 %2375
        %v2378 = vshrl.u32 %v1988, 16
        %v2380 = vshll.u32 %v1988, 16
        %v2382 = vrot.slane %v2380, 1
        %v2383 = vor.u32 %v2378, %v2382
        %v2385 = vshll.u32 %v2005, 16
        %v2387 = vrot.slane %v2385, 1
        %v2388 = vsel %vm2006, %v2383, %v2387
        %2389 = vrot.lane.b32.xlu0 %v2030, 32
        %v2390 = vpop.permute.xlu0 %2389
        %2391 = vrot.lane.b32.xlu0 %v2042, 32
        %v2392 = vpop.permute.xlu0 %2391
        %2393 = vrot.lane.b32.xlu0 %v2054, 32
        %v2394 = vpop.permute.xlu0 %2393
        %2395 = vrot.lane.b32.xlu0 %v2066, 32
        %v2396 = vpop.permute.xlu0 %2395
        %2397 = vrot.lane.b32.xlu0 %v2078, 32
        %v2398 = vpop.permute.xlu0 %2397
        %2399 = vrot.lane.b32.xlu0 %v2090, 32
        %v2400 = vpop.permute.xlu0 %2399
        %2401 = vrot.lane.b32.xlu0 %v2102, 32
        %v2402 = vpop.permute.xlu0 %2401
        %2403 = vrot.lane.b32.xlu0 %v2114, 32
        %v2404 = vpop.permute.xlu0 %2403
        %2405 = vrot.lane.b32.xlu0 %v2126, 32
        %v2406 = vpop.permute.xlu0 %2405
        %2407 = vrot.lane.b32.xlu0 %v2138, 32
        %v2408 = vpop.permute.xlu0 %2407
        %2409 = vrot.lane.b32.xlu0 %v2150, 32
        %v2410 = vpop.permute.xlu0 %2409
        %2411 = vrot.lane.b32.xlu0 %v2162, 32
        %v2412 = vpop.permute.xlu0 %2411
        %2413 = vrot.lane.b32.xlu0 %v2174, 32
        %v2414 = vpop.permute.xlu0 %2413
        %2415 = vrot.lane.b32.xlu0 %v2186, 32
        %v2416 = vpop.permute.xlu0 %2415
        %2417 = vrot.lane.b32.xlu0 %v2198, 32
        %v2418 = vpop.permute.xlu0 %2417
        %2419 = vrot.lane.b32.xlu0 %v2388, 32
        %v2420 = vpop.permute.xlu0 %2419
        %v2422 = vrot.slane %v1988, 1
        %v2423 = vrot.slane %v2005, 1
        %v2424 = vsel %vm2263, %v2422, %v2423
        %2425 = vrot.lane.b32.xlu0 %v2269, 40
        %v2426 = vpop.permute.xlu0 %2425
        %2427 = vrot.lane.b32.xlu0 %v2272, 40
        %v2428 = vpop.permute.xlu0 %2427
        %2429 = vrot.lane.b32.xlu0 %v2275, 40
        %v2430 = vpop.permute.xlu0 %2429
        %2431 = vrot.lane.b32.xlu0 %v2278, 40
        %v2432 = vpop.permute.xlu0 %2431
        %2433 = vrot.lane.b32.xlu0 %v2281, 40
        %v2434 = vpop.permute.xlu0 %2433
        %2435 = vrot.lane.b32.xlu0 %v2284, 40
        %v2436 = vpop.permute.xlu0 %2435
        %2437 = vrot.lane.b32.xlu0 %v2287, 40
        %v2438 = vpop.permute.xlu0 %2437
        %2439 = vrot.lane.b32.xlu0 %v2290, 40
        %v2440 = vpop.permute.xlu0 %2439
        %2441 = vrot.lane.b32.xlu0 %v2293, 40
        %v2442 = vpop.permute.xlu0 %2441
        %2443 = vrot.lane.b32.xlu0 %v2296, 40
        %v2444 = vpop.permute.xlu0 %2443
        %2445 = vrot.lane.b32.xlu0 %v2299, 40
        %v2446 = vpop.permute.xlu0 %2445
        %2447 = vrot.lane.b32.xlu0 %v2302, 40
        %v2448 = vpop.permute.xlu0 %2447
        %2449 = vrot.lane.b32.xlu0 %v2305, 40
        %v2450 = vpop.permute.xlu0 %2449
        %2451 = vrot.lane.b32.xlu0 %v2308, 40
        %v2452 = vpop.permute.xlu0 %2451
        %2453 = vrot.lane.b32.xlu0 %v2311, 40
        %v2454 = vpop.permute.xlu0 %2453
        %2455 = vrot.lane.b32.xlu0 %v2424, 40
        %v2456 = vpop.permute.xlu0 %2455
        %2457 = vrot.lane.b32.xlu0 %v1974, 48
        %v2458 = vpop.permute.xlu0 %2457
        %2459 = vrot.lane.b32.xlu0 %v1975, 48
        %v2460 = vpop.permute.xlu0 %2459
        %2461 = vrot.lane.b32.xlu0 %v1976, 48
        %v2462 = vpop.permute.xlu0 %2461
        %2463 = vrot.lane.b32.xlu0 %v1977, 48
        %v2464 = vpop.permute.xlu0 %2463
        %2465 = vrot.lane.b32.xlu0 %v1978, 48
        %v2466 = vpop.permute.xlu0 %2465
        %2467 = vrot.lane.b32.xlu0 %v1979, 48
        %v2468 = vpop.permute.xlu0 %2467
        %2469 = vrot.lane.b32.xlu0 %v1980, 48
        %v2470 = vpop.permute.xlu0 %2469
        %2471 = vrot.lane.b32.xlu0 %v1981, 48
        %v2472 = vpop.permute.xlu0 %2471
        %2473 = vrot.lane.b32.xlu0 %v1982, 48
        %v2474 = vpop.permute.xlu0 %2473
        %2475 = vrot.lane.b32.xlu0 %v1983, 48
        %v2476 = vpop.permute.xlu0 %2475
        %2477 = vrot.lane.b32.xlu0 %v1984, 48
        %v2478 = vpop.permute.xlu0 %2477
        %2479 = vrot.lane.b32.xlu0 %v1985, 48
        %v2480 = vpop.permute.xlu0 %2479
        %2481 = vrot.lane.b32.xlu0 %v1986, 48
        %v2482 = vpop.permute.xlu0 %2481
        %2483 = vrot.lane.b32.xlu0 %v1987, 48
        %v2484 = vpop.permute.xlu0 %2483
        %2485 = vrot.lane.b32.xlu0 %v1988, 48
        %v2486 = vpop.permute.xlu0 %2485
        %2487 = vrot.lane.b32.xlu0 %v1972, 48
        %v2488 = vpop.permute.xlu0 %2487
        %2489 = vrot.lane.b32.xlu0 %v2042, 56
        %v2490 = vpop.permute.xlu0 %2489
        %2491 = vrot.lane.b32.xlu0 %v2054, 56
        %v2492 = vpop.permute.xlu0 %2491
        %2493 = vrot.lane.b32.xlu0 %v2066, 56
        %v2494 = vpop.permute.xlu0 %2493
        %2495 = vrot.lane.b32.xlu0 %v2078, 56
        %v2496 = vpop.permute.xlu0 %2495
        %2497 = vrot.lane.b32.xlu0 %v2090, 56
        %v2498 = vpop.permute.xlu0 %2497
        %2499 = vrot.lane.b32.xlu0 %v2102, 56
        %v2500 = vpop.permute.xlu0 %2499
        %2501 = vrot.lane.b32.xlu0 %v2114, 56
        %v2502 = vpop.permute.xlu0 %2501
        %2503 = vrot.lane.b32.xlu0 %v2126, 56
        %v2504 = vpop.permute.xlu0 %2503
        %2505 = vrot.lane.b32.xlu0 %v2138, 56
        %v2506 = vpop.permute.xlu0 %2505
        %2507 = vrot.lane.b32.xlu0 %v2150, 56
        %v2508 = vpop.permute.xlu0 %2507
        %2509 = vrot.lane.b32.xlu0 %v2162, 56
        %v2510 = vpop.permute.xlu0 %2509
        %2511 = vrot.lane.b32.xlu0 %v2174, 56
        %v2512 = vpop.permute.xlu0 %2511
        %2513 = vrot.lane.b32.xlu0 %v2186, 56
        %v2514 = vpop.permute.xlu0 %2513
        %2515 = vrot.lane.b32.xlu0 %v2198, 56
        %v2516 = vpop.permute.xlu0 %2515
        %2517 = vrot.lane.b32.xlu0 %v2388, 56
        %v2518 = vpop.permute.xlu0 %2517
        %2519 = vrot.lane.b32.xlu0 %v2018, 56
        %v2520 = vpop.permute.xlu0 %2519
        %2521 = vrot.lane.b32.xlu0 %v2272, 64
        %v2522 = vpop.permute.xlu0 %2521
        %2523 = vrot.lane.b32.xlu0 %v2275, 64
        %v2524 = vpop.permute.xlu0 %2523
        %2525 = vrot.lane.b32.xlu0 %v2278, 64
        %v2526 = vpop.permute.xlu0 %2525
        %2527 = vrot.lane.b32.xlu0 %v2281, 64
        %v2528 = vpop.permute.xlu0 %2527
        %2529 = vrot.lane.b32.xlu0 %v2284, 64
        %v2530 = vpop.permute.xlu0 %2529
        %2531 = vrot.lane.b32.xlu0 %v2287, 64
        %v2532 = vpop.permute.xlu0 %2531
        %2533 = vrot.lane.b32.xlu0 %v2290, 64
        %v2534 = vpop.permute.xlu0 %2533
        %2535 = vrot.lane.b32.xlu0 %v2293, 64
        %v2536 = vpop.permute.xlu0 %2535
        %2537 = vrot.lane.b32.xlu0 %v2296, 64
        %v2538 = vpop.permute.xlu0 %2537
        %2539 = vrot.lane.b32.xlu0 %v2299, 64
        %v2540 = vpop.permute.xlu0 %2539
        %2541 = vrot.lane.b32.xlu0 %v2302, 64
        %v2542 = vpop.permute.xlu0 %2541
        %2543 = vrot.lane.b32.xlu0 %v2305, 64
        %v2544 = vpop.permute.xlu0 %2543
        %2545 = vrot.lane.b32.xlu0 %v2308, 64
        %v2546 = vpop.permute.xlu0 %2545
        %2547 = vrot.lane.b32.xlu0 %v2311, 64
        %v2548 = vpop.permute.xlu0 %2547
        %2549 = vrot.lane.b32.xlu0 %v2424, 64
        %v2550 = vpop.permute.xlu0 %2549
        %2551 = vrot.lane.b32.xlu0 %v2266, 64
        %v2552 = vpop.permute.xlu0 %2551
        %vm2553 = vcmask 64512
        %v2555 = vsel %vm2553, %v1972, %v2200
        %v2557 = vsel %vm2553, %v1973, %v2202
        %v2559 = vsel %vm2553, %v1974, %v2204
        %v2561 = vsel %vm2553, %v1975, %v2206
        %v2563 = vsel %vm2553, %v1976, %v2208
        %v2565 = vsel %vm2553, %v1977, %v2210
        %v2567 = vsel %vm2553, %v1978, %v2212
        %v2569 = vsel %vm2553, %v1979, %v2214
        %v2571 = vsel %vm2553, %v1980, %v2216
        %v2573 = vsel %vm2553, %v1981, %v2218
        %v2575 = vsel %vm2553, %v1982, %v2220
        %v2577 = vsel %vm2553, %v1983, %v2222
        %v2579 = vsel %vm2553, %v1984, %v2224
        %v2581 = vsel %vm2553, %v1985, %v2226
        %v2583 = vsel %vm2553, %v1986, %v2228
        %v2585 = vsel %vm2553, %v1987, %v2230
        %vm2586 = vcmask 130048
        %v2588 = vsel %vm2586, %v2555, %v2313
        %v2590 = vsel %vm2586, %v2557, %v2315
        %v2592 = vsel %vm2586, %v2559, %v2317
        %v2594 = vsel %vm2586, %v2561, %v2319
        %v2596 = vsel %vm2586, %v2563, %v2321
        %v2598 = vsel %vm2586, %v2565, %v2323
        %v2600 = vsel %vm2586, %v2567, %v2325
        %v2602 = vsel %vm2586, %v2569, %v2327
        %v2604 = vsel %vm2586, %v2571, %v2329
        %v2606 = vsel %vm2586, %v2573, %v2331
        %v2608 = vsel %vm2586, %v2575, %v2333
        %v2610 = vsel %vm2586, %v2577, %v2335
        %v2612 = vsel %vm2586, %v2579, %v2337
        %v2614 = vsel %vm2586, %v2581, %v2339
        %v2616 = vsel %vm2586, %v2583, %v2341
        %v2618 = vsel %vm2586, %v2585, %v2343
        %vm2619 = vcmask 195584
        %v2621 = vsel %vm2619, %v2588, %v2346
        %v2623 = vsel %vm2619, %v2590, %v2348
        %v2625 = vsel %vm2619, %v2592, %v2350
        %v2627 = vsel %vm2619, %v2594, %v2352
        %v2629 = vsel %vm2619, %v2596, %v2354
        %v2631 = vsel %vm2619, %v2598, %v2356
        %v2633 = vsel %vm2619, %v2600, %v2358
        %v2635 = vsel %vm2619, %v2602, %v2360
        %v2637 = vsel %vm2619, %v2604, %v2362
        %v2639 = vsel %vm2619, %v2606, %v2364
        %v2641 = vsel %vm2619, %v2608, %v2366
        %v2643 = vsel %vm2619, %v2610, %v2368
        %v2645 = vsel %vm2619, %v2612, %v2370
        %v2647 = vsel %vm2619, %v2614, %v2372
        %v2649 = vsel %vm2619, %v2616, %v2374
        %v2651 = vsel %vm2619, %v2618, %v2376
        %v2653 = vsel %vm1558, %v2621, %v2390
        %v2655 = vsel %vm1558, %v2623, %v2392
        %v2657 = vsel %vm1558, %v2625, %v2394
        %v2659 = vsel %vm1558, %v2627, %v2396
        %v2661 = vsel %vm1558, %v2629, %v2398
        %v2663 = vsel %vm1558, %v2631, %v2400
        %v2665 = vsel %vm1558, %v2633, %v2402
        %v2667 = vsel %vm1558, %v2635, %v2404
        %v2669 = vsel %vm1558, %v2637, %v2406
        %v2671 = vsel %vm1558, %v2639, %v2408
        %v2673 = vsel %vm1558, %v2641, %v2410
        %v2675 = vsel %vm1558, %v2643, %v2412
        %v2677 = vsel %vm1558, %v2645, %v2414
        %v2679 = vsel %vm1558, %v2647, %v2416
        %v2681 = vsel %vm1558, %v2649, %v2418
        %v2683 = vsel %vm1558, %v2651, %v2420
        %vm2684 = vcmask 326656
        %v2686 = vsel %vm2684, %v2653, %v2426
        %v2688 = vsel %vm2684, %v2655, %v2428
        %v2690 = vsel %vm2684, %v2657, %v2430
        %v2692 = vsel %vm2684, %v2659, %v2432
        %v2694 = vsel %vm2684, %v2661, %v2434
        %v2696 = vsel %vm2684, %v2663, %v2436
        %v2698 = vsel %vm2684, %v2665, %v2438
        %v2700 = vsel %vm2684, %v2667, %v2440
        %v2702 = vsel %vm2684, %v2669, %v2442
        %v2704 = vsel %vm2684, %v2671, %v2444
        %v2706 = vsel %vm2684, %v2673, %v2446
        %v2708 = vsel %vm2684, %v2675, %v2448
        %v2710 = vsel %vm2684, %v2677, %v2450
        %v2712 = vsel %vm2684, %v2679, %v2452
        %v2714 = vsel %vm2684, %v2681, %v2454
        %v2716 = vsel %vm2684, %v2683, %v2456
        %vm2717 = vcmask 392192
        %v2719 = vsel %vm2717, %v2686, %v2458
        %v2721 = vsel %vm2717, %v2688, %v2460
        %v2723 = vsel %vm2717, %v2690, %v2462
        %v2725 = vsel %vm2717, %v2692, %v2464
        %v2727 = vsel %vm2717, %v2694, %v2466
        %v2729 = vsel %vm2717, %v2696, %v2468
        %v2731 = vsel %vm2717, %v2698, %v2470
        %v2733 = vsel %vm2717, %v2700, %v2472
        %v2735 = vsel %vm2717, %v2702, %v2474
        %v2737 = vsel %vm2717, %v2704, %v2476
        %v2739 = vsel %vm2717, %v2706, %v2478
        %v2741 = vsel %vm2717, %v2708, %v2480
        %v2743 = vsel %vm2717, %v2710, %v2482
        %v2745 = vsel %vm2717, %v2712, %v2484
        %v2747 = vsel %vm2717, %v2714, %v2486
        %v2749 = vsel %vm2717, %v2716, %v2488
        %vm2750 = vcmask 457728
        %v2752 = vsel %vm2750, %v2719, %v2490
        %v2754 = vsel %vm2750, %v2721, %v2492
        %v2756 = vsel %vm2750, %v2723, %v2494
        %v2758 = vsel %vm2750, %v2725, %v2496
        %v2760 = vsel %vm2750, %v2727, %v2498
        %v2762 = vsel %vm2750, %v2729, %v2500
        %v2764 = vsel %vm2750, %v2731, %v2502
        %v2766 = vsel %vm2750, %v2733, %v2504
        %v2768 = vsel %vm2750, %v2735, %v2506
        %v2770 = vsel %vm2750, %v2737, %v2508
        %v2772 = vsel %vm2750, %v2739, %v2510
        %v2774 = vsel %vm2750, %v2741, %v2512
        %v2776 = vsel %vm2750, %v2743, %v2514
        %v2778 = vsel %vm2750, %v2745, %v2516
        %v2780 = vsel %vm2750, %v2747, %v2518
        %v2782 = vsel %vm2750, %v2749, %v2520
        %vm2783 = vcmask 523264
        %v2785 = vsel %vm2783, %v2752, %v2522
        %v2787 = vsel %vm2783, %v2754, %v2524
        %v2789 = vsel %vm2783, %v2756, %v2526
        %v2791 = vsel %vm2783, %v2758, %v2528
        %v2793 = vsel %vm2783, %v2760, %v2530
        %v2795 = vsel %vm2783, %v2762, %v2532
        %v2797 = vsel %vm2783, %v2764, %v2534
        %v2799 = vsel %vm2783, %v2766, %v2536
        %v2801 = vsel %vm2783, %v2768, %v2538
        %v2803 = vsel %vm2783, %v2770, %v2540
        %v2805 = vsel %vm2783, %v2772, %v2542
        %v2807 = vsel %vm2783, %v2774, %v2544
        %v2809 = vsel %vm2783, %v2776, %v2546
        %v2811 = vsel %vm2783, %v2778, %v2548
        %v2813 = vsel %vm2783, %v2780, %v2550
        %v2815 = vsel %vm2783, %v2782, %v2552
        %v2817 = vlaneseq
        %v2818 = vshrl.u32 %v2817, 7
        %v2819 = vsub.s32 0, %v2818
        %v2820 = vrot.slane %v1180, %v2819
        %v2831 = vunpack.c.l.b16 %v1171
        %v2832 = vunpack.c.l.b16 %v1172
        %v2833 = vunpack.c.l.b16 %v1173
        %v2834 = vunpack.c.l.b16 %v1174
        %v2835 = vunpack.c.l.b16 %v1175
        %v2836 = vunpack.c.l.b16 %v1176
        %v2837 = vunpack.c.l.b16 %v1177
        %v2838 = vunpack.c.l.b16 %v1178
        %v2839 = vunpack.c.l.b16 %v1179
        %v2840 = vpack.c.b16 %v2832, %v2831
        %v2841 = vpack.c.b16 %v2834, %v2833
        %v2842 = vpack.c.b16 %v2836, %v2835
        %v2843 = vpack.c.b16 %v2838, %v2837
        %v2844 = vpack.c.b16 %v2839, %v2839
        %vm2849 = vcmask 588800
        %v2850 = vsel %vm2849, %v2785, 0
        %v2852 = vsel %vm2849, %v2787, 0
        %v2854 = vsel %vm2849, %v2789, 0
        %v2856 = vsel %vm2849, %v2791, 0
        %v2858 = vsel %vm2849, %v2793, 0
        %v2860 = vsel %vm2849, %v2795, 0
        %v2862 = vsel %vm2849, %v2797, 0
        %v2864 = vsel %vm2849, %v2799, 0
        %v2866 = vsel %vm2849, %v2801, 0
        %v2868 = vsel %vm2849, %v2803, 0
        %v2870 = vsel %vm2849, %v2805, 0
        %v2872 = vsel %vm2849, %v2807, 0
        %v2874 = vsel %vm2849, %v2809, 0
        %v2876 = vsel %vm2849, %v2811, 0
        %v2878 = vsel %vm2849, %v2813, 0
        %v2880 = vsel %vm2849, %v2815, 0
        %vm2882 = vcmask 1043456
        %v2884 = vsel %vm2882, %v2844, 0
        %2886 = vmatprep.subr.bf16.mxu0 0
        %2887 = vmatpush1.bf16.msra.mxu0 0
        %2888 = vmatprep.subr.bf16.mxu0 0
        %2889 = vmatpush1.bf16.msra.mxu0 0
        %2890 = vmatprep.subr.bf16.mxu0 0
        %2891 = vmatpush1.bf16.msra.mxu0 0
        %2892 = vmatprep.subr.bf16.mxu0 0
        %2893 = vmatpush1.bf16.msra.mxu0 %v2884
        %2894 = vmatprep.subr.bf16.mxu0 0
        %2895 = vmatpush1.bf16.msra.mxu0 %v2843
        %2896 = vmatprep.subr.bf16.mxu0 0
        %2897 = vmatpush1.bf16.msra.mxu0 %v2842
        %2898 = vmatprep.subr.bf16.mxu0 0
        %2899 = vmatpush1.bf16.msra.mxu0 %v2841
        %2900 = vmatprep.subr.bf16.mxu0 0
        %2901 = vmatpush1.bf16.msra.mxu0 %v2840
        %2902 = vmatprep.subr.bf16.mxu0 0
        %2903 = vmatpush2.bf16.msra.mxu0 0
        %2904 = vmatprep.subr.bf16.mxu0 0
        %2905 = vmatpush2.bf16.msra.mxu0 0
        %2906 = vmatprep.subr.bf16.mxu0 0
        %2907 = vmatpush2.bf16.msra.mxu0 0
        %2908 = vmatprep.subr.bf16.mxu0 0
        %2909 = vmatpush2.bf16.msra.mxu0 0
        %2910 = vmatprep.subr.bf16.mxu0 0
        %2911 = vmatpush2.bf16.msra.mxu0 0
        %2912 = vmatprep.subr.bf16.mxu0 0
        %2913 = vmatpush2.bf16.msra.mxu0 0
        %2914 = vmatprep.subr.bf16.mxu0 0
        %2915 = vmatpush2.bf16.msra.mxu0 0
        %2916 = vmatprep.subr.bf16.mxu0 0
        %2917 = vmatpush2.bf16.msra.mxu0 0
        %2918 = vmatprep.mubr.bf16.mxu0 0
        %2919 = vmatmul.mubr.bf16.gmra.mxu0 %v2850
        %v2920 = vpop.f32.mrf.mxu0
        %v2921 = vadd.f32 %v2820, %v2920
        %v2922 = vpop.f32.mrf.mxu0
        %v2923 = vpop.f32.mrf.mxu0
        %v2924 = vadd.f32 %v2820, %v2923
        %v2925 = vpop.f32.mrf.mxu0
        %2926 = vmatprep.mubr.bf16.mxu0 0
        %2927 = vmatmul.mubr.bf16.gmra.mxu0 %v2852
        %v2928 = vpop.f32.mrf.mxu0
        %v2929 = vadd.f32 %v2820, %v2928
        %v2930 = vpop.f32.mrf.mxu0
        %v2931 = vpop.f32.mrf.mxu0
        %v2932 = vadd.f32 %v2820, %v2931
        %v2933 = vpop.f32.mrf.mxu0
        %2934 = vmatprep.mubr.bf16.mxu0 0
        %2935 = vmatmul.mubr.bf16.gmra.mxu0 %v2854
        %v2936 = vpop.f32.mrf.mxu0
        %v2937 = vadd.f32 %v2820, %v2936
        %v2938 = vpop.f32.mrf.mxu0
        %v2939 = vpop.f32.mrf.mxu0
        %v2940 = vadd.f32 %v2820, %v2939
        %v2941 = vpop.f32.mrf.mxu0
        %2942 = vmatprep.mubr.bf16.mxu0 0
        %2943 = vmatmul.mubr.bf16.gmra.mxu0 %v2856
        %v2944 = vpop.f32.mrf.mxu0
        %v2945 = vadd.f32 %v2820, %v2944
        %v2946 = vpop.f32.mrf.mxu0
        %v2947 = vpop.f32.mrf.mxu0
        %v2948 = vadd.f32 %v2820, %v2947
        %v2949 = vpop.f32.mrf.mxu0
        %2950 = vmatprep.mubr.bf16.mxu0 0
        %2951 = vmatmul.mubr.bf16.gmra.mxu0 %v2858
        %v2952 = vpop.f32.mrf.mxu0
        %v2953 = vadd.f32 %v2820, %v2952
        %v2954 = vpop.f32.mrf.mxu0
        %v2955 = vpop.f32.mrf.mxu0
        %v2956 = vadd.f32 %v2820, %v2955
        %v2957 = vpop.f32.mrf.mxu0
        %2958 = vmatprep.mubr.bf16.mxu0 0
        %2959 = vmatmul.mubr.bf16.gmra.mxu0 %v2860
        %v2960 = vpop.f32.mrf.mxu0
        %v2961 = vadd.f32 %v2820, %v2960
        %v2962 = vpop.f32.mrf.mxu0
        %v2963 = vpop.f32.mrf.mxu0
        %v2964 = vadd.f32 %v2820, %v2963
        %v2965 = vpop.f32.mrf.mxu0
        %2966 = vmatprep.mubr.bf16.mxu0 0
        %2967 = vmatmul.mubr.bf16.gmra.mxu0 %v2862
        %v2968 = vpop.f32.mrf.mxu0
        %v2969 = vadd.f32 %v2820, %v2968
        %v2970 = vpop.f32.mrf.mxu0
        %v2971 = vpop.f32.mrf.mxu0
        %v2972 = vadd.f32 %v2820, %v2971
        %v2973 = vpop.f32.mrf.mxu0
        %2974 = vmatprep.mubr.bf16.mxu0 0
        %2975 = vmatmul.mubr.bf16.gmra.mxu0 %v2864
        %v2976 = vpop.f32.mrf.mxu0
        %v2977 = vadd.f32 %v2820, %v2976
        %v2978 = vpop.f32.mrf.mxu0
        %v2979 = vpop.f32.mrf.mxu0
        %v2980 = vadd.f32 %v2820, %v2979
        %v2981 = vpop.f32.mrf.mxu0
        %2982 = vmatprep.mubr.bf16.mxu0 0
        %2983 = vmatmul.mubr.bf16.gmra.mxu0 %v2866
        %v2984 = vpop.f32.mrf.mxu0
        %v2985 = vadd.f32 %v2820, %v2984
        %v2986 = vpop.f32.mrf.mxu0
        %v2987 = vpop.f32.mrf.mxu0
        %v2988 = vadd.f32 %v2820, %v2987
        %v2989 = vpop.f32.mrf.mxu0
        %2990 = vmatprep.mubr.bf16.mxu0 0
        %2991 = vmatmul.mubr.bf16.gmra.mxu0 %v2868
        %v2992 = vpop.f32.mrf.mxu0
        %v2993 = vadd.f32 %v2820, %v2992
        %v2994 = vpop.f32.mrf.mxu0
        %v2995 = vpop.f32.mrf.mxu0
        %v2996 = vadd.f32 %v2820, %v2995
        %v2997 = vpop.f32.mrf.mxu0
        %2998 = vmatprep.mubr.bf16.mxu0 0
        %2999 = vmatmul.mubr.bf16.gmra.mxu0 %v2870
        %v3000 = vpop.f32.mrf.mxu0
        %v3001 = vadd.f32 %v2820, %v3000
        %v3002 = vpop.f32.mrf.mxu0
        %v3003 = vpop.f32.mrf.mxu0
        %v3004 = vadd.f32 %v2820, %v3003
        %v3005 = vpop.f32.mrf.mxu0
        %3006 = vmatprep.mubr.bf16.mxu0 0
        %3007 = vmatmul.mubr.bf16.gmra.mxu0 %v2872
        %v3008 = vpop.f32.mrf.mxu0
        %v3009 = vadd.f32 %v2820, %v3008
        %v3010 = vpop.f32.mrf.mxu0
        %v3011 = vpop.f32.mrf.mxu0
        %v3012 = vadd.f32 %v2820, %v3011
        %v3013 = vpop.f32.mrf.mxu0
        %3014 = vmatprep.mubr.bf16.mxu0 0
        %3015 = vmatmul.mubr.bf16.gmra.mxu0 %v2874
        %v3016 = vpop.f32.mrf.mxu0
        %v3017 = vadd.f32 %v2820, %v3016
        %v3018 = vpop.f32.mrf.mxu0
        %v3019 = vpop.f32.mrf.mxu0
        %v3020 = vadd.f32 %v2820, %v3019
        %v3021 = vpop.f32.mrf.mxu0
        %3022 = vmatprep.mubr.bf16.mxu0 0
        %3023 = vmatmul.mubr.bf16.gmra.mxu0 %v2876
        %v3024 = vpop.f32.mrf.mxu0
        %v3025 = vadd.f32 %v2820, %v3024
        %v3026 = vpop.f32.mrf.mxu0
        %v3027 = vpop.f32.mrf.mxu0
        %v3028 = vadd.f32 %v2820, %v3027
        %v3029 = vpop.f32.mrf.mxu0
        %3030 = vmatprep.mubr.bf16.mxu0 0
        %3031 = vmatmul.mubr.bf16.gmra.mxu0 %v2878
        %v3032 = vpop.f32.mrf.mxu0
        %v3033 = vadd.f32 %v2820, %v3032
        %v3034 = vpop.f32.mrf.mxu0
        %v3035 = vpop.f32.mrf.mxu0
        %v3036 = vadd.f32 %v2820, %v3035
        %v3037 = vpop.f32.mrf.mxu0
        %3038 = vmatprep.mubr.bf16.mxu0 0
        %3039 = vmatmul.mubr.bf16.gmra.mxu0 %v2880
        %v3040 = vpop.f32.mrf.mxu0
        %v3041 = vadd.f32 %v2820, %v3040
        %v3042 = vpop.f32.mrf.mxu0
        %v3043 = vpop.f32.mrf.mxu0
        %v3044 = vadd.f32 %v2820, %v3043
        %v3045 = vpop.f32.mrf.mxu0
        %3046 = vdwg.mxu0
        %v3047 = vmax.f32 %v2921, 0.0
        %v3048 = vmax.f32 %v2924, 0.0
        %v3049 = vmax.f32 %v2929, 0.0
        %v3050 = vmax.f32 %v2932, 0.0
        %v3051 = vmax.f32 %v2937, 0.0
        %v3052 = vmax.f32 %v2940, 0.0
        %v3053 = vmax.f32 %v2945, 0.0
        %v3054 = vmax.f32 %v2948, 0.0
        %v3055 = vmax.f32 %v2953, 0.0
        %v3056 = vmax.f32 %v2956, 0.0
        %v3057 = vmax.f32 %v2961, 0.0
        %v3058 = vmax.f32 %v2964, 0.0
        %v3059 = vmax.f32 %v2969, 0.0
        %v3060 = vmax.f32 %v2972, 0.0
        %v3061 = vmax.f32 %v2977, 0.0
        %v3062 = vmax.f32 %v2980, 0.0
        %v3063 = vmax.f32 %v2985, 0.0
        %v3064 = vmax.f32 %v2988, 0.0
        %v3065 = vmax.f32 %v2993, 0.0
        %v3066 = vmax.f32 %v2996, 0.0
        %v3067 = vmax.f32 %v3001, 0.0
        %v3068 = vmax.f32 %v3004, 0.0
        %v3069 = vmax.f32 %v3009, 0.0
        %v3070 = vmax.f32 %v3012, 0.0
        %v3071 = vmax.f32 %v3017, 0.0
        %v3072 = vmax.f32 %v3020, 0.0
        %v3073 = vmax.f32 %v3025, 0.0
        %v3074 = vmax.f32 %v3028, 0.0
        %v3075 = vmax.f32 %v3033, 0.0
        %v3076 = vmax.f32 %v3036, 0.0
        %v3077 = vmax.f32 %v3041, 0.0
        %v3078 = vmax.f32 %v3044, 0.0
        %v3079 = vpack.c.bf16 %v3048, %v3047
        %v3080 = vpack.c.bf16 %v3050, %v3049
        %v3081 = vpack.c.bf16 %v3052, %v3051
        %v3082 = vpack.c.bf16 %v3054, %v3053
        %v3083 = vpack.c.bf16 %v3056, %v3055
        %v3084 = vpack.c.bf16 %v3058, %v3057
        %v3085 = vpack.c.bf16 %v3060, %v3059
        %v3086 = vpack.c.bf16 %v3062, %v3061
        %v3087 = vpack.c.bf16 %v3064, %v3063
        %v3088 = vpack.c.bf16 %v3066, %v3065
        %v3089 = vpack.c.bf16 %v3068, %v3067
        %v3090 = vpack.c.bf16 %v3070, %v3069
        %v3091 = vpack.c.bf16 %v3072, %v3071
        %v3092 = vpack.c.bf16 %v3074, %v3073
        %v3093 = vpack.c.bf16 %v3076, %v3075
        %v3094 = vpack.c.bf16 %v3078, %v3077
        %v3096 = vshrl.u32 %v3079, 16
        %v3098 = vrot.slane %v3096, 7
        %v3099 = vshll.u32 %v3079, 16
        %v3101 = vor.u32 %v3098, %v3099
        %v3103 = vshrl.u32 %v3080, 16
        %v3105 = vrot.slane %v3103, 7
        %v3106 = vshll.u32 %v3080, 16
        %v3108 = vor.u32 %v3105, %v3106
        %v3110 = vshrl.u32 %v3081, 16
        %v3112 = vrot.slane %v3110, 7
        %v3113 = vshll.u32 %v3081, 16
        %v3115 = vor.u32 %v3112, %v3113
        %v3117 = vshrl.u32 %v3082, 16
        %v3119 = vrot.slane %v3117, 7
        %v3120 = vshll.u32 %v3082, 16
        %v3122 = vor.u32 %v3119, %v3120
        %v3124 = vshrl.u32 %v3083, 16
        %v3126 = vrot.slane %v3124, 7
        %v3127 = vshll.u32 %v3083, 16
        %v3129 = vor.u32 %v3126, %v3127
        %v3131 = vshrl.u32 %v3084, 16
        %v3133 = vrot.slane %v3131, 7
        %v3134 = vshll.u32 %v3084, 16
        %v3136 = vor.u32 %v3133, %v3134
        %v3138 = vshrl.u32 %v3085, 16
        %v3140 = vrot.slane %v3138, 7
        %v3141 = vshll.u32 %v3085, 16
        %v3143 = vor.u32 %v3140, %v3141
        %v3145 = vshrl.u32 %v3086, 16
        %v3147 = vrot.slane %v3145, 7
        %v3148 = vshll.u32 %v3086, 16
        %v3150 = vor.u32 %v3147, %v3148
        %v3152 = vshrl.u32 %v3087, 16
        %v3154 = vrot.slane %v3152, 7
        %v3155 = vshll.u32 %v3087, 16
        %v3157 = vor.u32 %v3154, %v3155
        %v3159 = vshrl.u32 %v3088, 16
        %v3161 = vrot.slane %v3159, 7
        %v3162 = vshll.u32 %v3088, 16
        %v3164 = vor.u32 %v3161, %v3162
        %v3166 = vshrl.u32 %v3089, 16
        %v3168 = vrot.slane %v3166, 7
        %v3169 = vshll.u32 %v3089, 16
        %v3171 = vor.u32 %v3168, %v3169
        %v3173 = vshrl.u32 %v3090, 16
        %v3175 = vrot.slane %v3173, 7
        %v3176 = vshll.u32 %v3090, 16
        %v3178 = vor.u32 %v3175, %v3176
        %v3180 = vshrl.u32 %v3091, 16
        %v3182 = vrot.slane %v3180, 7
        %v3183 = vshll.u32 %v3091, 16
        %v3185 = vor.u32 %v3182, %v3183
        %v3187 = vshrl.u32 %v3092, 16
        %v3189 = vrot.slane %v3187, 7
        %v3190 = vshll.u32 %v3092, 16
        %v3192 = vor.u32 %v3189, %v3190
        %v3194 = vshrl.u32 %v3093, 16
        %v3196 = vrot.slane %v3194, 7
        %v3197 = vshll.u32 %v3093, 16
        %v3199 = vor.u32 %v3196, %v3197
        %v3201 = vshrl.u32 %v3094, 16
        %v3203 = vrot.slane %v3201, 7
        %v3204 = vshll.u32 %v3094, 16
        %v3206 = vor.u32 %v3203, %v3204
        %v3239 = vsel %vm1971, 0, %v3101
        %v3240 = vsel %vm1971, 0, %v3108
        %v3241 = vsel %vm1971, 0, %v3115
        %v3242 = vsel %vm1971, 0, %v3122
        %v3243 = vsel %vm1971, 0, %v3129
        %v3244 = vsel %vm1971, 0, %v3136
        %v3245 = vsel %vm1971, 0, %v3143
        %v3246 = vsel %vm1971, 0, %v3150
        %v3247 = vsel %vm1971, 0, %v3157
        %v3248 = vsel %vm1971, 0, %v3164
        %v3249 = vsel %vm1971, 0, %v3171
        %v3250 = vsel %vm1971, 0, %v3178
        %v3251 = vsel %vm1971, 0, %v3185
        %v3252 = vsel %vm1971, 0, %v3192
        %v3253 = vsel %vm1971, 0, %v3199
        %v3254 = vsel %vm1971, 0, %v3206
        %v3255 = vsel %vm1971, %v3098, 0
        %v3256 = vsel %vm1971, %v3105, 0
        %v3257 = vsel %vm1971, %v3112, 0
        %v3258 = vsel %vm1971, %v3119, 0
        %v3259 = vsel %vm1971, %v3126, 0
        %v3260 = vsel %vm1971, %v3133, 0
        %v3261 = vsel %vm1971, %v3140, 0
        %v3262 = vsel %vm1971, %v3147, 0
        %v3263 = vsel %vm1971, %v3154, 0
        %v3264 = vsel %vm1971, %v3161, 0
        %v3265 = vsel %vm1971, %v3168, 0
        %v3266 = vsel %vm1971, %v3175, 0
        %v3267 = vsel %vm1971, %v3182, 0
        %v3268 = vsel %vm1971, %v3189, 0
        %v3269 = vsel %vm1971, %v3196, 0
        %v3270 = vsel %vm1971, %v3203, 0
        %v3272 = vshrl.u32 %v3239, 16
        %v3274 = vshll.u32 %v3239, 16
        %v3276 = vrot.slane %v3274, 1
        %v3277 = vor.u32 %v3272, %v3276
        %v3279 = vshll.u32 %v3255, 16
        %v3281 = vrot.slane %v3279, 1
        %v3282 = vsel %vm2006, %v3277, %v3281
        %v3284 = vshrl.u32 %v3240, 16
        %v3286 = vshll.u32 %v3240, 16
        %v3288 = vrot.slane %v3286, 1
        %v3289 = vor.u32 %v3284, %v3288
        %v3291 = vshll.u32 %v3256, 16
        %v3293 = vrot.slane %v3291, 1
        %v3294 = vsel %vm2006, %v3289, %v3293
        %v3296 = vshrl.u32 %v3241, 16
        %v3298 = vshll.u32 %v3241, 16
        %v3300 = vrot.slane %v3298, 1
        %v3301 = vor.u32 %v3296, %v3300
        %v3303 = vshll.u32 %v3257, 16
        %v3305 = vrot.slane %v3303, 1
        %v3306 = vsel %vm2006, %v3301, %v3305
        %v3308 = vshrl.u32 %v3242, 16
        %v3310 = vshll.u32 %v3242, 16
        %v3312 = vrot.slane %v3310, 1
        %v3313 = vor.u32 %v3308, %v3312
        %v3315 = vshll.u32 %v3258, 16
        %v3317 = vrot.slane %v3315, 1
        %v3318 = vsel %vm2006, %v3313, %v3317
        %v3320 = vshrl.u32 %v3243, 16
        %v3322 = vshll.u32 %v3243, 16
        %v3324 = vrot.slane %v3322, 1
        %v3325 = vor.u32 %v3320, %v3324
        %v3327 = vshll.u32 %v3259, 16
        %v3329 = vrot.slane %v3327, 1
        %v3330 = vsel %vm2006, %v3325, %v3329
        %v3332 = vshrl.u32 %v3244, 16
        %v3334 = vshll.u32 %v3244, 16
        %v3336 = vrot.slane %v3334, 1
        %v3337 = vor.u32 %v3332, %v3336
        %v3339 = vshll.u32 %v3260, 16
        %v3341 = vrot.slane %v3339, 1
        %v3342 = vsel %vm2006, %v3337, %v3341
        %v3344 = vshrl.u32 %v3245, 16
        %v3346 = vshll.u32 %v3245, 16
        %v3348 = vrot.slane %v3346, 1
        %v3349 = vor.u32 %v3344, %v3348
        %v3351 = vshll.u32 %v3261, 16
        %v3353 = vrot.slane %v3351, 1
        %v3354 = vsel %vm2006, %v3349, %v3353
        %v3356 = vshrl.u32 %v3246, 16
        %v3358 = vshll.u32 %v3246, 16
        %v3360 = vrot.slane %v3358, 1
        %v3361 = vor.u32 %v3356, %v3360
        %v3363 = vshll.u32 %v3262, 16
        %v3365 = vrot.slane %v3363, 1
        %v3366 = vsel %vm2006, %v3361, %v3365
        %v3368 = vshrl.u32 %v3247, 16
        %v3370 = vshll.u32 %v3247, 16
        %v3372 = vrot.slane %v3370, 1
        %v3373 = vor.u32 %v3368, %v3372
        %v3375 = vshll.u32 %v3263, 16
        %v3377 = vrot.slane %v3375, 1
        %v3378 = vsel %vm2006, %v3373, %v3377
        %v3380 = vshrl.u32 %v3248, 16
        %v3382 = vshll.u32 %v3248, 16
        %v3384 = vrot.slane %v3382, 1
        %v3385 = vor.u32 %v3380, %v3384
        %v3387 = vshll.u32 %v3264, 16
        %v3389 = vrot.slane %v3387, 1
        %v3390 = vsel %vm2006, %v3385, %v3389
        %v3392 = vshrl.u32 %v3249, 16
        %v3394 = vshll.u32 %v3249, 16
        %v3396 = vrot.slane %v3394, 1
        %v3397 = vor.u32 %v3392, %v3396
        %v3399 = vshll.u32 %v3265, 16
        %v3401 = vrot.slane %v3399, 1
        %v3402 = vsel %vm2006, %v3397, %v3401
        %v3404 = vshrl.u32 %v3250, 16
        %v3406 = vshll.u32 %v3250, 16
        %v3408 = vrot.slane %v3406, 1
        %v3409 = vor.u32 %v3404, %v3408
        %v3411 = vshll.u32 %v3266, 16
        %v3413 = vrot.slane %v3411, 1
        %v3414 = vsel %vm2006, %v3409, %v3413
        %v3416 = vshrl.u32 %v3251, 16
        %v3418 = vshll.u32 %v3251, 16
        %v3420 = vrot.slane %v3418, 1
        %v3421 = vor.u32 %v3416, %v3420
        %v3423 = vshll.u32 %v3267, 16
        %v3425 = vrot.slane %v3423, 1
        %v3426 = vsel %vm2006, %v3421, %v3425
        %v3428 = vshrl.u32 %v3252, 16
        %v3430 = vshll.u32 %v3252, 16
        %v3432 = vrot.slane %v3430, 1
        %v3433 = vor.u32 %v3428, %v3432
        %v3435 = vshll.u32 %v3268, 16
        %v3437 = vrot.slane %v3435, 1
        %v3438 = vsel %vm2006, %v3433, %v3437
        %v3440 = vshrl.u32 %v3253, 16
        %v3442 = vshll.u32 %v3253, 16
        %v3444 = vrot.slane %v3442, 1
        %v3445 = vor.u32 %v3440, %v3444
        %v3447 = vshll.u32 %v3269, 16
        %v3449 = vrot.slane %v3447, 1
        %v3450 = vsel %vm2006, %v3445, %v3449
        %3451 = vrot.lane.b32.xlu0 %v3282, 8
        %v3452 = vpop.permute.xlu0 %3451
        %3453 = vrot.lane.b32.xlu0 %v3294, 8
        %v3454 = vpop.permute.xlu0 %3453
        %3455 = vrot.lane.b32.xlu0 %v3306, 8
        %v3456 = vpop.permute.xlu0 %3455
        %3457 = vrot.lane.b32.xlu0 %v3318, 8
        %v3458 = vpop.permute.xlu0 %3457
        %3459 = vrot.lane.b32.xlu0 %v3330, 8
        %v3460 = vpop.permute.xlu0 %3459
        %3461 = vrot.lane.b32.xlu0 %v3342, 8
        %v3462 = vpop.permute.xlu0 %3461
        %3463 = vrot.lane.b32.xlu0 %v3354, 8
        %v3464 = vpop.permute.xlu0 %3463
        %3465 = vrot.lane.b32.xlu0 %v3366, 8
        %v3466 = vpop.permute.xlu0 %3465
        %3467 = vrot.lane.b32.xlu0 %v3378, 8
        %v3468 = vpop.permute.xlu0 %3467
        %3469 = vrot.lane.b32.xlu0 %v3390, 8
        %v3470 = vpop.permute.xlu0 %3469
        %3471 = vrot.lane.b32.xlu0 %v3402, 8
        %v3472 = vpop.permute.xlu0 %3471
        %3473 = vrot.lane.b32.xlu0 %v3414, 8
        %v3474 = vpop.permute.xlu0 %3473
        %3475 = vrot.lane.b32.xlu0 %v3426, 8
        %v3476 = vpop.permute.xlu0 %3475
        %3477 = vrot.lane.b32.xlu0 %v3438, 8
        %v3478 = vpop.permute.xlu0 %3477
        %3479 = vrot.lane.b32.xlu0 %v3450, 8
        %v3480 = vpop.permute.xlu0 %3479
        %v3511 = vrot.slane %v3239, 1
        %v3512 = vrot.slane %v3255, 1
        %v3513 = vsel %vm2263, %v3511, %v3512
        %v3514 = vrot.slane %v3240, 1
        %v3515 = vrot.slane %v3256, 1
        %v3516 = vsel %vm2263, %v3514, %v3515
        %v3517 = vrot.slane %v3241, 1
        %v3518 = vrot.slane %v3257, 1
        %v3519 = vsel %vm2263, %v3517, %v3518
        %v3520 = vrot.slane %v3242, 1
        %v3521 = vrot.slane %v3258, 1
        %v3522 = vsel %vm2263, %v3520, %v3521
        %v3523 = vrot.slane %v3243, 1
        %v3524 = vrot.slane %v3259, 1
        %v3525 = vsel %vm2263, %v3523, %v3524
        %v3526 = vrot.slane %v3244, 1
        %v3527 = vrot.slane %v3260, 1
        %v3528 = vsel %vm2263, %v3526, %v3527
        %v3529 = vrot.slane %v3245, 1
        %v3530 = vrot.slane %v3261, 1
        %v3531 = vsel %vm2263, %v3529, %v3530
        %v3532 = vrot.slane %v3246, 1
        %v3533 = vrot.slane %v3262, 1
        %v3534 = vsel %vm2263, %v3532, %v3533
        %v3535 = vrot.slane %v3247, 1
        %v3536 = vrot.slane %v3263, 1
        %v3537 = vsel %vm2263, %v3535, %v3536
        %v3538 = vrot.slane %v3248, 1
        %v3539 = vrot.slane %v3264, 1
        %v3540 = vsel %vm2263, %v3538, %v3539
        %v3541 = vrot.slane %v3249, 1
        %v3542 = vrot.slane %v3265, 1
        %v3543 = vsel %vm2263, %v3541, %v3542
        %v3544 = vrot.slane %v3250, 1
        %v3545 = vrot.slane %v3266, 1
        %v3546 = vsel %vm2263, %v3544, %v3545
        %v3547 = vrot.slane %v3251, 1
        %v3548 = vrot.slane %v3267, 1
        %v3549 = vsel %vm2263, %v3547, %v3548
        %v3550 = vrot.slane %v3252, 1
        %v3551 = vrot.slane %v3268, 1
        %v3552 = vsel %vm2263, %v3550, %v3551
        %v3553 = vrot.slane %v3253, 1
        %v3554 = vrot.slane %v3269, 1
        %v3555 = vsel %vm2263, %v3553, %v3554
        %3556 = vrot.lane.b32.xlu0 %v3513, 16
        %v3557 = vpop.permute.xlu0 %3556
        %3558 = vrot.lane.b32.xlu0 %v3516, 16
        %v3559 = vpop.permute.xlu0 %3558
        %3560 = vrot.lane.b32.xlu0 %v3519, 16
        %v3561 = vpop.permute.xlu0 %3560
        %3562 = vrot.lane.b32.xlu0 %v3522, 16
        %v3563 = vpop.permute.xlu0 %3562
        %3564 = vrot.lane.b32.xlu0 %v3525, 16
        %v3565 = vpop.permute.xlu0 %3564
        %3566 = vrot.lane.b32.xlu0 %v3528, 16
        %v3567 = vpop.permute.xlu0 %3566
        %3568 = vrot.lane.b32.xlu0 %v3531, 16
        %v3569 = vpop.permute.xlu0 %3568
        %3570 = vrot.lane.b32.xlu0 %v3534, 16
        %v3571 = vpop.permute.xlu0 %3570
        %3572 = vrot.lane.b32.xlu0 %v3537, 16
        %v3573 = vpop.permute.xlu0 %3572
        %3574 = vrot.lane.b32.xlu0 %v3540, 16
        %v3575 = vpop.permute.xlu0 %3574
        %3576 = vrot.lane.b32.xlu0 %v3543, 16
        %v3577 = vpop.permute.xlu0 %3576
        %3578 = vrot.lane.b32.xlu0 %v3546, 16
        %v3579 = vpop.permute.xlu0 %3578
        %3580 = vrot.lane.b32.xlu0 %v3549, 16
        %v3581 = vpop.permute.xlu0 %3580
        %3582 = vrot.lane.b32.xlu0 %v3552, 16
        %v3583 = vpop.permute.xlu0 %3582
        %3584 = vrot.lane.b32.xlu0 %v3555, 16
        %v3585 = vpop.permute.xlu0 %3584
        %3587 = vrot.lane.b32.xlu0 %v3239, 24
        %v3588 = vpop.permute.xlu0 %3587
        %3589 = vrot.lane.b32.xlu0 %v3240, 24
        %v3590 = vpop.permute.xlu0 %3589
        %3591 = vrot.lane.b32.xlu0 %v3241, 24
        %v3592 = vpop.permute.xlu0 %3591
        %3593 = vrot.lane.b32.xlu0 %v3242, 24
        %v3594 = vpop.permute.xlu0 %3593
        %3595 = vrot.lane.b32.xlu0 %v3243, 24
        %v3596 = vpop.permute.xlu0 %3595
        %3597 = vrot.lane.b32.xlu0 %v3244, 24
        %v3598 = vpop.permute.xlu0 %3597
        %3599 = vrot.lane.b32.xlu0 %v3245, 24
        %v3600 = vpop.permute.xlu0 %3599
        %3601 = vrot.lane.b32.xlu0 %v3246, 24
        %v3602 = vpop.permute.xlu0 %3601
        %3603 = vrot.lane.b32.xlu0 %v3247, 24
        %v3604 = vpop.permute.xlu0 %3603
        %3605 = vrot.lane.b32.xlu0 %v3248, 24
        %v3606 = vpop.permute.xlu0 %3605
        %3607 = vrot.lane.b32.xlu0 %v3249, 24
        %v3608 = vpop.permute.xlu0 %3607
        %3609 = vrot.lane.b32.xlu0 %v3250, 24
        %v3610 = vpop.permute.xlu0 %3609
        %3611 = vrot.lane.b32.xlu0 %v3251, 24
        %v3612 = vpop.permute.xlu0 %3611
        %3613 = vrot.lane.b32.xlu0 %v3252, 24
        %v3614 = vpop.permute.xlu0 %3613
        %3615 = vrot.lane.b32.xlu0 %v3253, 24
        %v3616 = vpop.permute.xlu0 %3615
        %3617 = vrot.lane.b32.xlu0 %v3254, 24
        %v3618 = vpop.permute.xlu0 %3617
        %v3620 = vshrl.u32 %v3254, 16
        %v3622 = vshll.u32 %v3254, 16
        %v3624 = vrot.slane %v3622, 1
        %v3625 = vor.u32 %v3620, %v3624
        %v3627 = vshll.u32 %v3270, 16
        %v3629 = vrot.slane %v3627, 1
        %v3630 = vsel %vm2006, %v3625, %v3629
        %3631 = vrot.lane.b32.xlu0 %v3282, 32
        %v3632 = vpop.permute.xlu0 %3631
        %3633 = vrot.lane.b32.xlu0 %v3294, 32
        %v3634 = vpop.permute.xlu0 %3633
        %3635 = vrot.lane.b32.xlu0 %v3306, 32
        %v3636 = vpop.permute.xlu0 %3635
        %3637 = vrot.lane.b32.xlu0 %v3318, 32
        %v3638 = vpop.permute.xlu0 %3637
        %3639 = vrot.lane.b32.xlu0 %v3330, 32
        %v3640 = vpop.permute.xlu0 %3639
        %3641 = vrot.lane.b32.xlu0 %v3342, 32
        %v3642 = vpop.permute.xlu0 %3641
        %3643 = vrot.lane.b32.xlu0 %v3354, 32
        %v3644 = vpop.permute.xlu0 %3643
        %3645 = vrot.lane.b32.xlu0 %v3366, 32
        %v3646 = vpop.permute.xlu0 %3645
        %3647 = vrot.lane.b32.xlu0 %v3378, 32
        %v3648 = vpop.permute.xlu0 %3647
        %3649 = vrot.lane.b32.xlu0 %v3390, 32
        %v3650 = vpop.permute.xlu0 %3649
        %3651 = vrot.lane.b32.xlu0 %v3402, 32
        %v3652 = vpop.permute.xlu0 %3651
        %3653 = vrot.lane.b32.xlu0 %v3414, 32
        %v3654 = vpop.permute.xlu0 %3653
        %3655 = vrot.lane.b32.xlu0 %v3426, 32
        %v3656 = vpop.permute.xlu0 %3655
        %3657 = vrot.lane.b32.xlu0 %v3438, 32
        %v3658 = vpop.permute.xlu0 %3657
        %3659 = vrot.lane.b32.xlu0 %v3450, 32
        %v3660 = vpop.permute.xlu0 %3659
        %3661 = vrot.lane.b32.xlu0 %v3630, 32
        %v3662 = vpop.permute.xlu0 %3661
        %v3664 = vrot.slane %v3254, 1
        %v3665 = vrot.slane %v3270, 1
        %v3666 = vsel %vm2263, %v3664, %v3665
        %3667 = vrot.lane.b32.xlu0 %v3513, 40
        %v3668 = vpop.permute.xlu0 %3667
        %3669 = vrot.lane.b32.xlu0 %v3516, 40
        %v3670 = vpop.permute.xlu0 %3669
        %3671 = vrot.lane.b32.xlu0 %v3519, 40
        %v3672 = vpop.permute.xlu0 %3671
        %3673 = vrot.lane.b32.xlu0 %v3522, 40
        %v3674 = vpop.permute.xlu0 %3673
        %3675 = vrot.lane.b32.xlu0 %v3525, 40
        %v3676 = vpop.permute.xlu0 %3675
        %3677 = vrot.lane.b32.xlu0 %v3528, 40
        %v3678 = vpop.permute.xlu0 %3677
        %3679 = vrot.lane.b32.xlu0 %v3531, 40
        %v3680 = vpop.permute.xlu0 %3679
        %3681 = vrot.lane.b32.xlu0 %v3534, 40
        %v3682 = vpop.permute.xlu0 %3681
        %3683 = vrot.lane.b32.xlu0 %v3537, 40
        %v3684 = vpop.permute.xlu0 %3683
        %3685 = vrot.lane.b32.xlu0 %v3540, 40
        %v3686 = vpop.permute.xlu0 %3685
        %3687 = vrot.lane.b32.xlu0 %v3543, 40
        %v3688 = vpop.permute.xlu0 %3687
        %3689 = vrot.lane.b32.xlu0 %v3546, 40
        %v3690 = vpop.permute.xlu0 %3689
        %3691 = vrot.lane.b32.xlu0 %v3549, 40
        %v3692 = vpop.permute.xlu0 %3691
        %3693 = vrot.lane.b32.xlu0 %v3552, 40
        %v3694 = vpop.permute.xlu0 %3693
        %3695 = vrot.lane.b32.xlu0 %v3555, 40
        %v3696 = vpop.permute.xlu0 %3695
        %3697 = vrot.lane.b32.xlu0 %v3666, 40
        %v3698 = vpop.permute.xlu0 %3697
        %3699 = vrot.lane.b32.xlu0 %v3240, 48
        %v3700 = vpop.permute.xlu0 %3699
        %3701 = vrot.lane.b32.xlu0 %v3241, 48
        %v3702 = vpop.permute.xlu0 %3701
        %3703 = vrot.lane.b32.xlu0 %v3242, 48
        %v3704 = vpop.permute.xlu0 %3703
        %3705 = vrot.lane.b32.xlu0 %v3243, 48
        %v3706 = vpop.permute.xlu0 %3705
        %3707 = vrot.lane.b32.xlu0 %v3244, 48
        %v3708 = vpop.permute.xlu0 %3707
        %3709 = vrot.lane.b32.xlu0 %v3245, 48
        %v3710 = vpop.permute.xlu0 %3709
        %3711 = vrot.lane.b32.xlu0 %v3246, 48
        %v3712 = vpop.permute.xlu0 %3711
        %3713 = vrot.lane.b32.xlu0 %v3247, 48
        %v3714 = vpop.permute.xlu0 %3713
        %3715 = vrot.lane.b32.xlu0 %v3248, 48
        %v3716 = vpop.permute.xlu0 %3715
        %3717 = vrot.lane.b32.xlu0 %v3249, 48
        %v3718 = vpop.permute.xlu0 %3717
        %3719 = vrot.lane.b32.xlu0 %v3250, 48
        %v3720 = vpop.permute.xlu0 %3719
        %3721 = vrot.lane.b32.xlu0 %v3251, 48
        %v3722 = vpop.permute.xlu0 %3721
        %3723 = vrot.lane.b32.xlu0 %v3252, 48
        %v3724 = vpop.permute.xlu0 %3723
        %3725 = vrot.lane.b32.xlu0 %v3253, 48
        %v3726 = vpop.permute.xlu0 %3725
        %3727 = vrot.lane.b32.xlu0 %v3254, 48
        %v3728 = vpop.permute.xlu0 %3727
        %3729 = vrot.lane.b32.xlu0 %v3294, 56
        %v3730 = vpop.permute.xlu0 %3729
        %3731 = vrot.lane.b32.xlu0 %v3306, 56
        %v3732 = vpop.permute.xlu0 %3731
        %3733 = vrot.lane.b32.xlu0 %v3318, 56
        %v3734 = vpop.permute.xlu0 %3733
        %3735 = vrot.lane.b32.xlu0 %v3330, 56
        %v3736 = vpop.permute.xlu0 %3735
        %3737 = vrot.lane.b32.xlu0 %v3342, 56
        %v3738 = vpop.permute.xlu0 %3737
        %3739 = vrot.lane.b32.xlu0 %v3354, 56
        %v3740 = vpop.permute.xlu0 %3739
        %3741 = vrot.lane.b32.xlu0 %v3366, 56
        %v3742 = vpop.permute.xlu0 %3741
        %3743 = vrot.lane.b32.xlu0 %v3378, 56
        %v3744 = vpop.permute.xlu0 %3743
        %3745 = vrot.lane.b32.xlu0 %v3390, 56
        %v3746 = vpop.permute.xlu0 %3745
        %3747 = vrot.lane.b32.xlu0 %v3402, 56
        %v3748 = vpop.permute.xlu0 %3747
        %3749 = vrot.lane.b32.xlu0 %v3414, 56
        %v3750 = vpop.permute.xlu0 %3749
        %3751 = vrot.lane.b32.xlu0 %v3426, 56
        %v3752 = vpop.permute.xlu0 %3751
        %3753 = vrot.lane.b32.xlu0 %v3438, 56
        %v3754 = vpop.permute.xlu0 %3753
        %3755 = vrot.lane.b32.xlu0 %v3450, 56
        %v3756 = vpop.permute.xlu0 %3755
        %3757 = vrot.lane.b32.xlu0 %v3630, 56
        %v3758 = vpop.permute.xlu0 %3757
        %3759 = vrot.lane.b32.xlu0 %v3516, 64
        %v3760 = vpop.permute.xlu0 %3759
        %3761 = vrot.lane.b32.xlu0 %v3519, 64
        %v3762 = vpop.permute.xlu0 %3761
        %3763 = vrot.lane.b32.xlu0 %v3522, 64
        %v3764 = vpop.permute.xlu0 %3763
        %3765 = vrot.lane.b32.xlu0 %v3525, 64
        %v3766 = vpop.permute.xlu0 %3765
        %3767 = vrot.lane.b32.xlu0 %v3528, 64
        %v3768 = vpop.permute.xlu0 %3767
        %3769 = vrot.lane.b32.xlu0 %v3531, 64
        %v3770 = vpop.permute.xlu0 %3769
        %3771 = vrot.lane.b32.xlu0 %v3534, 64
        %v3772 = vpop.permute.xlu0 %3771
        %3773 = vrot.lane.b32.xlu0 %v3537, 64
        %v3774 = vpop.permute.xlu0 %3773
        %3775 = vrot.lane.b32.xlu0 %v3540, 64
        %v3776 = vpop.permute.xlu0 %3775
        %3777 = vrot.lane.b32.xlu0 %v3543, 64
        %v3778 = vpop.permute.xlu0 %3777
        %3779 = vrot.lane.b32.xlu0 %v3546, 64
        %v3780 = vpop.permute.xlu0 %3779
        %3781 = vrot.lane.b32.xlu0 %v3549, 64
        %v3782 = vpop.permute.xlu0 %3781
        %3783 = vrot.lane.b32.xlu0 %v3552, 64
        %v3784 = vpop.permute.xlu0 %3783
        %3785 = vrot.lane.b32.xlu0 %v3555, 64
        %v3786 = vpop.permute.xlu0 %3785
        %3787 = vrot.lane.b32.xlu0 %v3666, 64
        %v3788 = vpop.permute.xlu0 %3787
        %v3790 = vsel %vm2553, %v3239, %v3452
        %v3792 = vsel %vm2553, %v3240, %v3454
        %v3794 = vsel %vm2553, %v3241, %v3456
        %v3796 = vsel %vm2553, %v3242, %v3458
        %v3798 = vsel %vm2553, %v3243, %v3460
        %v3800 = vsel %vm2553, %v3244, %v3462
        %v3802 = vsel %vm2553, %v3245, %v3464
        %v3804 = vsel %vm2553, %v3246, %v3466
        %v3806 = vsel %vm2553, %v3247, %v3468
        %v3808 = vsel %vm2553, %v3248, %v3470
        %v3810 = vsel %vm2553, %v3249, %v3472
        %v3812 = vsel %vm2553, %v3250, %v3474
        %v3814 = vsel %vm2553, %v3251, %v3476
        %v3816 = vsel %vm2553, %v3252, %v3478
        %v3818 = vsel %vm2553, %v3253, %v3480
        %v3820 = vsel %vm2586, %v3790, %v3557
        %v3822 = vsel %vm2586, %v3792, %v3559
        %v3824 = vsel %vm2586, %v3794, %v3561
        %v3826 = vsel %vm2586, %v3796, %v3563
        %v3828 = vsel %vm2586, %v3798, %v3565
        %v3830 = vsel %vm2586, %v3800, %v3567
        %v3832 = vsel %vm2586, %v3802, %v3569
        %v3834 = vsel %vm2586, %v3804, %v3571
        %v3836 = vsel %vm2586, %v3806, %v3573
        %v3838 = vsel %vm2586, %v3808, %v3575
        %v3840 = vsel %vm2586, %v3810, %v3577
        %v3842 = vsel %vm2586, %v3812, %v3579
        %v3844 = vsel %vm2586, %v3814, %v3581
        %v3846 = vsel %vm2586, %v3816, %v3583
        %v3848 = vsel %vm2586, %v3818, %v3585
        %v3850 = vsel %vm2619, %v2588, %v3588
        %v3852 = vsel %vm2619, %v3820, %v3590
        %v3854 = vsel %vm2619, %v3822, %v3592
        %v3856 = vsel %vm2619, %v3824, %v3594
        %v3858 = vsel %vm2619, %v3826, %v3596
        %v3860 = vsel %vm2619, %v3828, %v3598
        %v3862 = vsel %vm2619, %v3830, %v3600
        %v3864 = vsel %vm2619, %v3832, %v3602
        %v3866 = vsel %vm2619, %v3834, %v3604
        %v3868 = vsel %vm2619, %v3836, %v3606
        %v3870 = vsel %vm2619, %v3838, %v3608
        %v3872 = vsel %vm2619, %v3840, %v3610
        %v3874 = vsel %vm2619, %v3842, %v3612
        %v3876 = vsel %vm2619, %v3844, %v3614
        %v3878 = vsel %vm2619, %v3846, %v3616
        %v3880 = vsel %vm2619, %v3848, %v3618
        %v3882 = vsel %vm1558, %v3850, %v3632
        %v3884 = vsel %vm1558, %v3852, %v3634
        %v3886 = vsel %vm1558, %v3854, %v3636
        %v3888 = vsel %vm1558, %v3856, %v3638
        %v3890 = vsel %vm1558, %v3858, %v3640
        %v3892 = vsel %vm1558, %v3860, %v3642
        %v3894 = vsel %vm1558, %v3862, %v3644
        %v3896 = vsel %vm1558, %v3864, %v3646
        %v3898 = vsel %vm1558, %v3866, %v3648
        %v3900 = vsel %vm1558, %v3868, %v3650
        %v3902 = vsel %vm1558, %v3870, %v3652
        %v3904 = vsel %vm1558, %v3872, %v3654
        %v3906 = vsel %vm1558, %v3874, %v3656
        %v3908 = vsel %vm1558, %v3876, %v3658
        %v3910 = vsel %vm1558, %v3878, %v3660
        %v3912 = vsel %vm1558, %v3880, %v3662
        %v3914 = vsel %vm2684, %v3882, %v3668
        %v3916 = vsel %vm2684, %v3884, %v3670
        %v3918 = vsel %vm2684, %v3886, %v3672
        %v3920 = vsel %vm2684, %v3888, %v3674
        %v3922 = vsel %vm2684, %v3890, %v3676
        %v3924 = vsel %vm2684, %v3892, %v3678
        %v3926 = vsel %vm2684, %v3894, %v3680
        %v3928 = vsel %vm2684, %v3896, %v3682
        %v3930 = vsel %vm2684, %v3898, %v3684
        %v3932 = vsel %vm2684, %v3900, %v3686
        %v3934 = vsel %vm2684, %v3902, %v3688
        %v3936 = vsel %vm2684, %v3904, %v3690
        %v3938 = vsel %vm2684, %v3906, %v3692
        %v3940 = vsel %vm2684, %v3908, %v3694
        %v3942 = vsel %vm2684, %v3910, %v3696
        %v3944 = vsel %vm2684, %v3912, %v3698
        %v3946 = vsel %vm2717, %v3914, %v3700
        %v3948 = vsel %vm2717, %v3916, %v3702
        %v3950 = vsel %vm2717, %v3918, %v3704
        %v3952 = vsel %vm2717, %v3920, %v3706
        %v3954 = vsel %vm2717, %v3922, %v3708
        %v3956 = vsel %vm2717, %v3924, %v3710
        %v3958 = vsel %vm2717, %v3926, %v3712
        %v3960 = vsel %vm2717, %v3928, %v3714
        %v3962 = vsel %vm2717, %v3930, %v3716
        %v3964 = vsel %vm2717, %v3932, %v3718
        %v3966 = vsel %vm2717, %v3934, %v3720
        %v3968 = vsel %vm2717, %v3936, %v3722
        %v3970 = vsel %vm2717, %v3938, %v3724
        %v3972 = vsel %vm2717, %v3940, %v3726
        %v3974 = vsel %vm2717, %v3942, %v3728
        %v3975 = vsel %vm2717, %v3944, %v2488
        %v3977 = vsel %vm2750, %v3946, %v3730
        %v3979 = vsel %vm2750, %v3948, %v3732
        %v3981 = vsel %vm2750, %v3950, %v3734
        %v3983 = vsel %vm2750, %v3952, %v3736
        %v3985 = vsel %vm2750, %v3954, %v3738
        %v3987 = vsel %vm2750, %v3956, %v3740
        %v3989 = vsel %vm2750, %v3958, %v3742
        %v3991 = vsel %vm2750, %v3960, %v3744
        %v3993 = vsel %vm2750, %v3962, %v3746
        %v3995 = vsel %vm2750, %v3964, %v3748
        %v3997 = vsel %vm2750, %v3966, %v3750
        %v3999 = vsel %vm2750, %v3968, %v3752
        %v4001 = vsel %vm2750, %v3970, %v3754
        %v4003 = vsel %vm2750, %v3972, %v3756
        %v4005 = vsel %vm2750, %v3974, %v3758
        %v4006 = vsel %vm2750, %v3975, %v2520
        %v4008 = vsel %vm2783, %v3977, %v3760
        %v4010 = vsel %vm2783, %v3979, %v3762
        %v4012 = vsel %vm2783, %v3981, %v3764
        %v4014 = vsel %vm2783, %v3983, %v3766
        %v4016 = vsel %vm2783, %v3985, %v3768
        %v4018 = vsel %vm2783, %v3987, %v3770
        %v4020 = vsel %vm2783, %v3989, %v3772
        %v4022 = vsel %vm2783, %v3991, %v3774
        %v4024 = vsel %vm2783, %v3993, %v3776
        %v4026 = vsel %vm2783, %v3995, %v3778
        %v4028 = vsel %vm2783, %v3997, %v3780
        %v4030 = vsel %vm2783, %v3999, %v3782
        %v4032 = vsel %vm2783, %v4001, %v3784
        %v4034 = vsel %vm2783, %v4003, %v3786
        %v4036 = vsel %vm2783, %v4005, %v3788
        %v4037 = vsel %vm2783, %v4006, %v2552
        %v4039 = vlaneseq
        %v4040 = vshrl.u32 %v4039, 7
        %v4041 = vsub.s32 0, %v4040
        %v4042 = vrot.slane %v1190, %v4041
        %v4053 = vunpack.c.l.b16 %v1181
        %v4054 = vunpack.c.l.b16 %v1182
        %v4055 = vunpack.c.l.b16 %v1183
        %v4056 = vunpack.c.l.b16 %v1184
        %v4057 = vunpack.c.l.b16 %v1185
        %v4058 = vunpack.c.l.b16 %v1186
        %v4059 = vunpack.c.l.b16 %v1187
        %v4060 = vunpack.c.l.b16 %v1188
        %v4061 = vunpack.c.l.b16 %v1189
        %v4062 = vpack.c.b16 %v4054, %v4053
        %v4063 = vpack.c.b16 %v4056, %v4055
        %v4064 = vpack.c.b16 %v4058, %v4057
        %v4065 = vpack.c.b16 %v4060, %v4059
        %v4066 = vpack.c.b16 %v4061, %v4061
        %v4071 = vsel %vm2849, %v4008, 0
        %v4073 = vsel %vm2849, %v4010, 0
        %v4075 = vsel %vm2849, %v4012, 0
        %v4077 = vsel %vm2849, %v4014, 0
        %v4079 = vsel %vm2849, %v4016, 0
        %v4081 = vsel %vm2849, %v4018, 0
        %v4083 = vsel %vm2849, %v4020, 0
        %v4085 = vsel %vm2849, %v4022, 0
        %v4087 = vsel %vm2849, %v4024, 0
        %v4089 = vsel %vm2849, %v4026, 0
        %v4091 = vsel %vm2849, %v4028, 0
        %v4093 = vsel %vm2849, %v4030, 0
        %v4095 = vsel %vm2849, %v4032, 0
        %v4097 = vsel %vm2849, %v4034, 0
        %v4099 = vsel %vm2849, %v4036, 0
        %v4101 = vsel %vm2849, %v4037, 0
        %v4104 = vsel %vm2882, %v4066, 0
        %4106 = vmatprep.subr.bf16.mxu0 0
        %4107 = vmatpush1.bf16.msra.mxu0 0
        %4108 = vmatprep.subr.bf16.mxu0 0
        %4109 = vmatpush1.bf16.msra.mxu0 0
        %4110 = vmatprep.subr.bf16.mxu0 0
        %4111 = vmatpush1.bf16.msra.mxu0 0
        %4112 = vmatprep.subr.bf16.mxu0 0
        %4113 = vmatpush1.bf16.msra.mxu0 %v4104
        %4114 = vmatprep.subr.bf16.mxu0 0
        %4115 = vmatpush1.bf16.msra.mxu0 %v4065
        %4116 = vmatprep.subr.bf16.mxu0 0
        %4117 = vmatpush1.bf16.msra.mxu0 %v4064
        %4118 = vmatprep.subr.bf16.mxu0 0
        %4119 = vmatpush1.bf16.msra.mxu0 %v4063
        %4120 = vmatprep.subr.bf16.mxu0 0
        %4121 = vmatpush1.bf16.msra.mxu0 %v4062
        %4122 = vmatprep.subr.bf16.mxu0 0
        %4123 = vmatpush2.bf16.msra.mxu0 0
        %4124 = vmatprep.subr.bf16.mxu0 0
        %4125 = vmatpush2.bf16.msra.mxu0 0
        %4126 = vmatprep.subr.bf16.mxu0 0
        %4127 = vmatpush2.bf16.msra.mxu0 0
        %4128 = vmatprep.subr.bf16.mxu0 0
        %4129 = vmatpush2.bf16.msra.mxu0 0
        %4130 = vmatprep.subr.bf16.mxu0 0
        %4131 = vmatpush2.bf16.msra.mxu0 0
        %4132 = vmatprep.subr.bf16.mxu0 0
        %4133 = vmatpush2.bf16.msra.mxu0 0
        %4134 = vmatprep.subr.bf16.mxu0 0
        %4135 = vmatpush2.bf16.msra.mxu0 0
        %4136 = vmatprep.subr.bf16.mxu0 0
        %4137 = vmatpush2.bf16.msra.mxu0 0
        %4138 = vmatprep.mubr.bf16.mxu0 0
        %4139 = vmatmul.mubr.bf16.gmra.mxu0 %v4071
        %v4140 = vpop.f32.mrf.mxu0
        %v4141 = vadd.f32 %v4042, %v4140
        %v4142 = vpop.f32.mrf.mxu0
        %v4143 = vpop.f32.mrf.mxu0
        %v4144 = vadd.f32 %v4042, %v4143
        %v4145 = vpop.f32.mrf.mxu0
        %4146 = vmatprep.mubr.bf16.mxu0 0
        %4147 = vmatmul.mubr.bf16.gmra.mxu0 %v4073
        %v4148 = vpop.f32.mrf.mxu0
        %v4149 = vadd.f32 %v4042, %v4148
        %v4150 = vpop.f32.mrf.mxu0
        %v4151 = vpop.f32.mrf.mxu0
        %v4152 = vadd.f32 %v4042, %v4151
        %v4153 = vpop.f32.mrf.mxu0
        %4154 = vmatprep.mubr.bf16.mxu0 0
        %4155 = vmatmul.mubr.bf16.gmra.mxu0 %v4075
        %v4156 = vpop.f32.mrf.mxu0
        %v4157 = vadd.f32 %v4042, %v4156
        %v4158 = vpop.f32.mrf.mxu0
        %v4159 = vpop.f32.mrf.mxu0
        %v4160 = vadd.f32 %v4042, %v4159
        %v4161 = vpop.f32.mrf.mxu0
        %4162 = vmatprep.mubr.bf16.mxu0 0
        %4163 = vmatmul.mubr.bf16.gmra.mxu0 %v4077
        %v4164 = vpop.f32.mrf.mxu0
        %v4165 = vadd.f32 %v4042, %v4164
        %v4166 = vpop.f32.mrf.mxu0
        %v4167 = vpop.f32.mrf.mxu0
        %v4168 = vadd.f32 %v4042, %v4167
        %v4169 = vpop.f32.mrf.mxu0
        %4170 = vmatprep.mubr.bf16.mxu0 0
        %4171 = vmatmul.mubr.bf16.gmra.mxu0 %v4079
        %v4172 = vpop.f32.mrf.mxu0
        %v4173 = vadd.f32 %v4042, %v4172
        %v4174 = vpop.f32.mrf.mxu0
        %v4175 = vpop.f32.mrf.mxu0
        %v4176 = vadd.f32 %v4042, %v4175
        %v4177 = vpop.f32.mrf.mxu0
        %4178 = vmatprep.mubr.bf16.mxu0 0
        %4179 = vmatmul.mubr.bf16.gmra.mxu0 %v4081
        %v4180 = vpop.f32.mrf.mxu0
        %v4181 = vadd.f32 %v4042, %v4180
        %v4182 = vpop.f32.mrf.mxu0
        %v4183 = vpop.f32.mrf.mxu0
        %v4184 = vadd.f32 %v4042, %v4183
        %v4185 = vpop.f32.mrf.mxu0
        %4186 = vmatprep.mubr.bf16.mxu0 0
        %4187 = vmatmul.mubr.bf16.gmra.mxu0 %v4083
        %v4188 = vpop.f32.mrf.mxu0
        %v4189 = vadd.f32 %v4042, %v4188
        %v4190 = vpop.f32.mrf.mxu0
        %v4191 = vpop.f32.mrf.mxu0
        %v4192 = vadd.f32 %v4042, %v4191
        %v4193 = vpop.f32.mrf.mxu0
        %4194 = vmatprep.mubr.bf16.mxu0 0
        %4195 = vmatmul.mubr.bf16.gmra.mxu0 %v4085
        %v4196 = vpop.f32.mrf.mxu0
        %v4197 = vadd.f32 %v4042, %v4196
        %v4198 = vpop.f32.mrf.mxu0
        %v4199 = vpop.f32.mrf.mxu0
        %v4200 = vadd.f32 %v4042, %v4199
        %v4201 = vpop.f32.mrf.mxu0
        %4202 = vmatprep.mubr.bf16.mxu0 0
        %4203 = vmatmul.mubr.bf16.gmra.mxu0 %v4087
        %v4204 = vpop.f32.mrf.mxu0
        %v4205 = vadd.f32 %v4042, %v4204
        %v4206 = vpop.f32.mrf.mxu0
        %v4207 = vpop.f32.mrf.mxu0
        %v4208 = vadd.f32 %v4042, %v4207
        %v4209 = vpop.f32.mrf.mxu0
        %4210 = vmatprep.mubr.bf16.mxu0 0
        %4211 = vmatmul.mubr.bf16.gmra.mxu0 %v4089
        %v4212 = vpop.f32.mrf.mxu0
        %v4213 = vadd.f32 %v4042, %v4212
        %v4214 = vpop.f32.mrf.mxu0
        %v4215 = vpop.f32.mrf.mxu0
        %v4216 = vadd.f32 %v4042, %v4215
        %v4217 = vpop.f32.mrf.mxu0
        %4218 = vmatprep.mubr.bf16.mxu0 0
        %4219 = vmatmul.mubr.bf16.gmra.mxu0 %v4091
        %v4220 = vpop.f32.mrf.mxu0
        %v4221 = vadd.f32 %v4042, %v4220
        %v4222 = vpop.f32.mrf.mxu0
        %v4223 = vpop.f32.mrf.mxu0
        %v4224 = vadd.f32 %v4042, %v4223
        %v4225 = vpop.f32.mrf.mxu0
        %4226 = vmatprep.mubr.bf16.mxu0 0
        %4227 = vmatmul.mubr.bf16.gmra.mxu0 %v4093
        %v4228 = vpop.f32.mrf.mxu0
        %v4229 = vadd.f32 %v4042, %v4228
        %v4230 = vpop.f32.mrf.mxu0
        %v4231 = vpop.f32.mrf.mxu0
        %v4232 = vadd.f32 %v4042, %v4231
        %v4233 = vpop.f32.mrf.mxu0
        %4234 = vmatprep.mubr.bf16.mxu0 0
        %4235 = vmatmul.mubr.bf16.gmra.mxu0 %v4095
        %v4236 = vpop.f32.mrf.mxu0
        %v4237 = vadd.f32 %v4042, %v4236
        %v4238 = vpop.f32.mrf.mxu0
        %v4239 = vpop.f32.mrf.mxu0
        %v4240 = vadd.f32 %v4042, %v4239
        %v4241 = vpop.f32.mrf.mxu0
        %4242 = vmatprep.mubr.bf16.mxu0 0
        %4243 = vmatmul.mubr.bf16.gmra.mxu0 %v4097
        %v4244 = vpop.f32.mrf.mxu0
        %v4245 = vadd.f32 %v4042, %v4244
        %v4246 = vpop.f32.mrf.mxu0
        %v4247 = vpop.f32.mrf.mxu0
        %v4248 = vadd.f32 %v4042, %v4247
        %v4249 = vpop.f32.mrf.mxu0
        %4250 = vmatprep.mubr.bf16.mxu0 0
        %4251 = vmatmul.mubr.bf16.gmra.mxu0 %v4099
        %v4252 = vpop.f32.mrf.mxu0
        %v4253 = vadd.f32 %v4042, %v4252
        %v4254 = vpop.f32.mrf.mxu0
        %v4255 = vpop.f32.mrf.mxu0
        %v4256 = vadd.f32 %v4042, %v4255
        %v4257 = vpop.f32.mrf.mxu0
        %4258 = vmatprep.mubr.bf16.mxu0 0
        %4259 = vmatmul.mubr.bf16.gmra.mxu0 %v4101
        %v4260 = vpop.f32.mrf.mxu0
        %v4261 = vadd.f32 %v4042, %v4260
        %v4262 = vpop.f32.mrf.mxu0
        %v4263 = vpop.f32.mrf.mxu0
        %v4264 = vadd.f32 %v4042, %v4263
        %v4265 = vpop.f32.mrf.mxu0
        %4266 = vdwg.mxu0
        %v4267 = vmax.f32 %v4141, 0.0
        %v4268 = vmax.f32 %v4144, 0.0
        %v4269 = vmax.f32 %v4149, 0.0
        %v4270 = vmax.f32 %v4152, 0.0
        %v4271 = vmax.f32 %v4157, 0.0
        %v4272 = vmax.f32 %v4160, 0.0
        %v4273 = vmax.f32 %v4165, 0.0
        %v4274 = vmax.f32 %v4168, 0.0
        %v4275 = vmax.f32 %v4173, 0.0
        %v4276 = vmax.f32 %v4176, 0.0
        %v4277 = vmax.f32 %v4181, 0.0
        %v4278 = vmax.f32 %v4184, 0.0
        %v4279 = vmax.f32 %v4189, 0.0
        %v4280 = vmax.f32 %v4192, 0.0
        %v4281 = vmax.f32 %v4197, 0.0
        %v4282 = vmax.f32 %v4200, 0.0
        %v4283 = vmax.f32 %v4205, 0.0
        %v4284 = vmax.f32 %v4208, 0.0
        %v4285 = vmax.f32 %v4213, 0.0
        %v4286 = vmax.f32 %v4216, 0.0
        %v4287 = vmax.f32 %v4221, 0.0
        %v4288 = vmax.f32 %v4224, 0.0
        %v4289 = vmax.f32 %v4229, 0.0
        %v4290 = vmax.f32 %v4232, 0.0
        %v4291 = vmax.f32 %v4237, 0.0
        %v4292 = vmax.f32 %v4240, 0.0
        %v4293 = vmax.f32 %v4245, 0.0
        %v4294 = vmax.f32 %v4248, 0.0
        %v4295 = vmax.f32 %v4253, 0.0
        %v4296 = vmax.f32 %v4256, 0.0
        %v4297 = vmax.f32 %v4261, 0.0
        %v4298 = vmax.f32 %v4264, 0.0
        %v4299 = vpack.c.bf16 %v4268, %v4267
        %v4300 = vpack.c.bf16 %v4270, %v4269
        %v4301 = vpack.c.bf16 %v4272, %v4271
        %v4302 = vpack.c.bf16 %v4274, %v4273
        %v4303 = vpack.c.bf16 %v4276, %v4275
        %v4304 = vpack.c.bf16 %v4278, %v4277
        %v4305 = vpack.c.bf16 %v4280, %v4279
        %v4306 = vpack.c.bf16 %v4282, %v4281
        %v4307 = vpack.c.bf16 %v4284, %v4283
        %v4308 = vpack.c.bf16 %v4286, %v4285
        %v4309 = vpack.c.bf16 %v4288, %v4287
        %v4310 = vpack.c.bf16 %v4290, %v4289
        %v4311 = vpack.c.bf16 %v4292, %v4291
        %v4312 = vpack.c.bf16 %v4294, %v4293
        %v4313 = vpack.c.bf16 %v4296, %v4295
        %v4314 = vpack.c.bf16 %v4298, %v4297
        %v4331 = vunpack.c.l.b16 %v4299
        %v4332 = vunpack.c.h.b16 %v4299
        %v4333 = vunpack.c.l.b16 %v4300
        %v4334 = vunpack.c.h.b16 %v4300
        %v4335 = vunpack.c.l.b16 %v4301
        %v4336 = vunpack.c.h.b16 %v4301
        %v4337 = vunpack.c.l.b16 %v4302
        %v4338 = vunpack.c.h.b16 %v4302
        %v4339 = vunpack.c.l.b16 %v4303
        %v4340 = vunpack.c.h.b16 %v4303
        %v4341 = vunpack.c.l.b16 %v4304
        %v4342 = vunpack.c.h.b16 %v4304
        %v4343 = vunpack.c.l.b16 %v4305
        %v4344 = vunpack.c.h.b16 %v4305
        %v4345 = vunpack.c.l.b16 %v4306
        %v4346 = vunpack.c.h.b16 %v4306
        %v4347 = vunpack.c.l.b16 %v4307
        %v4348 = vunpack.c.h.b16 %v4307
        %v4349 = vunpack.c.l.b16 %v4308
        %v4350 = vunpack.c.h.b16 %v4308
        %v4351 = vunpack.c.l.b16 %v4309
        %v4352 = vunpack.c.h.b16 %v4309
        %v4353 = vunpack.c.l.b16 %v4310
        %v4354 = vunpack.c.h.b16 %v4310
        %v4355 = vunpack.c.l.b16 %v4311
        %v4356 = vunpack.c.h.b16 %v4311
        %v4357 = vunpack.c.l.b16 %v4312
        %v4358 = vunpack.c.h.b16 %v4312
        %v4359 = vunpack.c.l.b16 %v4313
        %v4360 = vunpack.c.h.b16 %v4313
        %v4361 = vunpack.c.l.b16 %v4314
        %v4362 = vunpack.c.h.b16 %v4314
        %v4363 = vpack.c.b16 %v4331, %v4331
        %v4364 = vpack.c.b16 %v4332, %v4332
        %v4365 = vpack.c.b16 %v4333, %v4333
        %v4366 = vpack.c.b16 %v4334, %v4334
        %v4367 = vpack.c.b16 %v4335, %v4335
        %v4368 = vpack.c.b16 %v4336, %v4336
        %v4369 = vpack.c.b16 %v4337, %v4337
        %v4370 = vpack.c.b16 %v4338, %v4338
        %v4371 = vpack.c.b16 %v4339, %v4339
        %v4372 = vpack.c.b16 %v4340, %v4340
        %v4373 = vpack.c.b16 %v4341, %v4341
        %v4374 = vpack.c.b16 %v4342, %v4342
        %v4375 = vpack.c.b16 %v4343, %v4343
        %v4376 = vpack.c.b16 %v4344, %v4344
        %v4377 = vpack.c.b16 %v4345, %v4345
        %v4378 = vpack.c.b16 %v4346, %v4346
        %v4379 = vpack.c.b16 %v4347, %v4347
        %v4380 = vpack.c.b16 %v4348, %v4348
        %v4381 = vpack.c.b16 %v4349, %v4349
        %v4382 = vpack.c.b16 %v4350, %v4350
        %v4383 = vpack.c.b16 %v4351, %v4351
        %v4384 = vpack.c.b16 %v4352, %v4352
        %v4385 = vpack.c.b16 %v4353, %v4353
        %v4386 = vpack.c.b16 %v4354, %v4354
        %v4387 = vpack.c.b16 %v4355, %v4355
        %v4388 = vpack.c.b16 %v4356, %v4356
        %v4389 = vpack.c.b16 %v4357, %v4357
        %v4390 = vpack.c.b16 %v4358, %v4358
        %v4391 = vpack.c.b16 %v4359, %v4359
        %v4392 = vpack.c.b16 %v4360, %v4360
        %v4393 = vpack.c.b16 %v4361, %v4361
        %v4394 = vpack.c.b16 %v4362, %v4362
        %vm4427 = vcmask 125952
        %4428 = vst.msk [vmem:[%s1126] sm:$0xf] %vm4427, %v4363
        %4429 = vst.msk [vmem:[%s1126 + $0x4] sm:$0xf] %vm4427, %v4364
        %4430 = vst.msk [vmem:[%s1126 + $0x8] sm:$0xf] %vm4427, %v4365
        %4431 = vst.msk [vmem:[%s1126 + $0xc] sm:$0xf] %vm4427, %v4366
        %4432 = vst.msk [vmem:[%s1126 + $0x10] sm:$0xf] %vm4427, %v4367
        %4433 = vst.msk [vmem:[%s1126 + $0x14] sm:$0xf] %vm4427, %v4368
        %4434 = vst.msk [vmem:[%s1126 + $0x18] sm:$0xf] %vm4427, %v4369
        %4435 = vst.msk [vmem:[%s1126 + $0x1c] sm:$0xf] %vm4427, %v4370
        %4436 = vst.msk [vmem:[%s1126 + $0x20] sm:$0xf] %vm4427, %v4371
        %4437 = vst.msk [vmem:[%s1126 + $0x24] sm:$0xf] %vm4427, %v4372
        %4438 = vst.msk [vmem:[%s1126 + $0x28] sm:$0xf] %vm4427, %v4373
        %4439 = vst.msk [vmem:[%s1126 + $0x2c] sm:$0xf] %vm4427, %v4374
        %4440 = vst.msk [vmem:[%s1126 + $0x30] sm:$0xf] %vm4427, %v4375
        %4441 = vst.msk [vmem:[%s1126 + $0x34] sm:$0xf] %vm4427, %v4376
        %4442 = vst.msk [vmem:[%s1126 + $0x38] sm:$0xf] %vm4427, %v4377
        %4443 = vst.msk [vmem:[%s1126 + $0x3c] sm:$0xf] %vm4427, %v4378
        %4444 = vst.msk [vmem:[%s1126 + $0x40] sm:$0xf] %vm4427, %v4379
        %4445 = vst.msk [vmem:[%s1126 + $0x44] sm:$0xf] %vm4427, %v4380
        %4446 = vst.msk [vmem:[%s1126 + $0x48] sm:$0xf] %vm4427, %v4381
        %4447 = vst.msk [vmem:[%s1126 + $0x4c] sm:$0xf] %vm4427, %v4382
        %4448 = vst.msk [vmem:[%s1126 + $0x50] sm:$0xf] %vm4427, %v4383
        %4449 = vst.msk [vmem:[%s1126 + $0x54] sm:$0xf] %vm4427, %v4384
        %4450 = vst.msk [vmem:[%s1126 + $0x58] sm:$0xf] %vm4427, %v4385
        %4451 = vst.msk [vmem:[%s1126 + $0x5c] sm:$0xf] %vm4427, %v4386
        %4452 = vst.msk [vmem:[%s1126 + $0x60] sm:$0xf] %vm4427, %v4387
        %4453 = vst.msk [vmem:[%s1126 + $0x64] sm:$0xf] %vm4427, %v4388
        %4454 = vst.msk [vmem:[%s1126 + $0x68] sm:$0xf] %vm4427, %v4389
        %4455 = vst.msk [vmem:[%s1126 + $0x6c] sm:$0xf] %vm4427, %v4390
        %4456 = vst.msk [vmem:[%s1126 + $0x70] sm:$0xf] %vm4427, %v4391
        %4457 = vst.msk [vmem:[%s1126 + $0x74] sm:$0xf] %vm4427, %v4392
        %4458 = vst.msk [vmem:[%s1126 + $0x78] sm:$0xf] %vm4427, %v4393
        %4459 = vst.msk [vmem:[%s1126 + $0x7c] sm:$0xf] %vm4427, %v4394
        %v4461 = vshrl.u32 %v4299, 16
        %v4463 = vrot.slane %v4461, 7
        %v4464 = vshll.u32 %v4299, 16
        %v4466 = vor.u32 %v4463, %v4464
        %v4468 = vshrl.u32 %v4300, 16
        %v4470 = vrot.slane %v4468, 7
        %v4471 = vshll.u32 %v4300, 16
        %v4473 = vor.u32 %v4470, %v4471
        %v4475 = vshrl.u32 %v4301, 16
        %v4477 = vrot.slane %v4475, 7
        %v4478 = vshll.u32 %v4301, 16
        %v4480 = vor.u32 %v4477, %v4478
        %v4482 = vshrl.u32 %v4302, 16
        %v4484 = vrot.slane %v4482, 7
        %v4485 = vshll.u32 %v4302, 16
        %v4487 = vor.u32 %v4484, %v4485
        %v4489 = vshrl.u32 %v4303, 16
        %v4491 = vrot.slane %v4489, 7
        %v4492 = vshll.u32 %v4303, 16
        %v4494 = vor.u32 %v4491, %v4492
        %v4496 = vshrl.u32 %v4304, 16
        %v4498 = vrot.slane %v4496, 7
        %v4499 = vshll.u32 %v4304, 16
        %v4501 = vor.u32 %v4498, %v4499
        %v4503 = vshrl.u32 %v4305, 16
        %v4505 = vrot.slane %v4503, 7
        %v4506 = vshll.u32 %v4305, 16
        %v4508 = vor.u32 %v4505, %v4506
        %v4510 = vshrl.u32 %v4306, 16
        %v4512 = vrot.slane %v4510, 7
        %v4513 = vshll.u32 %v4306, 16
        %v4515 = vor.u32 %v4512, %v4513
        %v4517 = vshrl.u32 %v4307, 16
        %v4519 = vrot.slane %v4517, 7
        %v4520 = vshll.u32 %v4307, 16
        %v4522 = vor.u32 %v4519, %v4520
        %v4524 = vshrl.u32 %v4308, 16
        %v4526 = vrot.slane %v4524, 7
        %v4527 = vshll.u32 %v4308, 16
        %v4529 = vor.u32 %v4526, %v4527
        %v4531 = vshrl.u32 %v4309, 16
        %v4533 = vrot.slane %v4531, 7
        %v4534 = vshll.u32 %v4309, 16
        %v4536 = vor.u32 %v4533, %v4534
        %v4538 = vshrl.u32 %v4310, 16
        %v4540 = vrot.slane %v4538, 7
        %v4541 = vshll.u32 %v4310, 16
        %v4543 = vor.u32 %v4540, %v4541
        %v4545 = vshrl.u32 %v4311, 16
        %v4547 = vrot.slane %v4545, 7
        %v4548 = vshll.u32 %v4311, 16
        %v4550 = vor.u32 %v4547, %v4548
        %v4552 = vshrl.u32 %v4312, 16
        %v4554 = vrot.slane %v4552, 7
        %v4555 = vshll.u32 %v4312, 16
        %v4557 = vor.u32 %v4554, %v4555
        %v4559 = vshrl.u32 %v4313, 16
        %v4561 = vrot.slane %v4559, 7
        %v4562 = vshll.u32 %v4313, 16
        %v4564 = vor.u32 %v4561, %v4562
        %v4566 = vshrl.u32 %v4314, 16
        %v4568 = vrot.slane %v4566, 7
        %v4569 = vshll.u32 %v4314, 16
        %v4571 = vor.u32 %v4568, %v4569
        %v4604 = vsel %vm1971, 0, %v4466
        %v4605 = vsel %vm1971, 0, %v4473
        %v4606 = vsel %vm1971, 0, %v4480
        %v4607 = vsel %vm1971, 0, %v4487
        %v4608 = vsel %vm1971, 0, %v4494
        %v4609 = vsel %vm1971, 0, %v4501
        %v4610 = vsel %vm1971, 0, %v4508
        %v4611 = vsel %vm1971, 0, %v4515
        %v4612 = vsel %vm1971, 0, %v4522
        %v4613 = vsel %vm1971, 0, %v4529
        %v4614 = vsel %vm1971, 0, %v4536
        %v4615 = vsel %vm1971, 0, %v4543
        %v4616 = vsel %vm1971, 0, %v4550
        %v4617 = vsel %vm1971, 0, %v4557
        %v4618 = vsel %vm1971, 0, %v4564
        %v4619 = vsel %vm1971, 0, %v4571
        %v4620 = vsel %vm1971, %v4463, 0
        %v4621 = vsel %vm1971, %v4470, 0
        %v4622 = vsel %vm1971, %v4477, 0
        %v4623 = vsel %vm1971, %v4484, 0
        %v4624 = vsel %vm1971, %v4491, 0
        %v4625 = vsel %vm1971, %v4498, 0
        %v4626 = vsel %vm1971, %v4505, 0
        %v4627 = vsel %vm1971, %v4512, 0
        %v4628 = vsel %vm1971, %v4519, 0
        %v4629 = vsel %vm1971, %v4526, 0
        %v4630 = vsel %vm1971, %v4533, 0
        %v4631 = vsel %vm1971, %v4540, 0
        %v4632 = vsel %vm1971, %v4547, 0
        %v4633 = vsel %vm1971, %v4554, 0
        %v4634 = vsel %vm1971, %v4561, 0
        %v4635 = vsel %vm1971, %v4568, 0
        %v4637 = vshrl.u32 %v4604, 16
        %v4639 = vshll.u32 %v4604, 16
        %v4641 = vrot.slane %v4639, 1
        %v4642 = vor.u32 %v4637, %v4641
        %v4644 = vshll.u32 %v4620, 16
        %v4646 = vrot.slane %v4644, 1
        %v4647 = vsel %vm2006, %v4642, %v4646
        %v4649 = vshrl.u32 %v4605, 16
        %v4651 = vshll.u32 %v4605, 16
        %v4653 = vrot.slane %v4651, 1
        %v4654 = vor.u32 %v4649, %v4653
        %v4656 = vshll.u32 %v4621, 16
        %v4658 = vrot.slane %v4656, 1
        %v4659 = vsel %vm2006, %v4654, %v4658
        %v4661 = vshrl.u32 %v4606, 16
        %v4663 = vshll.u32 %v4606, 16
        %v4665 = vrot.slane %v4663, 1
        %v4666 = vor.u32 %v4661, %v4665
        %v4668 = vshll.u32 %v4622, 16
        %v4670 = vrot.slane %v4668, 1
        %v4671 = vsel %vm2006, %v4666, %v4670
        %v4673 = vshrl.u32 %v4607, 16
        %v4675 = vshll.u32 %v4607, 16
        %v4677 = vrot.slane %v4675, 1
        %v4678 = vor.u32 %v4673, %v4677
        %v4680 = vshll.u32 %v4623, 16
        %v4682 = vrot.slane %v4680, 1
        %v4683 = vsel %vm2006, %v4678, %v4682
        %v4685 = vshrl.u32 %v4608, 16
        %v4687 = vshll.u32 %v4608, 16
        %v4689 = vrot.slane %v4687, 1
        %v4690 = vor.u32 %v4685, %v4689
        %v4692 = vshll.u32 %v4624, 16
        %v4694 = vrot.slane %v4692, 1
        %v4695 = vsel %vm2006, %v4690, %v4694
        %v4697 = vshrl.u32 %v4609, 16
        %v4699 = vshll.u32 %v4609, 16
        %v4701 = vrot.slane %v4699, 1
        %v4702 = vor.u32 %v4697, %v4701
        %v4704 = vshll.u32 %v4625, 16
        %v4706 = vrot.slane %v4704, 1
        %v4707 = vsel %vm2006, %v4702, %v4706
        %v4709 = vshrl.u32 %v4610, 16
        %v4711 = vshll.u32 %v4610, 16
        %v4713 = vrot.slane %v4711, 1
        %v4714 = vor.u32 %v4709, %v4713
        %v4716 = vshll.u32 %v4626, 16
        %v4718 = vrot.slane %v4716, 1
        %v4719 = vsel %vm2006, %v4714, %v4718
        %v4721 = vshrl.u32 %v4611, 16
        %v4723 = vshll.u32 %v4611, 16
        %v4725 = vrot.slane %v4723, 1
        %v4726 = vor.u32 %v4721, %v4725
        %v4728 = vshll.u32 %v4627, 16
        %v4730 = vrot.slane %v4728, 1
        %v4731 = vsel %vm2006, %v4726, %v4730
        %v4733 = vshrl.u32 %v4612, 16
        %v4735 = vshll.u32 %v4612, 16
        %v4737 = vrot.slane %v4735, 1
        %v4738 = vor.u32 %v4733, %v4737
        %v4740 = vshll.u32 %v4628, 16
        %v4742 = vrot.slane %v4740, 1
        %v4743 = vsel %vm2006, %v4738, %v4742
        %v4745 = vshrl.u32 %v4613, 16
        %v4747 = vshll.u32 %v4613, 16
        %v4749 = vrot.slane %v4747, 1
        %v4750 = vor.u32 %v4745, %v4749
        %v4752 = vshll.u32 %v4629, 16
        %v4754 = vrot.slane %v4752, 1
        %v4755 = vsel %vm2006, %v4750, %v4754
        %v4757 = vshrl.u32 %v4614, 16
        %v4759 = vshll.u32 %v4614, 16
        %v4761 = vrot.slane %v4759, 1
        %v4762 = vor.u32 %v4757, %v4761
        %v4764 = vshll.u32 %v4630, 16
        %v4766 = vrot.slane %v4764, 1
        %v4767 = vsel %vm2006, %v4762, %v4766
        %v4769 = vshrl.u32 %v4615, 16
        %v4771 = vshll.u32 %v4615, 16
        %v4773 = vrot.slane %v4771, 1
        %v4774 = vor.u32 %v4769, %v4773
        %v4776 = vshll.u32 %v4631, 16
        %v4778 = vrot.slane %v4776, 1
        %v4779 = vsel %vm2006, %v4774, %v4778
        %v4781 = vshrl.u32 %v4616, 16
        %v4783 = vshll.u32 %v4616, 16
        %v4785 = vrot.slane %v4783, 1
        %v4786 = vor.u32 %v4781, %v4785
        %v4788 = vshll.u32 %v4632, 16
        %v4790 = vrot.slane %v4788, 1
        %v4791 = vsel %vm2006, %v4786, %v4790
        %v4793 = vshrl.u32 %v4617, 16
        %v4795 = vshll.u32 %v4617, 16
        %v4797 = vrot.slane %v4795, 1
        %v4798 = vor.u32 %v4793, %v4797
        %v4800 = vshll.u32 %v4633, 16
        %v4802 = vrot.slane %v4800, 1
        %v4803 = vsel %vm2006, %v4798, %v4802
        %v4805 = vshrl.u32 %v4618, 16
        %v4807 = vshll.u32 %v4618, 16
        %v4809 = vrot.slane %v4807, 1
        %v4810 = vor.u32 %v4805, %v4809
        %v4812 = vshll.u32 %v4634, 16
        %v4814 = vrot.slane %v4812, 1
        %v4815 = vsel %vm2006, %v4810, %v4814
        %v4832 = vmax.bf16 %v1972, %v2018
        %v4833 = vmax.bf16 %v4604, %v4647
        %v4834 = vmax.bf16 %v4605, %v4659
        %v4835 = vmax.bf16 %v4606, %v4671
        %v4836 = vmax.bf16 %v4607, %v4683
        %v4837 = vmax.bf16 %v4608, %v4695
        %v4838 = vmax.bf16 %v4609, %v4707
        %v4839 = vmax.bf16 %v4610, %v4719
        %v4840 = vmax.bf16 %v4611, %v4731
        %v4841 = vmax.bf16 %v4612, %v4743
        %v4842 = vmax.bf16 %v4613, %v4755
        %v4843 = vmax.bf16 %v4614, %v4767
        %v4844 = vmax.bf16 %v4615, %v4779
        %v4845 = vmax.bf16 %v4616, %v4791
        %v4846 = vmax.bf16 %v4617, %v4803
        %v4847 = vmax.bf16 %v4618, %v4815
        %v4878 = vrot.slane %v4604, 1
        %v4879 = vrot.slane %v4620, 1
        %v4880 = vsel %vm2263, %v4878, %v4879
        %v4881 = vrot.slane %v4605, 1
        %v4882 = vrot.slane %v4621, 1
        %v4883 = vsel %vm2263, %v4881, %v4882
        %v4884 = vrot.slane %v4606, 1
        %v4885 = vrot.slane %v4622, 1
        %v4886 = vsel %vm2263, %v4884, %v4885
        %v4887 = vrot.slane %v4607, 1
        %v4888 = vrot.slane %v4623, 1
        %v4889 = vsel %vm2263, %v4887, %v4888
        %v4890 = vrot.slane %v4608, 1
        %v4891 = vrot.slane %v4624, 1
        %v4892 = vsel %vm2263, %v4890, %v4891
        %v4893 = vrot.slane %v4609, 1
        %v4894 = vrot.slane %v4625, 1
        %v4895 = vsel %vm2263, %v4893, %v4894
        %v4896 = vrot.slane %v4610, 1
        %v4897 = vrot.slane %v4626, 1
        %v4898 = vsel %vm2263, %v4896, %v4897
        %v4899 = vrot.slane %v4611, 1
        %v4900 = vrot.slane %v4627, 1
        %v4901 = vsel %vm2263, %v4899, %v4900
        %v4902 = vrot.slane %v4612, 1
        %v4903 = vrot.slane %v4628, 1
        %v4904 = vsel %vm2263, %v4902, %v4903
        %v4905 = vrot.slane %v4613, 1
        %v4906 = vrot.slane %v4629, 1
        %v4907 = vsel %vm2263, %v4905, %v4906
        %v4908 = vrot.slane %v4614, 1
        %v4909 = vrot.slane %v4630, 1
        %v4910 = vsel %vm2263, %v4908, %v4909
        %v4911 = vrot.slane %v4615, 1
        %v4912 = vrot.slane %v4631, 1
        %v4913 = vsel %vm2263, %v4911, %v4912
        %v4914 = vrot.slane %v4616, 1
        %v4915 = vrot.slane %v4632, 1
        %v4916 = vsel %vm2263, %v4914, %v4915
        %v4917 = vrot.slane %v4617, 1
        %v4918 = vrot.slane %v4633, 1
        %v4919 = vsel %vm2263, %v4917, %v4918
        %v4920 = vrot.slane %v4618, 1
        %v4921 = vrot.slane %v4634, 1
        %v4922 = vsel %vm2263, %v4920, %v4921
        %v4939 = vmax.bf16 %v4832, %v2266
        %v4940 = vmax.bf16 %v4833, %v4880
        %v4941 = vmax.bf16 %v4834, %v4883
        %v4942 = vmax.bf16 %v4835, %v4886
        %v4943 = vmax.bf16 %v4836, %v4889
        %v4944 = vmax.bf16 %v4837, %v4892
        %v4945 = vmax.bf16 %v4838, %v4895
        %v4946 = vmax.bf16 %v4839, %v4898
        %v4947 = vmax.bf16 %v4840, %v4901
        %v4948 = vmax.bf16 %v4841, %v4904
        %v4949 = vmax.bf16 %v4842, %v4907
        %v4950 = vmax.bf16 %v4843, %v4910
        %v4951 = vmax.bf16 %v4844, %v4913
        %v4952 = vmax.bf16 %v4845, %v4916
        %v4953 = vmax.bf16 %v4846, %v4919
        %v4954 = vmax.bf16 %v4847, %v4922
        %v4955 = vmax.bf16 %v4939, %v4604
        %v4956 = vmax.bf16 %v4940, %v4605
        %v4957 = vmax.bf16 %v4941, %v4606
        %v4958 = vmax.bf16 %v4942, %v4607
        %v4959 = vmax.bf16 %v4943, %v4608
        %v4960 = vmax.bf16 %v4944, %v4609
        %v4961 = vmax.bf16 %v4945, %v4610
        %v4962 = vmax.bf16 %v4946, %v4611
        %v4963 = vmax.bf16 %v4947, %v4612
        %v4964 = vmax.bf16 %v4948, %v4613
        %v4965 = vmax.bf16 %v4949, %v4614
        %v4966 = vmax.bf16 %v4950, %v4615
        %v4967 = vmax.bf16 %v4951, %v4616
        %v4968 = vmax.bf16 %v4952, %v4617
        %v4969 = vmax.bf16 %v4953, %v4618
        %v4970 = vmax.bf16 %v4954, %v4619
        %v4972 = vshrl.u32 %v4619, 16
        %v4974 = vshll.u32 %v4619, 16
        %v4976 = vrot.slane %v4974, 1
        %v4977 = vor.u32 %v4972, %v4976
        %v4979 = vshll.u32 %v4635, 16
        %v4981 = vrot.slane %v4979, 1
        %v4982 = vsel %vm2006, %v4977, %v4981
        %v4984 = vmax.bf16 %v4955, %v4647
        %v4985 = vmax.bf16 %v4956, %v4659
        %v4986 = vmax.bf16 %v4957, %v4671
        %v4987 = vmax.bf16 %v4958, %v4683
        %v4988 = vmax.bf16 %v4959, %v4695
        %v4989 = vmax.bf16 %v4960, %v4707
        %v4990 = vmax.bf16 %v4961, %v4719
        %v4991 = vmax.bf16 %v4962, %v4731
        %v4992 = vmax.bf16 %v4963, %v4743
        %v4993 = vmax.bf16 %v4964, %v4755
        %v4994 = vmax.bf16 %v4965, %v4767
        %v4995 = vmax.bf16 %v4966, %v4779
        %v4996 = vmax.bf16 %v4967, %v4791
        %v4997 = vmax.bf16 %v4968, %v4803
        %v4998 = vmax.bf16 %v4969, %v4815
        %v4999 = vmax.bf16 %v4970, %v4982
        %v5002 = vrot.slane %v4619, 1
        %v5003 = vrot.slane %v4635, 1
        %v5004 = vsel %vm2263, %v5002, %v5003
        %v5006 = vmax.bf16 %v4984, %v4880
        %v5007 = vmax.bf16 %v4985, %v4883
        %v5008 = vmax.bf16 %v4986, %v4886
        %v5009 = vmax.bf16 %v4987, %v4889
        %v5010 = vmax.bf16 %v4988, %v4892
        %v5011 = vmax.bf16 %v4989, %v4895
        %v5012 = vmax.bf16 %v4990, %v4898
        %v5013 = vmax.bf16 %v4991, %v4901
        %v5014 = vmax.bf16 %v4992, %v4904
        %v5015 = vmax.bf16 %v4993, %v4907
        %v5016 = vmax.bf16 %v4994, %v4910
        %v5017 = vmax.bf16 %v4995, %v4913
        %v5018 = vmax.bf16 %v4996, %v4916
        %v5019 = vmax.bf16 %v4997, %v4919
        %v5020 = vmax.bf16 %v4998, %v4922
        %v5021 = vmax.bf16 %v4999, %v5004
        %v5022 = vmax.bf16 %v5006, %v4605
        %v5023 = vmax.bf16 %v5007, %v4606
        %v5024 = vmax.bf16 %v5008, %v4607
        %v5025 = vmax.bf16 %v5009, %v4608
        %v5026 = vmax.bf16 %v5010, %v4609
        %v5027 = vmax.bf16 %v5011, %v4610
        %v5028 = vmax.bf16 %v5012, %v4611
        %v5029 = vmax.bf16 %v5013, %v4612
        %v5030 = vmax.bf16 %v5014, %v4613
        %v5031 = vmax.bf16 %v5015, %v4614
        %v5032 = vmax.bf16 %v5016, %v4615
        %v5033 = vmax.bf16 %v5017, %v4616
        %v5034 = vmax.bf16 %v5018, %v4617
        %v5035 = vmax.bf16 %v5019, %v4618
        %v5036 = vmax.bf16 %v5020, %v4619
        %v5037 = vmax.bf16 %v5021, %v1972
        %v5038 = vmax.bf16 %v5022, %v4659
        %v5039 = vmax.bf16 %v5023, %v4671
        %v5040 = vmax.bf16 %v5024, %v4683
        %v5041 = vmax.bf16 %v5025, %v4695
        %v5042 = vmax.bf16 %v5026, %v4707
        %v5043 = vmax.bf16 %v5027, %v4719
        %v5044 = vmax.bf16 %v5028, %v4731
        %v5045 = vmax.bf16 %v5029, %v4743
        %v5046 = vmax.bf16 %v5030, %v4755
        %v5047 = vmax.bf16 %v5031, %v4767
        %v5048 = vmax.bf16 %v5032, %v4779
        %v5049 = vmax.bf16 %v5033, %v4791
        %v5050 = vmax.bf16 %v5034, %v4803
        %v5051 = vmax.bf16 %v5035, %v4815
        %v5052 = vmax.bf16 %v5036, %v4982
        %v5053 = vmax.bf16 %v5037, %v2018
        %v5054 = vmax.bf16 %v5038, %v4883
        %v5055 = vmax.bf16 %v5039, %v4886
        %v5056 = vmax.bf16 %v5040, %v4889
        %v5057 = vmax.bf16 %v5041, %v4892
        %v5058 = vmax.bf16 %v5042, %v4895
        %v5059 = vmax.bf16 %v5043, %v4898
        %v5060 = vmax.bf16 %v5044, %v4901
        %v5061 = vmax.bf16 %v5045, %v4904
        %v5062 = vmax.bf16 %v5046, %v4907
        %v5063 = vmax.bf16 %v5047, %v4910
        %v5064 = vmax.bf16 %v5048, %v4913
        %v5065 = vmax.bf16 %v5049, %v4916
        %v5066 = vmax.bf16 %v5050, %v4919
        %v5067 = vmax.bf16 %v5051, %v4922
        %v5068 = vmax.bf16 %v5052, %v5004
        %v5069 = vmax.bf16 %v5053, %v2266
        %v5070 = vld [vmem:[%s3] sm:$0xff]
        %v5071 = vld [vmem:[%s3 + $0x8] sm:$0xff]
        %v5072 = vld [vmem:[%s3 + $0x10] sm:$0xff]
        %v5073 = vld [vmem:[%s3 + $0x18] sm:$0xff]
        %v5074 = vld [vmem:[%s3 + $0x20] sm:$0xff]
        %v5075 = vld [vmem:[%s3 + $0x28] sm:$0xff]
        %v5076 = vld [vmem:[%s3 + $0x30] sm:$0xff]
        %v5077 = vld [vmem:[%s3 + $0x38] sm:$0xff]
        %v5086 = vunpack.c.l.b16 %v5070
        %v5087 = vunpack.c.h.b16 %v5070
        %v5088 = vunpack.c.l.b16 %v5071
        %v5089 = vunpack.c.h.b16 %v5071
        %v5090 = vunpack.c.l.b16 %v5072
        %v5091 = vunpack.c.h.b16 %v5072
        %v5092 = vunpack.c.l.b16 %v5073
        %v5093 = vunpack.c.h.b16 %v5073
        %v5094 = vunpack.c.l.b16 %v5074
        %v5095 = vunpack.c.h.b16 %v5074
        %v5096 = vunpack.c.l.b16 %v5075
        %v5097 = vunpack.c.h.b16 %v5075
        %v5098 = vunpack.c.l.b16 %v5076
        %v5099 = vunpack.c.h.b16 %v5076
        %v5100 = vunpack.c.l.b16 %v5077
        %v5101 = vunpack.c.h.b16 %v5077
        %v5102 = vpack.c.b16 %v5088, %v5086
        %v5103 = vpack.c.b16 %v5089, %v5087
        %v5104 = vpack.c.b16 %v5092, %v5090
        %v5105 = vpack.c.b16 %v5093, %v5091
        %v5106 = vpack.c.b16 %v5096, %v5094
        %v5107 = vpack.c.b16 %v5097, %v5095
        %v5108 = vpack.c.b16 %v5100, %v5098
        %v5109 = vpack.c.b16 %v5101, %v5099
        %5118 = vmatprep.subr.bf16.mxu0 0
        %5119 = vmatpush1.bf16.msra.mxu0 %v5061
        %5120 = vmatprep.subr.bf16.mxu0 0
        %5121 = vmatpush1.bf16.msra.mxu0 %v5060
        %5122 = vmatprep.subr.bf16.mxu0 0
        %5123 = vmatpush1.bf16.msra.mxu0 %v5059
        %5124 = vmatprep.subr.bf16.mxu0 0
        %5125 = vmatpush1.bf16.msra.mxu0 %v5058
        %5126 = vmatprep.subr.bf16.mxu0 0
        %5127 = vmatpush1.bf16.msra.mxu0 %v5057
        %5128 = vmatprep.subr.bf16.mxu0 0
        %5129 = vmatpush1.bf16.msra.mxu0 %v5056
        %5130 = vmatprep.subr.bf16.mxu0 0
        %5131 = vmatpush1.bf16.msra.mxu0 %v5055
        %5132 = vmatprep.subr.bf16.mxu0 0
        %5133 = vmatpush1.bf16.msra.mxu0 %v5054
        %5134 = vmatprep.subr.bf16.mxu0 0
        %5135 = vmatpush2.bf16.msra.mxu0 %v5069
        %5136 = vmatprep.subr.bf16.mxu0 0
        %5137 = vmatpush2.bf16.msra.mxu0 %v5068
        %5138 = vmatprep.subr.bf16.mxu0 0
        %5139 = vmatpush2.bf16.msra.mxu0 %v5067
        %5140 = vmatprep.subr.bf16.mxu0 0
        %5141 = vmatpush2.bf16.msra.mxu0 %v5066
        %5142 = vmatprep.subr.bf16.mxu0 0
        %5143 = vmatpush2.bf16.msra.mxu0 %v5065
        %5144 = vmatprep.subr.bf16.mxu0 0
        %5145 = vmatpush2.bf16.msra.mxu0 %v5064
        %5146 = vmatprep.subr.bf16.mxu0 0
        %5147 = vmatpush2.bf16.msra.mxu0 %v5063
        %5148 = vmatprep.subr.bf16.mxu0 0
        %5149 = vmatpush2.bf16.msra.mxu0 %v5062
        %5150 = vmatprep.mubr.bf16.mxu0 %v5103
        %5151 = vmatmul.mubr.bf16.gmra.mxu0 %v5102
        %v5152 = vpop.f32.mrf.mxu0
        %v5153 = vadd.f32 0.0, %v5152
        %v5154 = vpop.f32.mrf.mxu0
        %v5155 = vpop.f32.mrf.mxu0
        %v5156 = vadd.f32 0.0, %v5155
        %v5157 = vpop.f32.mrf.mxu0
        %5158 = vmatprep.mubr.bf16.mxu0 %v5105
        %5159 = vmatmul.mubr.bf16.gmra.mxu0 %v5104
        %v5160 = vpop.f32.mrf.mxu0
        %v5161 = vadd.f32 0.0, %v5160
        %v5162 = vpop.f32.mrf.mxu0
        %v5163 = vpop.f32.mrf.mxu0
        %v5164 = vadd.f32 0.0, %v5163
        %v5165 = vpop.f32.mrf.mxu0
        %5166 = vmatprep.mubr.bf16.mxu0 %v5107
        %5167 = vmatmul.mubr.bf16.gmra.mxu0 %v5106
        %v5168 = vpop.f32.mrf.mxu0
        %v5169 = vadd.f32 0.0, %v5168
        %v5170 = vpop.f32.mrf.mxu0
        %v5171 = vpop.f32.mrf.mxu0
        %v5172 = vadd.f32 0.0, %v5171
        %v5173 = vpop.f32.mrf.mxu0
        %5174 = vmatprep.mubr.bf16.mxu0 %v5109
        %5175 = vmatmul.mubr.bf16.gmra.mxu0 %v5108
        %v5176 = vpop.f32.mrf.mxu0
        %v5177 = vadd.f32 0.0, %v5176
        %v5178 = vpop.f32.mrf.mxu0
        %v5179 = vpop.f32.mrf.mxu0
        %v5180 = vadd.f32 0.0, %v5179
        %v5181 = vpop.f32.mrf.mxu0
        %5182 = vdwg.mxu0
        %v5183 = vpack.c.bf16 %v5156, %v5153
        %v5184 = vpack.c.bf16 %v5164, %v5161
        %v5185 = vpack.c.bf16 %v5172, %v5169
        %v5186 = vpack.c.bf16 %v5180, %v5177
        %v5191 = vunpack.c.l.b16 %v5183
        %v5192 = vunpack.c.h.b16 %v5183
        %v5193 = vunpack.c.l.b16 %v5184
        %v5194 = vunpack.c.h.b16 %v5184
        %v5195 = vunpack.c.l.b16 %v5185
        %v5196 = vunpack.c.h.b16 %v5185
        %v5197 = vunpack.c.l.b16 %v5186
        %v5198 = vunpack.c.h.b16 %v5186
        %v5199 = vpack.c.b16 %v5191, %v5191
        %v5200 = vpack.c.b16 %v5192, %v5192
        %v5201 = vpack.c.b16 %v5193, %v5193
        %v5202 = vpack.c.b16 %v5194, %v5194
        %v5203 = vpack.c.b16 %v5195, %v5195
        %v5204 = vpack.c.b16 %v5196, %v5196
        %v5205 = vpack.c.b16 %v5197, %v5197
        %v5206 = vpack.c.b16 %v5198, %v5198
        %v5208 = vshrl.u32 %v5199, 16
        %v5210 = vrot.slane %v5208, 7
        %v5211 = vshll.u32 %v5199, 16
        %v5213 = vor.u32 %v5210, %v5211
        %v5215 = vshrl.u32 %v5200, 16
        %v5217 = vrot.slane %v5215, 7
        %v5218 = vshll.u32 %v5200, 16
        %v5220 = vor.u32 %v5217, %v5218
        %v5222 = vshrl.u32 %v5201, 16
        %v5224 = vrot.slane %v5222, 7
        %v5225 = vshll.u32 %v5201, 16
        %v5227 = vor.u32 %v5224, %v5225
        %v5229 = vshrl.u32 %v5202, 16
        %v5231 = vrot.slane %v5229, 7
        %v5232 = vshll.u32 %v5202, 16
        %v5234 = vor.u32 %v5231, %v5232
        %v5236 = vshrl.u32 %v5203, 16
        %v5238 = vrot.slane %v5236, 7
        %v5239 = vshll.u32 %v5203, 16
        %v5241 = vor.u32 %v5238, %v5239
        %v5243 = vshrl.u32 %v5204, 16
        %v5245 = vrot.slane %v5243, 7
        %v5246 = vshll.u32 %v5204, 16
        %v5248 = vor.u32 %v5245, %v5246
        %v5250 = vshrl.u32 %v5205, 16
        %v5252 = vrot.slane %v5250, 7
        %v5253 = vshll.u32 %v5205, 16
        %v5255 = vor.u32 %v5252, %v5253
        %v5257 = vshrl.u32 %v5206, 16
        %v5259 = vrot.slane %v5257, 7
        %v5260 = vshll.u32 %v5206, 16
        %v5262 = vor.u32 %v5259, %v5260
        %v5271 = vsel %vm1971, 0, %v5213
        %v5272 = vsel %vm1971, 0, %v5220
        %v5273 = vsel %vm1971, 0, %v5227
        %v5274 = vsel %vm1971, 0, %v5234
        %v5275 = vsel %vm1971, 0, %v5241
        %v5276 = vsel %vm1971, 0, %v5248
        %v5277 = vsel %vm1971, 0, %v5255
        %v5278 = vsel %vm1971, 0, %v5262
        %vm5279 = vcmask 1044480
        %vm5280 = vsmask.f32 4352
        %vm5281 = vmand %vm5279, %vm5280
        %v5282 = vsel %vm5281, %v1972, 0
        %v5283 = vsel %vm5281, %v5271, 0
        %v5284 = vsel %vm5281, %v5272, 0
        %v5285 = vsel %vm5281, %v5273, 0
        %v5286 = vsel %vm5281, %v5274, 0
        %v5287 = vsel %vm5281, %v5275, 0
        %v5288 = vsel %vm5281, %v5276, 0
        %v5289 = vsel %vm5281, %v5277, 0
        %v5290 = vsel %vm5281, %v5278, 0
        %v5292 = vshrl.u32 %v5282, 16
        %v5294 = vshll.u32 %v5282, 16
        %v5296 = vrot.slane %v5294, 1
        %v5297 = vor.u32 %v5292, %v5296
        %v5299 = vshrl.u32 %v5283, 16
        %v5301 = vshll.u32 %v5283, 16
        %v5303 = vrot.slane %v5301, 1
        %v5304 = vor.u32 %v5299, %v5303
        %v5306 = vshrl.u32 %v5284, 16
        %v5308 = vshll.u32 %v5284, 16
        %v5310 = vrot.slane %v5308, 1
        %v5311 = vor.u32 %v5306, %v5310
        %v5313 = vshrl.u32 %v5285, 16
        %v5315 = vshll.u32 %v5285, 16
        %v5317 = vrot.slane %v5315, 1
        %v5318 = vor.u32 %v5313, %v5317
        %v5320 = vshrl.u32 %v5286, 16
        %v5322 = vshll.u32 %v5286, 16
        %v5324 = vrot.slane %v5322, 1
        %v5325 = vor.u32 %v5320, %v5324
        %v5327 = vshrl.u32 %v5287, 16
        %v5329 = vshll.u32 %v5287, 16
        %v5331 = vrot.slane %v5329, 1
        %v5332 = vor.u32 %v5327, %v5331
        %v5334 = vshrl.u32 %v5288, 16
        %v5336 = vshll.u32 %v5288, 16
        %v5338 = vrot.slane %v5336, 1
        %v5339 = vor.u32 %v5334, %v5338
        %v5341 = vshrl.u32 %v5289, 16
        %v5343 = vshll.u32 %v5289, 16
        %v5345 = vrot.slane %v5343, 1
        %v5346 = vor.u32 %v5341, %v5345
        %5347 = vrot.lane.b32.xlu0 %v5297, 16
        %v5348 = vpop.permute.xlu0 %5347
        %5349 = vrot.lane.b32.xlu0 %v5304, 16
        %v5350 = vpop.permute.xlu0 %5349
        %5351 = vrot.lane.b32.xlu0 %v5311, 16
        %v5352 = vpop.permute.xlu0 %5351
        %5353 = vrot.lane.b32.xlu0 %v5318, 16
        %v5354 = vpop.permute.xlu0 %5353
        %5355 = vrot.lane.b32.xlu0 %v5325, 16
        %v5356 = vpop.permute.xlu0 %5355
        %5357 = vrot.lane.b32.xlu0 %v5332, 16
        %v5358 = vpop.permute.xlu0 %5357
        %5359 = vrot.lane.b32.xlu0 %v5339, 16
        %v5360 = vpop.permute.xlu0 %5359
        %5361 = vrot.lane.b32.xlu0 %v5346, 16
        %v5362 = vpop.permute.xlu0 %5361
        %v5371 = vrot.slane %v5282, 1
        %v5372 = vrot.slane %v5283, 1
        %v5373 = vrot.slane %v5284, 1
        %v5374 = vrot.slane %v5285, 1
        %v5375 = vrot.slane %v5286, 1
        %v5376 = vrot.slane %v5287, 1
        %v5377 = vrot.slane %v5288, 1
        %v5378 = vrot.slane %v5289, 1
        %5379 = vrot.lane.b32.xlu0 %v5371, 32
        %v5380 = vpop.permute.xlu0 %5379
        %5381 = vrot.lane.b32.xlu0 %v5372, 32
        %v5382 = vpop.permute.xlu0 %5381
        %5383 = vrot.lane.b32.xlu0 %v5373, 32
        %v5384 = vpop.permute.xlu0 %5383
        %5385 = vrot.lane.b32.xlu0 %v5374, 32
        %v5386 = vpop.permute.xlu0 %5385
        %5387 = vrot.lane.b32.xlu0 %v5375, 32
        %v5388 = vpop.permute.xlu0 %5387
        %5389 = vrot.lane.b32.xlu0 %v5376, 32
        %v5390 = vpop.permute.xlu0 %5389
        %5391 = vrot.lane.b32.xlu0 %v5377, 32
        %v5392 = vpop.permute.xlu0 %5391
        %5393 = vrot.lane.b32.xlu0 %v5378, 32
        %v5394 = vpop.permute.xlu0 %5393
        %5396 = vrot.lane.b32.xlu0 %v5283, 48
        %v5397 = vpop.permute.xlu0 %5396
        %5398 = vrot.lane.b32.xlu0 %v5284, 48
        %v5399 = vpop.permute.xlu0 %5398
        %5400 = vrot.lane.b32.xlu0 %v5285, 48
        %v5401 = vpop.permute.xlu0 %5400
        %5402 = vrot.lane.b32.xlu0 %v5286, 48
        %v5403 = vpop.permute.xlu0 %5402
        %5404 = vrot.lane.b32.xlu0 %v5287, 48
        %v5405 = vpop.permute.xlu0 %5404
        %5406 = vrot.lane.b32.xlu0 %v5288, 48
        %v5407 = vpop.permute.xlu0 %5406
        %5408 = vrot.lane.b32.xlu0 %v5289, 48
        %v5409 = vpop.permute.xlu0 %5408
        %5410 = vrot.lane.b32.xlu0 %v5290, 48
        %v5411 = vpop.permute.xlu0 %5410
        %v5413 = vshrl.u32 %v5290, 16
        %v5415 = vshll.u32 %v5290, 16
        %v5417 = vrot.slane %v5415, 1
        %v5418 = vor.u32 %v5413, %v5417
        %5419 = vrot.lane.b32.xlu0 %v5304, 64
        %v5420 = vpop.permute.xlu0 %5419
        %5421 = vrot.lane.b32.xlu0 %v5311, 64
        %v5422 = vpop.permute.xlu0 %5421
        %5423 = vrot.lane.b32.xlu0 %v5318, 64
        %v5424 = vpop.permute.xlu0 %5423
        %5425 = vrot.lane.b32.xlu0 %v5325, 64
        %v5426 = vpop.permute.xlu0 %5425
        %5427 = vrot.lane.b32.xlu0 %v5332, 64
        %v5428 = vpop.permute.xlu0 %5427
        %5429 = vrot.lane.b32.xlu0 %v5339, 64
        %v5430 = vpop.permute.xlu0 %5429
        %5431 = vrot.lane.b32.xlu0 %v5346, 64
        %v5432 = vpop.permute.xlu0 %5431
        %5433 = vrot.lane.b32.xlu0 %v5418, 64
        %v5434 = vpop.permute.xlu0 %5433
        %v5435 = vrot.slane %v5290, 1
        %5436 = vrot.lane.b32.xlu0 %v5372, 80
        %v5437 = vpop.permute.xlu0 %5436
        %5438 = vrot.lane.b32.xlu0 %v5373, 80
        %v5439 = vpop.permute.xlu0 %5438
        %5440 = vrot.lane.b32.xlu0 %v5374, 80
        %v5441 = vpop.permute.xlu0 %5440
        %5442 = vrot.lane.b32.xlu0 %v5375, 80
        %v5443 = vpop.permute.xlu0 %5442
        %5444 = vrot.lane.b32.xlu0 %v5376, 80
        %v5445 = vpop.permute.xlu0 %5444
        %5446 = vrot.lane.b32.xlu0 %v5377, 80
        %v5447 = vpop.permute.xlu0 %5446
        %5448 = vrot.lane.b32.xlu0 %v5378, 80
        %v5449 = vpop.permute.xlu0 %5448
        %5450 = vrot.lane.b32.xlu0 %v5435, 80
        %v5451 = vpop.permute.xlu0 %5450
        %5452 = vrot.lane.b32.xlu0 %v5284, 96
        %v5453 = vpop.permute.xlu0 %5452
        %5454 = vrot.lane.b32.xlu0 %v5285, 96
        %v5455 = vpop.permute.xlu0 %5454
        %5456 = vrot.lane.b32.xlu0 %v5286, 96
        %v5457 = vpop.permute.xlu0 %5456
        %5458 = vrot.lane.b32.xlu0 %v5287, 96
        %v5459 = vpop.permute.xlu0 %5458
        %5460 = vrot.lane.b32.xlu0 %v5288, 96
        %v5461 = vpop.permute.xlu0 %5460
        %5462 = vrot.lane.b32.xlu0 %v5289, 96
        %v5463 = vpop.permute.xlu0 %5462
        %5464 = vrot.lane.b32.xlu0 %v5290, 96
        %v5465 = vpop.permute.xlu0 %5464
        %5466 = vrot.lane.b32.xlu0 %v5282, 96
        %v5467 = vpop.permute.xlu0 %5466
        %5468 = vrot.lane.b32.xlu0 %v5311, 112
        %v5469 = vpop.permute.xlu0 %5468
        %5470 = vrot.lane.b32.xlu0 %v5318, 112
        %v5471 = vpop.permute.xlu0 %5470
        %5472 = vrot.lane.b32.xlu0 %v5325, 112
        %v5473 = vpop.permute.xlu0 %5472
        %5474 = vrot.lane.b32.xlu0 %v5332, 112
        %v5475 = vpop.permute.xlu0 %5474
        %5476 = vrot.lane.b32.xlu0 %v5339, 112
        %v5477 = vpop.permute.xlu0 %5476
        %5478 = vrot.lane.b32.xlu0 %v5346, 112
        %v5479 = vpop.permute.xlu0 %5478
        %5480 = vrot.lane.b32.xlu0 %v5418, 112
        %v5481 = vpop.permute.xlu0 %5480
        %5482 = vrot.lane.b32.xlu0 %v5297, 112
        %v5483 = vpop.permute.xlu0 %5482
        %v5485 = vsel %vm2586, %v5282, %v5348
        %v5487 = vsel %vm2586, %v5283, %v5350
        %v5489 = vsel %vm2586, %v5284, %v5352
        %v5491 = vsel %vm2586, %v5285, %v5354
        %v5493 = vsel %vm2586, %v5286, %v5356
        %v5495 = vsel %vm2586, %v5287, %v5358
        %v5497 = vsel %vm2586, %v5288, %v5360
        %v5499 = vsel %vm2586, %v5289, %v5362
        %v5501 = vsel %vm1558, %v5485, %v5380
        %v5503 = vsel %vm1558, %v5487, %v5382
        %v5505 = vsel %vm1558, %v5489, %v5384
        %v5507 = vsel %vm1558, %v5491, %v5386
        %v5509 = vsel %vm1558, %v5493, %v5388
        %v5511 = vsel %vm1558, %v5495, %v5390
        %v5513 = vsel %vm1558, %v5497, %v5392
        %v5515 = vsel %vm1558, %v5499, %v5394
        %v5517 = vsel %vm2717, %v5501, %v5397
        %v5519 = vsel %vm2717, %v5503, %v5399
        %v5521 = vsel %vm2717, %v5505, %v5401
        %v5523 = vsel %vm2717, %v5507, %v5403
        %v5525 = vsel %vm2717, %v5509, %v5405
        %v5527 = vsel %vm2717, %v5511, %v5407
        %v5529 = vsel %vm2717, %v5513, %v5409
        %v5531 = vsel %vm2717, %v5515, %v5411
        %v5533 = vsel %vm2783, %v5517, %v5420
        %v5535 = vsel %vm2783, %v5519, %v5422
        %v5537 = vsel %vm2783, %v5521, %v5424
        %v5539 = vsel %vm2783, %v5523, %v5426
        %v5541 = vsel %vm2783, %v5525, %v5428
        %v5543 = vsel %vm2783, %v5527, %v5430
        %v5545 = vsel %vm2783, %v5529, %v5432
        %v5547 = vsel %vm2783, %v5531, %v5434
        %vm5548 = vcmask 654336
        %v5550 = vsel %vm5548, %v5533, %v5437
        %v5552 = vsel %vm5548, %v5535, %v5439
        %v5554 = vsel %vm5548, %v5537, %v5441
        %v5556 = vsel %vm5548, %v5539, %v5443
        %v5558 = vsel %vm5548, %v5541, %v5445
        %v5560 = vsel %vm5548, %v5543, %v5447
        %v5562 = vsel %vm5548, %v5545, %v5449
        %v5564 = vsel %vm5548, %v5547, %v5451
        %vm5565 = vcmask 785408
        %v5567 = vsel %vm5565, %v5550, %v5453
        %v5569 = vsel %vm5565, %v5552, %v5455
        %v5571 = vsel %vm5565, %v5554, %v5457
        %v5573 = vsel %vm5565, %v5556, %v5459
        %v5575 = vsel %vm5565, %v5558, %v5461
        %v5577 = vsel %vm5565, %v5560, %v5463
        %v5579 = vsel %vm5565, %v5562, %v5465
        %v5581 = vsel %vm5565, %v5564, %v5467
        %vm5582 = vcmask 916480
        %v5584 = vsel %vm5582, %v5567, %v5469
        %v5586 = vsel %vm5582, %v5569, %v5471
        %v5588 = vsel %vm5582, %v5571, %v5473
        %v5590 = vsel %vm5582, %v5573, %v5475
        %v5592 = vsel %vm5582, %v5575, %v5477
        %v5594 = vsel %vm5582, %v5577, %v5479
        %v5596 = vsel %vm5582, %v5579, %v5481
        %v5598 = vsel %vm5582, %v5581, %v5483
        %v5607 = vunpack.c.l.b16 %v5584
        %v5608 = vunpack.c.l.b16 %v5373
        %v5609 = vunpack.c.l.b16 %v5586
        %v5610 = vunpack.c.l.b16 %v5374
        %v5611 = vunpack.c.l.b16 %v5588
        %v5612 = vunpack.c.l.b16 %v5375
        %v5613 = vunpack.c.l.b16 %v5590
        %v5614 = vunpack.c.l.b16 %v5376
        %v5615 = vunpack.c.l.b16 %v5592
        %v5616 = vunpack.c.l.b16 %v5377
        %v5617 = vunpack.c.l.b16 %v5594
        %v5618 = vunpack.c.l.b16 %v5378
        %v5619 = vunpack.c.l.b16 %v5596
        %v5620 = vunpack.c.l.b16 %v5435
        %v5621 = vunpack.c.l.b16 %v5598
        %v5622 = vunpack.c.l.b16 %v5371
        %v5624 = vlaneseq
        %v5625 = vshrl.u32 %v5624, 7
        %v5626 = vsub.s32 0, %v5625
        %v5627 = vrot.slane %v1209, %v5626
        %v5629 = vpack.c.b16 %v5609, %v5607
        %v5630 = vpack.c.b16 %v5610, %v5608
        %v5631 = vpack.c.b16 %v5613, %v5611
        %v5632 = vpack.c.b16 %v5614, %v5612
        %v5633 = vpack.c.b16 %v5617, %v5615
        %v5634 = vpack.c.b16 %v5618, %v5616
        %v5635 = vpack.c.b16 %v5621, %v5619
        %v5636 = vpack.c.b16 %v5622, %v5620
        %v5659 = vunpack.c.l.b16 %v1191
        %v5660 = vunpack.c.l.b16 %v1192
        %v5661 = vunpack.c.l.b16 %v1193
        %v5662 = vunpack.c.l.b16 %v1194
        %v5663 = vunpack.c.l.b16 %v1195
        %v5664 = vunpack.c.l.b16 %v1196
        %v5665 = vunpack.c.l.b16 %v1197
        %v5666 = vunpack.c.l.b16 %v1198
        %v5667 = vunpack.c.l.b16 %v1199
        %v5668 = vunpack.c.l.b16 %v1200
        %v5669 = vunpack.c.l.b16 %v1201
        %v5670 = vunpack.c.l.b16 %v1202
        %v5671 = vunpack.c.l.b16 %v1203
        %v5672 = vunpack.c.l.b16 %v1204
        %v5673 = vunpack.c.l.b16 %v1205
        %v5674 = vunpack.c.l.b16 %v1206
        %v5675 = vunpack.c.l.b16 %v1207
        %v5676 = vunpack.c.l.b16 %v1208
        %v5677 = vpack.c.b16 %v5660, %v5659
        %v5678 = vpack.c.b16 %v5662, %v5661
        %v5679 = vpack.c.b16 %v5664, %v5663
        %v5680 = vpack.c.b16 %v5666, %v5665
        %v5681 = vpack.c.b16 %v5668, %v5667
        %v5682 = vpack.c.b16 %v5670, %v5669
        %v5683 = vpack.c.b16 %v5672, %v5671
        %v5684 = vpack.c.b16 %v5674, %v5673
        %v5685 = vpack.c.b16 %v5676, %v5675
        %v5696 = vsel %vm2586, %v5630, 0
        %v5699 = vsel %vm2586, %v5632, 0
        %v5702 = vsel %vm2586, %v5634, 0
        %v5705 = vsel %vm2586, %v5636, 0
        %5707 = vmatprep.subr.bf16.mxu0 0
        %5708 = vmatpush1.bf16.msra.mxu0 %v5684
        %5709 = vmatprep.subr.bf16.mxu0 0
        %5710 = vmatpush1.bf16.msra.mxu0 %v5683
        %5711 = vmatprep.subr.bf16.mxu0 0
        %5712 = vmatpush1.bf16.msra.mxu0 %v5682
        %5713 = vmatprep.subr.bf16.mxu0 0
        %5714 = vmatpush1.bf16.msra.mxu0 %v5681
        %5715 = vmatprep.subr.bf16.mxu0 0
        %5716 = vmatpush1.bf16.msra.mxu0 %v5680
        %5717 = vmatprep.subr.bf16.mxu0 0
        %5718 = vmatpush1.bf16.msra.mxu0 %v5679
        %5719 = vmatprep.subr.bf16.mxu0 0
        %5720 = vmatpush1.bf16.msra.mxu0 %v5678
        %5721 = vmatprep.subr.bf16.mxu0 0
        %5722 = vmatpush1.bf16.msra.mxu0 %v5677
        %5723 = vmatprep.subr.bf16.mxu0 0
        %5724 = vmatpush2.bf16.msra.mxu0 0
        %5725 = vmatprep.subr.bf16.mxu0 0
        %5726 = vmatpush2.bf16.msra.mxu0 0
        %5727 = vmatprep.subr.bf16.mxu0 0
        %5728 = vmatpush2.bf16.msra.mxu0 0
        %5729 = vmatprep.subr.bf16.mxu0 0
        %5730 = vmatpush2.bf16.msra.mxu0 0
        %5731 = vmatprep.subr.bf16.mxu0 0
        %5732 = vmatpush2.bf16.msra.mxu0 0
        %5733 = vmatprep.subr.bf16.mxu0 0
        %5734 = vmatpush2.bf16.msra.mxu0 0
        %5735 = vmatprep.subr.bf16.mxu0 0
        %5736 = vmatpush2.bf16.msra.mxu0 0
        %5737 = vmatprep.subr.bf16.mxu0 0
        %5738 = vmatpush2.bf16.msra.mxu0 %v5685
        %5739 = vmatprep.mubr.bf16.mxu0 %v5696
        %5740 = vmatmul.mubr.bf16.gmra.mxu0 %v5629
        %v5741 = vpop.f32.mrf.mxu0
        %v5742 = vadd.f32 %v5627, %v5741
        %v5743 = vpop.f32.mrf.mxu0
        %v5744 = vpop.f32.mrf.mxu0
        %v5745 = vadd.f32 %v5627, %v5744
        %v5746 = vpop.f32.mrf.mxu0
        %5747 = vmatprep.mubr.bf16.mxu0 %v5699
        %5748 = vmatmul.mubr.bf16.gmra.mxu0 %v5631
        %v5749 = vpop.f32.mrf.mxu0
        %v5750 = vadd.f32 %v5627, %v5749
        %v5751 = vpop.f32.mrf.mxu0
        %v5752 = vpop.f32.mrf.mxu0
        %v5753 = vadd.f32 %v5627, %v5752
        %v5754 = vpop.f32.mrf.mxu0
        %5755 = vmatprep.mubr.bf16.mxu0 %v5702
        %5756 = vmatmul.mubr.bf16.gmra.mxu0 %v5633
        %v5757 = vpop.f32.mrf.mxu0
        %v5758 = vadd.f32 %v5627, %v5757
        %v5759 = vpop.f32.mrf.mxu0
        %v5760 = vpop.f32.mrf.mxu0
        %v5761 = vadd.f32 %v5627, %v5760
        %v5762 = vpop.f32.mrf.mxu0
        %5763 = vmatprep.mubr.bf16.mxu0 %v5705
        %5764 = vmatmul.mubr.bf16.gmra.mxu0 %v5635
        %v5765 = vpop.f32.mrf.mxu0
        %v5766 = vadd.f32 %v5627, %v5765
        %v5767 = vpop.f32.mrf.mxu0
        %v5768 = vpop.f32.mrf.mxu0
        %v5769 = vadd.f32 %v5627, %v5768
        %v5770 = vpop.f32.mrf.mxu0
        %5771 = vdwg.mxu0
        %v5772 = vmax.f32 %v5742, 0.0
        %v5773 = vmax.f32 %v5745, 0.0
        %v5774 = vmax.f32 %v5750, 0.0
        %v5775 = vmax.f32 %v5753, 0.0
        %v5776 = vmax.f32 %v5758, 0.0
        %v5777 = vmax.f32 %v5761, 0.0
        %v5778 = vmax.f32 %v5766, 0.0
        %v5779 = vmax.f32 %v5769, 0.0
        %v5781 = vlaneseq
        %v5782 = vshrl.u32 %v5781, 7
        %v5783 = vsub.s32 0, %v5782
        %v5784 = vrot.slane %v1212, %v5783
        %v5788 = vunpack.c.l.b16 %v1210
        %v5789 = vunpack.c.l.b16 %v1211
        %v5790 = vpack.c.b16 %v5789, %v5788
        %v5793 = vsel %vm2586, %v5183, 0
        %v5796 = vsel %vm2586, %v5184, 0
        %v5799 = vsel %vm2586, %v5185, 0
        %v5802 = vsel %vm2586, %v5186, 0
        %5804 = vmatprep.subr.bf16.mxu0 0
        %5805 = vmatpush1.bf16.msra.mxu0 0
        %5806 = vmatprep.subr.bf16.mxu0 0
        %5807 = vmatpush1.bf16.msra.mxu0 0
        %5808 = vmatprep.subr.bf16.mxu0 0
        %5809 = vmatpush1.bf16.msra.mxu0 0
        %5810 = vmatprep.subr.bf16.mxu0 0
        %5811 = vmatpush1.bf16.msra.mxu0 0
        %5812 = vmatprep.subr.bf16.mxu0 0
        %5813 = vmatpush1.bf16.msra.mxu0 0
        %5814 = vmatprep.subr.bf16.mxu0 0
        %5815 = vmatpush1.bf16.msra.mxu0 0
        %5816 = vmatprep.subr.bf16.mxu0 0
        %5817 = vmatpush1.bf16.msra.mxu0 0
        %5818 = vmatprep.subr.bf16.mxu0 0
        %5819 = vmatpush1.bf16.msra.mxu0 %v5790
        %5820 = vmatprep.subr.bf16.mxu0 0
        %5821 = vmatpush2.bf16.msra.mxu0 0
        %5822 = vmatprep.subr.bf16.mxu0 0
        %5823 = vmatpush2.bf16.msra.mxu0 0
        %5824 = vmatprep.subr.bf16.mxu0 0
        %5825 = vmatpush2.bf16.msra.mxu0 0
        %5826 = vmatprep.subr.bf16.mxu0 0
        %5827 = vmatpush2.bf16.msra.mxu0 0
        %5828 = vmatprep.subr.bf16.mxu0 0
        %5829 = vmatpush2.bf16.msra.mxu0 0
        %5830 = vmatprep.subr.bf16.mxu0 0
        %5831 = vmatpush2.bf16.msra.mxu0 0
        %5832 = vmatprep.subr.bf16.mxu0 0
        %5833 = vmatpush2.bf16.msra.mxu0 0
        %5834 = vmatprep.subr.bf16.mxu0 0
        %5835 = vmatpush2.bf16.msra.mxu0 0
        %5836 = vmatprep.mubr.bf16.mxu0 0
        %5837 = vmatmul.mubr.bf16.gmra.mxu0 %v5793
        %v5838 = vpop.f32.mrf.mxu0
        %v5839 = vadd.f32 %v5784, %v5838
        %v5840 = vpop.f32.mrf.mxu0
        %v5841 = vpop.f32.mrf.mxu0
        %v5842 = vadd.f32 %v5784, %v5841
        %v5843 = vpop.f32.mrf.mxu0
        %5844 = vmatprep.mubr.bf16.mxu0 0
        %5845 = vmatmul.mubr.bf16.gmra.mxu0 %v5796
        %v5846 = vpop.f32.mrf.mxu0
        %v5847 = vadd.f32 %v5784, %v5846
        %v5848 = vpop.f32.mrf.mxu0
        %v5849 = vpop.f32.mrf.mxu0
        %v5850 = vadd.f32 %v5784, %v5849
        %v5851 = vpop.f32.mrf.mxu0
        %5852 = vmatprep.mubr.bf16.mxu0 0
        %5853 = vmatmul.mubr.bf16.gmra.mxu0 %v5799
        %v5854 = vpop.f32.mrf.mxu0
        %v5855 = vadd.f32 %v5784, %v5854
        %v5856 = vpop.f32.mrf.mxu0
        %v5857 = vpop.f32.mrf.mxu0
        %v5858 = vadd.f32 %v5784, %v5857
        %v5859 = vpop.f32.mrf.mxu0
        %5860 = vmatprep.mubr.bf16.mxu0 0
        %5861 = vmatmul.mubr.bf16.gmra.mxu0 %v5802
        %v5862 = vpop.f32.mrf.mxu0
        %v5863 = vadd.f32 %v5784, %v5862
        %v5864 = vpop.f32.mrf.mxu0
        %v5865 = vpop.f32.mrf.mxu0
        %v5866 = vadd.f32 %v5784, %v5865
        %v5867 = vpop.f32.mrf.mxu0
        %5868 = vdwg.mxu0
        %v5869 = vpack.c.bf16 %v5773, %v5772
        %v5870 = vpack.c.bf16 %v5775, %v5774
        %v5871 = vpack.c.bf16 %v5777, %v5776
        %v5872 = vpack.c.bf16 %v5779, %v5778
        %v5877 = vunpack.c.l.b16 %v5869
        %v5878 = vunpack.c.h.b16 %v5869
        %v5879 = vunpack.c.l.b16 %v5870
        %v5880 = vunpack.c.h.b16 %v5870
        %v5881 = vunpack.c.l.b16 %v5871
        %v5882 = vunpack.c.h.b16 %v5871
        %v5883 = vunpack.c.l.b16 %v5872
        %v5884 = vunpack.c.h.b16 %v5872
        %v5885 = vpack.c.b16 %v5877, %v5877
        %v5886 = vpack.c.b16 %v5878, %v5878
        %v5887 = vpack.c.b16 %v5879, %v5879
        %v5888 = vpack.c.b16 %v5880, %v5880
        %v5889 = vpack.c.b16 %v5881, %v5881
        %v5890 = vpack.c.b16 %v5882, %v5882
        %v5891 = vpack.c.b16 %v5883, %v5883
        %v5892 = vpack.c.b16 %v5884, %v5884
        %v5894 = vshrl.u32 %v5885, 16
        %v5896 = vrot.slane %v5894, 7
        %v5897 = vshll.u32 %v5885, 16
        %v5899 = vor.u32 %v5896, %v5897
        %v5901 = vshrl.u32 %v5886, 16
        %v5903 = vrot.slane %v5901, 7
        %v5904 = vshll.u32 %v5886, 16
        %v5906 = vor.u32 %v5903, %v5904
        %v5908 = vshrl.u32 %v5887, 16
        %v5910 = vrot.slane %v5908, 7
        %v5911 = vshll.u32 %v5887, 16
        %v5913 = vor.u32 %v5910, %v5911
        %v5915 = vshrl.u32 %v5888, 16
        %v5917 = vrot.slane %v5915, 7
        %v5918 = vshll.u32 %v5888, 16
        %v5920 = vor.u32 %v5917, %v5918
        %v5922 = vshrl.u32 %v5889, 16
        %v5924 = vrot.slane %v5922, 7
        %v5925 = vshll.u32 %v5889, 16
        %v5927 = vor.u32 %v5924, %v5925
        %v5929 = vshrl.u32 %v5890, 16
        %v5931 = vrot.slane %v5929, 7
        %v5932 = vshll.u32 %v5890, 16
        %v5934 = vor.u32 %v5931, %v5932
        %v5936 = vshrl.u32 %v5891, 16
        %v5938 = vrot.slane %v5936, 7
        %v5939 = vshll.u32 %v5891, 16
        %v5941 = vor.u32 %v5938, %v5939
        %v5943 = vshrl.u32 %v5892, 16
        %v5945 = vrot.slane %v5943, 7
        %v5946 = vshll.u32 %v5892, 16
        %v5948 = vor.u32 %v5945, %v5946
        %v5957 = vsel %vm1971, 0, %v5899
        %v5958 = vsel %vm1971, 0, %v5906
        %v5959 = vsel %vm1971, 0, %v5913
        %v5960 = vsel %vm1971, 0, %v5920
        %v5961 = vsel %vm1971, 0, %v5927
        %v5962 = vsel %vm1971, 0, %v5934
        %v5963 = vsel %vm1971, 0, %v5941
        %v5964 = vsel %vm1971, 0, %v5948
        %v5965 = vsel %vm5281, %v5957, 0
        %v5966 = vsel %vm5281, %v5958, 0
        %v5967 = vsel %vm5281, %v5959, 0
        %v5968 = vsel %vm5281, %v5960, 0
        %v5969 = vsel %vm5281, %v5961, 0
        %v5970 = vsel %vm5281, %v5962, 0
        %v5971 = vsel %vm5281, %v5963, 0
        %v5972 = vsel %vm5281, %v5964, 0
        %v5974 = vshrl.u32 %v5965, 16
        %v5976 = vshll.u32 %v5965, 16
        %v5978 = vrot.slane %v5976, 1
        %v5979 = vor.u32 %v5974, %v5978
        %v5981 = vshrl.u32 %v5966, 16
        %v5983 = vshll.u32 %v5966, 16
        %v5985 = vrot.slane %v5983, 1
        %v5986 = vor.u32 %v5981, %v5985
        %v5988 = vshrl.u32 %v5967, 16
        %v5990 = vshll.u32 %v5967, 16
        %v5992 = vrot.slane %v5990, 1
        %v5993 = vor.u32 %v5988, %v5992
        %v5995 = vshrl.u32 %v5968, 16
        %v5997 = vshll.u32 %v5968, 16
        %v5999 = vrot.slane %v5997, 1
        %v6000 = vor.u32 %v5995, %v5999
        %v6002 = vshrl.u32 %v5969, 16
        %v6004 = vshll.u32 %v5969, 16
        %v6006 = vrot.slane %v6004, 1
        %v6007 = vor.u32 %v6002, %v6006
        %v6009 = vshrl.u32 %v5970, 16
        %v6011 = vshll.u32 %v5970, 16
        %v6013 = vrot.slane %v6011, 1
        %v6014 = vor.u32 %v6009, %v6013
        %v6016 = vshrl.u32 %v5971, 16
        %v6018 = vshll.u32 %v5971, 16
        %v6020 = vrot.slane %v6018, 1
        %v6021 = vor.u32 %v6016, %v6020
        %6022 = vrot.lane.b32.xlu0 %v5297, 8
        %v6023 = vpop.permute.xlu0 %6022
        %6024 = vrot.lane.b32.xlu0 %v5979, 8
        %v6025 = vpop.permute.xlu0 %6024
        %6026 = vrot.lane.b32.xlu0 %v5986, 8
        %v6027 = vpop.permute.xlu0 %6026
        %6028 = vrot.lane.b32.xlu0 %v5993, 8
        %v6029 = vpop.permute.xlu0 %6028
        %6030 = vrot.lane.b32.xlu0 %v6000, 8
        %v6031 = vpop.permute.xlu0 %6030
        %6032 = vrot.lane.b32.xlu0 %v6007, 8
        %v6033 = vpop.permute.xlu0 %6032
        %6034 = vrot.lane.b32.xlu0 %v6014, 8
        %v6035 = vpop.permute.xlu0 %6034
        %6036 = vrot.lane.b32.xlu0 %v6021, 8
        %v6037 = vpop.permute.xlu0 %6036
        %v6045 = vrot.slane %v5965, 1
        %v6046 = vrot.slane %v5966, 1
        %v6047 = vrot.slane %v5967, 1
        %v6048 = vrot.slane %v5968, 1
        %v6049 = vrot.slane %v5969, 1
        %v6050 = vrot.slane %v5970, 1
        %v6051 = vrot.slane %v5971, 1
        %6052 = vrot.lane.b32.xlu0 %v5371, 16
        %v6053 = vpop.permute.xlu0 %6052
        %6054 = vrot.lane.b32.xlu0 %v6045, 16
        %v6055 = vpop.permute.xlu0 %6054
        %6056 = vrot.lane.b32.xlu0 %v6046, 16
        %v6057 = vpop.permute.xlu0 %6056
        %6058 = vrot.lane.b32.xlu0 %v6047, 16
        %v6059 = vpop.permute.xlu0 %6058
        %6060 = vrot.lane.b32.xlu0 %v6048, 16
        %v6061 = vpop.permute.xlu0 %6060
        %6062 = vrot.lane.b32.xlu0 %v6049, 16
        %v6063 = vpop.permute.xlu0 %6062
        %6064 = vrot.lane.b32.xlu0 %v6050, 16
        %v6065 = vpop.permute.xlu0 %6064
        %6066 = vrot.lane.b32.xlu0 %v6051, 16
        %v6067 = vpop.permute.xlu0 %6066
        %6069 = vrot.lane.b32.xlu0 %v5965, 24
        %v6070 = vpop.permute.xlu0 %6069
        %6071 = vrot.lane.b32.xlu0 %v5966, 24
        %v6072 = vpop.permute.xlu0 %6071
        %6073 = vrot.lane.b32.xlu0 %v5967, 24
        %v6074 = vpop.permute.xlu0 %6073
        %6075 = vrot.lane.b32.xlu0 %v5968, 24
        %v6076 = vpop.permute.xlu0 %6075
        %6077 = vrot.lane.b32.xlu0 %v5969, 24
        %v6078 = vpop.permute.xlu0 %6077
        %6079 = vrot.lane.b32.xlu0 %v5970, 24
        %v6080 = vpop.permute.xlu0 %6079
        %6081 = vrot.lane.b32.xlu0 %v5971, 24
        %v6082 = vpop.permute.xlu0 %6081
        %6083 = vrot.lane.b32.xlu0 %v5972, 24
        %v6084 = vpop.permute.xlu0 %6083
        %v6086 = vshrl.u32 %v5972, 16
        %v6088 = vshll.u32 %v5972, 16
        %v6090 = vrot.slane %v6088, 1
        %v6091 = vor.u32 %v6086, %v6090
        %6092 = vrot.lane.b32.xlu0 %v5979, 32
        %v6093 = vpop.permute.xlu0 %6092
        %6094 = vrot.lane.b32.xlu0 %v5986, 32
        %v6095 = vpop.permute.xlu0 %6094
        %6096 = vrot.lane.b32.xlu0 %v5993, 32
        %v6097 = vpop.permute.xlu0 %6096
        %6098 = vrot.lane.b32.xlu0 %v6000, 32
        %v6099 = vpop.permute.xlu0 %6098
        %6100 = vrot.lane.b32.xlu0 %v6007, 32
        %v6101 = vpop.permute.xlu0 %6100
        %6102 = vrot.lane.b32.xlu0 %v6014, 32
        %v6103 = vpop.permute.xlu0 %6102
        %6104 = vrot.lane.b32.xlu0 %v6021, 32
        %v6105 = vpop.permute.xlu0 %6104
        %6106 = vrot.lane.b32.xlu0 %v6091, 32
        %v6107 = vpop.permute.xlu0 %6106
        %v6108 = vrot.slane %v5972, 1
        %6109 = vrot.lane.b32.xlu0 %v6045, 40
        %v6110 = vpop.permute.xlu0 %6109
        %6111 = vrot.lane.b32.xlu0 %v6046, 40
        %v6112 = vpop.permute.xlu0 %6111
        %6113 = vrot.lane.b32.xlu0 %v6047, 40
        %v6114 = vpop.permute.xlu0 %6113
        %6115 = vrot.lane.b32.xlu0 %v6048, 40
        %v6116 = vpop.permute.xlu0 %6115
        %6117 = vrot.lane.b32.xlu0 %v6049, 40
        %v6118 = vpop.permute.xlu0 %6117
        %6119 = vrot.lane.b32.xlu0 %v6050, 40
        %v6120 = vpop.permute.xlu0 %6119
        %6121 = vrot.lane.b32.xlu0 %v6051, 40
        %v6122 = vpop.permute.xlu0 %6121
        %6123 = vrot.lane.b32.xlu0 %v6108, 40
        %v6124 = vpop.permute.xlu0 %6123
        %6125 = vrot.lane.b32.xlu0 %v5966, 48
        %v6126 = vpop.permute.xlu0 %6125
        %6127 = vrot.lane.b32.xlu0 %v5967, 48
        %v6128 = vpop.permute.xlu0 %6127
        %6129 = vrot.lane.b32.xlu0 %v5968, 48
        %v6130 = vpop.permute.xlu0 %6129
        %6131 = vrot.lane.b32.xlu0 %v5969, 48
        %v6132 = vpop.permute.xlu0 %6131
        %6133 = vrot.lane.b32.xlu0 %v5970, 48
        %v6134 = vpop.permute.xlu0 %6133
        %6135 = vrot.lane.b32.xlu0 %v5971, 48
        %v6136 = vpop.permute.xlu0 %6135
        %6137 = vrot.lane.b32.xlu0 %v5972, 48
        %v6138 = vpop.permute.xlu0 %6137
        %6139 = vrot.lane.b32.xlu0 %v5282, 48
        %v6140 = vpop.permute.xlu0 %6139
        %6141 = vrot.lane.b32.xlu0 %v5986, 56
        %v6142 = vpop.permute.xlu0 %6141
        %6143 = vrot.lane.b32.xlu0 %v5993, 56
        %v6144 = vpop.permute.xlu0 %6143
        %6145 = vrot.lane.b32.xlu0 %v6000, 56
        %v6146 = vpop.permute.xlu0 %6145
        %6147 = vrot.lane.b32.xlu0 %v6007, 56
        %v6148 = vpop.permute.xlu0 %6147
        %6149 = vrot.lane.b32.xlu0 %v6014, 56
        %v6150 = vpop.permute.xlu0 %6149
        %6151 = vrot.lane.b32.xlu0 %v6021, 56
        %v6152 = vpop.permute.xlu0 %6151
        %6153 = vrot.lane.b32.xlu0 %v6091, 56
        %v6154 = vpop.permute.xlu0 %6153
        %6155 = vrot.lane.b32.xlu0 %v5297, 56
        %v6156 = vpop.permute.xlu0 %6155
        %6157 = vrot.lane.b32.xlu0 %v6046, 64
        %v6158 = vpop.permute.xlu0 %6157
        %6159 = vrot.lane.b32.xlu0 %v6047, 64
        %v6160 = vpop.permute.xlu0 %6159
        %6161 = vrot.lane.b32.xlu0 %v6048, 64
        %v6162 = vpop.permute.xlu0 %6161
        %6163 = vrot.lane.b32.xlu0 %v6049, 64
        %v6164 = vpop.permute.xlu0 %6163
        %6165 = vrot.lane.b32.xlu0 %v6050, 64
        %v6166 = vpop.permute.xlu0 %6165
        %6167 = vrot.lane.b32.xlu0 %v6051, 64
        %v6168 = vpop.permute.xlu0 %6167
        %6169 = vrot.lane.b32.xlu0 %v6108, 64
        %v6170 = vpop.permute.xlu0 %6169
        %6171 = vrot.lane.b32.xlu0 %v5371, 64
        %v6172 = vpop.permute.xlu0 %6171
        %v6174 = vsel %vm2553, %v5282, %v6023
        %v6176 = vsel %vm2553, %v5965, %v6025
        %v6178 = vsel %vm2553, %v5966, %v6027
        %v6180 = vsel %vm2553, %v5967, %v6029
        %v6182 = vsel %vm2553, %v5968, %v6031
        %v6184 = vsel %vm2553, %v5969, %v6033
        %v6186 = vsel %vm2553, %v5970, %v6035
        %v6188 = vsel %vm2553, %v5971, %v6037
        %v6190 = vsel %vm2586, %v6174, %v6053
        %v6192 = vsel %vm2586, %v6176, %v6055
        %v6194 = vsel %vm2586, %v6178, %v6057
        %v6196 = vsel %vm2586, %v6180, %v6059
        %v6198 = vsel %vm2586, %v6182, %v6061
        %v6200 = vsel %vm2586, %v6184, %v6063
        %v6202 = vsel %vm2586, %v6186, %v6065
        %v6204 = vsel %vm2586, %v6188, %v6067
        %v6206 = vsel %vm2619, %v6190, %v6070
        %v6208 = vsel %vm2619, %v6192, %v6072
        %v6210 = vsel %vm2619, %v6194, %v6074
        %v6212 = vsel %vm2619, %v6196, %v6076
        %v6214 = vsel %vm2619, %v6198, %v6078
        %v6216 = vsel %vm2619, %v6200, %v6080
        %v6218 = vsel %vm2619, %v6202, %v6082
        %v6220 = vsel %vm2619, %v6204, %v6084
        %v6222 = vsel %vm1558, %v6206, %v6093
        %v6224 = vsel %vm1558, %v6208, %v6095
        %v6226 = vsel %vm1558, %v6210, %v6097
        %v6228 = vsel %vm1558, %v6212, %v6099
        %v6230 = vsel %vm1558, %v6214, %v6101
        %v6232 = vsel %vm1558, %v6216, %v6103
        %v6234 = vsel %vm1558, %v6218, %v6105
        %v6236 = vsel %vm1558, %v6220, %v6107
        %v6238 = vsel %vm2684, %v6222, %v6110
        %v6240 = vsel %vm2684, %v6224, %v6112
        %v6242 = vsel %vm2684, %v6226, %v6114
        %v6244 = vsel %vm2684, %v6228, %v6116
        %v6246 = vsel %vm2684, %v6230, %v6118
        %v6248 = vsel %vm2684, %v6232, %v6120
        %v6250 = vsel %vm2684, %v6234, %v6122
        %v6252 = vsel %vm2684, %v6236, %v6124
        %v6254 = vsel %vm2717, %v6238, %v6126
        %v6256 = vsel %vm2717, %v6240, %v6128
        %v6258 = vsel %vm2717, %v6242, %v6130
        %v6260 = vsel %vm2717, %v6244, %v6132
        %v6262 = vsel %vm2717, %v6246, %v6134
        %v6264 = vsel %vm2717, %v6248, %v6136
        %v6266 = vsel %vm2717, %v6250, %v6138
        %v6268 = vsel %vm2717, %v6252, %v6140
        %v6270 = vsel %vm2750, %v6254, %v6142
        %v6272 = vsel %vm2750, %v6256, %v6144
        %v6274 = vsel %vm2750, %v6258, %v6146
        %v6276 = vsel %vm2750, %v6260, %v6148
        %v6278 = vsel %vm2750, %v6262, %v6150
        %v6280 = vsel %vm2750, %v6264, %v6152
        %v6282 = vsel %vm2750, %v6266, %v6154
        %v6284 = vsel %vm2750, %v6268, %v6156
        %v6286 = vsel %vm2783, %v6270, %v6158
        %v6288 = vsel %vm2783, %v6272, %v6160
        %v6290 = vsel %vm2783, %v6274, %v6162
        %v6292 = vsel %vm2783, %v6276, %v6164
        %v6294 = vsel %vm2783, %v6278, %v6166
        %v6296 = vsel %vm2783, %v6280, %v6168
        %v6298 = vsel %vm2783, %v6282, %v6170
        %v6300 = vsel %vm2783, %v6284, %v6172
        %v6302 = vlaneseq
        %v6303 = vshrl.u32 %v6302, 7
        %v6304 = vsub.s32 0, %v6303
        %v6305 = vrot.slane %v1222, %v6304
        %v6315 = vunpack.c.l.b16 %v6286
        %v6316 = vunpack.c.l.b16 %v6288
        %v6317 = vunpack.c.l.b16 %v6290
        %v6318 = vunpack.c.l.b16 %v6292
        %v6319 = vunpack.c.l.b16 %v6294
        %v6320 = vunpack.c.l.b16 %v6296
        %v6321 = vunpack.c.l.b16 %v6298
        %v6322 = vunpack.c.l.b16 %v6300
        %v6323 = vpack.c.b16 %v6316, %v6315
        %v6324 = vpack.c.b16 %v6318, %v6317
        %v6325 = vpack.c.b16 %v6320, %v6319
        %v6326 = vpack.c.b16 %v6322, %v6321
        %v6336 = vunpack.c.l.b16 %v1213
        %v6337 = vunpack.c.l.b16 %v1214
        %v6338 = vunpack.c.l.b16 %v1215
        %v6339 = vunpack.c.l.b16 %v1216
        %v6340 = vunpack.c.l.b16 %v1217
        %v6341 = vunpack.c.l.b16 %v1218
        %v6342 = vunpack.c.l.b16 %v1219
        %v6343 = vunpack.c.l.b16 %v1220
        %v6344 = vunpack.c.l.b16 %v1221
        %v6345 = vpack.c.b16 %v6337, %v6336
        %v6346 = vpack.c.b16 %v6339, %v6338
        %v6347 = vpack.c.b16 %v6341, %v6340
        %v6348 = vpack.c.b16 %v6343, %v6342
        %v6349 = vpack.c.b16 %v6344, %v6344
        %v6355 = vsel %vm2849, %v6323, 0
        %v6358 = vsel %vm2849, %v6324, 0
        %v6361 = vsel %vm2849, %v6325, 0
        %v6364 = vsel %vm2849, %v6326, 0
        %v6367 = vsel %vm2882, %v6349, 0
        %6369 = vmatprep.subr.bf16.mxu0 0
        %6370 = vmatpush1.bf16.msra.mxu0 0
        %6371 = vmatprep.subr.bf16.mxu0 0
        %6372 = vmatpush1.bf16.msra.mxu0 0
        %6373 = vmatprep.subr.bf16.mxu0 0
        %6374 = vmatpush1.bf16.msra.mxu0 0
        %6375 = vmatprep.subr.bf16.mxu0 0
        %6376 = vmatpush1.bf16.msra.mxu0 %v6367
        %6377 = vmatprep.subr.bf16.mxu0 0
        %6378 = vmatpush1.bf16.msra.mxu0 %v6348
        %6379 = vmatprep.subr.bf16.mxu0 0
        %6380 = vmatpush1.bf16.msra.mxu0 %v6347
        %6381 = vmatprep.subr.bf16.mxu0 0
        %6382 = vmatpush1.bf16.msra.mxu0 %v6346
        %6383 = vmatprep.subr.bf16.mxu0 0
        %6384 = vmatpush1.bf16.msra.mxu0 %v6345
        %6385 = vmatprep.subr.bf16.mxu0 0
        %6386 = vmatpush2.bf16.msra.mxu0 0
        %6387 = vmatprep.subr.bf16.mxu0 0
        %6388 = vmatpush2.bf16.msra.mxu0 0
        %6389 = vmatprep.subr.bf16.mxu0 0
        %6390 = vmatpush2.bf16.msra.mxu0 0
        %6391 = vmatprep.subr.bf16.mxu0 0
        %6392 = vmatpush2.bf16.msra.mxu0 0
        %6393 = vmatprep.subr.bf16.mxu0 0
        %6394 = vmatpush2.bf16.msra.mxu0 0
        %6395 = vmatprep.subr.bf16.mxu0 0
        %6396 = vmatpush2.bf16.msra.mxu0 0
        %6397 = vmatprep.subr.bf16.mxu0 0
        %6398 = vmatpush2.bf16.msra.mxu0 0
        %6399 = vmatprep.subr.bf16.mxu0 0
        %6400 = vmatpush2.bf16.msra.mxu0 0
        %6401 = vmatprep.mubr.bf16.mxu0 0
        %6402 = vmatmul.mubr.bf16.gmra.mxu0 %v6355
        %v6403 = vpop.f32.mrf.mxu0
        %v6404 = vadd.f32 %v6305, %v6403
        %v6405 = vpop.f32.mrf.mxu0
        %v6406 = vpop.f32.mrf.mxu0
        %v6407 = vadd.f32 %v6305, %v6406
        %v6408 = vpop.f32.mrf.mxu0
        %6409 = vmatprep.mubr.bf16.mxu0 0
        %6410 = vmatmul.mubr.bf16.gmra.mxu0 %v6358
        %v6411 = vpop.f32.mrf.mxu0
        %v6412 = vadd.f32 %v6305, %v6411
        %v6413 = vpop.f32.mrf.mxu0
        %v6414 = vpop.f32.mrf.mxu0
        %v6415 = vadd.f32 %v6305, %v6414
        %v6416 = vpop.f32.mrf.mxu0
        %6417 = vmatprep.mubr.bf16.mxu0 0
        %6418 = vmatmul.mubr.bf16.gmra.mxu0 %v6361
        %v6419 = vpop.f32.mrf.mxu0
        %v6420 = vadd.f32 %v6305, %v6419
        %v6421 = vpop.f32.mrf.mxu0
        %v6422 = vpop.f32.mrf.mxu0
        %v6423 = vadd.f32 %v6305, %v6422
        %v6424 = vpop.f32.mrf.mxu0
        %6425 = vmatprep.mubr.bf16.mxu0 0
        %6426 = vmatmul.mubr.bf16.gmra.mxu0 %v6364
        %v6427 = vpop.f32.mrf.mxu0
        %v6428 = vadd.f32 %v6305, %v6427
        %v6429 = vpop.f32.mrf.mxu0
        %v6430 = vpop.f32.mrf.mxu0
        %v6431 = vadd.f32 %v6305, %v6430
        %v6432 = vpop.f32.mrf.mxu0
        %6433 = vdwg.mxu0
        %v6434 = vadd.f32 %v6404, %v5839
        %v6435 = vadd.f32 %v6407, %v5842
        %v6436 = vadd.f32 %v6412, %v5847
        %v6437 = vadd.f32 %v6415, %v5850
        %v6438 = vadd.f32 %v6420, %v5855
        %v6439 = vadd.f32 %v6423, %v5858
        %v6440 = vadd.f32 %v6428, %v5863
        %v6441 = vadd.f32 %v6431, %v5866
        %v6442 = vmax.f32 %v6434, 0.0
        %v6443 = vmax.f32 %v6435, 0.0
        %v6444 = vmax.f32 %v6436, 0.0
        %v6445 = vmax.f32 %v6437, 0.0
        %v6446 = vmax.f32 %v6438, 0.0
        %v6447 = vmax.f32 %v6439, 0.0
        %v6448 = vmax.f32 %v6440, 0.0
        %v6449 = vmax.f32 %v6441, 0.0
        %v6450 = vpack.c.bf16 %v6443, %v6442
        %v6451 = vpack.c.bf16 %v6445, %v6444
        %v6452 = vpack.c.bf16 %v6447, %v6446
        %v6453 = vpack.c.bf16 %v6449, %v6448
        %v6458 = vunpack.c.l.b16 %v6450
        %v6459 = vunpack.c.h.b16 %v6450
        %v6460 = vunpack.c.l.b16 %v6451
        %v6461 = vunpack.c.h.b16 %v6451
        %v6462 = vunpack.c.l.b16 %v6452
        %v6463 = vunpack.c.h.b16 %v6452
        %v6464 = vunpack.c.l.b16 %v6453
        %v6465 = vunpack.c.h.b16 %v6453
        %v6466 = vpack.c.b16 %v6458, %v6458
        %v6467 = vpack.c.b16 %v6459, %v6459
        %v6468 = vpack.c.b16 %v6460, %v6460
        %v6469 = vpack.c.b16 %v6461, %v6461
        %v6470 = vpack.c.b16 %v6462, %v6462
        %v6471 = vpack.c.b16 %v6463, %v6463
        %v6472 = vpack.c.b16 %v6464, %v6464
        %v6473 = vpack.c.b16 %v6465, %v6465
        %vm6482 = vcmask 60416
        %6483 = vst.msk [vmem:[%s1133] sm:$0xf] %vm6482, %v6466
        %6484 = vst.msk [vmem:[%s1133 + $0x4] sm:$0xf] %vm6482, %v6467
        %6485 = vst.msk [vmem:[%s1133 + $0x8] sm:$0xf] %vm6482, %v6468
        %6486 = vst.msk [vmem:[%s1133 + $0xc] sm:$0xf] %vm6482, %v6469
        %6487 = vst.msk [vmem:[%s1133 + $0x10] sm:$0xf] %vm6482, %v6470
        %6488 = vst.msk [vmem:[%s1133 + $0x14] sm:$0xf] %vm6482, %v6471
        %6489 = vst.msk [vmem:[%s1133 + $0x18] sm:$0xf] %vm6482, %v6472
        %6490 = vst.msk [vmem:[%s1133 + $0x1c] sm:$0xf] %vm6482, %v6473
        %v6491 = vld [vmem:[%s5] sm:$0xf]
        %v6492 = vld [vmem:[%s5 + $0x4] sm:$0xf]
        %v6494 = vshrl.u32 %v6466, 16
        %v6496 = vrot.slane %v6494, 7
        %v6497 = vshll.u32 %v6466, 16
        %v6499 = vor.u32 %v6496, %v6497
        %v6501 = vshrl.u32 %v6467, 16
        %v6503 = vrot.slane %v6501, 7
        %v6504 = vshll.u32 %v6467, 16
        %v6506 = vor.u32 %v6503, %v6504
        %v6508 = vshrl.u32 %v6468, 16
        %v6510 = vrot.slane %v6508, 7
        %v6511 = vshll.u32 %v6468, 16
        %v6513 = vor.u32 %v6510, %v6511
        %v6515 = vshrl.u32 %v6469, 16
        %v6517 = vrot.slane %v6515, 7
        %v6518 = vshll.u32 %v6469, 16
        %v6520 = vor.u32 %v6517, %v6518
        %v6522 = vshrl.u32 %v6470, 16
        %v6524 = vrot.slane %v6522, 7
        %v6525 = vshll.u32 %v6470, 16
        %v6527 = vor.u32 %v6524, %v6525
        %v6529 = vshrl.u32 %v6471, 16
        %v6531 = vrot.slane %v6529, 7
        %v6532 = vshll.u32 %v6471, 16
        %v6534 = vor.u32 %v6531, %v6532
        %v6536 = vshrl.u32 %v6472, 16
        %v6538 = vrot.slane %v6536, 7
        %v6539 = vshll.u32 %v6472, 16
        %v6541 = vor.u32 %v6538, %v6539
        %v6543 = vshrl.u32 %v6473, 16
        %v6545 = vrot.slane %v6543, 7
        %v6546 = vshll.u32 %v6473, 16
        %v6548 = vor.u32 %v6545, %v6546
        %v6557 = vsel %vm1971, 0, %v6499
        %v6558 = vsel %vm1971, 0, %v6506
        %v6559 = vsel %vm1971, 0, %v6513
        %v6560 = vsel %vm1971, 0, %v6520
        %v6561 = vsel %vm1971, 0, %v6527
        %v6562 = vsel %vm1971, 0, %v6534
        %v6563 = vsel %vm1971, 0, %v6541
        %v6564 = vsel %vm1971, 0, %v6548
        %v6565 = vsel %vm5281, %v6557, 0
        %v6566 = vsel %vm5281, %v6558, 0
        %v6567 = vsel %vm5281, %v6559, 0
        %v6568 = vsel %vm5281, %v6560, 0
        %v6569 = vsel %vm5281, %v6561, 0
        %v6570 = vsel %vm5281, %v6562, 0
        %v6571 = vsel %vm5281, %v6563, 0
        %v6572 = vsel %vm5281, %v6564, 0
        %v6574 = vshrl.u32 %v6565, 16
        %v6576 = vshll.u32 %v6565, 16
        %v6578 = vrot.slane %v6576, 1
        %v6579 = vor.u32 %v6574, %v6578
        %v6581 = vshrl.u32 %v6566, 16
        %v6583 = vshll.u32 %v6566, 16
        %v6585 = vrot.slane %v6583, 1
        %v6586 = vor.u32 %v6581, %v6585
        %v6588 = vshrl.u32 %v6567, 16
        %v6590 = vshll.u32 %v6567, 16
        %v6592 = vrot.slane %v6590, 1
        %v6593 = vor.u32 %v6588, %v6592
        %v6595 = vshrl.u32 %v6568, 16
        %v6597 = vshll.u32 %v6568, 16
        %v6599 = vrot.slane %v6597, 1
        %v6600 = vor.u32 %v6595, %v6599
        %v6602 = vshrl.u32 %v6569, 16
        %v6604 = vshll.u32 %v6569, 16
        %v6606 = vrot.slane %v6604, 1
        %v6607 = vor.u32 %v6602, %v6606
        %v6609 = vshrl.u32 %v6570, 16
        %v6611 = vshll.u32 %v6570, 16
        %v6613 = vrot.slane %v6611, 1
        %v6614 = vor.u32 %v6609, %v6613
        %v6616 = vshrl.u32 %v6571, 16
        %v6618 = vshll.u32 %v6571, 16
        %v6620 = vrot.slane %v6618, 1
        %v6621 = vor.u32 %v6616, %v6620
        %6622 = vrot.lane.b32.xlu0 %v6579, 8
        %v6623 = vpop.permute.xlu0 %6622
        %6624 = vrot.lane.b32.xlu0 %v6586, 8
        %v6625 = vpop.permute.xlu0 %6624
        %6626 = vrot.lane.b32.xlu0 %v6593, 8
        %v6627 = vpop.permute.xlu0 %6626
        %6628 = vrot.lane.b32.xlu0 %v6600, 8
        %v6629 = vpop.permute.xlu0 %6628
        %6630 = vrot.lane.b32.xlu0 %v6607, 8
        %v6631 = vpop.permute.xlu0 %6630
        %6632 = vrot.lane.b32.xlu0 %v6614, 8
        %v6633 = vpop.permute.xlu0 %6632
        %6634 = vrot.lane.b32.xlu0 %v6621, 8
        %v6635 = vpop.permute.xlu0 %6634
        %v6643 = vrot.slane %v6565, 1
        %v6644 = vrot.slane %v6566, 1
        %v6645 = vrot.slane %v6567, 1
        %v6646 = vrot.slane %v6568, 1
        %v6647 = vrot.slane %v6569, 1
        %v6648 = vrot.slane %v6570, 1
        %v6649 = vrot.slane %v6571, 1
        %6650 = vrot.lane.b32.xlu0 %v6643, 16
        %v6651 = vpop.permute.xlu0 %6650
        %6652 = vrot.lane.b32.xlu0 %v6644, 16
        %v6653 = vpop.permute.xlu0 %6652
        %6654 = vrot.lane.b32.xlu0 %v6645, 16
        %v6655 = vpop.permute.xlu0 %6654
        %6656 = vrot.lane.b32.xlu0 %v6646, 16
        %v6657 = vpop.permute.xlu0 %6656
        %6658 = vrot.lane.b32.xlu0 %v6647, 16
        %v6659 = vpop.permute.xlu0 %6658
        %6660 = vrot.lane.b32.xlu0 %v6648, 16
        %v6661 = vpop.permute.xlu0 %6660
        %6662 = vrot.lane.b32.xlu0 %v6649, 16
        %v6663 = vpop.permute.xlu0 %6662
        %6665 = vrot.lane.b32.xlu0 %v6565, 24
        %v6666 = vpop.permute.xlu0 %6665
        %6667 = vrot.lane.b32.xlu0 %v6566, 24
        %v6668 = vpop.permute.xlu0 %6667
        %6669 = vrot.lane.b32.xlu0 %v6567, 24
        %v6670 = vpop.permute.xlu0 %6669
        %6671 = vrot.lane.b32.xlu0 %v6568, 24
        %v6672 = vpop.permute.xlu0 %6671
        %6673 = vrot.lane.b32.xlu0 %v6569, 24
        %v6674 = vpop.permute.xlu0 %6673
        %6675 = vrot.lane.b32.xlu0 %v6570, 24
        %v6676 = vpop.permute.xlu0 %6675
        %6677 = vrot.lane.b32.xlu0 %v6571, 24
        %v6678 = vpop.permute.xlu0 %6677
        %6679 = vrot.lane.b32.xlu0 %v6572, 24
        %v6680 = vpop.permute.xlu0 %6679
        %v6682 = vshrl.u32 %v6572, 16
        %v6684 = vshll.u32 %v6572, 16
        %v6686 = vrot.slane %v6684, 1
        %v6687 = vor.u32 %v6682, %v6686
        %6688 = vrot.lane.b32.xlu0 %v6579, 32
        %v6689 = vpop.permute.xlu0 %6688
        %6690 = vrot.lane.b32.xlu0 %v6586, 32
        %v6691 = vpop.permute.xlu0 %6690
        %6692 = vrot.lane.b32.xlu0 %v6593, 32
        %v6693 = vpop.permute.xlu0 %6692
        %6694 = vrot.lane.b32.xlu0 %v6600, 32
        %v6695 = vpop.permute.xlu0 %6694
        %6696 = vrot.lane.b32.xlu0 %v6607, 32
        %v6697 = vpop.permute.xlu0 %6696
        %6698 = vrot.lane.b32.xlu0 %v6614, 32
        %v6699 = vpop.permute.xlu0 %6698
        %6700 = vrot.lane.b32.xlu0 %v6621, 32
        %v6701 = vpop.permute.xlu0 %6700
        %6702 = vrot.lane.b32.xlu0 %v6687, 32
        %v6703 = vpop.permute.xlu0 %6702
        %v6704 = vrot.slane %v6572, 1
        %6705 = vrot.lane.b32.xlu0 %v6643, 40
        %v6706 = vpop.permute.xlu0 %6705
        %6707 = vrot.lane.b32.xlu0 %v6644, 40
        %v6708 = vpop.permute.xlu0 %6707
        %6709 = vrot.lane.b32.xlu0 %v6645, 40
        %v6710 = vpop.permute.xlu0 %6709
        %6711 = vrot.lane.b32.xlu0 %v6646, 40
        %v6712 = vpop.permute.xlu0 %6711
        %6713 = vrot.lane.b32.xlu0 %v6647, 40
        %v6714 = vpop.permute.xlu0 %6713
        %6715 = vrot.lane.b32.xlu0 %v6648, 40
        %v6716 = vpop.permute.xlu0 %6715
        %6717 = vrot.lane.b32.xlu0 %v6649, 40
        %v6718 = vpop.permute.xlu0 %6717
        %6719 = vrot.lane.b32.xlu0 %v6704, 40
        %v6720 = vpop.permute.xlu0 %6719
        %6721 = vrot.lane.b32.xlu0 %v6566, 48
        %v6722 = vpop.permute.xlu0 %6721
        %6723 = vrot.lane.b32.xlu0 %v6567, 48
        %v6724 = vpop.permute.xlu0 %6723
        %6725 = vrot.lane.b32.xlu0 %v6568, 48
        %v6726 = vpop.permute.xlu0 %6725
        %6727 = vrot.lane.b32.xlu0 %v6569, 48
        %v6728 = vpop.permute.xlu0 %6727
        %6729 = vrot.lane.b32.xlu0 %v6570, 48
        %v6730 = vpop.permute.xlu0 %6729
        %6731 = vrot.lane.b32.xlu0 %v6571, 48
        %v6732 = vpop.permute.xlu0 %6731
        %6733 = vrot.lane.b32.xlu0 %v6572, 48
        %v6734 = vpop.permute.xlu0 %6733
        %6735 = vrot.lane.b32.xlu0 %v6586, 56
        %v6736 = vpop.permute.xlu0 %6735
        %6737 = vrot.lane.b32.xlu0 %v6593, 56
        %v6738 = vpop.permute.xlu0 %6737
        %6739 = vrot.lane.b32.xlu0 %v6600, 56
        %v6740 = vpop.permute.xlu0 %6739
        %6741 = vrot.lane.b32.xlu0 %v6607, 56
        %v6742 = vpop.permute.xlu0 %6741
        %6743 = vrot.lane.b32.xlu0 %v6614, 56
        %v6744 = vpop.permute.xlu0 %6743
        %6745 = vrot.lane.b32.xlu0 %v6621, 56
        %v6746 = vpop.permute.xlu0 %6745
        %6747 = vrot.lane.b32.xlu0 %v6687, 56
        %v6748 = vpop.permute.xlu0 %6747
        %6749 = vrot.lane.b32.xlu0 %v6644, 64
        %v6750 = vpop.permute.xlu0 %6749
        %6751 = vrot.lane.b32.xlu0 %v6645, 64
        %v6752 = vpop.permute.xlu0 %6751
        %6753 = vrot.lane.b32.xlu0 %v6646, 64
        %v6754 = vpop.permute.xlu0 %6753
        %6755 = vrot.lane.b32.xlu0 %v6647, 64
        %v6756 = vpop.permute.xlu0 %6755
        %6757 = vrot.lane.b32.xlu0 %v6648, 64
        %v6758 = vpop.permute.xlu0 %6757
        %6759 = vrot.lane.b32.xlu0 %v6649, 64
        %v6760 = vpop.permute.xlu0 %6759
        %6761 = vrot.lane.b32.xlu0 %v6704, 64
        %v6762 = vpop.permute.xlu0 %6761
        %v6764 = vsel %vm2553, %v6565, %v6623
        %v6766 = vsel %vm2553, %v6566, %v6625
        %v6768 = vsel %vm2553, %v6567, %v6627
        %v6770 = vsel %vm2553, %v6568, %v6629
        %v6772 = vsel %vm2553, %v6569, %v6631
        %v6774 = vsel %vm2553, %v6570, %v6633
        %v6776 = vsel %vm2553, %v6571, %v6635
        %v6778 = vsel %vm2586, %v6764, %v6651
        %v6780 = vsel %vm2586, %v6766, %v6653
        %v6782 = vsel %vm2586, %v6768, %v6655
        %v6784 = vsel %vm2586, %v6770, %v6657
        %v6786 = vsel %vm2586, %v6772, %v6659
        %v6788 = vsel %vm2586, %v6774, %v6661
        %v6790 = vsel %vm2586, %v6776, %v6663
        %v6792 = vsel %vm2619, %v6190, %v6666
        %v6794 = vsel %vm2619, %v6778, %v6668
        %v6796 = vsel %vm2619, %v6780, %v6670
        %v6798 = vsel %vm2619, %v6782, %v6672
        %v6800 = vsel %vm2619, %v6784, %v6674
        %v6802 = vsel %vm2619, %v6786, %v6676
        %v6804 = vsel %vm2619, %v6788, %v6678
        %v6806 = vsel %vm2619, %v6790, %v6680
        %v6808 = vsel %vm1558, %v6792, %v6689
        %v6810 = vsel %vm1558, %v6794, %v6691
        %v6812 = vsel %vm1558, %v6796, %v6693
        %v6814 = vsel %vm1558, %v6798, %v6695
        %v6816 = vsel %vm1558, %v6800, %v6697
        %v6818 = vsel %vm1558, %v6802, %v6699
        %v6820 = vsel %vm1558, %v6804, %v6701
        %v6822 = vsel %vm1558, %v6806, %v6703
        %v6824 = vsel %vm2684, %v6808, %v6706
        %v6826 = vsel %vm2684, %v6810, %v6708
        %v6828 = vsel %vm2684, %v6812, %v6710
        %v6830 = vsel %vm2684, %v6814, %v6712
        %v6832 = vsel %vm2684, %v6816, %v6714
        %v6834 = vsel %vm2684, %v6818, %v6716
        %v6836 = vsel %vm2684, %v6820, %v6718
        %v6838 = vsel %vm2684, %v6822, %v6720
        %v6840 = vsel %vm2717, %v6824, %v6722
        %v6842 = vsel %vm2717, %v6826, %v6724
        %v6844 = vsel %vm2717, %v6828, %v6726
        %v6846 = vsel %vm2717, %v6830, %v6728
        %v6848 = vsel %vm2717, %v6832, %v6730
        %v6850 = vsel %vm2717, %v6834, %v6732
        %v6852 = vsel %vm2717, %v6836, %v6734
        %v6853 = vsel %vm2717, %v6838, %v6140
        %v6855 = vsel %vm2750, %v6840, %v6736
        %v6857 = vsel %vm2750, %v6842, %v6738
        %v6859 = vsel %vm2750, %v6844, %v6740
        %v6861 = vsel %vm2750, %v6846, %v6742
        %v6863 = vsel %vm2750, %v6848, %v6744
        %v6865 = vsel %vm2750, %v6850, %v6746
        %v6867 = vsel %vm2750, %v6852, %v6748
        %v6868 = vsel %vm2750, %v6853, %v6156
        %v6870 = vsel %vm2783, %v6855, %v6750
        %v6872 = vsel %vm2783, %v6857, %v6752
        %v6874 = vsel %vm2783, %v6859, %v6754
        %v6876 = vsel %vm2783, %v6861, %v6756
        %v6878 = vsel %vm2783, %v6863, %v6758
        %v6880 = vsel %vm2783, %v6865, %v6760
        %v6882 = vsel %vm2783, %v6867, %v6762
        %v6883 = vsel %vm2783, %v6868, %v6172
        %v6886 = vunpack.c.l.b16 %v6491
        %v6887 = vunpack.c.l.b16 %v6492
        %v6888 = vpack.c.b16 %v6887, %v6886
        %v6897 = vunpack.c.l.b16 %v6870
        %v6898 = vunpack.c.l.b16 %v6872
        %v6899 = vunpack.c.l.b16 %v6874
        %v6900 = vunpack.c.l.b16 %v6876
        %v6901 = vunpack.c.l.b16 %v6878
        %v6902 = vunpack.c.l.b16 %v6880
        %v6903 = vunpack.c.l.b16 %v6882
        %v6904 = vunpack.c.l.b16 %v6883
        %v6905 = vpack.c.b16 %v6898, %v6897
        %v6906 = vpack.c.b16 %v6900, %v6899
        %v6907 = vpack.c.b16 %v6902, %v6901
        %v6908 = vpack.c.b16 %v6904, %v6903
        %v6914 = vsel %vm2783, %v6888, 0
        %6916 = vmatprep.subr.bf16.mxu0 0
        %6917 = vmatpush1.bf16.msra.mxu0 0
        %6918 = vmatprep.subr.bf16.mxu0 0
        %6919 = vmatpush1.bf16.msra.mxu0 0
        %6920 = vmatprep.subr.bf16.mxu0 0
        %6921 = vmatpush1.bf16.msra.mxu0 0
        %6922 = vmatprep.subr.bf16.mxu0 0
        %6923 = vmatpush1.bf16.msra.mxu0 0
        %6924 = vmatprep.subr.bf16.mxu0 0
        %6925 = vmatpush1.bf16.msra.mxu0 %v6908
        %6926 = vmatprep.subr.bf16.mxu0 0
        %6927 = vmatpush1.bf16.msra.mxu0 %v6907
        %6928 = vmatprep.subr.bf16.mxu0 0
        %6929 = vmatpush1.bf16.msra.mxu0 %v6906
        %6930 = vmatprep.subr.bf16.mxu0 0
        %6931 = vmatpush1.bf16.msra.mxu0 %v6905
        %6932 = vmatprep.subr.bf16.mxu0 0
        %6933 = vmatpush2.bf16.msra.mxu0 0
        %6934 = vmatprep.subr.bf16.mxu0 0
        %6935 = vmatpush2.bf16.msra.mxu0 0
        %6936 = vmatprep.subr.bf16.mxu0 0
        %6937 = vmatpush2.bf16.msra.mxu0 0
        %6938 = vmatprep.subr.bf16.mxu0 0
        %6939 = vmatpush2.bf16.msra.mxu0 0
        %6940 = vmatprep.subr.bf16.mxu0 0
        %6941 = vmatpush2.bf16.msra.mxu0 0
        %6942 = vmatprep.subr.bf16.mxu0 0
        %6943 = vmatpush2.bf16.msra.mxu0 0
        %6944 = vmatprep.subr.bf16.mxu0 0
        %6945 = vmatpush2.bf16.msra.mxu0 0
        %6946 = vmatprep.subr.bf16.mxu0 0
        %6947 = vmatpush2.bf16.msra.mxu0 0
        %6948 = vmatprep.mubr.bf16.mxu0 0
        %6949 = vmatmul.mubr.bf16.gmra.mxu0 %v6914
        %v6950 = vpop.f32.mrf.mxu0
        %v6951 = vadd.f32 0.0, %v6950
        %v6952 = vpop.f32.mrf.mxu0
        %v6953 = vpop.f32.mrf.mxu0
        %v6954 = vadd.f32 0.0, %v6953
        %v6955 = vpop.f32.mrf.mxu0
        %6956 = vdwg.mxu0
        %v6957 = vpack.c.bf16 %v6954, %v6951
        %v6959 = vlaneseq
        %v6960 = vshrl.u32 %v6959, 7
        %v6961 = vsub.s32 0, %v6960
        %v6962 = vrot.slane %v1232, %v6961
        %v6973 = vunpack.c.l.b16 %v1223
        %v6974 = vunpack.c.l.b16 %v1224
        %v6975 = vunpack.c.l.b16 %v1225
        %v6976 = vunpack.c.l.b16 %v1226
        %v6977 = vunpack.c.l.b16 %v1227
        %v6978 = vunpack.c.l.b16 %v1228
        %v6979 = vunpack.c.l.b16 %v1229
        %v6980 = vunpack.c.l.b16 %v1230
        %v6981 = vunpack.c.l.b16 %v1231
        %v6982 = vpack.c.b16 %v6974, %v6973
        %v6983 = vpack.c.b16 %v6976, %v6975
        %v6984 = vpack.c.b16 %v6978, %v6977
        %v6985 = vpack.c.b16 %v6980, %v6979
        %v6986 = vpack.c.b16 %v6981, %v6981
        %v6992 = vsel %vm2849, %v6957, 0
        %v6995 = vsel %vm2882, %v6986, 0
        %6997 = vmatprep.subr.bf16.mxu0 0
        %6998 = vmatpush1.bf16.msra.mxu0 0
        %6999 = vmatprep.subr.bf16.mxu0 0
        %7000 = vmatpush1.bf16.msra.mxu0 0
        %7001 = vmatprep.subr.bf16.mxu0 0
        %7002 = vmatpush1.bf16.msra.mxu0 0
        %7003 = vmatprep.subr.bf16.mxu0 0
        %7004 = vmatpush1.bf16.msra.mxu0 %v6995
        %7005 = vmatprep.subr.bf16.mxu0 0
        %7006 = vmatpush1.bf16.msra.mxu0 %v6985
        %7007 = vmatprep.subr.bf16.mxu0 0
        %7008 = vmatpush1.bf16.msra.mxu0 %v6984
        %7009 = vmatprep.subr.bf16.mxu0 0
        %7010 = vmatpush1.bf16.msra.mxu0 %v6983
        %7011 = vmatprep.subr.bf16.mxu0 0
        %7012 = vmatpush1.bf16.msra.mxu0 %v6982
        %7013 = vmatprep.subr.bf16.mxu0 0
        %7014 = vmatpush2.bf16.msra.mxu0 0
        %7015 = vmatprep.subr.bf16.mxu0 0
        %7016 = vmatpush2.bf16.msra.mxu0 0
        %7017 = vmatprep.subr.bf16.mxu0 0
        %7018 = vmatpush2.bf16.msra.mxu0 0
        %7019 = vmatprep.subr.bf16.mxu0 0
        %7020 = vmatpush2.bf16.msra.mxu0 0
        %7021 = vmatprep.subr.bf16.mxu0 0
        %7022 = vmatpush2.bf16.msra.mxu0 0
        %7023 = vmatprep.subr.bf16.mxu0 0
        %7024 = vmatpush2.bf16.msra.mxu0 0
        %7025 = vmatprep.subr.bf16.mxu0 0
        %7026 = vmatpush2.bf16.msra.mxu0 0
        %7027 = vmatprep.subr.bf16.mxu0 0
        %7028 = vmatpush2.bf16.msra.mxu0 0
        %7029 = vmatprep.mubr.bf16.mxu0 0
        %7030 = vmatmul.mubr.bf16.gmra.mxu0 %v6992
        %v7031 = vpop.f32.mrf.mxu0
        %v7032 = vadd.f32 %v6962, %v7031
        %v7033 = vpop.f32.mrf.mxu0
        %v7034 = vpop.f32.mrf.mxu0
        %v7035 = vadd.f32 %v6962, %v7034
        %v7036 = vpop.f32.mrf.mxu0
        %7037 = vdwg.mxu0
        %v7038 = vmax.f32 %v7032, 0.0
        %v7039 = vmax.f32 %v7035, 0.0
        %7040 = vmatprep.subr.bf16.mxu0 0
        %7041 = vmatpush1.bf16.msra.mxu0 0
        %7042 = vmatprep.subr.bf16.mxu0 0
        %7043 = vmatpush1.bf16.msra.mxu0 0
        %7044 = vmatprep.subr.bf16.mxu0 0
        %7045 = vmatpush1.bf16.msra.mxu0 0
        %7046 = vmatprep.subr.bf16.mxu0 0
        %7047 = vmatpush1.bf16.msra.mxu0 0
        %7048 = vmatprep.subr.bf16.mxu0 0
        %7049 = vmatpush1.bf16.msra.mxu0 %v6453
        %7050 = vmatprep.subr.bf16.mxu0 0
        %7051 = vmatpush1.bf16.msra.mxu0 %v6452
        %7052 = vmatprep.subr.bf16.mxu0 0
        %7053 = vmatpush1.bf16.msra.mxu0 %v6451
        %7054 = vmatprep.subr.bf16.mxu0 0
        %7055 = vmatpush1.bf16.msra.mxu0 %v6450
        %7056 = vmatprep.subr.bf16.mxu0 0
        %7057 = vmatpush2.bf16.msra.mxu0 0
        %7058 = vmatprep.subr.bf16.mxu0 0
        %7059 = vmatpush2.bf16.msra.mxu0 0
        %7060 = vmatprep.subr.bf16.mxu0 0
        %7061 = vmatpush2.bf16.msra.mxu0 0
        %7062 = vmatprep.subr.bf16.mxu0 0
        %7063 = vmatpush2.bf16.msra.mxu0 0
        %7064 = vmatprep.subr.bf16.mxu0 0
        %7065 = vmatpush2.bf16.msra.mxu0 0
        %7066 = vmatprep.subr.bf16.mxu0 0
        %7067 = vmatpush2.bf16.msra.mxu0 0
        %7068 = vmatprep.subr.bf16.mxu0 0
        %7069 = vmatpush2.bf16.msra.mxu0 0
        %7070 = vmatprep.subr.bf16.mxu0 0
        %7071 = vmatpush2.bf16.msra.mxu0 0
        %7072 = vmatprep.mubr.bf16.mxu0 0
        %7073 = vmatmul.mubr.bf16.gmra.mxu0 %v6914
        %v7074 = vpop.f32.mrf.mxu0
        %v7075 = vadd.f32 0.0, %v7074
        %v7076 = vpop.f32.mrf.mxu0
        %v7077 = vpop.f32.mrf.mxu0
        %v7078 = vadd.f32 0.0, %v7077
        %v7079 = vpop.f32.mrf.mxu0
        %7080 = vdwg.mxu0
        %v7081 = vpack.c.bf16 %v7078, %v7075
        %v7083 = vlaneseq
        %v7084 = vshrl.u32 %v7083, 7
        %v7085 = vsub.s32 0, %v7084
        %v7086 = vrot.slane %v1234, %v7085
        %v7089 = vsel %vm2553, %v7081, 0
        %v7092 = vsel %vm2882, %v1233, 0
        %7094 = vmatprep.subr.bf16.mxu0 0
        %7095 = vmatpush1.bf16.msra.mxu0 0
        %7096 = vmatprep.subr.bf16.mxu0 0
        %7097 = vmatpush1.bf16.msra.mxu0 0
        %7098 = vmatprep.subr.bf16.mxu0 0
        %7099 = vmatpush1.bf16.msra.mxu0 0
        %7100 = vmatprep.subr.bf16.mxu0 0
        %7101 = vmatpush1.bf16.msra.mxu0 0
        %7102 = vmatprep.subr.bf16.mxu0 0
        %7103 = vmatpush1.bf16.msra.mxu0 0
        %7104 = vmatprep.subr.bf16.mxu0 0
        %7105 = vmatpush1.bf16.msra.mxu0 0
        %7106 = vmatprep.subr.bf16.mxu0 0
        %7107 = vmatpush1.bf16.msra.mxu0 0
        %7108 = vmatprep.subr.bf16.mxu0 0
        %7109 = vmatpush1.bf16.msra.mxu0 %v7092
        %7110 = vmatprep.subr.bf16.mxu0 0
        %7111 = vmatpush2.bf16.msra.mxu0 0
        %7112 = vmatprep.subr.bf16.mxu0 0
        %7113 = vmatpush2.bf16.msra.mxu0 0
        %7114 = vmatprep.subr.bf16.mxu0 0
        %7115 = vmatpush2.bf16.msra.mxu0 0
        %7116 = vmatprep.subr.bf16.mxu0 0
        %7117 = vmatpush2.bf16.msra.mxu0 0
        %7118 = vmatprep.subr.bf16.mxu0 0
        %7119 = vmatpush2.bf16.msra.mxu0 0
        %7120 = vmatprep.subr.bf16.mxu0 0
        %7121 = vmatpush2.bf16.msra.mxu0 0
        %7122 = vmatprep.subr.bf16.mxu0 0
        %7123 = vmatpush2.bf16.msra.mxu0 0
        %7124 = vmatprep.subr.bf16.mxu0 0
        %7125 = vmatpush2.bf16.msra.mxu0 0
        %7126 = vmatprep.mubr.bf16.mxu0 0
        %7127 = vmatmul.mubr.bf16.gmra.mxu0 %v7089
        %v7128 = vpop.f32.mrf.mxu0
        %v7129 = vadd.f32 %v7086, %v7128
        %v7130 = vpop.f32.mrf.mxu0
        %v7131 = vpop.f32.mrf.mxu0
        %v7132 = vadd.f32 %v7086, %v7131
        %v7133 = vpop.f32.mrf.mxu0
        %7134 = vdwg.mxu0
        %v7135 = vpack.c.bf16 %v7039, %v7038
        %v7137 = vcombine.high %v7135, %v7135
        %v7139 = vunpack.c.l.s4 1983009808
        %v7140 = vunpack.c.0.s8 %v7139
        %v7141 = vlaneseq
        %v7142 = vshrl.u32 %v7141, 7
        %v7143 = vsub.s32 %v7140, %v7142
        %v7144 = vrot.slane %v7135, %v7143
        %v7146 = vunpack.c.l.s4 1983009808
        %v7147 = vunpack.c.0.s8 %v7146
        %v7148 = vlaneseq
        %v7149 = vshrl.u32 %v7148, 7
        %v7150 = vsub.s32 %v7147, %v7149
        %v7151 = vrot.slane %v7137, %v7150
        %v7152 = vcombine.high %v7144, %v7144
        %v7153 = vcombine.high %v7151, %v7151
        %v7155 = vshrl.u32 %v7144, 16
        %v7157 = vrot.slane %v7155, 7
        %v7158 = vshll.u32 %v7144, 16
        %v7160 = vor.u32 %v7157, %v7158
        %v7162 = vshrl.u32 %v7152, 16
        %v7164 = vrot.slane %v7162, 7
        %v7165 = vshll.u32 %v7152, 16
        %v7167 = vor.u32 %v7164, %v7165
        %v7169 = vshrl.u32 %v7151, 16
        %v7171 = vrot.slane %v7169, 7
        %v7172 = vshll.u32 %v7151, 16
        %v7174 = vor.u32 %v7171, %v7172
        %v7176 = vshrl.u32 %v7153, 16
        %v7178 = vrot.slane %v7176, 7
        %v7179 = vshll.u32 %v7153, 16
        %v7181 = vor.u32 %v7178, %v7179
        %v7186 = vsel %vm1971, 0, %v7160
        %v7187 = vsel %vm1971, 0, %v7167
        %v7188 = vsel %vm1971, 0, %v7174
        %v7189 = vsel %vm1971, 0, %v7181
        %vm7190 = vcmask 1042432
        %vm7191 = vsmask.f32 2304
        %vm7192 = vmand %vm7190, %vm7191
        %v7193 = vsel %vm7192, %v1972, 0
        %v7194 = vsel %vm7192, %v7186, 0
        %v7195 = vsel %vm7192, %v7187, 0
        %v7196 = vsel %vm7192, %v7188, 0
        %v7197 = vsel %vm7192, %v7189, 0
        %v7199 = vshrl.u32 %v7193, 16
        %v7201 = vshll.u32 %v7193, 16
        %v7203 = vrot.slane %v7201, 1
        %v7204 = vor.u32 %v7199, %v7203
        %v7206 = vshrl.u32 %v7194, 16
        %v7208 = vshll.u32 %v7194, 16
        %v7210 = vrot.slane %v7208, 1
        %v7211 = vor.u32 %v7206, %v7210
        %v7213 = vshrl.u32 %v7195, 16
        %v7215 = vshll.u32 %v7195, 16
        %v7217 = vrot.slane %v7215, 1
        %v7218 = vor.u32 %v7213, %v7217
        %v7220 = vshrl.u32 %v7196, 16
        %v7222 = vshll.u32 %v7196, 16
        %v7224 = vrot.slane %v7222, 1
        %v7225 = vor.u32 %v7220, %v7224
        %7226 = vrot.lane.b32.xlu0 %v7204, 16
        %v7227 = vpop.permute.xlu0 %7226
        %7228 = vrot.lane.b32.xlu0 %v7211, 16
        %v7229 = vpop.permute.xlu0 %7228
        %7230 = vrot.lane.b32.xlu0 %v7218, 16
        %v7231 = vpop.permute.xlu0 %7230
        %7232 = vrot.lane.b32.xlu0 %v7225, 16
        %v7233 = vpop.permute.xlu0 %7232
        %v7238 = vrot.slane %v7193, 1
        %v7239 = vrot.slane %v7194, 1
        %v7240 = vrot.slane %v7195, 1
        %v7241 = vrot.slane %v7196, 1
        %7242 = vrot.lane.b32.xlu0 %v7238, 32
        %v7243 = vpop.permute.xlu0 %7242
        %7244 = vrot.lane.b32.xlu0 %v7239, 32
        %v7245 = vpop.permute.xlu0 %7244
        %7246 = vrot.lane.b32.xlu0 %v7240, 32
        %v7247 = vpop.permute.xlu0 %7246
        %7248 = vrot.lane.b32.xlu0 %v7241, 32
        %v7249 = vpop.permute.xlu0 %7248
        %7251 = vrot.lane.b32.xlu0 %v7194, 48
        %v7252 = vpop.permute.xlu0 %7251
        %7253 = vrot.lane.b32.xlu0 %v7195, 48
        %v7254 = vpop.permute.xlu0 %7253
        %7255 = vrot.lane.b32.xlu0 %v7196, 48
        %v7256 = vpop.permute.xlu0 %7255
        %7257 = vrot.lane.b32.xlu0 %v7197, 48
        %v7258 = vpop.permute.xlu0 %7257
        %v7260 = vshrl.u32 %v7197, 16
        %v7262 = vshll.u32 %v7197, 16
        %v7264 = vrot.slane %v7262, 1
        %v7265 = vor.u32 %v7260, %v7264
        %7266 = vrot.lane.b32.xlu0 %v7211, 64
        %v7267 = vpop.permute.xlu0 %7266
        %7268 = vrot.lane.b32.xlu0 %v7218, 64
        %v7269 = vpop.permute.xlu0 %7268
        %7270 = vrot.lane.b32.xlu0 %v7225, 64
        %v7271 = vpop.permute.xlu0 %7270
        %7272 = vrot.lane.b32.xlu0 %v7265, 64
        %v7273 = vpop.permute.xlu0 %7272
        %v7274 = vrot.slane %v7197, 1
        %7275 = vrot.lane.b32.xlu0 %v7239, 80
        %v7276 = vpop.permute.xlu0 %7275
        %7277 = vrot.lane.b32.xlu0 %v7240, 80
        %v7278 = vpop.permute.xlu0 %7277
        %7279 = vrot.lane.b32.xlu0 %v7241, 80
        %v7280 = vpop.permute.xlu0 %7279
        %7281 = vrot.lane.b32.xlu0 %v7274, 80
        %v7282 = vpop.permute.xlu0 %7281
        %7283 = vrot.lane.b32.xlu0 %v7195, 96
        %v7284 = vpop.permute.xlu0 %7283
        %7285 = vrot.lane.b32.xlu0 %v7196, 96
        %v7286 = vpop.permute.xlu0 %7285
        %7287 = vrot.lane.b32.xlu0 %v7197, 96
        %v7288 = vpop.permute.xlu0 %7287
        %7289 = vrot.lane.b32.xlu0 %v7193, 96
        %v7290 = vpop.permute.xlu0 %7289
        %7291 = vrot.lane.b32.xlu0 %v7218, 112
        %v7292 = vpop.permute.xlu0 %7291
        %7293 = vrot.lane.b32.xlu0 %v7225, 112
        %v7294 = vpop.permute.xlu0 %7293
        %7295 = vrot.lane.b32.xlu0 %v7265, 112
        %v7296 = vpop.permute.xlu0 %7295
        %7297 = vrot.lane.b32.xlu0 %v7204, 112
        %v7298 = vpop.permute.xlu0 %7297
        %v7300 = vsel %vm2586, %v7193, %v7227
        %v7302 = vsel %vm2586, %v7194, %v7229
        %v7304 = vsel %vm2586, %v7195, %v7231
        %v7306 = vsel %vm2586, %v7196, %v7233
        %v7308 = vsel %vm1558, %v7300, %v7243
        %v7310 = vsel %vm1558, %v7302, %v7245
        %v7312 = vsel %vm1558, %v7304, %v7247
        %v7314 = vsel %vm1558, %v7306, %v7249
        %v7316 = vsel %vm2717, %v7308, %v7252
        %v7318 = vsel %vm2717, %v7310, %v7254
        %v7320 = vsel %vm2717, %v7312, %v7256
        %v7322 = vsel %vm2717, %v7314, %v7258
        %v7324 = vsel %vm2783, %v7316, %v7267
        %v7326 = vsel %vm2783, %v7318, %v7269
        %v7328 = vsel %vm2783, %v7320, %v7271
        %v7330 = vsel %vm2783, %v7322, %v7273
        %v7332 = vsel %vm5548, %v7324, %v7276
        %v7334 = vsel %vm5548, %v7326, %v7278
        %v7336 = vsel %vm5548, %v7328, %v7280
        %v7338 = vsel %vm5548, %v7330, %v7282
        %v7340 = vsel %vm5565, %v7332, %v7284
        %v7342 = vsel %vm5565, %v7334, %v7286
        %v7344 = vsel %vm5565, %v7336, %v7288
        %v7346 = vsel %vm5565, %v7338, %v7290
        %v7348 = vsel %vm5582, %v7340, %v7292
        %v7350 = vsel %vm5582, %v7342, %v7294
        %v7352 = vsel %vm5582, %v7344, %v7296
        %v7354 = vsel %vm5582, %v7346, %v7298
        %v7359 = vcombine.low %v7348, %v7240
        %v7361 = vunpack.c.l.s4 1983009808
        %v7362 = vunpack.c.0.s8 %v7361
        %v7363 = vlaneseq
        %v7364 = vshrl.u32 %v7363, 7
        %v7365 = vsub.s32 %v7362, %v7364
        %v7366 = vrot.slane %v7359, %v7365
        %v7367 = vcombine.low %v7350, %v7241
        %v7369 = vunpack.c.l.s4 1983009808
        %v7370 = vunpack.c.0.s8 %v7369
        %v7371 = vlaneseq
        %v7372 = vshrl.u32 %v7371, 7
        %v7373 = vsub.s32 %v7370, %v7372
        %v7374 = vrot.slane %v7367, %v7373
        %v7375 = vcombine.low %v7352, %v7274
        %v7377 = vunpack.c.l.s4 1983009808
        %v7378 = vunpack.c.0.s8 %v7377
        %v7379 = vlaneseq
        %v7380 = vshrl.u32 %v7379, 7
        %v7381 = vsub.s32 %v7378, %v7380
        %v7382 = vrot.slane %v7375, %v7381
        %v7383 = vcombine.low %v7354, %v7238
        %v7385 = vunpack.c.l.s4 1983009808
        %v7386 = vunpack.c.0.s8 %v7385
        %v7387 = vlaneseq
        %v7388 = vshrl.u32 %v7387, 7
        %v7389 = vsub.s32 %v7386, %v7388
        %v7390 = vrot.slane %v7383, %v7389
        %v7392 = vlaneseq
        %v7393 = vshrl.u32 %v7392, 7
        %v7394 = vsub.s32 0, %v7393
        %v7395 = vrot.slane %v1253, %v7394
        %v7397 = vcombine.low %v7366, %v7374
        %v7398 = vcombine.low %v7382, %v7390
        %v7400 = vunpack.c.l.s4 1983009808
        %v7401 = vunpack.c.0.s8 %v7400
        %v7402 = vlaneseq
        %v7403 = vshrl.u32 %v7402, 7
        %v7404 = vsub.s32 %v7401, %v7403
        %v7405 = vrot.slane %v7397, %v7404
        %v7407 = vunpack.c.l.s4 1983009808
        %v7408 = vunpack.c.0.s8 %v7407
        %v7409 = vlaneseq
        %v7410 = vshrl.u32 %v7409, 7
        %v7411 = vsub.s32 %v7408, %v7410
        %v7412 = vrot.slane %v7398, %v7411
        %v7413 = vcombine.low %v7405, %v7412
        %v7414 = vcombine.high %v7405, %v7412
        %v7434 = vunpack.c.l.b16 %v1235
        %v7435 = vunpack.c.l.b16 %v1236
        %v7436 = vunpack.c.l.b16 %v1237
        %v7437 = vunpack.c.l.b16 %v1238
        %v7438 = vunpack.c.l.b16 %v1239
        %v7439 = vunpack.c.l.b16 %v1240
        %v7440 = vunpack.c.l.b16 %v1241
        %v7441 = vunpack.c.l.b16 %v1242
        %v7442 = vunpack.c.l.b16 %v1243
        %v7443 = vunpack.c.l.b16 %v1244
        %v7444 = vunpack.c.l.b16 %v1245
        %v7445 = vunpack.c.l.b16 %v1246
        %v7446 = vunpack.c.l.b16 %v1247
        %v7447 = vunpack.c.l.b16 %v1248
        %v7448 = vunpack.c.l.b16 %v1249
        %v7449 = vunpack.c.l.b16 %v1250
        %v7450 = vunpack.c.l.b16 %v1251
        %v7451 = vunpack.c.l.b16 %v1252
        %v7452 = vpack.c.b16 %v7435, %v7434
        %v7453 = vpack.c.b16 %v7437, %v7436
        %v7454 = vpack.c.b16 %v7439, %v7438
        %v7455 = vpack.c.b16 %v7441, %v7440
        %v7456 = vpack.c.b16 %v7443, %v7442
        %v7457 = vpack.c.b16 %v7445, %v7444
        %v7458 = vpack.c.b16 %v7447, %v7446
        %v7459 = vpack.c.b16 %v7449, %v7448
        %v7460 = vpack.c.b16 %v7451, %v7450
        %v7471 = vsel %vm2586, %v7414, 0
        %7473 = vmatprep.subr.bf16.mxu0 0
        %7474 = vmatpush1.bf16.msra.mxu0 %v7459
        %7475 = vmatprep.subr.bf16.mxu0 0
        %7476 = vmatpush1.bf16.msra.mxu0 %v7458
        %7477 = vmatprep.subr.bf16.mxu0 0
        %7478 = vmatpush1.bf16.msra.mxu0 %v7457
        %7479 = vmatprep.subr.bf16.mxu0 0
        %7480 = vmatpush1.bf16.msra.mxu0 %v7456
        %7481 = vmatprep.subr.bf16.mxu0 0
        %7482 = vmatpush1.bf16.msra.mxu0 %v7455
        %7483 = vmatprep.subr.bf16.mxu0 0
        %7484 = vmatpush1.bf16.msra.mxu0 %v7454
        %7485 = vmatprep.subr.bf16.mxu0 0
        %7486 = vmatpush1.bf16.msra.mxu0 %v7453
        %7487 = vmatprep.subr.bf16.mxu0 0
        %7488 = vmatpush1.bf16.msra.mxu0 %v7452
        %7489 = vmatprep.subr.bf16.mxu0 0
        %7490 = vmatpush2.bf16.msra.mxu0 0
        %7491 = vmatprep.subr.bf16.mxu0 0
        %7492 = vmatpush2.bf16.msra.mxu0 0
        %7493 = vmatprep.subr.bf16.mxu0 0
        %7494 = vmatpush2.bf16.msra.mxu0 0
        %7495 = vmatprep.subr.bf16.mxu0 0
        %7496 = vmatpush2.bf16.msra.mxu0 0
        %7497 = vmatprep.subr.bf16.mxu0 0
        %7498 = vmatpush2.bf16.msra.mxu0 0
        %7499 = vmatprep.subr.bf16.mxu0 0
        %7500 = vmatpush2.bf16.msra.mxu0 0
        %7501 = vmatprep.subr.bf16.mxu0 0
        %7502 = vmatpush2.bf16.msra.mxu0 0
        %7503 = vmatprep.subr.bf16.mxu0 0
        %7504 = vmatpush2.bf16.msra.mxu0 %v7460
        %7505 = vmatprep.mubr.bf16.mxu0 %v7471
        %7506 = vmatmul.mubr.bf16.gmra.mxu0 %v7413
        %v7507 = vpop.f32.mrf.mxu0
        %v7508 = vadd.f32 %v7395, %v7507
        %v7509 = vpop.f32.mrf.mxu0
        %v7510 = vpop.f32.mrf.mxu0
        %v7511 = vadd.f32 %v7395, %v7510
        %v7512 = vpop.f32.mrf.mxu0
        %7513 = vdwg.mxu0
        %v7514 = vadd.f32 %v7508, %v7129
        %v7515 = vadd.f32 %v7511, %v7132
        %v7516 = vmax.f32 %v7514, 0.0
        %v7517 = vmax.f32 %v7515, 0.0
        %v7518 = vpack.c.bf16 %v7517, %v7516
        %v7520 = vcombine.high %v7518, %v7518
        %v7522 = vunpack.c.l.s4 1983009808
        %v7523 = vunpack.c.0.s8 %v7522
        %v7524 = vlaneseq
        %v7525 = vshrl.u32 %v7524, 7
        %v7526 = vsub.s32 %v7523, %v7525
        %v7527 = vrot.slane %v7518, %v7526
        %v7529 = vunpack.c.l.s4 1983009808
        %v7530 = vunpack.c.0.s8 %v7529
        %v7531 = vlaneseq
        %v7532 = vshrl.u32 %v7531, 7
        %v7533 = vsub.s32 %v7530, %v7532
        %v7534 = vrot.slane %v7520, %v7533
        %v7535 = vcombine.high %v7527, %v7527
        %v7536 = vcombine.high %v7534, %v7534
        %vm7541 = vcmask 123904
        %7542 = vst.msk [vmem:[%s1140] sm:$0x3] %vm7541, %v7527
        %7543 = vst.msk [vmem:[%s1140 + $0x2] sm:$0x3] %vm7541, %v7535
        %7544 = vst.msk [vmem:[%s1140 + $0x4] sm:$0x3] %vm7541, %v7534
        %7545 = vst.msk [vmem:[%s1140 + $0x6] sm:$0x3] %vm7541, %v7536
        %v7547 = vshrl.u32 %v7527, 16
        %v7549 = vrot.slane %v7547, 7
        %v7550 = vshll.u32 %v7527, 16
        %v7552 = vor.u32 %v7549, %v7550
        %v7554 = vshrl.u32 %v7535, 16
        %v7556 = vrot.slane %v7554, 7
        %v7557 = vshll.u32 %v7535, 16
        %v7559 = vor.u32 %v7556, %v7557
        %v7561 = vshrl.u32 %v7534, 16
        %v7563 = vrot.slane %v7561, 7
        %v7564 = vshll.u32 %v7534, 16
        %v7566 = vor.u32 %v7563, %v7564
        %v7568 = vshrl.u32 %v7536, 16
        %v7570 = vrot.slane %v7568, 7
        %v7571 = vshll.u32 %v7536, 16
        %v7573 = vor.u32 %v7570, %v7571
        %v7578 = vsel %vm1971, 0, %v7552
        %v7579 = vsel %vm1971, 0, %v7559
        %v7580 = vsel %vm1971, 0, %v7566
        %v7581 = vsel %vm1971, 0, %v7573
        %v7582 = vsel %vm7192, %v7578, 0
        %v7583 = vsel %vm7192, %v7579, 0
        %v7584 = vsel %vm7192, %v7580, 0
        %v7585 = vsel %vm7192, %v7581, 0
        %v7587 = vshrl.u32 %v7582, 16
        %v7589 = vshll.u32 %v7582, 16
        %v7591 = vrot.slane %v7589, 1
        %v7592 = vor.u32 %v7587, %v7591
        %v7594 = vshrl.u32 %v7583, 16
        %v7596 = vshll.u32 %v7583, 16
        %v7598 = vrot.slane %v7596, 1
        %v7599 = vor.u32 %v7594, %v7598
        %v7601 = vshrl.u32 %v7584, 16
        %v7603 = vshll.u32 %v7584, 16
        %v7605 = vrot.slane %v7603, 1
        %v7606 = vor.u32 %v7601, %v7605
        %7607 = vrot.lane.b32.xlu0 %v7592, 16
        %v7608 = vpop.permute.xlu0 %7607
        %7609 = vrot.lane.b32.xlu0 %v7599, 16
        %v7610 = vpop.permute.xlu0 %7609
        %7611 = vrot.lane.b32.xlu0 %v7606, 16
        %v7612 = vpop.permute.xlu0 %7611
        %v7616 = vrot.slane %v7582, 1
        %v7617 = vrot.slane %v7583, 1
        %v7618 = vrot.slane %v7584, 1
        %7619 = vrot.lane.b32.xlu0 %v7616, 32
        %v7620 = vpop.permute.xlu0 %7619
        %7621 = vrot.lane.b32.xlu0 %v7617, 32
        %v7622 = vpop.permute.xlu0 %7621
        %7623 = vrot.lane.b32.xlu0 %v7618, 32
        %v7624 = vpop.permute.xlu0 %7623
        %7626 = vrot.lane.b32.xlu0 %v7582, 48
        %v7627 = vpop.permute.xlu0 %7626
        %7628 = vrot.lane.b32.xlu0 %v7583, 48
        %v7629 = vpop.permute.xlu0 %7628
        %7630 = vrot.lane.b32.xlu0 %v7584, 48
        %v7631 = vpop.permute.xlu0 %7630
        %7632 = vrot.lane.b32.xlu0 %v7585, 48
        %v7633 = vpop.permute.xlu0 %7632
        %v7635 = vshrl.u32 %v7585, 16
        %v7637 = vshll.u32 %v7585, 16
        %v7639 = vrot.slane %v7637, 1
        %v7640 = vor.u32 %v7635, %v7639
        %7641 = vrot.lane.b32.xlu0 %v7592, 64
        %v7642 = vpop.permute.xlu0 %7641
        %7643 = vrot.lane.b32.xlu0 %v7599, 64
        %v7644 = vpop.permute.xlu0 %7643
        %7645 = vrot.lane.b32.xlu0 %v7606, 64
        %v7646 = vpop.permute.xlu0 %7645
        %7647 = vrot.lane.b32.xlu0 %v7640, 64
        %v7648 = vpop.permute.xlu0 %7647
        %v7649 = vrot.slane %v7585, 1
        %7650 = vrot.lane.b32.xlu0 %v7616, 80
        %v7651 = vpop.permute.xlu0 %7650
        %7652 = vrot.lane.b32.xlu0 %v7617, 80
        %v7653 = vpop.permute.xlu0 %7652
        %7654 = vrot.lane.b32.xlu0 %v7618, 80
        %v7655 = vpop.permute.xlu0 %7654
        %7656 = vrot.lane.b32.xlu0 %v7649, 80
        %v7657 = vpop.permute.xlu0 %7656
        %7658 = vrot.lane.b32.xlu0 %v7583, 96
        %v7659 = vpop.permute.xlu0 %7658
        %7660 = vrot.lane.b32.xlu0 %v7584, 96
        %v7661 = vpop.permute.xlu0 %7660
        %7662 = vrot.lane.b32.xlu0 %v7585, 96
        %v7663 = vpop.permute.xlu0 %7662
        %7664 = vrot.lane.b32.xlu0 %v7599, 112
        %v7665 = vpop.permute.xlu0 %7664
        %7666 = vrot.lane.b32.xlu0 %v7606, 112
        %v7667 = vpop.permute.xlu0 %7666
        %7668 = vrot.lane.b32.xlu0 %v7640, 112
        %v7669 = vpop.permute.xlu0 %7668
        %v7671 = vsel %vm2586, %v7582, %v7608
        %v7673 = vsel %vm2586, %v7583, %v7610
        %v7675 = vsel %vm2586, %v7584, %v7612
        %v7677 = vsel %vm1558, %v7671, %v7620
        %v7679 = vsel %vm1558, %v7673, %v7622
        %v7681 = vsel %vm1558, %v7675, %v7624
        %v7683 = vsel %vm2717, %v7308, %v7627
        %v7685 = vsel %vm2717, %v7677, %v7629
        %v7687 = vsel %vm2717, %v7679, %v7631
        %v7689 = vsel %vm2717, %v7681, %v7633
        %v7691 = vsel %vm2783, %v7683, %v7642
        %v7693 = vsel %vm2783, %v7685, %v7644
        %v7695 = vsel %vm2783, %v7687, %v7646
        %v7697 = vsel %vm2783, %v7689, %v7648
        %v7699 = vsel %vm5548, %v7691, %v7651
        %v7701 = vsel %vm5548, %v7693, %v7653
        %v7703 = vsel %vm5548, %v7695, %v7655
        %v7705 = vsel %vm5548, %v7697, %v7657
        %v7707 = vsel %vm5565, %v7699, %v7659
        %v7709 = vsel %vm5565, %v7701, %v7661
        %v7711 = vsel %vm5565, %v7703, %v7663
        %v7712 = vsel %vm5565, %v7705, %v7290
        %v7714 = vsel %vm5582, %v7707, %v7665
        %v7716 = vsel %vm5582, %v7709, %v7667
        %v7718 = vsel %vm5582, %v7711, %v7669
        %v7719 = vsel %vm5582, %v7712, %v7298
        %v7724 = vcombine.low %v7714, %v7617
        %v7726 = vunpack.c.l.s4 1983009808
        %v7727 = vunpack.c.0.s8 %v7726
        %v7728 = vlaneseq
        %v7729 = vshrl.u32 %v7728, 7
        %v7730 = vsub.s32 %v7727, %v7729
        %v7731 = vrot.slane %v7724, %v7730
        %v7732 = vcombine.low %v7716, %v7618
        %v7734 = vunpack.c.l.s4 1983009808
        %v7735 = vunpack.c.0.s8 %v7734
        %v7736 = vlaneseq
        %v7737 = vshrl.u32 %v7736, 7
        %v7738 = vsub.s32 %v7735, %v7737
        %v7739 = vrot.slane %v7732, %v7738
        %v7740 = vcombine.low %v7718, %v7649
        %v7742 = vunpack.c.l.s4 1983009808
        %v7743 = vunpack.c.0.s8 %v7742
        %v7744 = vlaneseq
        %v7745 = vshrl.u32 %v7744, 7
        %v7746 = vsub.s32 %v7743, %v7745
        %v7747 = vrot.slane %v7740, %v7746
        %v7748 = vcombine.low %v7719, %v7238
        %v7750 = vunpack.c.l.s4 1983009808
        %v7751 = vunpack.c.0.s8 %v7750
        %v7752 = vlaneseq
        %v7753 = vshrl.u32 %v7752, 7
        %v7754 = vsub.s32 %v7751, %v7753
        %v7755 = vrot.slane %v7748, %v7754
        %v7757 = vlaneseq
        %v7758 = vshrl.u32 %v7757, 7
        %v7759 = vsub.s32 0, %v7758
        %v7760 = vrot.slane %v1272, %v7759
        %v7762 = vcombine.low %v7731, %v7739
        %v7763 = vcombine.low %v7747, %v7755
        %v7765 = vunpack.c.l.s4 1983009808
        %v7766 = vunpack.c.0.s8 %v7765
        %v7767 = vlaneseq
        %v7768 = vshrl.u32 %v7767, 7
        %v7769 = vsub.s32 %v7766, %v7768
        %v7770 = vrot.slane %v7762, %v7769
        %v7772 = vunpack.c.l.s4 1983009808
        %v7773 = vunpack.c.0.s8 %v7772
        %v7774 = vlaneseq
        %v7775 = vshrl.u32 %v7774, 7
        %v7776 = vsub.s32 %v7773, %v7775
        %v7777 = vrot.slane %v7763, %v7776
        %v7778 = vcombine.low %v7770, %v7777
        %v7779 = vcombine.high %v7770, %v7777
        %v7799 = vunpack.c.l.b16 %v1254
        %v7800 = vunpack.c.l.b16 %v1255
        %v7801 = vunpack.c.l.b16 %v1256
        %v7802 = vunpack.c.l.b16 %v1257
        %v7803 = vunpack.c.l.b16 %v1258
        %v7804 = vunpack.c.l.b16 %v1259
        %v7805 = vunpack.c.l.b16 %v1260
        %v7806 = vunpack.c.l.b16 %v1261
        %v7807 = vunpack.c.l.b16 %v1262
        %v7808 = vunpack.c.l.b16 %v1263
        %v7809 = vunpack.c.l.b16 %v1264
        %v7810 = vunpack.c.l.b16 %v1265
        %v7811 = vunpack.c.l.b16 %v1266
        %v7812 = vunpack.c.l.b16 %v1267
        %v7813 = vunpack.c.l.b16 %v1268
        %v7814 = vunpack.c.l.b16 %v1269
        %v7815 = vunpack.c.l.b16 %v1270
        %v7816 = vunpack.c.l.b16 %v1271
        %v7817 = vpack.c.b16 %v7800, %v7799
        %v7818 = vpack.c.b16 %v7802, %v7801
        %v7819 = vpack.c.b16 %v7804, %v7803
        %v7820 = vpack.c.b16 %v7806, %v7805
        %v7821 = vpack.c.b16 %v7808, %v7807
        %v7822 = vpack.c.b16 %v7810, %v7809
        %v7823 = vpack.c.b16 %v7812, %v7811
        %v7824 = vpack.c.b16 %v7814, %v7813
        %v7825 = vpack.c.b16 %v7816, %v7815
        %v7836 = vsel %vm2586, %v7779, 0
        %7838 = vmatprep.subr.bf16.mxu0 0
        %7839 = vmatpush1.bf16.msra.mxu0 %v7824
        %7840 = vmatprep.subr.bf16.mxu0 0
        %7841 = vmatpush1.bf16.msra.mxu0 %v7823
        %7842 = vmatprep.subr.bf16.mxu0 0
        %7843 = vmatpush1.bf16.msra.mxu0 %v7822
        %7844 = vmatprep.subr.bf16.mxu0 0
        %7845 = vmatpush1.bf16.msra.mxu0 %v7821
        %7846 = vmatprep.subr.bf16.mxu0 0
        %7847 = vmatpush1.bf16.msra.mxu0 %v7820
        %7848 = vmatprep.subr.bf16.mxu0 0
        %7849 = vmatpush1.bf16.msra.mxu0 %v7819
        %7850 = vmatprep.subr.bf16.mxu0 0
        %7851 = vmatpush1.bf16.msra.mxu0 %v7818
        %7852 = vmatprep.subr.bf16.mxu0 0
        %7853 = vmatpush1.bf16.msra.mxu0 %v7817
        %7854 = vmatprep.subr.bf16.mxu0 0
        %7855 = vmatpush2.bf16.msra.mxu0 0
        %7856 = vmatprep.subr.bf16.mxu0 0
        %7857 = vmatpush2.bf16.msra.mxu0 0
        %7858 = vmatprep.subr.bf16.mxu0 0
        %7859 = vmatpush2.bf16.msra.mxu0 0
        %7860 = vmatprep.subr.bf16.mxu0 0
        %7861 = vmatpush2.bf16.msra.mxu0 0
        %7862 = vmatprep.subr.bf16.mxu0 0
        %7863 = vmatpush2.bf16.msra.mxu0 0
        %7864 = vmatprep.subr.bf16.mxu0 0
        %7865 = vmatpush2.bf16.msra.mxu0 0
        %7866 = vmatprep.subr.bf16.mxu0 0
        %7867 = vmatpush2.bf16.msra.mxu0 0
        %7868 = vmatprep.subr.bf16.mxu0 0
        %7869 = vmatpush2.bf16.msra.mxu0 %v7825
        %7870 = vmatprep.mubr.bf16.mxu0 %v7836
        %7871 = vmatmul.mubr.bf16.gmra.mxu0 %v7778
        %v7872 = vpop.f32.mrf.mxu0
        %v7873 = vadd.f32 %v7760, %v7872
        %v7874 = vpop.f32.mrf.mxu0
        %v7875 = vpop.f32.mrf.mxu0
        %v7876 = vadd.f32 %v7760, %v7875
        %v7877 = vpop.f32.mrf.mxu0
        %7878 = vdwg.mxu0
        %v7879 = vmax.f32 %v7873, 0.0
        %v7880 = vmax.f32 %v7876, 0.0
        %v7882 = vlaneseq
        %v7883 = vshrl.u32 %v7882, 7
        %v7884 = vsub.s32 0, %v7883
        %v7885 = vrot.slane %v1275, %v7884
        %v7889 = vunpack.c.l.b16 %v1273
        %v7890 = vunpack.c.l.b16 %v1274
        %v7891 = vpack.c.b16 %v7890, %v7889
        %v7894 = vsel %vm2586, %v7518, 0
        %7896 = vmatprep.subr.bf16.mxu0 0
        %7897 = vmatpush1.bf16.msra.mxu0 0
        %7898 = vmatprep.subr.bf16.mxu0 0
        %7899 = vmatpush1.bf16.msra.mxu0 0
        %7900 = vmatprep.subr.bf16.mxu0 0
        %7901 = vmatpush1.bf16.msra.mxu0 0
        %7902 = vmatprep.subr.bf16.mxu0 0
        %7903 = vmatpush1.bf16.msra.mxu0 0
        %7904 = vmatprep.subr.bf16.mxu0 0
        %7905 = vmatpush1.bf16.msra.mxu0 0
        %7906 = vmatprep.subr.bf16.mxu0 0
        %7907 = vmatpush1.bf16.msra.mxu0 0
        %7908 = vmatprep.subr.bf16.mxu0 0
        %7909 = vmatpush1.bf16.msra.mxu0 0
        %7910 = vmatprep.subr.bf16.mxu0 0
        %7911 = vmatpush1.bf16.msra.mxu0 %v7891
        %7912 = vmatprep.subr.bf16.mxu0 0
        %7913 = vmatpush2.bf16.msra.mxu0 0
        %7914 = vmatprep.subr.bf16.mxu0 0
        %7915 = vmatpush2.bf16.msra.mxu0 0
        %7916 = vmatprep.subr.bf16.mxu0 0
        %7917 = vmatpush2.bf16.msra.mxu0 0
        %7918 = vmatprep.subr.bf16.mxu0 0
        %7919 = vmatpush2.bf16.msra.mxu0 0
        %7920 = vmatprep.subr.bf16.mxu0 0
        %7921 = vmatpush2.bf16.msra.mxu0 0
        %7922 = vmatprep.subr.bf16.mxu0 0
        %7923 = vmatpush2.bf16.msra.mxu0 0
        %7924 = vmatprep.subr.bf16.mxu0 0
        %7925 = vmatpush2.bf16.msra.mxu0 0
        %7926 = vmatprep.subr.bf16.mxu0 0
        %7927 = vmatpush2.bf16.msra.mxu0 0
        %7928 = vmatprep.mubr.bf16.mxu0 0
        %7929 = vmatmul.mubr.bf16.gmra.mxu0 %v7894
        %v7930 = vpop.f32.mrf.mxu0
        %v7931 = vadd.f32 %v7885, %v7930
        %v7932 = vpop.f32.mrf.mxu0
        %v7933 = vpop.f32.mrf.mxu0
        %v7934 = vadd.f32 %v7885, %v7933
        %v7935 = vpop.f32.mrf.mxu0
        %7936 = vdwg.mxu0
        %v7937 = vpack.c.bf16 %v7880, %v7879
        %v7939 = vcombine.high %v7937, %v7937
        %v7941 = vunpack.c.l.s4 1983009808
        %v7942 = vunpack.c.0.s8 %v7941
        %v7943 = vlaneseq
        %v7944 = vshrl.u32 %v7943, 7
        %v7945 = vsub.s32 %v7942, %v7944
        %v7946 = vrot.slane %v7937, %v7945
        %v7948 = vunpack.c.l.s4 1983009808
        %v7949 = vunpack.c.0.s8 %v7948
        %v7950 = vlaneseq
        %v7951 = vshrl.u32 %v7950, 7
        %v7952 = vsub.s32 %v7949, %v7951
        %v7953 = vrot.slane %v7939, %v7952
        %v7954 = vcombine.high %v7946, %v7946
        %v7955 = vcombine.high %v7953, %v7953
        %v7957 = vrot.slane 0, 7
        %v7958 = vrot.slane %v7946, 7
        %v7959 = vrot.slane %v7954, 7
        %v7960 = vrot.slane %v7953, 7
        %v7961 = vrot.slane %v7955, 7
        %vm7962 = vcmask 1040384
        %v7964 = vsel %vm7962, 0, %v7957
        %v7966 = vsel %vm7962, 0, %v7958
        %v7968 = vsel %vm7962, 0, %v7959
        %v7970 = vsel %vm7962, 0, %v7960
        %v7972 = vsel %vm7962, 0, %v7961
        %vm7973 = vcmask 1042432
        %v7974 = vsel %vm7973, %v7964, 0
        %v7975 = vsel %vm7973, %v7966, 0
        %v7976 = vsel %vm7973, %v7968, 0
        %v7977 = vsel %vm7973, %v7970, 0
        %v7978 = vsel %vm7973, %v7972, 0
        %v7982 = vrot.slane %v7974, 1
        %v7983 = vrot.slane %v7975, 1
        %v7984 = vrot.slane %v7976, 1
        %7985 = vrot.lane.b32.xlu0 %v7982, 32
        %v7986 = vpop.permute.xlu0 %7985
        %7987 = vrot.lane.b32.xlu0 %v7983, 32
        %v7988 = vpop.permute.xlu0 %7987
        %7989 = vrot.lane.b32.xlu0 %v7984, 32
        %v7990 = vpop.permute.xlu0 %7989
        %v7991 = vrot.slane %v7974, 2
        %v7992 = vrot.slane %v7975, 2
        %v7993 = vrot.slane %v7976, 2
        %7994 = vrot.lane.b32.xlu0 %v7991, 64
        %v7995 = vpop.permute.xlu0 %7994
        %7996 = vrot.lane.b32.xlu0 %v7992, 64
        %v7997 = vpop.permute.xlu0 %7996
        %7998 = vrot.lane.b32.xlu0 %v7993, 64
        %v7999 = vpop.permute.xlu0 %7998
        %8002 = vrot.lane.b32.xlu0 %v7975, 96
        %v8003 = vpop.permute.xlu0 %8002
        %8004 = vrot.lane.b32.xlu0 %v7976, 96
        %v8005 = vpop.permute.xlu0 %8004
        %8006 = vrot.lane.b32.xlu0 %v7977, 96
        %v8007 = vpop.permute.xlu0 %8006
        %8008 = vrot.lane.b32.xlu0 %v7978, 96
        %v8009 = vpop.permute.xlu0 %8008
        %v8010 = vrot.slane %v7977, 1
        %v8011 = vrot.slane %v7978, 1
        %v8012 = vrot.slane %v7977, 2
        %v8013 = vrot.slane %v7978, 2
        %8014 = vrot.lane.b32.xlu0 %v7992, 32
        %v8015 = vpop.permute.xlu0 %8014
        %8016 = vrot.lane.b32.xlu0 %v7993, 32
        %v8017 = vpop.permute.xlu0 %8016
        %8018 = vrot.lane.b32.xlu0 %v8012, 32
        %v8019 = vpop.permute.xlu0 %8018
        %8020 = vrot.lane.b32.xlu0 %v8013, 32
        %v8021 = vpop.permute.xlu0 %8020
        %8022 = vrot.lane.b32.xlu0 %v7977, 64
        %v8023 = vpop.permute.xlu0 %8022
        %8024 = vrot.lane.b32.xlu0 %v7978, 64
        %v8025 = vpop.permute.xlu0 %8024
        %8026 = vrot.lane.b32.xlu0 %v7974, 64
        %v8027 = vpop.permute.xlu0 %8026
        %8028 = vrot.lane.b32.xlu0 %v8010, 96
        %v8029 = vpop.permute.xlu0 %8028
        %8030 = vrot.lane.b32.xlu0 %v8011, 96
        %v8031 = vpop.permute.xlu0 %8030
        %8032 = vrot.lane.b32.xlu0 %v7982, 96
        %v8033 = vpop.permute.xlu0 %8032
        %v8035 = vsel %vm1558, %v7974, %v7986
        %v8037 = vsel %vm1558, %v7975, %v7988
        %v8039 = vsel %vm1558, %v7976, %v7990
        %v8041 = vsel %vm2783, %v8035, %v7995
        %v8043 = vsel %vm2783, %v8037, %v7997
        %v8045 = vsel %vm2783, %v8039, %v7999
        %v8047 = vsel %vm5565, %v8041, %v8003
        %v8049 = vsel %vm5565, %v8041, %v8005
        %v8051 = vsel %vm5565, %v8043, %v8007
        %v8053 = vsel %vm5565, %v8045, %v8009
        %v8056 = vsel %vm1558, %v7983, %v8015
        %v8059 = vsel %vm1558, %v7984, %v8017
        %v8062 = vsel %vm1558, %v8010, %v8019
        %v8065 = vsel %vm1558, %v8011, %v8021
        %v8067 = vsel %vm2783, %v8056, %v8023
        %v8069 = vsel %vm2783, %v8059, %v8025
        %v8071 = vsel %vm2783, %v8062, %v8027
        %v8072 = vsel %vm2783, %v8065, %v8027
        %v8074 = vsel %vm5565, %v8067, %v8029
        %v8076 = vsel %vm5565, %v8069, %v8031
        %v8078 = vsel %vm5565, %v8071, %v8033
        %v8079 = vsel %vm5565, %v8072, %v8033
        %v8088 = vcombine.low %v8047, %v8074
        %v8090 = vunpack.c.l.s4 1983009808
        %v8091 = vunpack.c.0.s8 %v8090
        %v8092 = vlaneseq
        %v8093 = vshrl.u32 %v8092, 7
        %v8094 = vsub.s32 %v8091, %v8093
        %v8095 = vrot.slane %v8088, %v8094
        %v8097 = vunpack.c.l.s4 1983009808
        %v8098 = vunpack.c.0.s8 %v8097
        %v8099 = vlaneseq
        %v8100 = vshrl.u32 %v8099, 7
        %v8101 = vsub.s32 %v8098, %v8100
        %v8102 = vrot.slane %v8012, %v8101
        %v8103 = vcombine.low %v8095, %v8102
        %v8104 = vcombine.low %v8049, %v8076
        %v8106 = vunpack.c.l.s4 1983009808
        %v8107 = vunpack.c.0.s8 %v8106
        %v8108 = vlaneseq
        %v8109 = vshrl.u32 %v8108, 7
        %v8110 = vsub.s32 %v8107, %v8109
        %v8111 = vrot.slane %v8104, %v8110
        %v8113 = vunpack.c.l.s4 1983009808
        %v8114 = vunpack.c.0.s8 %v8113
        %v8115 = vlaneseq
        %v8116 = vshrl.u32 %v8115, 7
        %v8117 = vsub.s32 %v8114, %v8116
        %v8118 = vrot.slane %v8013, %v8117
        %v8119 = vcombine.low %v8111, %v8118
        %v8120 = vcombine.low %v8051, %v8078
        %v8122 = vunpack.c.l.s4 1983009808
        %v8123 = vunpack.c.0.s8 %v8122
        %v8124 = vlaneseq
        %v8125 = vshrl.u32 %v8124, 7
        %v8126 = vsub.s32 %v8123, %v8125
        %v8127 = vrot.slane %v8120, %v8126
        %v8129 = vunpack.c.l.s4 1983009808
        %v8130 = vunpack.c.0.s8 %v8129
        %v8131 = vlaneseq
        %v8132 = vshrl.u32 %v8131, 7
        %v8133 = vsub.s32 %v8130, %v8132
        %v8134 = vrot.slane %v7991, %v8133
        %v8135 = vcombine.low %v8127, %v8134
        %v8136 = vcombine.low %v8053, %v8079
        %v8138 = vunpack.c.l.s4 1983009808
        %v8139 = vunpack.c.0.s8 %v8138
        %v8140 = vlaneseq
        %v8141 = vshrl.u32 %v8140, 7
        %v8142 = vsub.s32 %v8139, %v8141
        %v8143 = vrot.slane %v8136, %v8142
        %v8144 = vcombine.low %v8143, %v8134
        %v8146 = vlaneseq
        %v8147 = vshrl.u32 %v8146, 7
        %v8148 = vsub.s32 0, %v8147
        %v8149 = vrot.slane %v1312, %v8148
        %v8151 = vcombine.low %v8103, %v8119
        %v8152 = vcombine.high %v8103, %v8119
        %v8153 = vcombine.low %v8135, %v8144
        %v8154 = vcombine.high %v8135, %v8144
        %v8156 = vunpack.c.l.s4 1983009808
        %v8157 = vunpack.c.0.s8 %v8156
        %v8158 = vlaneseq
        %v8159 = vshrl.u32 %v8158, 7
        %v8160 = vsub.s32 %v8157, %v8159
        %v8161 = vrot.slane %v8151, %v8160
        %v8163 = vunpack.c.l.s4 1983009808
        %v8164 = vunpack.c.0.s8 %v8163
        %v8165 = vlaneseq
        %v8166 = vshrl.u32 %v8165, 7
        %v8167 = vsub.s32 %v8164, %v8166
        %v8168 = vrot.slane %v8152, %v8167
        %v8170 = vunpack.c.l.s4 1983009808
        %v8171 = vunpack.c.0.s8 %v8170
        %v8172 = vlaneseq
        %v8173 = vshrl.u32 %v8172, 7
        %v8174 = vsub.s32 %v8171, %v8173
        %v8175 = vrot.slane %v8153, %v8174
        %v8177 = vunpack.c.l.s4 1983009808
        %v8178 = vunpack.c.0.s8 %v8177
        %v8179 = vlaneseq
        %v8180 = vshrl.u32 %v8179, 7
        %v8181 = vsub.s32 %v8178, %v8180
        %v8182 = vrot.slane %v8154, %v8181
        %v8183 = vcombine.low %v8161, %v8175
        %v8184 = vcombine.high %v8161, %v8175
        %v8185 = vcombine.low %v8168, %v8182
        %v8224 = vunpack.c.l.b16 %v1276
        %v8225 = vunpack.c.l.b16 %v1277
        %v8226 = vunpack.c.l.b16 %v1278
        %v8227 = vunpack.c.l.b16 %v1279
        %v8228 = vunpack.c.l.b16 %v1280
        %v8229 = vunpack.c.l.b16 %v1281
        %v8230 = vunpack.c.l.b16 %v1282
        %v8231 = vunpack.c.l.b16 %v1283
        %v8232 = vunpack.c.l.b16 %v1284
        %v8233 = vunpack.c.l.b16 %v1285
        %v8234 = vunpack.c.l.b16 %v1286
        %v8235 = vunpack.c.l.b16 %v1287
        %v8236 = vunpack.c.l.b16 %v1288
        %v8237 = vunpack.c.l.b16 %v1289
        %v8238 = vunpack.c.l.b16 %v1290
        %v8239 = vunpack.c.l.b16 %v1291
        %v8240 = vunpack.c.l.b16 %v1292
        %v8241 = vunpack.c.l.b16 %v1293
        %v8242 = vunpack.c.l.b16 %v1294
        %v8243 = vunpack.c.l.b16 %v1295
        %v8244 = vunpack.c.l.b16 %v1296
        %v8245 = vunpack.c.l.b16 %v1297
        %v8246 = vunpack.c.l.b16 %v1298
        %v8247 = vunpack.c.l.b16 %v1299
        %v8248 = vunpack.c.l.b16 %v1300
        %v8249 = vunpack.c.l.b16 %v1301
        %v8250 = vunpack.c.l.b16 %v1302
        %v8251 = vunpack.c.l.b16 %v1303
        %v8252 = vunpack.c.l.b16 %v1304
        %v8253 = vunpack.c.l.b16 %v1305
        %v8254 = vunpack.c.l.b16 %v1306
        %v8255 = vunpack.c.l.b16 %v1307
        %v8256 = vunpack.c.l.b16 %v1308
        %v8257 = vunpack.c.l.b16 %v1309
        %v8258 = vunpack.c.l.b16 %v1310
        %v8259 = vunpack.c.l.b16 %v1311
        %v8260 = vpack.c.b16 %v8225, %v8224
        %v8261 = vpack.c.b16 %v8227, %v8226
        %v8262 = vpack.c.b16 %v8229, %v8228
        %v8263 = vpack.c.b16 %v8231, %v8230
        %v8264 = vpack.c.b16 %v8233, %v8232
        %v8265 = vpack.c.b16 %v8235, %v8234
        %v8266 = vpack.c.b16 %v8237, %v8236
        %v8267 = vpack.c.b16 %v8239, %v8238
        %v8268 = vpack.c.b16 %v8241, %v8240
        %v8269 = vpack.c.b16 %v8243, %v8242
        %v8270 = vpack.c.b16 %v8245, %v8244
        %v8271 = vpack.c.b16 %v8247, %v8246
        %v8272 = vpack.c.b16 %v8249, %v8248
        %v8273 = vpack.c.b16 %v8251, %v8250
        %v8274 = vpack.c.b16 %v8253, %v8252
        %v8275 = vpack.c.b16 %v8255, %v8254
        %v8276 = vpack.c.b16 %v8257, %v8256
        %v8277 = vpack.c.b16 %v8259, %v8258
        %v8297 = vsel %vm1558, %v8185, 0
        %8299 = vmatprep.subr.bf16.mxu0 0
        %8300 = vmatpush1.bf16.msra.mxu0 %v8267
        %8301 = vmatprep.subr.bf16.mxu0 0
        %8302 = vmatpush1.bf16.msra.mxu0 %v8266
        %8303 = vmatprep.subr.bf16.mxu0 0
        %8304 = vmatpush1.bf16.msra.mxu0 %v8265
        %8305 = vmatprep.subr.bf16.mxu0 0
        %8306 = vmatpush1.bf16.msra.mxu0 %v8264
        %8307 = vmatprep.subr.bf16.mxu0 0
        %8308 = vmatpush1.bf16.msra.mxu0 %v8263
        %8309 = vmatprep.subr.bf16.mxu0 0
        %8310 = vmatpush1.bf16.msra.mxu0 %v8262
        %8311 = vmatprep.subr.bf16.mxu0 0
        %8312 = vmatpush1.bf16.msra.mxu0 %v8261
        %8313 = vmatprep.subr.bf16.mxu0 0
        %8314 = vmatpush1.bf16.msra.mxu0 %v8260
        %8315 = vmatprep.subr.bf16.mxu0 0
        %8316 = vmatpush2.bf16.msra.mxu0 %v8275
        %8317 = vmatprep.subr.bf16.mxu0 0
        %8318 = vmatpush2.bf16.msra.mxu0 %v8274
        %8319 = vmatprep.subr.bf16.mxu0 0
        %8320 = vmatpush2.bf16.msra.mxu0 %v8273
        %8321 = vmatprep.subr.bf16.mxu0 0
        %8322 = vmatpush2.bf16.msra.mxu0 %v8272
        %8323 = vmatprep.subr.bf16.mxu0 0
        %8324 = vmatpush2.bf16.msra.mxu0 %v8271
        %8325 = vmatprep.subr.bf16.mxu0 0
        %8326 = vmatpush2.bf16.msra.mxu0 %v8270
        %8327 = vmatprep.subr.bf16.mxu0 0
        %8328 = vmatpush2.bf16.msra.mxu0 %v8269
        %8329 = vmatprep.subr.bf16.mxu0 0
        %8330 = vmatpush2.bf16.msra.mxu0 %v8268
        %8331 = vmatprep.mubr.bf16.mxu0 %v8184
        %8332 = vmatmul.mubr.bf16.gmra.mxu0 %v8183
        %v8333 = vpop.f32.mrf.mxu0
        %v8334 = vadd.f32 %v8149, %v8333
        %v8335 = vpop.f32.mrf.mxu0
        %v8336 = vpop.f32.mrf.mxu0
        %v8337 = vadd.f32 %v8149, %v8336
        %v8338 = vpop.f32.mrf.mxu0
        %8339 = vdwg.mxu0
        %8340 = vmatprep.subr.bf16.mxu0 0
        %8341 = vmatpush1.bf16.msra.mxu0 0
        %8342 = vmatprep.subr.bf16.mxu0 0
        %8343 = vmatpush1.bf16.msra.mxu0 0
        %8344 = vmatprep.subr.bf16.mxu0 0
        %8345 = vmatpush1.bf16.msra.mxu0 0
        %8346 = vmatprep.subr.bf16.mxu0 0
        %8347 = vmatpush1.bf16.msra.mxu0 0
        %8348 = vmatprep.subr.bf16.mxu0 0
        %8349 = vmatpush1.bf16.msra.mxu0 0
        %8350 = vmatprep.subr.bf16.mxu0 0
        %8351 = vmatpush1.bf16.msra.mxu0 0
        %8352 = vmatprep.subr.bf16.mxu0 0
        %8353 = vmatpush1.bf16.msra.mxu0 %v8277
        %8354 = vmatprep.subr.bf16.mxu0 0
        %8355 = vmatpush1.bf16.msra.mxu0 %v8276
        %8356 = vmatprep.subr.bf16.mxu0 0
        %8357 = vmatpush2.bf16.msra.mxu0 0
        %8358 = vmatprep.subr.bf16.mxu0 0
        %8359 = vmatpush2.bf16.msra.mxu0 0
        %8360 = vmatprep.subr.bf16.mxu0 0
        %8361 = vmatpush2.bf16.msra.mxu0 0
        %8362 = vmatprep.subr.bf16.mxu0 0
        %8363 = vmatpush2.bf16.msra.mxu0 0
        %8364 = vmatprep.subr.bf16.mxu0 0
        %8365 = vmatpush2.bf16.msra.mxu0 0
        %8366 = vmatprep.subr.bf16.mxu0 0
        %8367 = vmatpush2.bf16.msra.mxu0 0
        %8368 = vmatprep.subr.bf16.mxu0 0
        %8369 = vmatpush2.bf16.msra.mxu0 0
        %8370 = vmatprep.subr.bf16.mxu0 0
        %8371 = vmatpush2.bf16.msra.mxu0 0
        %8372 = vmatprep.mubr.bf16.mxu0 0
        %8373 = vmatmul.mubr.bf16.gmra.mxu0 %v8297
        %v8374 = vpop.f32.mrf.mxu0
        %v8375 = vadd.f32 %v8334, %v8374
        %v8376 = vpop.f32.mrf.mxu0
        %v8377 = vpop.f32.mrf.mxu0
        %v8378 = vadd.f32 %v8337, %v8377
        %v8379 = vpop.f32.mrf.mxu0
        %8380 = vdwg.mxu0
        %v8381 = vadd.f32 %v8375, %v7931
        %v8382 = vadd.f32 %v8378, %v7934
        %v8383 = vmax.f32 %v8381, 0.0
        %v8384 = vmax.f32 %v8382, 0.0
        %v8385 = vpack.c.bf16 %v8384, %v8383
        %v8387 = vcombine.high %v8385, %v8385
        %v8389 = vunpack.c.l.s4 1983009808
        %v8390 = vunpack.c.0.s8 %v8389
        %v8391 = vlaneseq
        %v8392 = vshrl.u32 %v8391, 7
        %v8393 = vsub.s32 %v8390, %v8392
        %v8394 = vrot.slane %v8385, %v8393
        %v8396 = vunpack.c.l.s4 1983009808
        %v8397 = vunpack.c.0.s8 %v8396
        %v8398 = vlaneseq
        %v8399 = vshrl.u32 %v8398, 7
        %v8400 = vsub.s32 %v8397, %v8399
        %v8401 = vrot.slane %v8387, %v8400
        %v8402 = vcombine.high %v8394, %v8394
        %v8403 = vcombine.high %v8401, %v8401
        %vm8408 = vcmask 254976
        %8409 = vst.msk [vmem:[%s1147] sm:$0x3] %vm8408, %v8394
        %8410 = vst.msk [vmem:[%s1147 + $0x2] sm:$0x3] %vm8408, %v8402
        %8411 = vst.msk [vmem:[%s1147 + $0x4] sm:$0x3] %vm8408, %v8401
        %8412 = vst.msk [vmem:[%s1147 + $0x6] sm:$0x3] %vm8408, %v8403
        %v8413 = vrot.slane %v8394, 7
        %v8414 = vrot.slane %v8402, 7
        %v8415 = vrot.slane %v8401, 7
        %v8416 = vrot.slane %v8403, 7
        %v8418 = vsel %vm7962, 0, %v8413
        %v8420 = vsel %vm7962, 0, %v8414
        %v8422 = vsel %vm7962, 0, %v8415
        %v8424 = vsel %vm7962, 0, %v8416
        %v8425 = vsel %vm7973, %v8418, 0
        %v8426 = vsel %vm7973, %v8420, 0
        %v8427 = vsel %vm7973, %v8422, 0
        %v8428 = vsel %vm7973, %v8424, 0
        %v8431 = vrot.slane %v8425, 1
        %v8432 = vrot.slane %v8426, 1
        %8433 = vrot.lane.b32.xlu0 %v8431, 32
        %v8434 = vpop.permute.xlu0 %8433
        %8435 = vrot.lane.b32.xlu0 %v8432, 32
        %v8436 = vpop.permute.xlu0 %8435
        %v8437 = vrot.slane %v8425, 2
        %v8438 = vrot.slane %v8426, 2
        %8439 = vrot.lane.b32.xlu0 %v8437, 64
        %v8440 = vpop.permute.xlu0 %8439
        %8441 = vrot.lane.b32.xlu0 %v8438, 64
        %v8442 = vpop.permute.xlu0 %8441
        %8445 = vrot.lane.b32.xlu0 %v8425, 96
        %v8446 = vpop.permute.xlu0 %8445
        %8447 = vrot.lane.b32.xlu0 %v8426, 96
        %v8448 = vpop.permute.xlu0 %8447
        %8449 = vrot.lane.b32.xlu0 %v8427, 96
        %v8450 = vpop.permute.xlu0 %8449
        %8451 = vrot.lane.b32.xlu0 %v8428, 96
        %v8452 = vpop.permute.xlu0 %8451
        %v8453 = vrot.slane %v8427, 1
        %v8454 = vrot.slane %v8428, 1
        %v8455 = vrot.slane %v8427, 2
        %v8456 = vrot.slane %v8428, 2
        %8457 = vrot.lane.b32.xlu0 %v8437, 32
        %v8458 = vpop.permute.xlu0 %8457
        %8459 = vrot.lane.b32.xlu0 %v8438, 32
        %v8460 = vpop.permute.xlu0 %8459
        %8461 = vrot.lane.b32.xlu0 %v8455, 32
        %v8462 = vpop.permute.xlu0 %8461
        %8463 = vrot.lane.b32.xlu0 %v8456, 32
        %v8464 = vpop.permute.xlu0 %8463
        %8465 = vrot.lane.b32.xlu0 %v8427, 64
        %v8466 = vpop.permute.xlu0 %8465
        %8467 = vrot.lane.b32.xlu0 %v8428, 64
        %v8468 = vpop.permute.xlu0 %8467
        %8469 = vrot.lane.b32.xlu0 %v8453, 96
        %v8470 = vpop.permute.xlu0 %8469
        %8471 = vrot.lane.b32.xlu0 %v8454, 96
        %v8472 = vpop.permute.xlu0 %8471
        %v8474 = vsel %vm1558, %v8425, %v8434
        %v8476 = vsel %vm1558, %v8426, %v8436
        %v8478 = vsel %vm2783, %v8474, %v8440
        %v8480 = vsel %vm2783, %v8476, %v8442
        %v8482 = vsel %vm5565, %v8041, %v8446
        %v8484 = vsel %vm5565, %v8041, %v8448
        %v8486 = vsel %vm5565, %v8478, %v8450
        %v8488 = vsel %vm5565, %v8480, %v8452
        %v8491 = vsel %vm1558, %v8431, %v8458
        %v8494 = vsel %vm1558, %v8432, %v8460
        %v8497 = vsel %vm1558, %v8453, %v8462
        %v8500 = vsel %vm1558, %v8454, %v8464
        %v8502 = vsel %vm2783, %v8491, %v8466
        %v8504 = vsel %vm2783, %v8494, %v8468
        %v8505 = vsel %vm2783, %v8497, %v8027
        %v8506 = vsel %vm2783, %v8500, %v8027
        %v8508 = vsel %vm5565, %v8502, %v8470
        %v8510 = vsel %vm5565, %v8504, %v8472
        %v8511 = vsel %vm5565, %v8505, %v8033
        %v8512 = vsel %vm5565, %v8506, %v8033
        %v8521 = vcombine.low %v8482, %v8508
        %v8523 = vunpack.c.l.s4 1983009808
        %v8524 = vunpack.c.0.s8 %v8523
        %v8525 = vlaneseq
        %v8526 = vshrl.u32 %v8525, 7
        %v8527 = vsub.s32 %v8524, %v8526
        %v8528 = vrot.slane %v8521, %v8527
        %v8530 = vunpack.c.l.s4 1983009808
        %v8531 = vunpack.c.0.s8 %v8530
        %v8532 = vlaneseq
        %v8533 = vshrl.u32 %v8532, 7
        %v8534 = vsub.s32 %v8531, %v8533
        %v8535 = vrot.slane %v8455, %v8534
        %v8536 = vcombine.low %v8528, %v8535
        %v8537 = vcombine.low %v8484, %v8510
        %v8539 = vunpack.c.l.s4 1983009808
        %v8540 = vunpack.c.0.s8 %v8539
        %v8541 = vlaneseq
        %v8542 = vshrl.u32 %v8541, 7
        %v8543 = vsub.s32 %v8540, %v8542
        %v8544 = vrot.slane %v8537, %v8543
        %v8546 = vunpack.c.l.s4 1983009808
        %v8547 = vunpack.c.0.s8 %v8546
        %v8548 = vlaneseq
        %v8549 = vshrl.u32 %v8548, 7
        %v8550 = vsub.s32 %v8547, %v8549
        %v8551 = vrot.slane %v8456, %v8550
        %v8552 = vcombine.low %v8544, %v8551
        %v8553 = vcombine.low %v8486, %v8511
        %v8555 = vunpack.c.l.s4 1983009808
        %v8556 = vunpack.c.0.s8 %v8555
        %v8557 = vlaneseq
        %v8558 = vshrl.u32 %v8557, 7
        %v8559 = vsub.s32 %v8556, %v8558
        %v8560 = vrot.slane %v8553, %v8559
        %v8561 = vcombine.low %v8560, %v8134
        %v8562 = vcombine.low %v8488, %v8512
        %v8564 = vunpack.c.l.s4 1983009808
        %v8565 = vunpack.c.0.s8 %v8564
        %v8566 = vlaneseq
        %v8567 = vshrl.u32 %v8566, 7
        %v8568 = vsub.s32 %v8565, %v8567
        %v8569 = vrot.slane %v8562, %v8568
        %v8570 = vcombine.low %v8569, %v8134
        %v8572 = vlaneseq
        %v8573 = vshrl.u32 %v8572, 7
        %v8574 = vsub.s32 0, %v8573
        %v8575 = vrot.slane %v1349, %v8574
        %v8577 = vcombine.low %v8536, %v8552
        %v8578 = vcombine.high %v8536, %v8552
        %v8579 = vcombine.low %v8561, %v8570
        %v8580 = vcombine.high %v8561, %v8570
        %v8582 = vunpack.c.l.s4 1983009808
        %v8583 = vunpack.c.0.s8 %v8582
        %v8584 = vlaneseq
        %v8585 = vshrl.u32 %v8584, 7
        %v8586 = vsub.s32 %v8583, %v8585
        %v8587 = vrot.slane %v8577, %v8586
        %v8589 = vunpack.c.l.s4 1983009808
        %v8590 = vunpack.c.0.s8 %v8589
        %v8591 = vlaneseq
        %v8592 = vshrl.u32 %v8591, 7
        %v8593 = vsub.s32 %v8590, %v8592
        %v8594 = vrot.slane %v8578, %v8593
        %v8596 = vunpack.c.l.s4 1983009808
        %v8597 = vunpack.c.0.s8 %v8596
        %v8598 = vlaneseq
        %v8599 = vshrl.u32 %v8598, 7
        %v8600 = vsub.s32 %v8597, %v8599
        %v8601 = vrot.slane %v8579, %v8600
        %v8603 = vunpack.c.l.s4 1983009808
        %v8604 = vunpack.c.0.s8 %v8603
        %v8605 = vlaneseq
        %v8606 = vshrl.u32 %v8605, 7
        %v8607 = vsub.s32 %v8604, %v8606
        %v8608 = vrot.slane %v8580, %v8607
        %v8609 = vcombine.low %v8587, %v8601
        %v8610 = vcombine.high %v8587, %v8601
        %v8611 = vcombine.low %v8594, %v8608
        %v8650 = vunpack.c.l.b16 %v1313
        %v8651 = vunpack.c.l.b16 %v1314
        %v8652 = vunpack.c.l.b16 %v1315
        %v8653 = vunpack.c.l.b16 %v1316
        %v8654 = vunpack.c.l.b16 %v1317
        %v8655 = vunpack.c.l.b16 %v1318
        %v8656 = vunpack.c.l.b16 %v1319
        %v8657 = vunpack.c.l.b16 %v1320
        %v8658 = vunpack.c.l.b16 %v1321
        %v8659 = vunpack.c.l.b16 %v1322
        %v8660 = vunpack.c.l.b16 %v1323
        %v8661 = vunpack.c.l.b16 %v1324
        %v8662 = vunpack.c.l.b16 %v1325
        %v8663 = vunpack.c.l.b16 %v1326
        %v8664 = vunpack.c.l.b16 %v1327
        %v8665 = vunpack.c.l.b16 %v1328
        %v8666 = vunpack.c.l.b16 %v1329
        %v8667 = vunpack.c.l.b16 %v1330
        %v8668 = vunpack.c.l.b16 %v1331
        %v8669 = vunpack.c.l.b16 %v1332
        %v8670 = vunpack.c.l.b16 %v1333
        %v8671 = vunpack.c.l.b16 %v1334
        %v8672 = vunpack.c.l.b16 %v1335
        %v8673 = vunpack.c.l.b16 %v1336
        %v8674 = vunpack.c.l.b16 %v1337
        %v8675 = vunpack.c.l.b16 %v1338
        %v8676 = vunpack.c.l.b16 %v1339
        %v8677 = vunpack.c.l.b16 %v1340
        %v8678 = vunpack.c.l.b16 %v1341
        %v8679 = vunpack.c.l.b16 %v1342
        %v8680 = vunpack.c.l.b16 %v1343
        %v8681 = vunpack.c.l.b16 %v1344
        %v8682 = vunpack.c.l.b16 %v1345
        %v8683 = vunpack.c.l.b16 %v1346
        %v8684 = vunpack.c.l.b16 %v1347
        %v8685 = vunpack.c.l.b16 %v1348
        %v8686 = vpack.c.b16 %v8651, %v8650
        %v8687 = vpack.c.b16 %v8653, %v8652
        %v8688 = vpack.c.b16 %v8655, %v8654
        %v8689 = vpack.c.b16 %v8657, %v8656
        %v8690 = vpack.c.b16 %v8659, %v8658
        %v8691 = vpack.c.b16 %v8661, %v8660
        %v8692 = vpack.c.b16 %v8663, %v8662
        %v8693 = vpack.c.b16 %v8665, %v8664
        %v8694 = vpack.c.b16 %v8667, %v8666
        %v8695 = vpack.c.b16 %v8669, %v8668
        %v8696 = vpack.c.b16 %v8671, %v8670
        %v8697 = vpack.c.b16 %v8673, %v8672
        %v8698 = vpack.c.b16 %v8675, %v8674
        %v8699 = vpack.c.b16 %v8677, %v8676
        %v8700 = vpack.c.b16 %v8679, %v8678
        %v8701 = vpack.c.b16 %v8681, %v8680
        %v8702 = vpack.c.b16 %v8683, %v8682
        %v8703 = vpack.c.b16 %v8685, %v8684
        %v8723 = vsel %vm1558, %v8611, 0
        %8725 = vmatprep.subr.bf16.mxu0 0
        %8726 = vmatpush1.bf16.msra.mxu0 %v8693
        %8727 = vmatprep.subr.bf16.mxu0 0
        %8728 = vmatpush1.bf16.msra.mxu0 %v8692
        %8729 = vmatprep.subr.bf16.mxu0 0
        %8730 = vmatpush1.bf16.msra.mxu0 %v8691
        %8731 = vmatprep.subr.bf16.mxu0 0
        %8732 = vmatpush1.bf16.msra.mxu0 %v8690
        %8733 = vmatprep.subr.bf16.mxu0 0
        %8734 = vmatpush1.bf16.msra.mxu0 %v8689
        %8735 = vmatprep.subr.bf16.mxu0 0
        %8736 = vmatpush1.bf16.msra.mxu0 %v8688
        %8737 = vmatprep.subr.bf16.mxu0 0
        %8738 = vmatpush1.bf16.msra.mxu0 %v8687
        %8739 = vmatprep.subr.bf16.mxu0 0
        %8740 = vmatpush1.bf16.msra.mxu0 %v8686
        %8741 = vmatprep.subr.bf16.mxu0 0
        %8742 = vmatpush2.bf16.msra.mxu0 %v8701
        %8743 = vmatprep.subr.bf16.mxu0 0
        %8744 = vmatpush2.bf16.msra.mxu0 %v8700
        %8745 = vmatprep.subr.bf16.mxu0 0
        %8746 = vmatpush2.bf16.msra.mxu0 %v8699
        %8747 = vmatprep.subr.bf16.mxu0 0
        %8748 = vmatpush2.bf16.msra.mxu0 %v8698
        %8749 = vmatprep.subr.bf16.mxu0 0
        %8750 = vmatpush2.bf16.msra.mxu0 %v8697
        %8751 = vmatprep.subr.bf16.mxu0 0
        %8752 = vmatpush2.bf16.msra.mxu0 %v8696
        %8753 = vmatprep.subr.bf16.mxu0 0
        %8754 = vmatpush2.bf16.msra.mxu0 %v8695
        %8755 = vmatprep.subr.bf16.mxu0 0
        %8756 = vmatpush2.bf16.msra.mxu0 %v8694
        %8757 = vmatprep.mubr.bf16.mxu0 %v8610
        %8758 = vmatmul.mubr.bf16.gmra.mxu0 %v8609
        %v8759 = vpop.f32.mrf.mxu0
        %v8760 = vadd.f32 %v8575, %v8759
        %v8761 = vpop.f32.mrf.mxu0
        %v8762 = vpop.f32.mrf.mxu0
        %v8763 = vadd.f32 %v8575, %v8762
        %v8764 = vpop.f32.mrf.mxu0
        %8765 = vdwg.mxu0
        %8766 = vmatprep.subr.bf16.mxu0 0
        %8767 = vmatpush1.bf16.msra.mxu0 0
        %8768 = vmatprep.subr.bf16.mxu0 0
        %8769 = vmatpush1.bf16.msra.mxu0 0
        %8770 = vmatprep.subr.bf16.mxu0 0
        %8771 = vmatpush1.bf16.msra.mxu0 0
        %8772 = vmatprep.subr.bf16.mxu0 0
        %8773 = vmatpush1.bf16.msra.mxu0 0
        %8774 = vmatprep.subr.bf16.mxu0 0
        %8775 = vmatpush1.bf16.msra.mxu0 0
        %8776 = vmatprep.subr.bf16.mxu0 0
        %8777 = vmatpush1.bf16.msra.mxu0 0
        %8778 = vmatprep.subr.bf16.mxu0 0
        %8779 = vmatpush1.bf16.msra.mxu0 %v8703
        %8780 = vmatprep.subr.bf16.mxu0 0
        %8781 = vmatpush1.bf16.msra.mxu0 %v8702
        %8782 = vmatprep.subr.bf16.mxu0 0
        %8783 = vmatpush2.bf16.msra.mxu0 0
        %8784 = vmatprep.subr.bf16.mxu0 0
        %8785 = vmatpush2.bf16.msra.mxu0 0
        %8786 = vmatprep.subr.bf16.mxu0 0
        %8787 = vmatpush2.bf16.msra.mxu0 0
        %8788 = vmatprep.subr.bf16.mxu0 0
        %8789 = vmatpush2.bf16.msra.mxu0 0
        %8790 = vmatprep.subr.bf16.mxu0 0
        %8791 = vmatpush2.bf16.msra.mxu0 0
        %8792 = vmatprep.subr.bf16.mxu0 0
        %8793 = vmatpush2.bf16.msra.mxu0 0
        %8794 = vmatprep.subr.bf16.mxu0 0
        %8795 = vmatpush2.bf16.msra.mxu0 0
        %8796 = vmatprep.subr.bf16.mxu0 0
        %8797 = vmatpush2.bf16.msra.mxu0 0
        %8798 = vmatprep.mubr.bf16.mxu0 0
        %8799 = vmatmul.mubr.bf16.gmra.mxu0 %v8723
        %v8800 = vpop.f32.mrf.mxu0
        %v8801 = vadd.f32 %v8760, %v8800
        %v8802 = vpop.f32.mrf.mxu0
        %v8803 = vpop.f32.mrf.mxu0
        %v8804 = vadd.f32 %v8763, %v8803
        %v8805 = vpop.f32.mrf.mxu0
        %8806 = vdwg.mxu0
        %v8807 = vmax.f32 %v8801, 0.0
        %v8808 = vmax.f32 %v8804, 0.0
        %v8810 = vlaneseq
        %v8811 = vshrl.u32 %v8810, 7
        %v8812 = vsub.s32 0, %v8811
        %v8813 = vrot.slane %v1354, %v8812
        %v8819 = vunpack.c.l.b16 %v1350
        %v8820 = vunpack.c.l.b16 %v1351
        %v8821 = vunpack.c.l.b16 %v1352
        %v8822 = vunpack.c.l.b16 %v1353
        %v8823 = vpack.c.b16 %v8820, %v8819
        %v8824 = vpack.c.b16 %v8822, %v8821
        %v8828 = vsel %vm1558, %v8385, 0
        %8830 = vmatprep.subr.bf16.mxu0 0
        %8831 = vmatpush1.bf16.msra.mxu0 0
        %8832 = vmatprep.subr.bf16.mxu0 0
        %8833 = vmatpush1.bf16.msra.mxu0 0
        %8834 = vmatprep.subr.bf16.mxu0 0
        %8835 = vmatpush1.bf16.msra.mxu0 0
        %8836 = vmatprep.subr.bf16.mxu0 0
        %8837 = vmatpush1.bf16.msra.mxu0 0
        %8838 = vmatprep.subr.bf16.mxu0 0
        %8839 = vmatpush1.bf16.msra.mxu0 0
        %8840 = vmatprep.subr.bf16.mxu0 0
        %8841 = vmatpush1.bf16.msra.mxu0 0
        %8842 = vmatprep.subr.bf16.mxu0 0
        %8843 = vmatpush1.bf16.msra.mxu0 %v8824
        %8844 = vmatprep.subr.bf16.mxu0 0
        %8845 = vmatpush1.bf16.msra.mxu0 %v8823
        %8846 = vmatprep.subr.bf16.mxu0 0
        %8847 = vmatpush2.bf16.msra.mxu0 0
        %8848 = vmatprep.subr.bf16.mxu0 0
        %8849 = vmatpush2.bf16.msra.mxu0 0
        %8850 = vmatprep.subr.bf16.mxu0 0
        %8851 = vmatpush2.bf16.msra.mxu0 0
        %8852 = vmatprep.subr.bf16.mxu0 0
        %8853 = vmatpush2.bf16.msra.mxu0 0
        %8854 = vmatprep.subr.bf16.mxu0 0
        %8855 = vmatpush2.bf16.msra.mxu0 0
        %8856 = vmatprep.subr.bf16.mxu0 0
        %8857 = vmatpush2.bf16.msra.mxu0 0
        %8858 = vmatprep.subr.bf16.mxu0 0
        %8859 = vmatpush2.bf16.msra.mxu0 0
        %8860 = vmatprep.subr.bf16.mxu0 0
        %8861 = vmatpush2.bf16.msra.mxu0 0
        %8862 = vmatprep.mubr.bf16.mxu0 0
        %8863 = vmatmul.mubr.bf16.gmra.mxu0 %v8828
        %v8864 = vpop.f32.mrf.mxu0
        %v8865 = vadd.f32 %v8813, %v8864
        %v8866 = vpop.f32.mrf.mxu0
        %v8867 = vpop.f32.mrf.mxu0
        %v8868 = vadd.f32 %v8813, %v8867
        %v8869 = vpop.f32.mrf.mxu0
        %8870 = vdwg.mxu0
        %v8871 = vpack.c.bf16 %v8808, %v8807
        %v8873 = vcombine.high %v8871, %v8871
        %v8875 = vunpack.c.l.s4 1983009808
        %v8876 = vunpack.c.0.s8 %v8875
        %v8877 = vlaneseq
        %v8878 = vshrl.u32 %v8877, 7
        %v8879 = vsub.s32 %v8876, %v8878
        %v8880 = vrot.slane %v8871, %v8879
        %v8882 = vunpack.c.l.s4 1983009808
        %v8883 = vunpack.c.0.s8 %v8882
        %v8884 = vlaneseq
        %v8885 = vshrl.u32 %v8884, 7
        %v8886 = vsub.s32 %v8883, %v8885
        %v8887 = vrot.slane %v8873, %v8886
        %v8888 = vcombine.high %v8880, %v8880
        %v8889 = vcombine.high %v8887, %v8887
        %v8890 = vrot.slane 0, 6
        %v8891 = vrot.slane %v8880, 6
        %v8892 = vrot.slane %v8888, 6
        %v8893 = vrot.slane %v8887, 6
        %v8894 = vrot.slane %v8889, 6
        %vm8895 = vcmask 1041408
        %v8897 = vsel %vm8895, 0, %v8890
        %v8899 = vsel %vm8895, 0, %v8891
        %v8901 = vsel %vm8895, 0, %v8892
        %v8903 = vsel %vm8895, 0, %v8893
        %v8905 = vsel %vm8895, 0, %v8894
        %v8906 = vsel %vm2882, %v8897, 0
        %v8907 = vsel %vm2882, %v8899, 0
        %v8908 = vsel %vm2882, %v8901, 0
        %v8909 = vsel %vm2882, %v8903, 0
        %v8910 = vsel %vm2882, %v8905, 0
        %v8912 = vrot.slane %v8906, 2
        %8913 = vrot.lane.b32.xlu0 %v8912, 64
        %v8914 = vpop.permute.xlu0 %8913
        %v8915 = vrot.slane %v8906, 4
        %8920 = vrot.lane.b32.xlu0 %v8907, 64
        %v8921 = vpop.permute.xlu0 %8920
        %8922 = vrot.lane.b32.xlu0 %v8908, 64
        %v8923 = vpop.permute.xlu0 %8922
        %8924 = vrot.lane.b32.xlu0 %v8909, 64
        %v8925 = vpop.permute.xlu0 %8924
        %8926 = vrot.lane.b32.xlu0 %v8910, 64
        %v8927 = vpop.permute.xlu0 %8926
        %v8928 = vrot.slane %v8907, 2
        %v8929 = vrot.slane %v8908, 2
        %v8930 = vrot.slane %v8909, 2
        %v8931 = vrot.slane %v8910, 2
        %v8932 = vrot.slane %v8907, 4
        %v8933 = vrot.slane %v8908, 4
        %v8934 = vrot.slane %v8909, 4
        %v8935 = vrot.slane %v8910, 4
        %8936 = vrot.lane.b32.xlu0 %v8932, 64
        %v8937 = vpop.permute.xlu0 %8936
        %8938 = vrot.lane.b32.xlu0 %v8933, 64
        %v8939 = vpop.permute.xlu0 %8938
        %8940 = vrot.lane.b32.xlu0 %v8934, 64
        %v8941 = vpop.permute.xlu0 %8940
        %8942 = vrot.lane.b32.xlu0 %v8935, 64
        %v8943 = vpop.permute.xlu0 %8942
        %v8945 = vsel %vm2783, %v8906, %v8914
        %v8948 = vsel %vm2783, %v8915, %v8921
        %v8950 = vsel %vm2783, %v8915, %v8923
        %v8952 = vsel %vm2783, %v8915, %v8925
        %v8954 = vsel %vm2783, %v8915, %v8927
        %v8957 = vsel %vm2783, %v8928, %v8937
        %v8960 = vsel %vm2783, %v8929, %v8939
        %v8963 = vsel %vm2783, %v8930, %v8941
        %v8966 = vsel %vm2783, %v8931, %v8943
        %v8976 = vcombine.low %v8945, %v8948
        %v8977 = vcombine.low %v8957, %v8945
        %v8979 = vunpack.c.l.s4 1983009808
        %v8980 = vunpack.c.0.s8 %v8979
        %v8981 = vlaneseq
        %v8982 = vshrl.u32 %v8981, 7
        %v8983 = vsub.s32 %v8980, %v8982
        %v8984 = vrot.slane %v8976, %v8983
        %v8986 = vunpack.c.l.s4 1983009808
        %v8987 = vunpack.c.0.s8 %v8986
        %v8988 = vlaneseq
        %v8989 = vshrl.u32 %v8988, 7
        %v8990 = vsub.s32 %v8987, %v8989
        %v8991 = vrot.slane %v8977, %v8990
        %v8992 = vcombine.low %v8984, %v8991
        %v8994 = vunpack.c.l.s4 1983009808
        %v8995 = vunpack.c.0.s8 %v8994
        %v8996 = vlaneseq
        %v8997 = vshrl.u32 %v8996, 7
        %v8998 = vsub.s32 %v8995, %v8997
        %v8999 = vrot.slane %v8915, %v8998
        %v9000 = vcombine.low %v8945, %v8950
        %v9001 = vcombine.low %v8960, %v8945
        %v9003 = vunpack.c.l.s4 1983009808
        %v9004 = vunpack.c.0.s8 %v9003
        %v9005 = vlaneseq
        %v9006 = vshrl.u32 %v9005, 7
        %v9007 = vsub.s32 %v9004, %v9006
        %v9008 = vrot.slane %v9000, %v9007
        %v9010 = vunpack.c.l.s4 1983009808
        %v9011 = vunpack.c.0.s8 %v9010
        %v9012 = vlaneseq
        %v9013 = vshrl.u32 %v9012, 7
        %v9014 = vsub.s32 %v9011, %v9013
        %v9015 = vrot.slane %v9001, %v9014
        %v9016 = vcombine.low %v9008, %v9015
        %v9017 = vcombine.low %v8945, %v8952
        %v9018 = vcombine.low %v8963, %v8945
        %v9020 = vunpack.c.l.s4 1983009808
        %v9021 = vunpack.c.0.s8 %v9020
        %v9022 = vlaneseq
        %v9023 = vshrl.u32 %v9022, 7
        %v9024 = vsub.s32 %v9021, %v9023
        %v9025 = vrot.slane %v9017, %v9024
        %v9027 = vunpack.c.l.s4 1983009808
        %v9028 = vunpack.c.0.s8 %v9027
        %v9029 = vlaneseq
        %v9030 = vshrl.u32 %v9029, 7
        %v9031 = vsub.s32 %v9028, %v9030
        %v9032 = vrot.slane %v9018, %v9031
        %v9033 = vcombine.low %v9025, %v9032
        %v9034 = vcombine.low %v8945, %v8954
        %v9035 = vcombine.low %v8966, %v8945
        %v9037 = vunpack.c.l.s4 1983009808
        %v9038 = vunpack.c.0.s8 %v9037
        %v9039 = vlaneseq
        %v9040 = vshrl.u32 %v9039, 7
        %v9041 = vsub.s32 %v9038, %v9040
        %v9042 = vrot.slane %v9034, %v9041
        %v9044 = vunpack.c.l.s4 1983009808
        %v9045 = vunpack.c.0.s8 %v9044
        %v9046 = vlaneseq
        %v9047 = vshrl.u32 %v9046, 7
        %v9048 = vsub.s32 %v9045, %v9047
        %v9049 = vrot.slane %v9035, %v9048
        %v9050 = vcombine.low %v9042, %v9049
        %v9052 = vlaneseq
        %v9053 = vshrl.u32 %v9052, 7
        %v9054 = vsub.s32 0, %v9053
        %v9055 = vrot.slane %v1427, %v9054
        %v9057 = vcombine.low %v8992, %v9016
        %v9058 = vcombine.high %v8992, %v9016
        %v9059 = vcombine.low %v9033, %v9050
        %v9060 = vcombine.high %v9033, %v9050
        %v9062 = vunpack.c.l.s4 1983009808
        %v9063 = vunpack.c.0.s8 %v9062
        %v9064 = vlaneseq
        %v9065 = vshrl.u32 %v9064, 7
        %v9066 = vsub.s32 %v9063, %v9065
        %v9067 = vrot.slane %v9057, %v9066
        %v9069 = vunpack.c.l.s4 1983009808
        %v9070 = vunpack.c.0.s8 %v9069
        %v9071 = vlaneseq
        %v9072 = vshrl.u32 %v9071, 7
        %v9073 = vsub.s32 %v9070, %v9072
        %v9074 = vrot.slane %v9058, %v9073
        %v9076 = vunpack.c.l.s4 1983009808
        %v9077 = vunpack.c.0.s8 %v9076
        %v9078 = vlaneseq
        %v9079 = vshrl.u32 %v9078, 7
        %v9080 = vsub.s32 %v9077, %v9079
        %v9081 = vrot.slane %v9059, %v9080
        %v9083 = vunpack.c.l.s4 1983009808
        %v9084 = vunpack.c.0.s8 %v9083
        %v9085 = vlaneseq
        %v9086 = vshrl.u32 %v9085, 7
        %v9087 = vsub.s32 %v9084, %v9086
        %v9088 = vrot.slane %v9060, %v9087
        %v9089 = vcombine.low %v9067, %v9081
        %v9090 = vcombine.high %v9067, %v9081
        %v9091 = vcombine.low %v9074, %v9088
        %v9092 = vcombine.high %v9074, %v9088
        %v9093 = vcombine.low %v8999, %v8999
        %v9095 = vunpack.c.l.s4 1983009808
        %v9096 = vunpack.c.0.s8 %v9095
        %v9097 = vlaneseq
        %v9098 = vshrl.u32 %v9097, 7
        %v9099 = vsub.s32 %v9096, %v9098
        %v9100 = vrot.slane %v9093, %v9099
        %v9101 = vcombine.low %v9100, %v9100
        %v9178 = vunpack.c.l.b16 %v1355
        %v9179 = vunpack.c.l.b16 %v1356
        %v9180 = vunpack.c.l.b16 %v1357
        %v9181 = vunpack.c.l.b16 %v1358
        %v9182 = vunpack.c.l.b16 %v1359
        %v9183 = vunpack.c.l.b16 %v1360
        %v9184 = vunpack.c.l.b16 %v1361
        %v9185 = vunpack.c.l.b16 %v1362
        %v9186 = vunpack.c.l.b16 %v1363
        %v9187 = vunpack.c.l.b16 %v1364
        %v9188 = vunpack.c.l.b16 %v1365
        %v9189 = vunpack.c.l.b16 %v1366
        %v9190 = vunpack.c.l.b16 %v1367
        %v9191 = vunpack.c.l.b16 %v1368
        %v9192 = vunpack.c.l.b16 %v1369
        %v9193 = vunpack.c.l.b16 %v1370
        %v9194 = vunpack.c.l.b16 %v1371
        %v9195 = vunpack.c.l.b16 %v1372
        %v9196 = vunpack.c.l.b16 %v1373
        %v9197 = vunpack.c.l.b16 %v1374
        %v9198 = vunpack.c.l.b16 %v1375
        %v9199 = vunpack.c.l.b16 %v1376
        %v9200 = vunpack.c.l.b16 %v1377
        %v9201 = vunpack.c.l.b16 %v1378
        %v9202 = vunpack.c.l.b16 %v1379
        %v9203 = vunpack.c.l.b16 %v1380
        %v9204 = vunpack.c.l.b16 %v1381
        %v9205 = vunpack.c.l.b16 %v1382
        %v9206 = vunpack.c.l.b16 %v1383
        %v9207 = vunpack.c.l.b16 %v1384
        %v9208 = vunpack.c.l.b16 %v1385
        %v9209 = vunpack.c.l.b16 %v1386
        %v9210 = vunpack.c.l.b16 %v1387
        %v9211 = vunpack.c.l.b16 %v1388
        %v9212 = vunpack.c.l.b16 %v1389
        %v9213 = vunpack.c.l.b16 %v1390
        %v9214 = vunpack.c.l.b16 %v1391
        %v9215 = vunpack.c.l.b16 %v1392
        %v9216 = vunpack.c.l.b16 %v1393
        %v9217 = vunpack.c.l.b16 %v1394
        %v9218 = vunpack.c.l.b16 %v1395
        %v9219 = vunpack.c.l.b16 %v1396
        %v9220 = vunpack.c.l.b16 %v1397
        %v9221 = vunpack.c.l.b16 %v1398
        %v9222 = vunpack.c.l.b16 %v1399
        %v9223 = vunpack.c.l.b16 %v1400
        %v9224 = vunpack.c.l.b16 %v1401
        %v9225 = vunpack.c.l.b16 %v1402
        %v9226 = vunpack.c.l.b16 %v1403
        %v9227 = vunpack.c.l.b16 %v1404
        %v9228 = vunpack.c.l.b16 %v1405
        %v9229 = vunpack.c.l.b16 %v1406
        %v9230 = vunpack.c.l.b16 %v1407
        %v9231 = vunpack.c.l.b16 %v1408
        %v9232 = vunpack.c.l.b16 %v1409
        %v9233 = vunpack.c.l.b16 %v1410
        %v9234 = vunpack.c.l.b16 %v1411
        %v9235 = vunpack.c.l.b16 %v1412
        %v9236 = vunpack.c.l.b16 %v1413
        %v9237 = vunpack.c.l.b16 %v1414
        %v9238 = vunpack.c.l.b16 %v1415
        %v9239 = vunpack.c.l.b16 %v1416
        %v9240 = vunpack.c.l.b16 %v1417
        %v9241 = vunpack.c.l.b16 %v1418
        %v9242 = vunpack.c.l.b16 %v1419
        %v9243 = vunpack.c.l.b16 %v1420
        %v9244 = vunpack.c.l.b16 %v1421
        %v9245 = vunpack.c.l.b16 %v1422
        %v9246 = vunpack.c.l.b16 %v1423
        %v9247 = vunpack.c.l.b16 %v1424
        %v9248 = vunpack.c.l.b16 %v1425
        %v9249 = vunpack.c.l.b16 %v1426
        %v9250 = vpack.c.b16 %v9179, %v9178
        %v9251 = vpack.c.b16 %v9181, %v9180
        %v9252 = vpack.c.b16 %v9183, %v9182
        %v9253 = vpack.c.b16 %v9185, %v9184
        %v9254 = vpack.c.b16 %v9187, %v9186
        %v9255 = vpack.c.b16 %v9189, %v9188
        %v9256 = vpack.c.b16 %v9191, %v9190
        %v9257 = vpack.c.b16 %v9193, %v9192
        %v9258 = vpack.c.b16 %v9195, %v9194
        %v9259 = vpack.c.b16 %v9197, %v9196
        %v9260 = vpack.c.b16 %v9199, %v9198
        %v9261 = vpack.c.b16 %v9201, %v9200
        %v9262 = vpack.c.b16 %v9203, %v9202
        %v9263 = vpack.c.b16 %v9205, %v9204
        %v9264 = vpack.c.b16 %v9207, %v9206
        %v9265 = vpack.c.b16 %v9209, %v9208
        %v9266 = vpack.c.b16 %v9211, %v9210
        %v9267 = vpack.c.b16 %v9213, %v9212
        %v9268 = vpack.c.b16 %v9215, %v9214
        %v9269 = vpack.c.b16 %v9217, %v9216
        %v9270 = vpack.c.b16 %v9219, %v9218
        %v9271 = vpack.c.b16 %v9221, %v9220
        %v9272 = vpack.c.b16 %v9223, %v9222
        %v9273 = vpack.c.b16 %v9225, %v9224
        %v9274 = vpack.c.b16 %v9227, %v9226
        %v9275 = vpack.c.b16 %v9229, %v9228
        %v9276 = vpack.c.b16 %v9231, %v9230
        %v9277 = vpack.c.b16 %v9233, %v9232
        %v9278 = vpack.c.b16 %v9235, %v9234
        %v9279 = vpack.c.b16 %v9237, %v9236
        %v9280 = vpack.c.b16 %v9239, %v9238
        %v9281 = vpack.c.b16 %v9241, %v9240
        %v9282 = vpack.c.b16 %v9243, %v9242
        %v9283 = vpack.c.b16 %v9245, %v9244
        %v9284 = vpack.c.b16 %v9247, %v9246
        %v9285 = vpack.c.b16 %v9249, %v9248
        %v9323 = vsel %vm2783, %v9101, 0
        %9325 = vmatprep.subr.bf16.mxu0 0
        %9326 = vmatpush1.bf16.msra.mxu0 %v9257
        %9327 = vmatprep.subr.bf16.mxu0 0
        %9328 = vmatpush1.bf16.msra.mxu0 %v9256
        %9329 = vmatprep.subr.bf16.mxu0 0
        %9330 = vmatpush1.bf16.msra.mxu0 %v9255
        %9331 = vmatprep.subr.bf16.mxu0 0
        %9332 = vmatpush1.bf16.msra.mxu0 %v9254
        %9333 = vmatprep.subr.bf16.mxu0 0
        %9334 = vmatpush1.bf16.msra.mxu0 %v9253
        %9335 = vmatprep.subr.bf16.mxu0 0
        %9336 = vmatpush1.bf16.msra.mxu0 %v9252
        %9337 = vmatprep.subr.bf16.mxu0 0
        %9338 = vmatpush1.bf16.msra.mxu0 %v9251
        %9339 = vmatprep.subr.bf16.mxu0 0
        %9340 = vmatpush1.bf16.msra.mxu0 %v9250
        %9341 = vmatprep.subr.bf16.mxu0 0
        %9342 = vmatpush2.bf16.msra.mxu0 %v9265
        %9343 = vmatprep.subr.bf16.mxu0 0
        %9344 = vmatpush2.bf16.msra.mxu0 %v9264
        %9345 = vmatprep.subr.bf16.mxu0 0
        %9346 = vmatpush2.bf16.msra.mxu0 %v9263
        %9347 = vmatprep.subr.bf16.mxu0 0
        %9348 = vmatpush2.bf16.msra.mxu0 %v9262
        %9349 = vmatprep.subr.bf16.mxu0 0
        %9350 = vmatpush2.bf16.msra.mxu0 %v9261
        %9351 = vmatprep.subr.bf16.mxu0 0
        %9352 = vmatpush2.bf16.msra.mxu0 %v9260
        %9353 = vmatprep.subr.bf16.mxu0 0
        %9354 = vmatpush2.bf16.msra.mxu0 %v9259
        %9355 = vmatprep.subr.bf16.mxu0 0
        %9356 = vmatpush2.bf16.msra.mxu0 %v9258
        %9357 = vmatprep.mubr.bf16.mxu0 %v9090
        %9358 = vmatmul.mubr.bf16.gmra.mxu0 %v9089
        %v9359 = vpop.f32.mrf.mxu0
        %v9360 = vadd.f32 %v9055, %v9359
        %v9361 = vpop.f32.mrf.mxu0
        %v9362 = vpop.f32.mrf.mxu0
        %v9363 = vadd.f32 %v9055, %v9362
        %v9364 = vpop.f32.mrf.mxu0
        %9365 = vdwg.mxu0
        %9366 = vmatprep.subr.bf16.mxu0 0
        %9367 = vmatpush1.bf16.msra.mxu0 %v9273
        %9368 = vmatprep.subr.bf16.mxu0 0
        %9369 = vmatpush1.bf16.msra.mxu0 %v9272
        %9370 = vmatprep.subr.bf16.mxu0 0
        %9371 = vmatpush1.bf16.msra.mxu0 %v9271
        %9372 = vmatprep.subr.bf16.mxu0 0
        %9373 = vmatpush1.bf16.msra.mxu0 %v9270
        %9374 = vmatprep.subr.bf16.mxu0 0
        %9375 = vmatpush1.bf16.msra.mxu0 %v9269
        %9376 = vmatprep.subr.bf16.mxu0 0
        %9377 = vmatpush1.bf16.msra.mxu0 %v9268
        %9378 = vmatprep.subr.bf16.mxu0 0
        %9379 = vmatpush1.bf16.msra.mxu0 %v9267
        %9380 = vmatprep.subr.bf16.mxu0 0
        %9381 = vmatpush1.bf16.msra.mxu0 %v9266
        %9382 = vmatprep.subr.bf16.mxu0 0
        %9383 = vmatpush2.bf16.msra.mxu0 %v9281
        %9384 = vmatprep.subr.bf16.mxu0 0
        %9385 = vmatpush2.bf16.msra.mxu0 %v9280
        %9386 = vmatprep.subr.bf16.mxu0 0
        %9387 = vmatpush2.bf16.msra.mxu0 %v9279
        %9388 = vmatprep.subr.bf16.mxu0 0
        %9389 = vmatpush2.bf16.msra.mxu0 %v9278
        %9390 = vmatprep.subr.bf16.mxu0 0
        %9391 = vmatpush2.bf16.msra.mxu0 %v9277
        %9392 = vmatprep.subr.bf16.mxu0 0
        %9393 = vmatpush2.bf16.msra.mxu0 %v9276
        %9394 = vmatprep.subr.bf16.mxu0 0
        %9395 = vmatpush2.bf16.msra.mxu0 %v9275
        %9396 = vmatprep.subr.bf16.mxu0 0
        %9397 = vmatpush2.bf16.msra.mxu0 %v9274
        %9398 = vmatprep.mubr.bf16.mxu0 %v9092
        %9399 = vmatmul.mubr.bf16.gmra.mxu0 %v9091
        %v9400 = vpop.f32.mrf.mxu0
        %v9401 = vadd.f32 %v9360, %v9400
        %v9402 = vpop.f32.mrf.mxu0
        %v9403 = vpop.f32.mrf.mxu0
        %v9404 = vadd.f32 %v9363, %v9403
        %v9405 = vpop.f32.mrf.mxu0
        %9406 = vdwg.mxu0
        %9407 = vmatprep.subr.bf16.mxu0 0
        %9408 = vmatpush1.bf16.msra.mxu0 0
        %9409 = vmatprep.subr.bf16.mxu0 0
        %9410 = vmatpush1.bf16.msra.mxu0 0
        %9411 = vmatprep.subr.bf16.mxu0 0
        %9412 = vmatpush1.bf16.msra.mxu0 0
        %9413 = vmatprep.subr.bf16.mxu0 0
        %9414 = vmatpush1.bf16.msra.mxu0 0
        %9415 = vmatprep.subr.bf16.mxu0 0
        %9416 = vmatpush1.bf16.msra.mxu0 %v9285
        %9417 = vmatprep.subr.bf16.mxu0 0
        %9418 = vmatpush1.bf16.msra.mxu0 %v9284
        %9419 = vmatprep.subr.bf16.mxu0 0
        %9420 = vmatpush1.bf16.msra.mxu0 %v9283
        %9421 = vmatprep.subr.bf16.mxu0 0
        %9422 = vmatpush1.bf16.msra.mxu0 %v9282
        %9423 = vmatprep.subr.bf16.mxu0 0
        %9424 = vmatpush2.bf16.msra.mxu0 0
        %9425 = vmatprep.subr.bf16.mxu0 0
        %9426 = vmatpush2.bf16.msra.mxu0 0
        %9427 = vmatprep.subr.bf16.mxu0 0
        %9428 = vmatpush2.bf16.msra.mxu0 0
        %9429 = vmatprep.subr.bf16.mxu0 0
        %9430 = vmatpush2.bf16.msra.mxu0 0
        %9431 = vmatprep.subr.bf16.mxu0 0
        %9432 = vmatpush2.bf16.msra.mxu0 0
        %9433 = vmatprep.subr.bf16.mxu0 0
        %9434 = vmatpush2.bf16.msra.mxu0 0
        %9435 = vmatprep.subr.bf16.mxu0 0
        %9436 = vmatpush2.bf16.msra.mxu0 0
        %9437 = vmatprep.subr.bf16.mxu0 0
        %9438 = vmatpush2.bf16.msra.mxu0 0
        %9439 = vmatprep.mubr.bf16.mxu0 0
        %9440 = vmatmul.mubr.bf16.gmra.mxu0 %v9323
        %v9441 = vpop.f32.mrf.mxu0
        %v9442 = vadd.f32 %v9401, %v9441
        %v9443 = vpop.f32.mrf.mxu0
        %v9444 = vpop.f32.mrf.mxu0
        %v9445 = vadd.f32 %v9404, %v9444
        %v9446 = vpop.f32.mrf.mxu0
        %9447 = vdwg.mxu0
        %v9448 = vadd.f32 %v9442, %v8865
        %v9449 = vadd.f32 %v9445, %v8868
        %v9450 = vmax.f32 %v9448, 0.0
        %v9451 = vmax.f32 %v9449, 0.0
        %v9452 = vpack.c.bf16 %v9451, %v9450
        %v9454 = vcombine.high %v9452, %v9452
        %v9456 = vunpack.c.l.s4 1983009808
        %v9457 = vunpack.c.0.s8 %v9456
        %v9458 = vlaneseq
        %v9459 = vshrl.u32 %v9458, 7
        %v9460 = vsub.s32 %v9457, %v9459
        %v9461 = vrot.slane %v9452, %v9460
        %v9463 = vunpack.c.l.s4 1983009808
        %v9464 = vunpack.c.0.s8 %v9463
        %v9465 = vlaneseq
        %v9466 = vshrl.u32 %v9465, 7
        %v9467 = vsub.s32 %v9464, %v9466
        %v9468 = vrot.slane %v9454, %v9467
        %v9469 = vcombine.high %v9461, %v9461
        %v9470 = vcombine.high %v9468, %v9468
        %vm9475 = vcmask 517120
        %9476 = vst.msk [vmem:[%s1164] sm:$0x3] %vm9475, %v9461
        %9477 = vst.msk [vmem:[%s1164 + $0x2] sm:$0x3] %vm9475, %v9469
        %9478 = vst.msk [vmem:[%s1164 + $0x4] sm:$0x3] %vm9475, %v9468
        %9479 = vst.msk [vmem:[%s1164 + $0x6] sm:$0x3] %vm9475, %v9470
        %s9480 = sand.u32 %s802, 1
        %s9481 = scalar_lea.sflag [#allocation3], %s9480
        %s9482 = sand.u32 %s802, 1
        %s9483 = smul.addr %s9482, 128
        %s9484 = scalar_lea.vmem [#allocation2], %s9483
        %s9485 = sand.u32 %s96, 1
        %s9486 = scalar_lea.sflag [#allocation5], %s9485
        %s9487 = sand.u32 %s828, 1
        %s9488 = smul.addr %s9487, 32
        %s9489 = scalar_lea.vmem [#allocation4], %s9488
        %s9490 = sand.u32 %s96, 1
        %s9491 = scalar_lea.sflag [#allocation5], %s9490
        %s9492 = sand.u32 %s854, 1
        %s9493 = smul.addr %s9492, 8
        %s9494 = scalar_lea.vmem [#allocation6], %s9493
        %s9495 = sand.u32 %s880, 1
        %s9496 = scalar_lea.sflag [#allocation8], %s9495
        %s9497 = sand.u32 %s880, 1
        %s9498 = smul.addr %s9497, 8
        %s9499 = scalar_lea.vmem [#allocation7], %s9498
        %p9500 = scmp.lt.s32.totalorder %s96, 1
        %s9501 = scalar_select %p9500, %s96, 1
        %s9502 = smul.addr %s9501, 4
        %s9503 = smul.addr %s9502, 2
        %s9504 = scalar_lea.vmem %s75, %s9503
        // Predicated region
        $region153: #{resnet_dilated_forward.1} parent=151 // pred_check
          %p9505 = pneg %p812
        $region154: #{resnet_dilated_forward.1} parent=151 // pred_check_branch
          %9507 = sbr.rel (%p9505) target = $region156
        $region155: #{resnet_dilated_forward.1} parent=151 // pred_region
          %s9509 = ssub.s32 2048, 2048
          %9510 = vsyncadd %s9481, %s9509
          %s9511 = smul.addr %s96, 32
          %s9512 = smul.addr %s9511, 64
          %s9513 = scalar_lea.hbm %s67, %s9512
          %s9514 = sshll.u32 %s9484, 4
          %s9515 = int_to_ptr.vmem [resolvable:$true] %s9514
          %9520 = dma.vmem_to_hbm [thread:$0]  %s9515, 2048, %s9513, %s9481, 64, 64, 4
        $region156: #{resnet_dilated_forward.1} parent=151 // pred_fallthru
          _
        // Predicated region
        $region157: #{resnet_dilated_forward.1} parent=151 // pred_check
          %p9521 = pneg %p838
        $region158: #{resnet_dilated_forward.1} parent=151 // pred_check_branch
          %9523 = sbr.rel (%p9521) target = $region160
        $region159: #{resnet_dilated_forward.1} parent=151 // pred_region
          %s9525 = ssub.s32 512, 512
          %9526 = vsyncadd %s9486, %s9525
          %s9527 = smul.addr %s96, 8
          %s9528 = smul.addr %s9527, 64
          %s9529 = scalar_lea.hbm %s69, %s9528
          %s9530 = sshll.u32 %s9489, 4
          %s9531 = int_to_ptr.vmem [resolvable:$true] %s9530
          %9536 = dma.vmem_to_hbm [thread:$0]  %s9531, 512, %s9529, %s9486, 64, 64, 4
        $region160: #{resnet_dilated_forward.1} parent=151 // pred_fallthru
          _
        // Predicated region
        $region161: #{resnet_dilated_forward.1} parent=151 // pred_check
          %p9537 = pneg %p864
        $region162: #{resnet_dilated_forward.1} parent=151 // pred_check_branch
          %9539 = sbr.rel (%p9537) target = $region164
        $region163: #{resnet_dilated_forward.1} parent=151 // pred_region
          %s9541 = ssub.s32 128, 128
          %9542 = vsyncadd %s9491, %s9541
          %s9543 = smul.addr %s96, 4
          %s9544 = smul.addr %s9543, 32
          %s9545 = scalar_lea.hbm %s71, %s9544
          %s9546 = sshll.u32 %s9494, 4
          %s9547 = int_to_ptr.vmem [resolvable:$true] %s9546
          %9552 = dma.vmem_to_hbm [thread:$0]  %s9547, 128, %s9545, %s9491, 32, 32, 2
        $region164: #{resnet_dilated_forward.1} parent=151 // pred_fallthru
          _
        // Predicated region
        $region165: #{resnet_dilated_forward.1} parent=151 // pred_check
          %p9553 = pneg %p890
        $region166: #{resnet_dilated_forward.1} parent=151 // pred_check_branch
          %9555 = sbr.rel (%p9553) target = $region168
        $region167: #{resnet_dilated_forward.1} parent=151 // pred_region
          %s9557 = ssub.s32 128, 128
          %9558 = vsyncadd %s9496, %s9557
          %s9559 = smul.addr %s96, 4
          %s9560 = smul.addr %s9559, 32
          %s9561 = scalar_lea.hbm %s73, %s9560
          %s9562 = sshll.u32 %s9499, 4
          %s9563 = int_to_ptr.vmem [resolvable:$true] %s9562
          %9568 = dma.vmem_to_hbm [thread:$0]  %s9563, 128, %s9561, %s9496, 32, 32, 2
        $region168: #{resnet_dilated_forward.1} parent=151 // pred_fallthru
          _
        // Predicated region
        $region169: #{resnet_dilated_forward.1} parent=151 // pred_check
          %p9569 = pneg %p916
        $region170: #{resnet_dilated_forward.1} parent=151 // pred_check_branch
          %9571 = sbr.rel (%p9569) target = $region172
        $region171: #{resnet_dilated_forward.1} parent=151 // pred_region
          _
        $region172: #{resnet_dilated_forward.1} parent=151 // pred_fallthru
          _
      $region152: #{resnet_dilated_forward.1} parent=5 // pred_fallthru
        _
      %p9572 = scmp.le.s32.totalorder 2, %s91
      // Predicated region
      $region173: #{resnet_dilated_forward.1} parent=5 // pred_check
        %p9573 = pneg %p9572
      $region174: #{resnet_dilated_forward.1} parent=5 // pred_check_branch
        %9575 = sbr.rel (%p9573) target = $region176
      $region175: #{resnet_dilated_forward.1} parent=5 // pred_region
        %s9576 = ssub.s32 %s91, 2
        // Predicated region
        $region177: #{resnet_dilated_forward.1} parent=175 // pred_check
          %p9577 = pneg %p818
        $region178: #{resnet_dilated_forward.1} parent=175 // pred_check_branch
          %9579 = sbr.rel (%p9577) target = $region180
        $region179: #{resnet_dilated_forward.1} parent=175 // pred_region
          %s9580 = sand.u32 %s803, 1
          %s9581 = scalar_lea.sflag [#allocation3], %s9580
          %s9582 = sand.u32 %s803, 1
          %s9583 = smul.addr %s9582, 128
          %s9584 = scalar_lea.vmem [#allocation2], %s9583
          %9585 = dma.done %s9581, 2048
        $region180: #{resnet_dilated_forward.1} parent=175 // pred_fallthru
          _
        // Predicated region
        $region181: #{resnet_dilated_forward.1} parent=175 // pred_check
          %p9586 = pneg %p844
        $region182: #{resnet_dilated_forward.1} parent=175 // pred_check_branch
          %9588 = sbr.rel (%p9586) target = $region184
        $region183: #{resnet_dilated_forward.1} parent=175 // pred_region
          %s9589 = sand.u32 %s97, 1
          %s9590 = scalar_lea.sflag [#allocation5], %s9589
          %s9591 = sand.u32 %s829, 1
          %s9592 = smul.addr %s9591, 32
          %s9593 = scalar_lea.vmem [#allocation4], %s9592
          %9594 = dma.done %s9590, 512
        $region184: #{resnet_dilated_forward.1} parent=175 // pred_fallthru
          _
        // Predicated region
        $region185: #{resnet_dilated_forward.1} parent=175 // pred_check
          %p9595 = pneg %p870
        $region186: #{resnet_dilated_forward.1} parent=175 // pred_check_branch
          %9597 = sbr.rel (%p9595) target = $region188
        $region187: #{resnet_dilated_forward.1} parent=175 // pred_region
          %s9598 = sand.u32 %s97, 1
          %s9599 = scalar_lea.sflag [#allocation5], %s9598
          %s9600 = sand.u32 %s855, 1
          %s9601 = smul.addr %s9600, 8
          %s9602 = scalar_lea.vmem [#allocation6], %s9601
          %9603 = dma.done %s9599, 128
        $region188: #{resnet_dilated_forward.1} parent=175 // pred_fallthru
          _
        // Predicated region
        $region189: #{resnet_dilated_forward.1} parent=175 // pred_check
          %p9604 = pneg %p896
        $region190: #{resnet_dilated_forward.1} parent=175 // pred_check_branch
          %9606 = sbr.rel (%p9604) target = $region192
        $region191: #{resnet_dilated_forward.1} parent=175 // pred_region
          %s9607 = sand.u32 %s881, 1
          %s9608 = scalar_lea.sflag [#allocation8], %s9607
          %s9609 = sand.u32 %s881, 1
          %s9610 = smul.addr %s9609, 8
          %s9611 = scalar_lea.vmem [#allocation7], %s9610
          %9612 = dma.done %s9608, 128
        $region192: #{resnet_dilated_forward.1} parent=175 // pred_fallthru
          _
        // Predicated region
        $region193: #{resnet_dilated_forward.1} parent=175 // pred_check
          %p9613 = pneg %p922
        $region194: #{resnet_dilated_forward.1} parent=175 // pred_check_branch
          %9615 = sbr.rel (%p9613) target = $region196
        $region195: #{resnet_dilated_forward.1} parent=175 // pred_region
          %p9616 = scmp.lt.s32.totalorder %s97, 1
          %s9617 = scalar_select %p9616, %s97, 1
          %s9618 = smul.addr %s9617, 4
          %s9619 = smul.addr %s9618, 2
          %s9620 = scalar_lea.vmem %s75, %s9619
        $region196: #{resnet_dilated_forward.1} parent=175 // pred_fallthru
          _
      $region176: #{resnet_dilated_forward.1} parent=5 // pred_fallthru
        _
    $region6: #{resnet_dilated_forward.1} parent=1 // loop_footer
      %s95 = sadd.s32 1, %s91
    $region7: #{resnet_dilated_forward.1} parent=1 // loop_footer_branch
      %90 = sbr.rel target = $region3
    $region8: #{resnet_dilated_forward.1} parent=1 // loop_exit
      _
    %9621 = vsyncpa [#allocation3], 1
    %s9622 = scalar_lea.sflag [#allocation3], 1
    %9623 = vsyncpa %s9622, 1
    %9624 = vsyncpa [#allocation5], 1
    %s9625 = scalar_lea.sflag [#allocation5], 1
    %9626 = vsyncpa %s9625, 1
    %9627 = vsyncpa [#allocation8], 1
    %s9628 = scalar_lea.sflag [#allocation8], 1
    %9629 = vsyncpa %s9628, 1

</llo_original>
